<compile_context>
chip_gen: v7x
topology: tpu7x:2x2x1
jax: 0.10.0
libtpu: 0.0.40
codegen_flags: <defaults>
</compile_context>

<pallas_src>
import jax
import jax.numpy as jnp
from jax.experimental import pallas as pl
from jax.experimental.pallas import tpu as pltpu

LANE = 128
BN_EPS = 1e-5


def _rup(n, m=LANE):
    return ((n + m - 1) // m) * m


def _pick_tile(m):
    for t in (256, 128, 64, 32, 16, 8):
        if m % t == 0:
            return t
    return m  # block == full dim is always legal


# ----------------------------- Pallas kernels -----------------------------

def _mm_kernel(a_ref, w_ref, o_ref):
    o_ref[...] = jnp.dot(a_ref[...], w_ref[...], preferred_element_type=jnp.float32)


def _mm_bnrelu_kernel(a_ref, w_ref, s_ref, t_ref, o_ref):
    # conv matmul with fused eval-mode BatchNorm + ReLU epilogue.
    acc = jnp.dot(a_ref[...], w_ref[...], preferred_element_type=jnp.float32)
    o_ref[...] = jnp.maximum(acc * s_ref[...] + t_ref[...], 0.0)


def _mm_resadd_kernel(a_ref, w_ref, r_ref, o_ref):
    # conv matmul + identity-residual add.
    acc = jnp.dot(a_ref[...], w_ref[...], preferred_element_type=jnp.float32)
    o_ref[...] = acc + r_ref[...]


def _mm_dualadd_kernel(a_ref, w_ref, sa_ref, sw_ref, o_ref):
    # conv2 matmul + shortcut 1x1-conv matmul + residual add, all in one pass.
    acc = jnp.dot(a_ref[...], w_ref[...], preferred_element_type=jnp.float32)
    acc = acc + jnp.dot(sa_ref[...], sw_ref[...], preferred_element_type=jnp.float32)
    o_ref[...] = acc


def _bn_relu_kernel(x_ref, s_ref, t_ref, o_ref):
    o_ref[...] = jnp.maximum(x_ref[...] * s_ref[...] + t_ref[...], 0.0)


def _head_kernel(x_ref, s_ref, t_ref, w_ref, b_ref, o_ref):
    # Final BN + ReLU + global average pool (H*W) + FC matmul + bias, fully fused.
    y = jnp.maximum(x_ref[...] * s_ref[...] + t_ref[...], 0.0)        # [N, HW, C]
    feat = jnp.mean(y, axis=1)                                        # [N, C]
    o_ref[...] = jnp.dot(feat.astype(jnp.bfloat16), w_ref[...],
                         preferred_element_type=jnp.float32) + b_ref[...]


# ----------------------------- pallas_call wrappers -----------------------------

def _mm_call(kernel, a, operands, out_cols):
    """M-tiled fused matmul.  a: [M, K] (bf16).  operands: list of (array, row_tiled)."""
    M, K = a.shape
    tm = _pick_tile(M)
    in_specs = [pl.BlockSpec((tm, K), lambda i: (i, 0))]
    args = [a]
    for arr, tiled in operands:
        if tiled:
            in_specs.append(pl.BlockSpec((tm, arr.shape[1]), lambda i: (i, 0)))
        else:  # whole-array operand (weights / per-channel scale / shift)
            in_specs.append(pl.BlockSpec(arr.shape, lambda i: (0, 0)))
        args.append(arr)
    return pl.pallas_call(
        kernel,
        out_shape=jax.ShapeDtypeStruct((M, out_cols), jnp.float32),
        grid=(M // tm,),
        in_specs=in_specs,
        out_specs=pl.BlockSpec((tm, out_cols), lambda i: (i, 0)),
        compiler_params=pltpu.CompilerParams(dimension_semantics=("parallel",)),
    )(*args)


def bn_relu_pallas(x, scale, shift):
    """Eval-mode BatchNorm2d fused with ReLU.  x: NHWC (channel-padded), f32."""
    N, H, W, C = x.shape
    x2 = x.reshape(N * H * W, C)
    R = x2.shape[0]
    tr = _pick_tile(R)
    out = pl.pallas_call(
        _bn_relu_kernel,
        out_shape=jax.ShapeDtypeStruct((R, C), jnp.float32),
        grid=(R // tr,),
        in_specs=[pl.BlockSpec((tr, C), lambda i: (i, 0)),
                  pl.BlockSpec((1, C), lambda i: (0, 0)),
                  pl.BlockSpec((1, C), lambda i: (0, 0))],
        out_specs=pl.BlockSpec((tr, C), lambda i: (i, 0)),
        compiler_params=pltpu.CompilerParams(dimension_semantics=("parallel",)),
    )(x2, scale, shift)
    return out.reshape(N, H, W, C)


def head_pallas(x, scale, shift, wmat, bias, num_classes):
    """Fused network head: BN + ReLU + GAP + FC.  x: [N,H,W,Cp] f32 -> [N, classes]."""
    N, H, W, C = x.shape
    nc_p = wmat.shape[1]
    out = pl.pallas_call(
        _head_kernel,
        out_shape=jax.ShapeDtypeStruct((N, nc_p), jnp.float32),
    )(x.reshape(N, H * W, C), scale.reshape(1, 1, C), shift.reshape(1, 1, C),
      wmat, bias)
    return out[:, :num_classes]


# ----------------------------- im2col glue (host-side, bf16) -----------------------------

def conv_im2col(x, stride):
    """x: NHWC f32.  Returns bf16 patches [N*Ho*Wo, 9*C], Ho, Wo (pad=1, k=3)."""
    N, H, W, C = x.shape
    Ho = (H + 2 - 3) // stride + 1
    Wo = (W + 2 - 3) // stride + 1
    xp = jnp.pad(x.astype(jnp.bfloat16), ((0, 0), (1, 1), (1, 1), (0, 0)))
    cols = [xp[:, dy:dy + stride * Ho:stride, dx:dx + stride * Wo:stride, :]
            for dy in range(3) for dx in range(3)]
    patches = jnp.stack(cols, axis=3).reshape(N * Ho * Wo, 9 * C)
    return patches, Ho, Wo


# ----------------------------- model -----------------------------

def basic_block(x, p):
    N = x.shape[0]
    stride = p['stride']

    # pre-activation: h = relu(bn1(x))
    h = bn_relu_pallas(x, *p['bn1'])

    # conv1 (stride) with fused BN2 + ReLU epilogue
    patches1, Ho, Wo = conv_im2col(h, stride)
    cp1 = p['conv1_w'].shape[1]
    h2 = _mm_call(_mm_bnrelu_kernel, patches1,
                  [(p['conv1_w'], False), (p['bn2'][0], False), (p['bn2'][1], False)],
                  cp1).reshape(N, Ho, Wo, cp1)

    # conv2 with fused residual epilogue (shortcut 1x1 conv on h, or identity on x)
    patches2, _, _ = conv_im2col(h2, 1)
    cout = p['conv2_w'].shape[1]
    if 'shortcut_w' in p:
        sc_a = h[:, ::stride, ::stride, :].reshape(N * Ho * Wo, -1).astype(jnp.bfloat16)
        out = _mm_call(_mm_dualadd_kernel, patches2,
                       [(p['conv2_w'], False), (sc_a, True), (p['shortcut_w'], False)],
                       cout)
    else:
        res = x.reshape(N * Ho * Wo, -1)  # identity residual (stride==1, same planes)
        out = _mm_call(_mm_resadd_kernel, patches2,
                       [(p['conv2_w'], False), (res, True)], cout)
    return out.reshape(N, Ho, Wo, cout)


def wideresnet_forward(params, x_nchw):
    x = jnp.transpose(x_nchw, (0, 2, 3, 1)).astype(jnp.float32)  # NCHW -> NHWC
    N = x.shape[0]

    # stem conv (3 -> 16, output zero-padded to 128 lanes; K stays at 9*3 = 27)
    patches, Ho, Wo = conv_im2col(x, 1)
    c0 = params['conv1_w'].shape[1]
    out = _mm_call(_mm_kernel, patches, [(params['conv1_w'], False)], c0)
    out = out.reshape(N, Ho, Wo, c0)

    for group in params['blocks']:
        for p in group:
            out = basic_block(out, p)

    # fused head: BN + ReLU + global average pool + FC + bias
    return head_pallas(out, *params['bn_final'], params['fc_w'], params['fc_b'],
                       params['num_classes'])


# ----------------------------- parameter init / pre-layout -----------------------------

def _kaiming_conv(key, shape):  # [Cout, Cin, kh, kw], kaiming_normal_ (fan_in, relu gain)
    fan_in = shape[1] * shape[2] * shape[3]
    return jax.random.normal(key, shape, jnp.float32) * (2.0 / fan_in) ** 0.5


def _xavier_conv(key, shape):  # xavier_normal_
    fan_in = shape[1] * shape[2] * shape[3]
    fan_out = shape[0] * shape[2] * shape[3]
    return jax.random.normal(key, shape, jnp.float32) * (2.0 / (fan_in + fan_out)) ** 0.5


def _xavier_linear(key, shape):  # [out, in]
    return jax.random.normal(key, shape, jnp.float32) * (2.0 / (shape[0] + shape[1])) ** 0.5


def _prep_conv3x3(w, cin_p, cout_p):
    """torch [Cout,Cin,3,3] -> bf16 [9*cin_p, cout_p] matmul layout (zero-padded)."""
    cout, cin = w.shape[0], w.shape[1]
    wm = jnp.transpose(w, (2, 3, 1, 0))                            # [3,3,Cin,Cout]
    wm = jnp.pad(wm, ((0, 0), (0, 0), (0, cin_p - cin), (0, cout_p - cout)))
    return wm.reshape(9 * cin_p, cout_p).astype(jnp.bfloat16)


def _prep_conv1x1(w, cin_p, cout_p):
    cout, cin = w.shape[0], w.shape[1]
    wm = jnp.pad(w.reshape(cout, cin).T, ((0, cin_p - cin), (0, cout_p - cout)))
    return wm.astype(jnp.bfloat16)


def _prep_bn(c, c_p):
    # PyTorch: gamma=1 (constant_ init), beta=0, running_mean=0, running_var=1 (eval mode).
    gamma = jnp.ones((c,), jnp.float32)
    beta = jnp.zeros((c,), jnp.float32)
    mean = jnp.zeros((c,), jnp.float32)
    var = jnp.ones((c,), jnp.float32)
    scale = gamma / jnp.sqrt(var + BN_EPS)
    shift = beta - mean * scale
    return (jnp.pad(scale, (0, c_p - c)).reshape(1, c_p),
            jnp.pad(shift, (0, c_p - c)).reshape(1, c_p))


def init_wideresnet(key, depth=10, num_classes=10, widen_factor=2):
    assert (depth - 4) % 6 == 0
    num_blocks = (depth - 4) // 6
    widths = [16, 16 * widen_factor, 32 * widen_factor, 64 * widen_factor]
    keys = iter(jax.random.split(key, 256))

    params = {
        # stem conv keeps true input channels (3) in the K axis; only Cout is padded.
        'conv1_w': _prep_conv3x3(_xavier_conv(next(keys), (16, 3, 3, 3)), 3, _rup(16)),
        'num_classes': num_classes,
    }
    blocks = []
    in_planes = 16
    for out_planes, first_stride in zip(widths[1:], [1, 2, 2]):
        group = []
        for s in [first_stride] + [1] * (num_blocks - 1):
            cin_p, cout_p = _rup(in_planes), _rup(out_planes)
            p = {
                'bn1': _prep_bn(in_planes, cin_p),
                'conv1_w': _prep_conv3x3(
                    _kaiming_conv(next(keys), (out_planes, in_planes, 3, 3)), cin_p, cout_p),
                'bn2': _prep_bn(out_planes, cout_p),
                'conv2_w': _prep_conv3x3(
                    _kaiming_conv(next(keys), (out_planes, out_planes, 3, 3)), cout_p, cout_p),
                'stride': s,
            }
            if in_planes != out_planes or s != 1:
                p['shortcut_w'] = _prep_conv1x1(
                    _kaiming_conv(next(keys), (out_planes, in_planes, 1, 1)), cin_p, cout_p)
            group.append(p)
            in_planes = out_planes
        blocks.append(group)
    params['blocks'] = blocks

    cf, cf_p = widths[3], _rup(widths[3])
    params['bn_final'] = _prep_bn(cf, cf_p)
    nc_p = _rup(num_classes)
    fc_w = _xavier_linear(next(keys), (num_classes, cf))
    params['fc_w'] = jnp.pad(fc_w.T, ((0, cf_p - cf), (0, nc_p - num_classes))).astype(jnp.bfloat16)
    bound = 1.0 / (cf ** 0.5)
    fc_b = jax.random.uniform(next(keys), (num_classes,), jnp.float32, -bound, bound)
    params['fc_b'] = jnp.pad(fc_b, (0, nc_p - num_classes)).reshape(1, nc_p)
    return params


# ----------------------------- main -----------------------------

if __name__ == "__main__":
    key = jax.random.PRNGKey(0)
    pkey, xkey = jax.random.split(key)

    # Small WRN: depth=10 (1 BasicBlock per group), widen_factor=2, 10 classes.
    params = init_wideresnet(pkey, depth=10, num_classes=10, widen_factor=2)

    # PyTorch NCHW input: [batch=2, channels=3, H=16, W=16].
    x = jax.random.normal(xkey, (2, 3, 16, 16), jnp.float32)

    fwd = jax.jit(lambda inp: wideresnet_forward(params, inp))
    logits = fwd(x)
    jax.block_until_ready(logits)
    assert logits.shape == (2, 10) and logits.dtype == jnp.float32
    print("KERNEL_OK")
</pallas_src>

<mosaic_0001>
module attributes {stable_mosaic.version = 11 : i64} {
  func.func @_mm_kernel(%arg0: i32, %arg1: memref<256x27xbf16, #tpu.memory_space<vmem>>, %arg2: memref<27x128xbf16, #tpu.memory_space<vmem>>, %arg3: memref<256x128xf32, #tpu.memory_space<vmem>>) attributes {dimension_semantics = [#tpu.dimension_semantics<parallel>], iteration_bounds = array<i64: 2>, scalar_prefetch = 0 : i64, scratch_operands = 0 : i64, tpu.core_type = #tpu.core_type<tc>, window_params = [{transform_indices = @transform_0, window_bounds = array<i64: 256, 27>}, {pipeline_mode = #tpu.pipeline_mode<synchronous>, transform_indices = @transform_1, window_bounds = array<i64: 27, 128>}, {transform_indices = @transform_2, window_bounds = array<i64: 256, 128>}]} {
    %c0 = arith.constant 0 : index
    %c0_0 = arith.constant 0 : index
    %0 = vector.load %arg1[%c0, %c0_0] : memref<256x27xbf16, #tpu.memory_space<vmem>>, vector<256x27xbf16>
    %c0_1 = arith.constant 0 : index
    %c0_2 = arith.constant 0 : index
    %1 = vector.load %arg2[%c0_1, %c0_2] : memref<27x128xbf16, #tpu.memory_space<vmem>>, vector<27x128xbf16>
    %cst = arith.constant dense<0.000000e+00> : vector<256x128xf32>
    %2 = tpu.matmul %0, %1, %cst {dimension_numbers = #tpu.dot_dimension_numbers<[1], [0], [0], [1], [0, 0, 1, 1], [], []>} : vector<256x27xbf16>, vector<27x128xbf16>, vector<256x128xf32> -> vector<256x128xf32>
    %c0_3 = arith.constant 0 : index
    %c0_4 = arith.constant 0 : index
    %3 = vector.load %arg3[%c0_3, %c0_4] : memref<256x128xf32, #tpu.memory_space<vmem>>, vector<256x128xf32>
    tpu.vector_store %arg3[%c0_3, %c0_4], %2 {strides = array<i32>} : memref<256x128xf32, #tpu.memory_space<vmem>>, vector<256x128xf32>,
    return
  }
  func.func @transform_0(%arg0: i32) -> (i32, i32) {
    %c0_i32 = arith.constant 0 : i32
    %c0_i32_0 = arith.constant 0 : i32
    return %arg0, %c0_i32 : i32, i32
  }
  func.func @transform_1(%arg0: i32) -> (i32, i32) {
    %c0_i32 = arith.constant 0 : i32
    %c0_i32_0 = arith.constant 0 : i32
    %c0_i32_1 = arith.constant 0 : i32
    return %c0_i32, %c0_i32_0 : i32, i32
  }
  func.func @transform_2(%arg0: i32) -> (i32, i32) {
    %c0_i32 = arith.constant 0 : i32
    %c0_i32_0 = arith.constant 0 : i32
    return %arg0, %c0_i32 : i32, i32
  }
}

module attributes {stable_mosaic.version = 11 : i64} {
  func.func @_bn_relu_kernel(%arg0: i32, %arg1: memref<256x128xf32, #tpu.memory_space<vmem>>, %arg2: memref<1x128xf32, #tpu.memory_space<vmem>>, %arg3: memref<1x128xf32, #tpu.memory_space<vmem>>, %arg4: memref<256x128xf32, #tpu.memory_space<vmem>>) attributes {dimension_semantics = [#tpu.dimension_semantics<parallel>], iteration_bounds = array<i64: 2>, scalar_prefetch = 0 : i64, scratch_operands = 0 : i64, tpu.core_type = #tpu.core_type<tc>, window_params = [{transform_indices = @transform_0, window_bounds = array<i64: 256, 128>}, {pipeline_mode = #tpu.pipeline_mode<synchronous>, transform_indices = @transform_1, window_bounds = array<i64: 1, 128>}, {pipeline_mode = #tpu.pipeline_mode<synchronous>, transform_indices = @transform_2, window_bounds = array<i64: 1, 128>}, {transform_indices = @transform_3, window_bounds = array<i64: 256, 128>}]} {
    %c0 = arith.constant 0 : index
    %c0_0 = arith.constant 0 : index
    %0 = vector.load %arg1[%c0, %c0_0] : memref<256x128xf32, #tpu.memory_space<vmem>>, vector<256x128xf32>
    %c0_1 = arith.constant 0 : index
    %c0_2 = arith.constant 0 : index
    %1 = vector.load %arg2[%c0_1, %c0_2] : memref<1x128xf32, #tpu.memory_space<vmem>>, vector<1x128xf32>
    %2 = vector.broadcast %1 : vector<1x128xf32> to vector<256x128xf32>
    %3 = arith.mulf %0, %2 : vector<256x128xf32>
    %c0_3 = arith.constant 0 : index
    %c0_4 = arith.constant 0 : index
    %4 = vector.load %arg3[%c0_3, %c0_4] : memref<1x128xf32, #tpu.memory_space<vmem>>, vector<1x128xf32>
    %5 = vector.broadcast %4 : vector<1x128xf32> to vector<256x128xf32>
    %6 = arith.addf %3, %5 : vector<256x128xf32>
    %cst = arith.constant 0.000000e+00 : f32
    %7 = vector.broadcast %cst : f32 to vector<256x128xf32>
    %8 = arith.maximumf %6, %7 : vector<256x128xf32>
    %c0_5 = arith.constant 0 : index
    %c0_6 = arith.constant 0 : index
    %9 = vector.load %arg4[%c0_5, %c0_6] : memref<256x128xf32, #tpu.memory_space<vmem>>, vector<256x128xf32>
    tpu.vector_store %arg4[%c0_5, %c0_6], %8 {strides = array<i32>} : memref<256x128xf32, #tpu.memory_space<vmem>>, vector<256x128xf32>,
    return
  }
  func.func @transform_0(%arg0: i32) -> (i32, i32) {
    %c0_i32 = arith.constant 0 : i32
    %c0_i32_0 = arith.constant 0 : i32
    return %arg0, %c0_i32 : i32, i32
  }
  func.func @transform_1(%arg0: i32) -> (i32, i32) {
    %c0_i32 = arith.constant 0 : i32
    %c0_i32_0 = arith.constant 0 : i32
    %c0_i32_1 = arith.constant 0 : i32
    return %c0_i32, %c0_i32_0 : i32, i32
  }
  func.func @transform_2(%arg0: i32) -> (i32, i32) {
    %c0_i32 = arith.constant 0 : i32
    %c0_i32_0 = arith.constant 0 : i32
    %c0_i32_1 = arith.constant 0 : i32
    return %c0_i32, %c0_i32_0 : i32, i32
  }
  func.func @transform_3(%arg0: i32) -> (i32, i32) {
    %c0_i32 = arith.constant 0 : i32
    %c0_i32_0 = arith.constant 0 : i32
    return %arg0, %c0_i32 : i32, i32
  }
}

module attributes {stable_mosaic.version = 11 : i64} {
  func.func @_mm_bnrelu_kernel(%arg0: i32, %arg1: memref<256x1152xbf16, #tpu.memory_space<vmem>>, %arg2: memref<1152x128xbf16, #tpu.memory_space<vmem>>, %arg3: memref<1x128xf32, #tpu.memory_space<vmem>>, %arg4: memref<1x128xf32, #tpu.memory_space<vmem>>, %arg5: memref<256x128xf32, #tpu.memory_space<vmem>>) attributes {dimension_semantics = [#tpu.dimension_semantics<parallel>], iteration_bounds = array<i64: 2>, scalar_prefetch = 0 : i64, scratch_operands = 0 : i64, tpu.core_type = #tpu.core_type<tc>, window_params = [{transform_indices = @transform_0, window_bounds = array<i64: 256, 1152>}, {pipeline_mode = #tpu.pipeline_mode<synchronous>, transform_indices = @transform_1, window_bounds = array<i64: 1152, 128>}, {pipeline_mode = #tpu.pipeline_mode<synchronous>, transform_indices = @transform_2, window_bounds = array<i64: 1, 128>}, {pipeline_mode = #tpu.pipeline_mode<synchronous>, transform_indices = @transform_3, window_bounds = array<i64: 1, 128>}, {transform_indices = @transform_4, window_bounds = array<i64: 256, 128>}]} {
    %c0 = arith.constant 0 : index
    %c0_0 = arith.constant 0 : index
    %0 = vector.load %arg1[%c0, %c0_0] : memref<256x1152xbf16, #tpu.memory_space<vmem>>, vector<256x1152xbf16>
    %c0_1 = arith.constant 0 : index
    %c0_2 = arith.constant 0 : index
    %1 = vector.load %arg2[%c0_1, %c0_2] : memref<1152x128xbf16, #tpu.memory_space<vmem>>, vector<1152x128xbf16>
    %cst = arith.constant dense<0.000000e+00> : vector<256x128xf32>
    %2 = tpu.matmul %0, %1, %cst {dimension_numbers = #tpu.dot_dimension_numbers<[1], [0], [0], [1], [0, 0, 1, 1], [], []>} : vector<256x1152xbf16>, vector<1152x128xbf16>, vector<256x128xf32> -> vector<256x128xf32>
    %c0_3 = arith.constant 0 : index
    %c0_4 = arith.constant 0 : index
    %3 = vector.load %arg3[%c0_3, %c0_4] : memref<1x128xf32, #tpu.memory_space<vmem>>, vector<1x128xf32>
    %4 = vector.broadcast %3 : vector<1x128xf32> to vector<256x128xf32>
    %5 = arith.mulf %2, %4 : vector<256x128xf32>
    %c0_5 = arith.constant 0 : index
    %c0_6 = arith.constant 0 : index
    %6 = vector.load %arg4[%c0_5, %c0_6] : memref<1x128xf32, #tpu.memory_space<vmem>>, vector<1x128xf32>
    %7 = vector.broadcast %6 : vector<1x128xf32> to vector<256x128xf32>
    %8 = arith.addf %5, %7 : vector<256x128xf32>
    %cst_7 = arith.constant 0.000000e+00 : f32
    %9 = vector.broadcast %cst_7 : f32 to vector<256x128xf32>
    %10 = arith.maximumf %8, %9 : vector<256x128xf32>
    %c0_8 = arith.constant 0 : index
    %c0_9 = arith.constant 0 : index
    %11 = vector.load %arg5[%c0_8, %c0_9] : memref<256x128xf32, #tpu.memory_space<vmem>>, vector<256x128xf32>
    tpu.vector_store %arg5[%c0_8, %c0_9], %10 {strides = array<i32>} : memref<256x128xf32, #tpu.memory_space<vmem>>, vector<256x128xf32>,
    return
  }
  func.func @transform_0(%arg0: i32) -> (i32, i32) {
    %c0_i32 = arith.constant 0 : i32
    %c0_i32_0 = arith.constant 0 : i32
    return %arg0, %c0_i32 : i32, i32
  }
  func.func @transform_1(%arg0: i32) -> (i32, i32) {
    %c0_i32 = arith.constant 0 : i32
    %c0_i32_0 = arith.constant 0 : i32
    %c0_i32_1 = arith.constant 0 : i32
    return %c0_i32, %c0_i32_0 : i32, i32
  }
  func.func @transform_2(%arg0: i32) -> (i32, i32) {
    %c0_i32 = arith.constant 0 : i32
    %c0_i32_0 = arith.constant 0 : i32
    %c0_i32_1 = arith.constant 0 : i32
    return %c0_i32, %c0_i32_0 : i32, i32
  }
  func.func @transform_3(%arg0: i32) -> (i32, i32) {
    %c0_i32 = arith.constant 0 : i32
    %c0_i32_0 = arith.constant 0 : i32
    %c0_i32_1 = arith.constant 0 : i32
    return %c0_i32, %c0_i32_0 : i32, i32
  }
  func.func @transform_4(%arg0: i32) -> (i32, i32) {
    %c0_i32 = arith.constant 0 : i32
    %c0_i32_0 = arith.constant 0 : i32
    return %arg0, %c0_i32 : i32, i32
  }
}

module attributes {stable_mosaic.version = 11 : i64} {
  func.func @_mm_dualadd_kernel(%arg0: i32, %arg1: memref<256x1152xbf16, #tpu.memory_space<vmem>>, %arg2: memref<1152x128xbf16, #tpu.memory_space<vmem>>, %arg3: memref<256x128xbf16, #tpu.memory_space<vmem>>, %arg4: memref<128x128xbf16, #tpu.memory_space<vmem>>, %arg5: memref<256x128xf32, #tpu.memory_space<vmem>>) attributes {dimension_semantics = [#tpu.dimension_semantics<parallel>], iteration_bounds = array<i64: 2>, scalar_prefetch = 0 : i64, scratch_operands = 0 : i64, tpu.core_type = #tpu.core_type<tc>, window_params = [{transform_indices = @transform_0, window_bounds = array<i64: 256, 1152>}, {pipeline_mode = #tpu.pipeline_mode<synchronous>, transform_indices = @transform_1, window_bounds = array<i64: 1152, 128>}, {transform_indices = @transform_2, window_bounds = array<i64: 256, 128>}, {pipeline_mode = #tpu.pipeline_mode<synchronous>, transform_indices = @transform_3, window_bounds = array<i64: 128, 128>}, {transform_indices = @transform_4, window_bounds = array<i64: 256, 128>}]} {
    %c0 = arith.constant 0 : index
    %c0_0 = arith.constant 0 : index
    %0 = vector.load %arg1[%c0, %c0_0] : memref<256x1152xbf16, #tpu.memory_space<vmem>>, vector<256x1152xbf16>
    %c0_1 = arith.constant 0 : index
    %c0_2 = arith.constant 0 : index
    %1 = vector.load %arg2[%c0_1, %c0_2] : memref<1152x128xbf16, #tpu.memory_space<vmem>>, vector<1152x128xbf16>
    %cst = arith.constant dense<0.000000e+00> : vector<256x128xf32>
    %2 = tpu.matmul %0, %1, %cst {dimension_numbers = #tpu.dot_dimension_numbers<[1], [0], [0], [1], [0, 0, 1, 1], [], []>} : vector<256x1152xbf16>, vector<1152x128xbf16>, vector<256x128xf32> -> vector<256x128xf32>
    %c0_3 = arith.constant 0 : index
    %c0_4 = arith.constant 0 : index
    %3 = vector.load %arg3[%c0_3, %c0_4] : memref<256x128xbf16, #tpu.memory_space<vmem>>, vector<256x128xbf16>
    %c0_5 = arith.constant 0 : index
    %c0_6 = arith.constant 0 : index
    %4 = vector.load %arg4[%c0_5, %c0_6] : memref<128x128xbf16, #tpu.memory_space<vmem>>, vector<128x128xbf16>
    %cst_7 = arith.constant dense<0.000000e+00> : vector<256x128xf32>
    %5 = tpu.matmul %3, %4, %cst_7 {dimension_numbers = #tpu.dot_dimension_numbers<[1], [0], [0], [1], [0, 0, 1, 1], [], []>} : vector<256x128xbf16>, vector<128x128xbf16>, vector<256x128xf32> -> vector<256x128xf32>
    %6 = arith.addf %2, %5 : vector<256x128xf32>
    %c0_8 = arith.constant 0 : index
    %c0_9 = arith.constant 0 : index
    %7 = vector.load %arg5[%c0_8, %c0_9] : memref<256x128xf32, #tpu.memory_space<vmem>>, vector<256x128xf32>
    tpu.vector_store %arg5[%c0_8, %c0_9], %6 {strides = array<i32>} : memref<256x128xf32, #tpu.memory_space<vmem>>, vector<256x128xf32>,
    return
  }
  func.func @transform_0(%arg0: i32) -> (i32, i32) {
    %c0_i32 = arith.constant 0 : i32
    %c0_i32_0 = arith.constant 0 : i32
    return %arg0, %c0_i32 : i32, i32
  }
  func.func @transform_1(%arg0: i32) -> (i32, i32) {
    %c0_i32 = arith.constant 0 : i32
    %c0_i32_0 = arith.constant 0 : i32
    %c0_i32_1 = arith.constant 0 : i32
    return %c0_i32, %c0_i32_0 : i32, i32
  }
  func.func @transform_2(%arg0: i32) -> (i32, i32) {
    %c0_i32 = arith.constant 0 : i32
    %c0_i32_0 = arith.constant 0 : i32
    return %arg0, %c0_i32 : i32, i32
  }
  func.func @transform_3(%arg0: i32) -> (i32, i32) {
    %c0_i32 = arith.constant 0 : i32
    %c0_i32_0 = arith.constant 0 : i32
    %c0_i32_1 = arith.constant 0 : i32
    return %c0_i32, %c0_i32_0 : i32, i32
  }
  func.func @transform_4(%arg0: i32) -> (i32, i32) {
    %c0_i32 = arith.constant 0 : i32
    %c0_i32_0 = arith.constant 0 : i32
    return %arg0, %c0_i32 : i32, i32
  }
}

module attributes {stable_mosaic.version = 11 : i64} {
  func.func @_mm_bnrelu_kernel(%arg0: i32, %arg1: memref<128x1152xbf16, #tpu.memory_space<vmem>>, %arg2: memref<1152x128xbf16, #tpu.memory_space<vmem>>, %arg3: memref<1x128xf32, #tpu.memory_space<vmem>>, %arg4: memref<1x128xf32, #tpu.memory_space<vmem>>, %arg5: memref<128x128xf32, #tpu.memory_space<vmem>>) attributes {dimension_semantics = [#tpu.dimension_semantics<parallel>], iteration_bounds = array<i64: 1>, scalar_prefetch = 0 : i64, scratch_operands = 0 : i64, tpu.core_type = #tpu.core_type<tc>, window_params = [{transform_indices = @transform_0, window_bounds = array<i64: 128, 1152>}, {pipeline_mode = #tpu.pipeline_mode<synchronous>, transform_indices = @transform_1, window_bounds = array<i64: 1152, 128>}, {pipeline_mode = #tpu.pipeline_mode<synchronous>, transform_indices = @transform_2, window_bounds = array<i64: 1, 128>}, {pipeline_mode = #tpu.pipeline_mode<synchronous>, transform_indices = @transform_3, window_bounds = array<i64: 1, 128>}, {transform_indices = @transform_4, window_bounds = array<i64: 128, 128>}]} {
    %c0 = arith.constant 0 : index
    %c0_0 = arith.constant 0 : index
    %0 = vector.load %arg1[%c0, %c0_0] : memref<128x1152xbf16, #tpu.memory_space<vmem>>, vector<128x1152xbf16>
    %c0_1 = arith.constant 0 : index
    %c0_2 = arith.constant 0 : index
    %1 = vector.load %arg2[%c0_1, %c0_2] : memref<1152x128xbf16, #tpu.memory_space<vmem>>, vector<1152x128xbf16>
    %cst = arith.constant dense<0.000000e+00> : vector<128x128xf32>
    %2 = tpu.matmul %0, %1, %cst {dimension_numbers = #tpu.dot_dimension_numbers<[1], [0], [0], [1], [0, 0, 1, 1], [], []>} : vector<128x1152xbf16>, vector<1152x128xbf16>, vector<128x128xf32> -> vector<128x128xf32>
    %c0_3 = arith.constant 0 : index
    %c0_4 = arith.constant 0 : index
    %3 = vector.load %arg3[%c0_3, %c0_4] : memref<1x128xf32, #tpu.memory_space<vmem>>, vector<1x128xf32>
    %4 = vector.broadcast %3 : vector<1x128xf32> to vector<128x128xf32>
    %5 = arith.mulf %2, %4 : vector<128x128xf32>
    %c0_5 = arith.constant 0 : index
    %c0_6 = arith.constant 0 : index
    %6 = vector.load %arg4[%c0_5, %c0_6] : memref<1x128xf32, #tpu.memory_space<vmem>>, vector<1x128xf32>
    %7 = vector.broadcast %6 : vector<1x128xf32> to vector<128x128xf32>
    %8 = arith.addf %5, %7 : vector<128x128xf32>
    %cst_7 = arith.constant 0.000000e+00 : f32
    %9 = vector.broadcast %cst_7 : f32 to vector<128x128xf32>
    %10 = arith.maximumf %8, %9 : vector<128x128xf32>
    %c0_8 = arith.constant 0 : index
    %c0_9 = arith.constant 0 : index
    %11 = vector.load %arg5[%c0_8, %c0_9] : memref<128x128xf32, #tpu.memory_space<vmem>>, vector<128x128xf32>
    tpu.vector_store %arg5[%c0_8, %c0_9], %10 {strides = array<i32>} : memref<128x128xf32, #tpu.memory_space<vmem>>, vector<128x128xf32>,
    return
  }
  func.func @transform_0(%arg0: i32) -> (i32, i32) {
    %c0_i32 = arith.constant 0 : i32
    %c0_i32_0 = arith.constant 0 : i32
    return %arg0, %c0_i32 : i32, i32
  }
  func.func @transform_1(%arg0: i32) -> (i32, i32) {
    %c0_i32 = arith.constant 0 : i32
    %c0_i32_0 = arith.constant 0 : i32
    %c0_i32_1 = arith.constant 0 : i32
    return %c0_i32, %c0_i32_0 : i32, i32
  }
  func.func @transform_2(%arg0: i32) -> (i32, i32) {
    %c0_i32 = arith.constant 0 : i32
    %c0_i32_0 = arith.constant 0 : i32
    %c0_i32_1 = arith.constant 0 : i32
    return %c0_i32, %c0_i32_0 : i32, i32
  }
  func.func @transform_3(%arg0: i32) -> (i32, i32) {
    %c0_i32 = arith.constant 0 : i32
    %c0_i32_0 = arith.constant 0 : i32
    %c0_i32_1 = arith.constant 0 : i32
    return %c0_i32, %c0_i32_0 : i32, i32
  }
  func.func @transform_4(%arg0: i32) -> (i32, i32) {
    %c0_i32 = arith.constant 0 : i32
    %c0_i32_0 = arith.constant 0 : i32
    return %arg0, %c0_i32 : i32, i32
  }
}

module attributes {stable_mosaic.version = 11 : i64} {
  func.func @_mm_dualadd_kernel(%arg0: i32, %arg1: memref<128x1152xbf16, #tpu.memory_space<vmem>>, %arg2: memref<1152x128xbf16, #tpu.memory_space<vmem>>, %arg3: memref<128x128xbf16, #tpu.memory_space<vmem>>, %arg4: memref<128x128xbf16, #tpu.memory_space<vmem>>, %arg5: memref<128x128xf32, #tpu.memory_space<vmem>>) attributes {dimension_semantics = [#tpu.dimension_semantics<parallel>], iteration_bounds = array<i64: 1>, scalar_prefetch = 0 : i64, scratch_operands = 0 : i64, tpu.core_type = #tpu.core_type<tc>, window_params = [{transform_indices = @transform_0, window_bounds = array<i64: 128, 1152>}, {pipeline_mode = #tpu.pipeline_mode<synchronous>, transform_indices = @transform_1, window_bounds = array<i64: 1152, 128>}, {transform_indices = @transform_2, window_bounds = array<i64: 128, 128>}, {pipeline_mode = #tpu.pipeline_mode<synchronous>, transform_indices = @transform_3, window_bounds = array<i64: 128, 128>}, {transform_indices = @transform_4, window_bounds = array<i64: 128, 128>}]} {
    %c0 = arith.constant 0 : index
    %c0_0 = arith.constant 0 : index
    %0 = vector.load %arg1[%c0, %c0_0] : memref<128x1152xbf16, #tpu.memory_space<vmem>>, vector<128x1152xbf16>
    %c0_1 = arith.constant 0 : index
    %c0_2 = arith.constant 0 : index
    %1 = vector.load %arg2[%c0_1, %c0_2] : memref<1152x128xbf16, #tpu.memory_space<vmem>>, vector<1152x128xbf16>
    %cst = arith.constant dense<0.000000e+00> : vector<128x128xf32>
    %2 = tpu.matmul %0, %1, %cst {dimension_numbers = #tpu.dot_dimension_numbers<[1], [0], [0], [1], [0, 0, 1, 1], [], []>} : vector<128x1152xbf16>, vector<1152x128xbf16>, vector<128x128xf32> -> vector<128x128xf32>
    %c0_3 = arith.constant 0 : index
    %c0_4 = arith.constant 0 : index
    %3 = vector.load %arg3[%c0_3, %c0_4] : memref<128x128xbf16, #tpu.memory_space<vmem>>, vector<128x128xbf16>
    %c0_5 = arith.constant 0 : index
    %c0_6 = arith.constant 0 : index
    %4 = vector.load %arg4[%c0_5, %c0_6] : memref<128x128xbf16, #tpu.memory_space<vmem>>, vector<128x128xbf16>
    %cst_7 = arith.constant dense<0.000000e+00> : vector<128x128xf32>
    %5 = tpu.matmul %3, %4, %cst_7 {dimension_numbers = #tpu.dot_dimension_numbers<[1], [0], [0], [1], [0, 0, 1, 1], [], []>} : vector<128x128xbf16>, vector<128x128xbf16>, vector<128x128xf32> -> vector<128x128xf32>
    %6 = arith.addf %2, %5 : vector<128x128xf32>
    %c0_8 = arith.constant 0 : index
    %c0_9 = arith.constant 0 : index
    %7 = vector.load %arg5[%c0_8, %c0_9] : memref<128x128xf32, #tpu.memory_space<vmem>>, vector<128x128xf32>
    tpu.vector_store %arg5[%c0_8, %c0_9], %6 {strides = array<i32>} : memref<128x128xf32, #tpu.memory_space<vmem>>, vector<128x128xf32>,
    return
  }
  func.func @transform_0(%arg0: i32) -> (i32, i32) {
    %c0_i32 = arith.constant 0 : i32
    %c0_i32_0 = arith.constant 0 : i32
    return %arg0, %c0_i32 : i32, i32
  }
  func.func @transform_1(%arg0: i32) -> (i32, i32) {
    %c0_i32 = arith.constant 0 : i32
    %c0_i32_0 = arith.constant 0 : i32
    %c0_i32_1 = arith.constant 0 : i32
    return %c0_i32, %c0_i32_0 : i32, i32
  }
  func.func @transform_2(%arg0: i32) -> (i32, i32) {
    %c0_i32 = arith.constant 0 : i32
    %c0_i32_0 = arith.constant 0 : i32
    return %arg0, %c0_i32 : i32, i32
  }
  func.func @transform_3(%arg0: i32) -> (i32, i32) {
    %c0_i32 = arith.constant 0 : i32
    %c0_i32_0 = arith.constant 0 : i32
    %c0_i32_1 = arith.constant 0 : i32
    return %c0_i32, %c0_i32_0 : i32, i32
  }
  func.func @transform_4(%arg0: i32) -> (i32, i32) {
    %c0_i32 = arith.constant 0 : i32
    %c0_i32_0 = arith.constant 0 : i32
    return %arg0, %c0_i32 : i32, i32
  }
}

module attributes {stable_mosaic.version = 11 : i64} {
  func.func @_bn_relu_kernel(%arg0: i32, %arg1: memref<128x128xf32, #tpu.memory_space<vmem>>, %arg2: memref<1x128xf32, #tpu.memory_space<vmem>>, %arg3: memref<1x128xf32, #tpu.memory_space<vmem>>, %arg4: memref<128x128xf32, #tpu.memory_space<vmem>>) attributes {dimension_semantics = [#tpu.dimension_semantics<parallel>], iteration_bounds = array<i64: 1>, scalar_prefetch = 0 : i64, scratch_operands = 0 : i64, tpu.core_type = #tpu.core_type<tc>, window_params = [{transform_indices = @transform_0, window_bounds = array<i64: 128, 128>}, {pipeline_mode = #tpu.pipeline_mode<synchronous>, transform_indices = @transform_1, window_bounds = array<i64: 1, 128>}, {pipeline_mode = #tpu.pipeline_mode<synchronous>, transform_indices = @transform_2, window_bounds = array<i64: 1, 128>}, {transform_indices = @transform_3, window_bounds = array<i64: 128, 128>}]} {
    %c0 = arith.constant 0 : index
    %c0_0 = arith.constant 0 : index
    %0 = vector.load %arg1[%c0, %c0_0] : memref<128x128xf32, #tpu.memory_space<vmem>>, vector<128x128xf32>
    %c0_1 = arith.constant 0 : index
    %c0_2 = arith.constant 0 : index
    %1 = vector.load %arg2[%c0_1, %c0_2] : memref<1x128xf32, #tpu.memory_space<vmem>>, vector<1x128xf32>
    %2 = vector.broadcast %1 : vector<1x128xf32> to vector<128x128xf32>
    %3 = arith.mulf %0, %2 : vector<128x128xf32>
    %c0_3 = arith.constant 0 : index
    %c0_4 = arith.constant 0 : index
    %4 = vector.load %arg3[%c0_3, %c0_4] : memref<1x128xf32, #tpu.memory_space<vmem>>, vector<1x128xf32>
    %5 = vector.broadcast %4 : vector<1x128xf32> to vector<128x128xf32>
    %6 = arith.addf %3, %5 : vector<128x128xf32>
    %cst = arith.constant 0.000000e+00 : f32
    %7 = vector.broadcast %cst : f32 to vector<128x128xf32>
    %8 = arith.maximumf %6, %7 : vector<128x128xf32>
    %c0_5 = arith.constant 0 : index
    %c0_6 = arith.constant 0 : index
    %9 = vector.load %arg4[%c0_5, %c0_6] : memref<128x128xf32, #tpu.memory_space<vmem>>, vector<128x128xf32>
    tpu.vector_store %arg4[%c0_5, %c0_6], %8 {strides = array<i32>} : memref<128x128xf32, #tpu.memory_space<vmem>>, vector<128x128xf32>,
    return
  }
  func.func @transform_0(%arg0: i32) -> (i32, i32) {
    %c0_i32 = arith.constant 0 : i32
    %c0_i32_0 = arith.constant 0 : i32
    return %arg0, %c0_i32 : i32, i32
  }
  func.func @transform_1(%arg0: i32) -> (i32, i32) {
    %c0_i32 = arith.constant 0 : i32
    %c0_i32_0 = arith.constant 0 : i32
    %c0_i32_1 = arith.constant 0 : i32
    return %c0_i32, %c0_i32_0 : i32, i32
  }
  func.func @transform_2(%arg0: i32) -> (i32, i32) {
    %c0_i32 = arith.constant 0 : i32
    %c0_i32_0 = arith.constant 0 : i32
    %c0_i32_1 = arith.constant 0 : i32
    return %c0_i32, %c0_i32_0 : i32, i32
  }
  func.func @transform_3(%arg0: i32) -> (i32, i32) {
    %c0_i32 = arith.constant 0 : i32
    %c0_i32_0 = arith.constant 0 : i32
    return %arg0, %c0_i32 : i32, i32
  }
}

module attributes {stable_mosaic.version = 11 : i64} {
  func.func @_mm_bnrelu_kernel(%arg0: i32, %arg1: memref<32x1152xbf16, #tpu.memory_space<vmem>>, %arg2: memref<1152x128xbf16, #tpu.memory_space<vmem>>, %arg3: memref<1x128xf32, #tpu.memory_space<vmem>>, %arg4: memref<1x128xf32, #tpu.memory_space<vmem>>, %arg5: memref<32x128xf32, #tpu.memory_space<vmem>>) attributes {dimension_semantics = [#tpu.dimension_semantics<parallel>], iteration_bounds = array<i64: 1>, scalar_prefetch = 0 : i64, scratch_operands = 0 : i64, tpu.core_type = #tpu.core_type<tc>, window_params = [{transform_indices = @transform_0, window_bounds = array<i64: 32, 1152>}, {pipeline_mode = #tpu.pipeline_mode<synchronous>, transform_indices = @transform_1, window_bounds = array<i64: 1152, 128>}, {pipeline_mode = #tpu.pipeline_mode<synchronous>, transform_indices = @transform_2, window_bounds = array<i64: 1, 128>}, {pipeline_mode = #tpu.pipeline_mode<synchronous>, transform_indices = @transform_3, window_bounds = array<i64: 1, 128>}, {transform_indices = @transform_4, window_bounds = array<i64: 32, 128>}]} {
    %c0 = arith.constant 0 : index
    %c0_0 = arith.constant 0 : index
    %0 = vector.load %arg1[%c0, %c0_0] : memref<32x1152xbf16, #tpu.memory_space<vmem>>, vector<32x1152xbf16>
    %c0_1 = arith.constant 0 : index
    %c0_2 = arith.constant 0 : index
    %1 = vector.load %arg2[%c0_1, %c0_2] : memref<1152x128xbf16, #tpu.memory_space<vmem>>, vector<1152x128xbf16>
    %cst = arith.constant dense<0.000000e+00> : vector<32x128xf32>
    %2 = tpu.matmul %0, %1, %cst {dimension_numbers = #tpu.dot_dimension_numbers<[1], [0], [0], [1], [0, 0, 1, 1], [], []>} : vector<32x1152xbf16>, vector<1152x128xbf16>, vector<32x128xf32> -> vector<32x128xf32>
    %c0_3 = arith.constant 0 : index
    %c0_4 = arith.constant 0 : index
    %3 = vector.load %arg3[%c0_3, %c0_4] : memref<1x128xf32, #tpu.memory_space<vmem>>, vector<1x128xf32>
    %4 = vector.broadcast %3 : vector<1x128xf32> to vector<32x128xf32>
    %5 = arith.mulf %2, %4 : vector<32x128xf32>
    %c0_5 = arith.constant 0 : index
    %c0_6 = arith.constant 0 : index
    %6 = vector.load %arg4[%c0_5, %c0_6] : memref<1x128xf32, #tpu.memory_space<vmem>>, vector<1x128xf32>
    %7 = vector.broadcast %6 : vector<1x128xf32> to vector<32x128xf32>
    %8 = arith.addf %5, %7 : vector<32x128xf32>
    %cst_7 = arith.constant 0.000000e+00 : f32
    %9 = vector.broadcast %cst_7 : f32 to vector<32x128xf32>
    %10 = arith.maximumf %8, %9 : vector<32x128xf32>
    %c0_8 = arith.constant 0 : index
    %c0_9 = arith.constant 0 : index
    %11 = vector.load %arg5[%c0_8, %c0_9] : memref<32x128xf32, #tpu.memory_space<vmem>>, vector<32x128xf32>
    tpu.vector_store %arg5[%c0_8, %c0_9], %10 {strides = array<i32>} : memref<32x128xf32, #tpu.memory_space<vmem>>, vector<32x128xf32>,
    return
  }
  func.func @transform_0(%arg0: i32) -> (i32, i32) {
    %c0_i32 = arith.constant 0 : i32
    %c0_i32_0 = arith.constant 0 : i32
    return %arg0, %c0_i32 : i32, i32
  }
  func.func @transform_1(%arg0: i32) -> (i32, i32) {
    %c0_i32 = arith.constant 0 : i32
    %c0_i32_0 = arith.constant 0 : i32
    %c0_i32_1 = arith.constant 0 : i32
    return %c0_i32, %c0_i32_0 : i32, i32
  }
  func.func @transform_2(%arg0: i32) -> (i32, i32) {
    %c0_i32 = arith.constant 0 : i32
    %c0_i32_0 = arith.constant 0 : i32
    %c0_i32_1 = arith.constant 0 : i32
    return %c0_i32, %c0_i32_0 : i32, i32
  }
  func.func @transform_3(%arg0: i32) -> (i32, i32) {
    %c0_i32 = arith.constant 0 : i32
    %c0_i32_0 = arith.constant 0 : i32
    %c0_i32_1 = arith.constant 0 : i32
    return %c0_i32, %c0_i32_0 : i32, i32
  }
  func.func @transform_4(%arg0: i32) -> (i32, i32) {
    %c0_i32 = arith.constant 0 : i32
    %c0_i32_0 = arith.constant 0 : i32
    return %arg0, %c0_i32 : i32, i32
  }
}

module attributes {stable_mosaic.version = 11 : i64} {
  func.func @_head_kernel(%arg0: memref<2x16x128xf32, #tpu.memory_space<vmem>>, %arg1: memref<1x1x128xf32, #tpu.memory_space<vmem>>, %arg2: memref<1x1x128xf32, #tpu.memory_space<vmem>>, %arg3: memref<128x128xbf16, #tpu.memory_space<vmem>>, %arg4: memref<1x128xf32, #tpu.memory_space<vmem>>, %arg5: memref<2x128xf32, #tpu.memory_space<vmem>>) attributes {dimension_semantics = [], scalar_prefetch = 0 : i64, scratch_operands = 0 : i64, tpu.core_type = #tpu.core_type<tc>} {
    %c0 = arith.constant 0 : index
    %c0_0 = arith.constant 0 : index
    %c0_1 = arith.constant 0 : index
    %0 = vector.load %arg0[%c0, %c0_0, %c0_1] : memref<2x16x128xf32, #tpu.memory_space<vmem>>, vector<2x16x128xf32>
    %c0_2 = arith.constant 0 : index
    %c0_3 = arith.constant 0 : index
    %c0_4 = arith.constant 0 : index
    %1 = vector.load %arg1[%c0_2, %c0_3, %c0_4] : memref<1x1x128xf32, #tpu.memory_space<vmem>>, vector<1x1x128xf32>
    %2 = vector.broadcast %1 : vector<1x1x128xf32> to vector<2x16x128xf32>
    %3 = arith.mulf %0, %2 : vector<2x16x128xf32>
    %c0_5 = arith.constant 0 : index
    %c0_6 = arith.constant 0 : index
    %c0_7 = arith.constant 0 : index
    %4 = vector.load %arg2[%c0_5, %c0_6, %c0_7] : memref<1x1x128xf32, #tpu.memory_space<vmem>>, vector<1x1x128xf32>
    %5 = vector.broadcast %4 : vector<1x1x128xf32> to vector<2x16x128xf32>
    %6 = arith.addf %3, %5 : vector<2x16x128xf32>
    %cst = arith.constant 0.000000e+00 : f32
    %7 = vector.broadcast %cst : f32 to vector<2x16x128xf32>
    %8 = arith.maximumf %6, %7 : vector<2x16x128xf32>
    %cst_8 = arith.constant dense<0.000000e+00> : vector<2x128xf32>
    %9 = vector.multi_reduction <add>, %8, %cst_8 [1] : vector<2x16x128xf32> to vector<2x128xf32>
    %cst_9 = arith.constant 1.600000e+01 : f32
    %10 = vector.broadcast %cst_9 : f32 to vector<2x128xf32>
    %11 = arith.divf %9, %10 : vector<2x128xf32>
    %12 = arith.truncf %11 : vector<2x128xf32> to vector<2x128xbf16>
    %c0_10 = arith.constant 0 : index
    %c0_11 = arith.constant 0 : index
    %13 = vector.load %arg3[%c0_10, %c0_11] : memref<128x128xbf16, #tpu.memory_space<vmem>>, vector<128x128xbf16>
    %cst_12 = arith.constant dense<0.000000e+00> : vector<2x128xf32>
    %14 = tpu.matmul %12, %13, %cst_12 {dimension_numbers = #tpu.dot_dimension_numbers<[1], [0], [0], [1], [0, 0, 1, 1], [], []>} : vector<2x128xbf16>, vector<128x128xbf16>, vector<2x128xf32> -> vector<2x128xf32>
    %c0_13 = arith.constant 0 : index
    %c0_14 = arith.constant 0 : index
    %15 = vector.load %arg4[%c0_13, %c0_14] : memref<1x128xf32, #tpu.memory_space<vmem>>, vector<1x128xf32>
    %16 = vector.broadcast %15 : vector<1x128xf32> to vector<2x128xf32>
    %17 = arith.addf %14, %16 : vector<2x128xf32>
    %c0_15 = arith.constant 0 : index
    %c0_16 = arith.constant 0 : index
    %18 = vector.load %arg5[%c0_15, %c0_16] : memref<2x128xf32, #tpu.memory_space<vmem>>, vector<2x128xf32>
    tpu.vector_store %arg5[%c0_15, %c0_16], %17 {strides = array<i32>} : memref<2x128xf32, #tpu.memory_space<vmem>>, vector<2x128xf32>,
    return
  }
}

module attributes {stable_mosaic.version = 11 : i64} {
  func.func @_mm_dualadd_kernel(%arg0: i32, %arg1: memref<32x1152xbf16, #tpu.memory_space<vmem>>, %arg2: memref<1152x128xbf16, #tpu.memory_space<vmem>>, %arg3: memref<32x128xbf16, #tpu.memory_space<vmem>>, %arg4: memref<128x128xbf16, #tpu.memory_space<vmem>>, %arg5: memref<32x128xf32, #tpu.memory_space<vmem>>) attributes {dimension_semantics = [#tpu.dimension_semantics<parallel>], iteration_bounds = array<i64: 1>, scalar_prefetch = 0 : i64, scratch_operands = 0 : i64, tpu.core_type = #tpu.core_type<tc>, window_params = [{transform_indices = @transform_0, window_bounds = array<i64: 32, 1152>}, {pipeline_mode = #tpu.pipeline_mode<synchronous>, transform_indices = @transform_1, window_bounds = array<i64: 1152, 128>}, {transform_indices = @transform_2, window_bounds = array<i64: 32, 128>}, {pipeline_mode = #tpu.pipeline_mode<synchronous>, transform_indices = @transform_3, window_bounds = array<i64: 128, 128>}, {transform_indices = @transform_4, window_bounds = array<i64: 32, 128>}]} {
    %c0 = arith.constant 0 : index
    %c0_0 = arith.constant 0 : index
    %0 = vector.load %arg1[%c0, %c0_0] : memref<32x1152xbf16, #tpu.memory_space<vmem>>, vector<32x1152xbf16>
    %c0_1 = arith.constant 0 : index
    %c0_2 = arith.constant 0 : index
    %1 = vector.load %arg2[%c0_1, %c0_2] : memref<1152x128xbf16, #tpu.memory_space<vmem>>, vector<1152x128xbf16>
    %cst = arith.constant dense<0.000000e+00> : vector<32x128xf32>
    %2 = tpu.matmul %0, %1, %cst {dimension_numbers = #tpu.dot_dimension_numbers<[1], [0], [0], [1], [0, 0, 1, 1], [], []>} : vector<32x1152xbf16>, vector<1152x128xbf16>, vector<32x128xf32> -> vector<32x128xf32>
    %c0_3 = arith.constant 0 : index
    %c0_4 = arith.constant 0 : index
    %3 = vector.load %arg3[%c0_3, %c0_4] : memref<32x128xbf16, #tpu.memory_space<vmem>>, vector<32x128xbf16>
    %c0_5 = arith.constant 0 : index
    %c0_6 = arith.constant 0 : index
    %4 = vector.load %arg4[%c0_5, %c0_6] : memref<128x128xbf16, #tpu.memory_space<vmem>>, vector<128x128xbf16>
    %cst_7 = arith.constant dense<0.000000e+00> : vector<32x128xf32>
    %5 = tpu.matmul %3, %4, %cst_7 {dimension_numbers = #tpu.dot_dimension_numbers<[1], [0], [0], [1], [0, 0, 1, 1], [], []>} : vector<32x128xbf16>, vector<128x128xbf16>, vector<32x128xf32> -> vector<32x128xf32>
    %6 = arith.addf %2, %5 : vector<32x128xf32>
    %c0_8 = arith.constant 0 : index
    %c0_9 = arith.constant 0 : index
    %7 = vector.load %arg5[%c0_8, %c0_9] : memref<32x128xf32, #tpu.memory_space<vmem>>, vector<32x128xf32>
    tpu.vector_store %arg5[%c0_8, %c0_9], %6 {strides = array<i32>} : memref<32x128xf32, #tpu.memory_space<vmem>>, vector<32x128xf32>,
    return
  }
  func.func @transform_0(%arg0: i32) -> (i32, i32) {
    %c0_i32 = arith.constant 0 : i32
    %c0_i32_0 = arith.constant 0 : i32
    return %arg0, %c0_i32 : i32, i32
  }
  func.func @transform_1(%arg0: i32) -> (i32, i32) {
    %c0_i32 = arith.constant 0 : i32
    %c0_i32_0 = arith.constant 0 : i32
    %c0_i32_1 = arith.constant 0 : i32
    return %c0_i32, %c0_i32_0 : i32, i32
  }
  func.func @transform_2(%arg0: i32) -> (i32, i32) {
    %c0_i32 = arith.constant 0 : i32
    %c0_i32_0 = arith.constant 0 : i32
    return %arg0, %c0_i32 : i32, i32
  }
  func.func @transform_3(%arg0: i32) -> (i32, i32) {
    %c0_i32 = arith.constant 0 : i32
    %c0_i32_0 = arith.constant 0 : i32
    %c0_i32_1 = arith.constant 0 : i32
    return %c0_i32, %c0_i32_0 : i32, i32
  }
  func.func @transform_4(%arg0: i32) -> (i32, i32) {
    %c0_i32 = arith.constant 0 : i32
    %c0_i32_0 = arith.constant 0 : i32
    return %arg0, %c0_i32 : i32, i32
  }
}

</mosaic_0001>

<llo_original>
// kernel: _lambda_.12
$region0: #{_lambda_.12}
  #allocation0 [shape = 'u32[]', space=smem, size = 0x4, offset = 0x4, fixed_abs, tag = 'smem constant byte address 0x4 - core index']
  #allocation1 [shape = 'u32[144,128]{1,0:T(1,128)}', space=vmem, size = 0x12000, scoped, tag = 'internal scratch']
  %s0 = inlined_call_operand.vmem [shape: f32[512,128], index: 0, kind: input, shape index: {}]
  %s1 = inlined_call_operand.vmem [shape: f32[1,128], index: 1, kind: input, shape index: {}]
  %s2 = inlined_call_operand.vmem [shape: f32[1,128], index: 2, kind: input, shape index: {}]
  %s3 = inlined_call_operand.vmem [shape: f32[512,128], index: 3, kind: output, shape index: {}]
  %s4 = sld [smem:[#allocation0]]
  $region45: #{_lambda_.12} parent=0
    _
  %s6 = ssub.s32 1, %s4
  %s7 = scalar_select 0, %s6, %s4
  loop: start=0, step=1, limit=4
  $region2: #{_lambda_.12} parent=0 // loop_pre_header
    _
  $region3: #{_lambda_.12} parent=0 // loop_header
    %s9 = sphi 0, %s13
    %p10 = scmp.ge.s32.totalorder %s9, 4
    %s19 = sphi 0, %s21
    %s22 = sphi 0, %s19
    %s23 = sphi 0, %s22
    %s39 = sphi 0, %s23
    %s43 = sphi 0, %s43
    %s45 = sphi 0, %s43
    %s46 = sphi 0, %s45
    %s60 = sphi 0, %s46
    %s64 = sphi 0, %s64
    %s66 = sphi 0, %s64
    %s67 = sphi 0, %s66
    %s81 = sphi 0, %s67
    %s87 = sphi 0, %s89
    %s90 = sphi 0, %s87
    %s91 = sphi 0, %s90
    %s107 = sphi 0, %s91
  $region4: #{_lambda_.12} parent=0 // loop_header_branch
    %12 = sbr.rel (%p10) target = $region8
  $region5: #{_lambda_.12} parent=0 // loop_body
    %s14 = ssub.s32 %s9, 1
    %s15 = ssub.s32 %s9, 2
    %s16 = sadd.s32 %s9, 1
    %s17 = ssub.s32 %s9, %s16
    %p18 = scmp.eq.s32.totalorder %s17, 0
    %s20 = sadd.s32 %s19, 1
    %s21 = scalar_select %p18, %s19, %s20
    %p24 = pneg %p18
    %p25 = scmp.eq.s32.totalorder %s9, 1
    %p26 = por %p24, %p25
    %p27 = scmp.ne.s32.totalorder %s19, %s22
    %p28 = scmp.eq.s32.totalorder %s9, 0
    %p29 = por %p27, %p28
    %p30 = scmp.ne.s32.totalorder %s19, %s22
    %p31 = scmp.eq.s32.totalorder %s14, 1
    %p32 = por %p30, %p31
    %p33 = scmp.ne.s32.totalorder %s22, %s23
    %p34 = scmp.eq.s32.totalorder %s14, 0
    %p35 = por %p33, %p34
    %p36 = scmp.ne.s32.totalorder %s22, %s23
    %p37 = scmp.eq.s32.totalorder %s15, 1
    %p38 = por %p36, %p37
    %p40 = scmp.ne.s32.totalorder %s23, %s39
    %p41 = scmp.eq.s32.totalorder %s15, 0
    %p42 = por %p40, %p41
    %s44 = sadd.s32 %s43, 1
    %p47 = scmp.eq.s32.totalorder %s9, 1
    %p48 = scmp.ne.s32.totalorder %s43, %s45
    %p49 = scmp.eq.s32.totalorder %s9, 0
    %p50 = por %p48, %p49
    %p51 = scmp.ne.s32.totalorder %s43, %s45
    %p52 = scmp.eq.s32.totalorder %s14, 1
    %p53 = por %p51, %p52
    %p54 = scmp.ne.s32.totalorder %s45, %s46
    %p55 = scmp.eq.s32.totalorder %s14, 0
    %p56 = por %p54, %p55
    %p57 = scmp.ne.s32.totalorder %s45, %s46
    %p58 = scmp.eq.s32.totalorder %s15, 1
    %p59 = por %p57, %p58
    %p61 = scmp.ne.s32.totalorder %s46, %s60
    %p62 = scmp.eq.s32.totalorder %s15, 0
    %p63 = por %p61, %p62
    %s65 = sadd.s32 %s64, 1
    %p68 = scmp.eq.s32.totalorder %s9, 1
    %p69 = scmp.ne.s32.totalorder %s64, %s66
    %p70 = scmp.eq.s32.totalorder %s9, 0
    %p71 = por %p69, %p70
    %p72 = scmp.ne.s32.totalorder %s64, %s66
    %p73 = scmp.eq.s32.totalorder %s14, 1
    %p74 = por %p72, %p73
    %p75 = scmp.ne.s32.totalorder %s66, %s67
    %p76 = scmp.eq.s32.totalorder %s14, 0
    %p77 = por %p75, %p76
    %p78 = scmp.ne.s32.totalorder %s66, %s67
    %p79 = scmp.eq.s32.totalorder %s15, 1
    %p80 = por %p78, %p79
    %p82 = scmp.ne.s32.totalorder %s67, %s81
    %p83 = scmp.eq.s32.totalorder %s15, 0
    %p84 = por %p82, %p83
    %s85 = ssub.s32 %s9, %s16
    %p86 = scmp.eq.s32.totalorder %s85, 0
    %s88 = sadd.s32 %s87, 1
    %s89 = scalar_select %p86, %s87, %s88
    %p92 = pneg %p86
    %p93 = scmp.eq.s32.totalorder %s9, 1
    %p94 = por %p92, %p93
    %p95 = scmp.ne.s32.totalorder %s87, %s90
    %p96 = scmp.eq.s32.totalorder %s9, 0
    %p97 = por %p95, %p96
    %p98 = scmp.ne.s32.totalorder %s87, %s90
    %p99 = scmp.eq.s32.totalorder %s14, 1
    %p100 = por %p98, %p99
    %p101 = scmp.ne.s32.totalorder %s90, %s91
    %p102 = scmp.eq.s32.totalorder %s14, 0
    %p103 = por %p101, %p102
    %p104 = scmp.ne.s32.totalorder %s90, %s91
    %p105 = scmp.eq.s32.totalorder %s15, 1
    %p106 = por %p104, %p105
    %p108 = scmp.ne.s32.totalorder %s91, %s107
    %p109 = scmp.eq.s32.totalorder %s15, 0
    %p110 = por %p108, %p109
    %p111 = scmp.le.s32.totalorder 1, %s9
    %p112 = scmp.lt.s32.totalorder %s9, 3
    %p113 = pnand %p111, %p112
    %p114 = pneg %p113
    // Predicated region
    $region9: #{_lambda_.12} parent=5 // pred_check
      _
    $region10: #{_lambda_.12} parent=5 // pred_check_branch
      %116 = sbr.rel (%p113) target = $region12
    $region11: #{_lambda_.12} parent=5 // pred_region
      %s117 = ssub.s32 %s9, 1
      // Predicated region
      $region13: #{_lambda_.12} parent=11 // pred_check
        %p118 = pneg %p56
      $region14: #{_lambda_.12} parent=11 // pred_check_branch
        %120 = sbr.rel (%p118) target = $region16
      $region15: #{_lambda_.12} parent=11 // pred_region
        _
      $region16: #{_lambda_.12} parent=11 // pred_fallthru
        _
      // Predicated region
      $region17: #{_lambda_.12} parent=11 // pred_check
        %p121 = pneg %p77
      $region18: #{_lambda_.12} parent=11 // pred_check_branch
        %123 = sbr.rel (%p121) target = $region20
      $region19: #{_lambda_.12} parent=11 // pred_region
        _
      $region20: #{_lambda_.12} parent=11 // pred_fallthru
        _
    $region12: #{_lambda_.12} parent=5 // pred_fallthru
      _
    %p124 = scmp.lt.s32.totalorder %s9, 2
    // Predicated region
    $region21: #{_lambda_.12} parent=5 // pred_check
      %p125 = pneg %p124
    $region22: #{_lambda_.12} parent=5 // pred_check_branch
      %127 = sbr.rel (%p125) target = $region24
    $region23: #{_lambda_.12} parent=5 // pred_region
      // Predicated region
      $region25: #{_lambda_.12} parent=23 // pred_check
        %p128 = pneg %p29
      $region26: #{_lambda_.12} parent=23 // pred_check_branch
        %130 = sbr.rel (%p128) target = $region28
      $region27: #{_lambda_.12} parent=23 // pred_region
        %s131 = smul.u32 32, %s9
        %p132 = scmp.lt.s32.totalorder %s131, 63
        %s133 = scalar_select %p132, %s131, 63
        %s134 = smul.addr %s133, 8
        %s135 = scalar_lea.vmem %s0, %s134
        %s136 = smul.u32 32, %s9
      $region28: #{_lambda_.12} parent=23 // pred_fallthru
        _
    $region24: #{_lambda_.12} parent=5 // pred_fallthru
      _
    %p137 = scmp.le.s32.totalorder 1, %s9
    %p138 = scmp.lt.s32.totalorder %s9, 3
    %p139 = pnand %p137, %p138
    %p140 = pneg %p139
    // Predicated region
    $region29: #{_lambda_.12} parent=5 // pred_check
      _
    $region30: #{_lambda_.12} parent=5 // pred_check_branch
      %142 = sbr.rel (%p139) target = $region32
    $region31: #{_lambda_.12} parent=5 // pred_region
      %s143 = ssub.s32 %s9, 1
      %s144 = smul.u32 32, %s14
      %p145 = scmp.lt.s32.totalorder %s144, 63
      %s146 = scalar_select %p145, %s144, 63
      %s147 = smul.addr %s146, 8
      %s148 = scalar_lea.vmem %s0, %s147
      %p149 = pneg %p35
      %p150 = pneg %p32
      %p151 = pneg %p56
      %p152 = pneg %p53
      %p153 = pneg %p77
      %p154 = pneg %p74
      %p155 = pneg %p103
      %p156 = pneg %p100
      %s157 = smul.u32 32, %s14
      %p158 = scmp.lt.s32.totalorder %s157, 63
      %s159 = scalar_select %p158, %s157, 63
      %s160 = smul.addr %s159, 8
      %s161 = scalar_lea.vmem %s3, %s160
      %s162 = smul.u32 32, %s14
      %p163 = scmp.lt.s32.totalorder %s162, 63
      %s164 = scalar_select %p163, %s162, 63
      %s165 = smul.addr %s164, 8
      %s166 = scalar_lea.vmem %s0, %s165
      %s167 = smul.u32 32, %s14
      %s168 = smul.u32 32, %s14
      %p169 = scmp.lt.s32.totalorder %s168, 63
      %s170 = scalar_select %p169, %s168, 63
      %s171 = smul.addr %s170, 8
      %s172 = scalar_lea.vmem %s3, %s171
      %s173 = smul.u32 32, %s14
      %v174 = vld [vmem:[%s166] sm:$0xff]
      %v175 = vld [vmem:[%s166 + $0x8] sm:$0xff]
      %v176 = vld [vmem:[%s166 + $0x10] sm:$0xff]
      %v177 = vld [vmem:[%s166 + $0x18] sm:$0xff]
      %v178 = vld [vmem:[%s166 + $0x20] sm:$0xff]
      %v179 = vld [vmem:[%s166 + $0x28] sm:$0xff]
      %v180 = vld [vmem:[%s166 + $0x30] sm:$0xff]
      %v181 = vld [vmem:[%s166 + $0x38] sm:$0xff]
      %v182 = vld [vmem:[%s166 + $0x40] sm:$0xff]
      %v183 = vld [vmem:[%s166 + $0x48] sm:$0xff]
      %v184 = vld [vmem:[%s166 + $0x50] sm:$0xff]
      %v185 = vld [vmem:[%s166 + $0x58] sm:$0xff]
      %v186 = vld [vmem:[%s166 + $0x60] sm:$0xff]
      %v187 = vld [vmem:[%s166 + $0x68] sm:$0xff]
      %v188 = vld [vmem:[%s166 + $0x70] sm:$0xff]
      %v189 = vld [vmem:[%s166 + $0x78] sm:$0xff]
      %v190 = vld [vmem:[%s166 + $0x80] sm:$0xff]
      %v191 = vld [vmem:[%s166 + $0x88] sm:$0xff]
      %v192 = vld [vmem:[%s166 + $0x90] sm:$0xff]
      %v193 = vld [vmem:[%s166 + $0x98] sm:$0xff]
      %v194 = vld [vmem:[%s166 + $0xa0] sm:$0xff]
      %v195 = vld [vmem:[%s166 + $0xa8] sm:$0xff]
      %v196 = vld [vmem:[%s166 + $0xb0] sm:$0xff]
      %v197 = vld [vmem:[%s166 + $0xb8] sm:$0xff]
      %v198 = vld [vmem:[%s166 + $0xc0] sm:$0xff]
      %v199 = vld [vmem:[%s166 + $0xc8] sm:$0xff]
      %v200 = vld [vmem:[%s166 + $0xd0] sm:$0xff]
      %v201 = vld [vmem:[%s166 + $0xd8] sm:$0xff]
      %v202 = vld [vmem:[%s166 + $0xe0] sm:$0xff]
      %v203 = vld [vmem:[%s166 + $0xe8] sm:$0xff]
      %v204 = vld [vmem:[%s166 + $0xf0] sm:$0xff]
      %v205 = vld [vmem:[%s166 + $0xf8] sm:$0xff]
      %v206 = vld [vmem:[%s1] sm:$0x1]
      %v208 = vlaneseq
      %v209 = vshrl.u32 %v208, 7
      %v210 = vsub.s32 0, %v209
      %v211 = vrot.slane %v206, %v210
      %v213 = vmul.f32 %v174, %v211
      %v214 = vmul.f32 %v175, %v211
      %v215 = vmul.f32 %v176, %v211
      %v216 = vmul.f32 %v177, %v211
      %v217 = vmul.f32 %v178, %v211
      %v218 = vmul.f32 %v179, %v211
      %v219 = vmul.f32 %v180, %v211
      %v220 = vmul.f32 %v181, %v211
      %v221 = vmul.f32 %v182, %v211
      %v222 = vmul.f32 %v183, %v211
      %v223 = vmul.f32 %v184, %v211
      %v224 = vmul.f32 %v185, %v211
      %v225 = vmul.f32 %v186, %v211
      %v226 = vmul.f32 %v187, %v211
      %v227 = vmul.f32 %v188, %v211
      %v228 = vmul.f32 %v189, %v211
      %v229 = vmul.f32 %v190, %v211
      %v230 = vmul.f32 %v191, %v211
      %v231 = vmul.f32 %v192, %v211
      %v232 = vmul.f32 %v193, %v211
      %v233 = vmul.f32 %v194, %v211
      %v234 = vmul.f32 %v195, %v211
      %v235 = vmul.f32 %v196, %v211
      %v236 = vmul.f32 %v197, %v211
      %v237 = vmul.f32 %v198, %v211
      %v238 = vmul.f32 %v199, %v211
      %v239 = vmul.f32 %v200, %v211
      %v240 = vmul.f32 %v201, %v211
      %v241 = vmul.f32 %v202, %v211
      %v242 = vmul.f32 %v203, %v211
      %v243 = vmul.f32 %v204, %v211
      %v244 = vmul.f32 %v205, %v211
      %v245 = vld [vmem:[%s2] sm:$0x1]
      %v247 = vlaneseq
      %v248 = vshrl.u32 %v247, 7
      %v249 = vsub.s32 0, %v248
      %v250 = vrot.slane %v245, %v249
      %v252 = vadd.f32 %v213, %v250
      %v253 = vadd.f32 %v214, %v250
      %v254 = vadd.f32 %v215, %v250
      %v255 = vadd.f32 %v216, %v250
      %v256 = vadd.f32 %v217, %v250
      %v257 = vadd.f32 %v218, %v250
      %v258 = vadd.f32 %v219, %v250
      %v259 = vadd.f32 %v220, %v250
      %v260 = vadd.f32 %v221, %v250
      %v261 = vadd.f32 %v222, %v250
      %v262 = vadd.f32 %v223, %v250
      %v263 = vadd.f32 %v224, %v250
      %v264 = vadd.f32 %v225, %v250
      %v265 = vadd.f32 %v226, %v250
      %v266 = vadd.f32 %v227, %v250
      %v267 = vadd.f32 %v228, %v250
      %v268 = vadd.f32 %v229, %v250
      %v269 = vadd.f32 %v230, %v250
      %v270 = vadd.f32 %v231, %v250
      %v271 = vadd.f32 %v232, %v250
      %v272 = vadd.f32 %v233, %v250
      %v273 = vadd.f32 %v234, %v250
      %v274 = vadd.f32 %v235, %v250
      %v275 = vadd.f32 %v236, %v250
      %v276 = vadd.f32 %v237, %v250
      %v277 = vadd.f32 %v238, %v250
      %v278 = vadd.f32 %v239, %v250
      %v279 = vadd.f32 %v240, %v250
      %v280 = vadd.f32 %v241, %v250
      %v281 = vadd.f32 %v242, %v250
      %v282 = vadd.f32 %v243, %v250
      %v283 = vadd.f32 %v244, %v250
      %v284 = vmax.f32 %v252, 0.0
      %v285 = vmax.f32 %v253, 0.0
      %v286 = vmax.f32 %v254, 0.0
      %v287 = vmax.f32 %v255, 0.0
      %v288 = vmax.f32 %v256, 0.0
      %v289 = vmax.f32 %v257, 0.0
      %v290 = vmax.f32 %v258, 0.0
      %v291 = vmax.f32 %v259, 0.0
      %v292 = vmax.f32 %v260, 0.0
      %v293 = vmax.f32 %v261, 0.0
      %v294 = vmax.f32 %v262, 0.0
      %v295 = vmax.f32 %v263, 0.0
      %v296 = vmax.f32 %v264, 0.0
      %v297 = vmax.f32 %v265, 0.0
      %v298 = vmax.f32 %v266, 0.0
      %v299 = vmax.f32 %v267, 0.0
      %v300 = vmax.f32 %v268, 0.0
      %v301 = vmax.f32 %v269, 0.0
      %v302 = vmax.f32 %v270, 0.0
      %v303 = vmax.f32 %v271, 0.0
      %v304 = vmax.f32 %v272, 0.0
      %v305 = vmax.f32 %v273, 0.0
      %v306 = vmax.f32 %v274, 0.0
      %v307 = vmax.f32 %v275, 0.0
      %v308 = vmax.f32 %v276, 0.0
      %v309 = vmax.f32 %v277, 0.0
      %v310 = vmax.f32 %v278, 0.0
      %v311 = vmax.f32 %v279, 0.0
      %v312 = vmax.f32 %v280, 0.0
      %v313 = vmax.f32 %v281, 0.0
      %v314 = vmax.f32 %v282, 0.0
      %v315 = vmax.f32 %v283, 0.0
      %316 = vst [vmem:[%s172] sm:$0xff] %v284
      %317 = vst [vmem:[%s172 + $0x8] sm:$0xff] %v285
      %318 = vst [vmem:[%s172 + $0x10] sm:$0xff] %v286
      %319 = vst [vmem:[%s172 + $0x18] sm:$0xff] %v287
      %320 = vst [vmem:[%s172 + $0x20] sm:$0xff] %v288
      %321 = vst [vmem:[%s172 + $0x28] sm:$0xff] %v289
      %322 = vst [vmem:[%s172 + $0x30] sm:$0xff] %v290
      %323 = vst [vmem:[%s172 + $0x38] sm:$0xff] %v291
      %324 = vst [vmem:[%s172 + $0x40] sm:$0xff] %v292
      %325 = vst [vmem:[%s172 + $0x48] sm:$0xff] %v293
      %326 = vst [vmem:[%s172 + $0x50] sm:$0xff] %v294
      %327 = vst [vmem:[%s172 + $0x58] sm:$0xff] %v295
      %328 = vst [vmem:[%s172 + $0x60] sm:$0xff] %v296
      %329 = vst [vmem:[%s172 + $0x68] sm:$0xff] %v297
      %330 = vst [vmem:[%s172 + $0x70] sm:$0xff] %v298
      %331 = vst [vmem:[%s172 + $0x78] sm:$0xff] %v299
      %332 = vst [vmem:[%s172 + $0x80] sm:$0xff] %v300
      %333 = vst [vmem:[%s172 + $0x88] sm:$0xff] %v301
      %334 = vst [vmem:[%s172 + $0x90] sm:$0xff] %v302
      %335 = vst [vmem:[%s172 + $0x98] sm:$0xff] %v303
      %336 = vst [vmem:[%s172 + $0xa0] sm:$0xff] %v304
      %337 = vst [vmem:[%s172 + $0xa8] sm:$0xff] %v305
      %338 = vst [vmem:[%s172 + $0xb0] sm:$0xff] %v306
      %339 = vst [vmem:[%s172 + $0xb8] sm:$0xff] %v307
      %340 = vst [vmem:[%s172 + $0xc0] sm:$0xff] %v308
      %341 = vst [vmem:[%s172 + $0xc8] sm:$0xff] %v309
      %342 = vst [vmem:[%s172 + $0xd0] sm:$0xff] %v310
      %343 = vst [vmem:[%s172 + $0xd8] sm:$0xff] %v311
      %344 = vst [vmem:[%s172 + $0xe0] sm:$0xff] %v312
      %345 = vst [vmem:[%s172 + $0xe8] sm:$0xff] %v313
      %346 = vst [vmem:[%s172 + $0xf0] sm:$0xff] %v314
      %347 = vst [vmem:[%s172 + $0xf8] sm:$0xff] %v315
      %s348 = smul.u32 32, %s14
      %p349 = scmp.lt.s32.totalorder %s348, 63
      %s350 = scalar_select %p349, %s348, 63
      %s351 = smul.addr %s350, 8
      %s352 = scalar_lea.vmem %s3, %s351
      // Predicated region
      $region33: #{_lambda_.12} parent=31 // pred_check
        %p353 = pneg %p100
      $region34: #{_lambda_.12} parent=31 // pred_check_branch
        %355 = sbr.rel (%p353) target = $region36
      $region35: #{_lambda_.12} parent=31 // pred_region
        %s356 = smul.u32 32, %s14
      $region36: #{_lambda_.12} parent=31 // pred_fallthru
        _
    $region32: #{_lambda_.12} parent=5 // pred_fallthru
      _
    %p357 = scmp.le.s32.totalorder 2, %s9
    // Predicated region
    $region37: #{_lambda_.12} parent=5 // pred_check
      %p358 = pneg %p357
    $region38: #{_lambda_.12} parent=5 // pred_check_branch
      %360 = sbr.rel (%p358) target = $region40
    $region39: #{_lambda_.12} parent=5 // pred_region
      %s361 = ssub.s32 %s9, 2
      // Predicated region
      $region41: #{_lambda_.12} parent=39 // pred_check
        %p362 = pneg %p106
      $region42: #{_lambda_.12} parent=39 // pred_check_branch
        %364 = sbr.rel (%p362) target = $region44
      $region43: #{_lambda_.12} parent=39 // pred_region
        %s365 = smul.u32 32, %s15
        %p366 = scmp.lt.s32.totalorder %s365, 63
        %s367 = scalar_select %p366, %s365, 63
        %s368 = smul.addr %s367, 8
        %s369 = scalar_lea.vmem %s3, %s368
      $region44: #{_lambda_.12} parent=39 // pred_fallthru
        _
    $region40: #{_lambda_.12} parent=5 // pred_fallthru
      _
  $region6: #{_lambda_.12} parent=0 // loop_footer
    %s13 = sadd.s32 1, %s9
  $region7: #{_lambda_.12} parent=0 // loop_footer_branch
    %8 = sbr.rel target = $region3
  $region8: #{_lambda_.12} parent=0 // loop_exit
    _

// kernel: _lambda_.11
$region0: #{_lambda_.11}
  #allocation0 [shape = 'u32[]', space=smem, size = 0x4, offset = 0x4, fixed_abs, tag = 'smem constant byte address 0x4 - core index']
  #allocation1 [shape = 'u32[144,128]{1,0:T(1,128)}', space=vmem, size = 0x12000, scoped, tag = 'internal scratch']
  %s0 = inlined_call_operand.vmem [shape: bf16[512,27], index: 0, kind: input, shape index: {}]
  %s1 = inlined_call_operand.vmem [shape: bf16[27,128], index: 1, kind: input, shape index: {}]
  %s2 = inlined_call_operand.vmem [shape: f32[512,128], index: 2, kind: output, shape index: {}]
  %s3 = sld [smem:[#allocation0]]
  $region41: #{_lambda_.11} parent=0
    _
  %s5 = ssub.s32 1, %s3
  %s6 = scalar_select 0, %s5, %s3
  loop: start=0, step=1, limit=4
  $region2: #{_lambda_.11} parent=0 // loop_pre_header
    _
  $region3: #{_lambda_.11} parent=0 // loop_header
    %s8 = sphi 0, %s12
    %p9 = scmp.ge.s32.totalorder %s8, 4
    %s18 = sphi 0, %s20
    %s21 = sphi 0, %s18
    %s22 = sphi 0, %s21
    %s38 = sphi 0, %s22
    %s42 = sphi 0, %s42
    %s44 = sphi 0, %s42
    %s45 = sphi 0, %s44
    %s59 = sphi 0, %s45
    %s65 = sphi 0, %s67
    %s68 = sphi 0, %s65
    %s69 = sphi 0, %s68
    %s85 = sphi 0, %s69
  $region4: #{_lambda_.11} parent=0 // loop_header_branch
    %11 = sbr.rel (%p9) target = $region8
  $region5: #{_lambda_.11} parent=0 // loop_body
    %s13 = ssub.s32 %s8, 1
    %s14 = ssub.s32 %s8, 2
    %s15 = sadd.s32 %s8, 1
    %s16 = ssub.s32 %s8, %s15
    %p17 = scmp.eq.s32.totalorder %s16, 0
    %s19 = sadd.s32 %s18, 1
    %s20 = scalar_select %p17, %s18, %s19
    %p23 = pneg %p17
    %p24 = scmp.eq.s32.totalorder %s8, 1
    %p25 = por %p23, %p24
    %p26 = scmp.ne.s32.totalorder %s18, %s21
    %p27 = scmp.eq.s32.totalorder %s8, 0
    %p28 = por %p26, %p27
    %p29 = scmp.ne.s32.totalorder %s18, %s21
    %p30 = scmp.eq.s32.totalorder %s13, 1
    %p31 = por %p29, %p30
    %p32 = scmp.ne.s32.totalorder %s21, %s22
    %p33 = scmp.eq.s32.totalorder %s13, 0
    %p34 = por %p32, %p33
    %p35 = scmp.ne.s32.totalorder %s21, %s22
    %p36 = scmp.eq.s32.totalorder %s14, 1
    %p37 = por %p35, %p36
    %p39 = scmp.ne.s32.totalorder %s22, %s38
    %p40 = scmp.eq.s32.totalorder %s14, 0
    %p41 = por %p39, %p40
    %s43 = sadd.s32 %s42, 1
    %p46 = scmp.eq.s32.totalorder %s8, 1
    %p47 = scmp.ne.s32.totalorder %s42, %s44
    %p48 = scmp.eq.s32.totalorder %s8, 0
    %p49 = por %p47, %p48
    %p50 = scmp.ne.s32.totalorder %s42, %s44
    %p51 = scmp.eq.s32.totalorder %s13, 1
    %p52 = por %p50, %p51
    %p53 = scmp.ne.s32.totalorder %s44, %s45
    %p54 = scmp.eq.s32.totalorder %s13, 0
    %p55 = por %p53, %p54
    %p56 = scmp.ne.s32.totalorder %s44, %s45
    %p57 = scmp.eq.s32.totalorder %s14, 1
    %p58 = por %p56, %p57
    %p60 = scmp.ne.s32.totalorder %s45, %s59
    %p61 = scmp.eq.s32.totalorder %s14, 0
    %p62 = por %p60, %p61
    %s63 = ssub.s32 %s8, %s15
    %p64 = scmp.eq.s32.totalorder %s63, 0
    %s66 = sadd.s32 %s65, 1
    %s67 = scalar_select %p64, %s65, %s66
    %p70 = pneg %p64
    %p71 = scmp.eq.s32.totalorder %s8, 1
    %p72 = por %p70, %p71
    %p73 = scmp.ne.s32.totalorder %s65, %s68
    %p74 = scmp.eq.s32.totalorder %s8, 0
    %p75 = por %p73, %p74
    %p76 = scmp.ne.s32.totalorder %s65, %s68
    %p77 = scmp.eq.s32.totalorder %s13, 1
    %p78 = por %p76, %p77
    %p79 = scmp.ne.s32.totalorder %s68, %s69
    %p80 = scmp.eq.s32.totalorder %s13, 0
    %p81 = por %p79, %p80
    %p82 = scmp.ne.s32.totalorder %s68, %s69
    %p83 = scmp.eq.s32.totalorder %s14, 1
    %p84 = por %p82, %p83
    %p86 = scmp.ne.s32.totalorder %s69, %s85
    %p87 = scmp.eq.s32.totalorder %s14, 0
    %p88 = por %p86, %p87
    %p89 = scmp.le.s32.totalorder 1, %s8
    %p90 = scmp.lt.s32.totalorder %s8, 3
    %p91 = pnand %p89, %p90
    %p92 = pneg %p91
    // Predicated region
    $region9: #{_lambda_.11} parent=5 // pred_check
      _
    $region10: #{_lambda_.11} parent=5 // pred_check_branch
      %94 = sbr.rel (%p91) target = $region12
    $region11: #{_lambda_.11} parent=5 // pred_region
      %s95 = ssub.s32 %s8, 1
      // Predicated region
      $region13: #{_lambda_.11} parent=11 // pred_check
        %p96 = pneg %p55
      $region14: #{_lambda_.11} parent=11 // pred_check_branch
        %98 = sbr.rel (%p96) target = $region16
      $region15: #{_lambda_.11} parent=11 // pred_region
        _
      $region16: #{_lambda_.11} parent=11 // pred_fallthru
        _
    $region12: #{_lambda_.11} parent=5 // pred_fallthru
      _
    %p99 = scmp.lt.s32.totalorder %s8, 2
    // Predicated region
    $region17: #{_lambda_.11} parent=5 // pred_check
      %p100 = pneg %p99
    $region18: #{_lambda_.11} parent=5 // pred_check_branch
      %102 = sbr.rel (%p100) target = $region20
    $region19: #{_lambda_.11} parent=5 // pred_region
      // Predicated region
      $region21: #{_lambda_.11} parent=19 // pred_check
        %p103 = pneg %p28
      $region22: #{_lambda_.11} parent=19 // pred_check_branch
        %105 = sbr.rel (%p103) target = $region24
      $region23: #{_lambda_.11} parent=19 // pred_region
        %s106 = smul.u32 32, %s8
        %p107 = scmp.lt.s32.totalorder %s106, 63
        %s108 = scalar_select %p107, %s106, 63
        %s109 = smul.addr %s108, 4
        %s110 = scalar_lea.vmem %s0, %s109
        %s111 = smul.u32 32, %s8
      $region24: #{_lambda_.11} parent=19 // pred_fallthru
        _
    $region20: #{_lambda_.11} parent=5 // pred_fallthru
      _
    %p112 = scmp.le.s32.totalorder 1, %s8
    %p113 = scmp.lt.s32.totalorder %s8, 3
    %p114 = pnand %p112, %p113
    %p115 = pneg %p114
    // Predicated region
    $region25: #{_lambda_.11} parent=5 // pred_check
      _
    $region26: #{_lambda_.11} parent=5 // pred_check_branch
      %117 = sbr.rel (%p114) target = $region28
    $region27: #{_lambda_.11} parent=5 // pred_region
      %s118 = ssub.s32 %s8, 1
      %s119 = smul.u32 32, %s13
      %p120 = scmp.lt.s32.totalorder %s119, 63
      %s121 = scalar_select %p120, %s119, 63
      %s122 = smul.addr %s121, 4
      %s123 = scalar_lea.vmem %s0, %s122
      %p124 = pneg %p34
      %p125 = pneg %p31
      %p126 = pneg %p55
      %p127 = pneg %p52
      %p128 = pneg %p81
      %p129 = pneg %p78
      %s130 = smul.u32 32, %s13
      %p131 = scmp.lt.s32.totalorder %s130, 63
      %s132 = scalar_select %p131, %s130, 63
      %s133 = smul.addr %s132, 8
      %s134 = scalar_lea.vmem %s2, %s133
      %s135 = smul.u32 32, %s13
      %p136 = scmp.lt.s32.totalorder %s135, 63
      %s137 = scalar_select %p136, %s135, 63
      %s138 = smul.addr %s137, 4
      %s139 = scalar_lea.vmem %s0, %s138
      %s140 = smul.u32 32, %s13
      %s141 = smul.u32 32, %s13
      %p142 = scmp.lt.s32.totalorder %s141, 63
      %s143 = scalar_select %p142, %s141, 63
      %s144 = smul.addr %s143, 8
      %s145 = scalar_lea.vmem %s2, %s144
      %s146 = smul.u32 32, %s13
      %v148 = vld [vmem:[%s139] sm:$0xf]
      %v149 = vld [vmem:[%s139 + $0x4] sm:$0xf]
      %v150 = vld [vmem:[%s139 + $0x8] sm:$0xf]
      %v151 = vld [vmem:[%s139 + $0xc] sm:$0xf]
      %v152 = vld [vmem:[%s139 + $0x10] sm:$0xf]
      %v153 = vld [vmem:[%s139 + $0x14] sm:$0xf]
      %v154 = vld [vmem:[%s139 + $0x18] sm:$0xf]
      %v155 = vld [vmem:[%s139 + $0x1c] sm:$0xf]
      %v156 = vld [vmem:[%s139 + $0x20] sm:$0xf]
      %v157 = vld [vmem:[%s139 + $0x24] sm:$0xf]
      %v158 = vld [vmem:[%s139 + $0x28] sm:$0xf]
      %v159 = vld [vmem:[%s139 + $0x2c] sm:$0xf]
      %v160 = vld [vmem:[%s139 + $0x30] sm:$0xf]
      %v161 = vld [vmem:[%s139 + $0x34] sm:$0xf]
      %v162 = vld [vmem:[%s139 + $0x38] sm:$0xf]
      %v163 = vld [vmem:[%s139 + $0x3c] sm:$0xf]
      %v164 = vld [vmem:[%s139 + $0x40] sm:$0xf]
      %v165 = vld [vmem:[%s139 + $0x44] sm:$0xf]
      %v166 = vld [vmem:[%s139 + $0x48] sm:$0xf]
      %v167 = vld [vmem:[%s139 + $0x4c] sm:$0xf]
      %v168 = vld [vmem:[%s139 + $0x50] sm:$0xf]
      %v169 = vld [vmem:[%s139 + $0x54] sm:$0xf]
      %v170 = vld [vmem:[%s139 + $0x58] sm:$0xf]
      %v171 = vld [vmem:[%s139 + $0x5c] sm:$0xf]
      %v172 = vld [vmem:[%s139 + $0x60] sm:$0xf]
      %v173 = vld [vmem:[%s139 + $0x64] sm:$0xf]
      %v174 = vld [vmem:[%s139 + $0x68] sm:$0xf]
      %v175 = vld [vmem:[%s139 + $0x6c] sm:$0xf]
      %v176 = vld [vmem:[%s139 + $0x70] sm:$0xf]
      %v177 = vld [vmem:[%s139 + $0x74] sm:$0xf]
      %v178 = vld [vmem:[%s139 + $0x78] sm:$0xf]
      %v179 = vld [vmem:[%s139 + $0x7c] sm:$0xf]
      %v180 = vld [vmem:[%s1] sm:$0xf]
      %v181 = vld [vmem:[%s1 + $0x4] sm:$0xf]
      %v182 = vld [vmem:[%s1 + $0x8] sm:$0xf]
      %v183 = vld [vmem:[%s1 + $0xc] sm:$0x3]
      %v216 = vunpack.c.l.b16 %v148
      %v217 = vunpack.c.l.b16 %v149
      %v218 = vunpack.c.l.b16 %v150
      %v219 = vunpack.c.l.b16 %v151
      %v220 = vunpack.c.l.b16 %v152
      %v221 = vunpack.c.l.b16 %v153
      %v222 = vunpack.c.l.b16 %v154
      %v223 = vunpack.c.l.b16 %v155
      %v224 = vunpack.c.l.b16 %v156
      %v225 = vunpack.c.l.b16 %v157
      %v226 = vunpack.c.l.b16 %v158
      %v227 = vunpack.c.l.b16 %v159
      %v228 = vunpack.c.l.b16 %v160
      %v229 = vunpack.c.l.b16 %v161
      %v230 = vunpack.c.l.b16 %v162
      %v231 = vunpack.c.l.b16 %v163
      %v232 = vunpack.c.l.b16 %v164
      %v233 = vunpack.c.l.b16 %v165
      %v234 = vunpack.c.l.b16 %v166
      %v235 = vunpack.c.l.b16 %v167
      %v236 = vunpack.c.l.b16 %v168
      %v237 = vunpack.c.l.b16 %v169
      %v238 = vunpack.c.l.b16 %v170
      %v239 = vunpack.c.l.b16 %v171
      %v240 = vunpack.c.l.b16 %v172
      %v241 = vunpack.c.l.b16 %v173
      %v242 = vunpack.c.l.b16 %v174
      %v243 = vunpack.c.l.b16 %v175
      %v244 = vunpack.c.l.b16 %v176
      %v245 = vunpack.c.l.b16 %v177
      %v246 = vunpack.c.l.b16 %v178
      %v247 = vunpack.c.l.b16 %v179
      %v248 = vpack.c.b16 %v217, %v216
      %v249 = vpack.c.b16 %v219, %v218
      %v250 = vpack.c.b16 %v221, %v220
      %v251 = vpack.c.b16 %v223, %v222
      %v252 = vpack.c.b16 %v225, %v224
      %v253 = vpack.c.b16 %v227, %v226
      %v254 = vpack.c.b16 %v229, %v228
      %v255 = vpack.c.b16 %v231, %v230
      %v256 = vpack.c.b16 %v233, %v232
      %v257 = vpack.c.b16 %v235, %v234
      %v258 = vpack.c.b16 %v237, %v236
      %v259 = vpack.c.b16 %v239, %v238
      %v260 = vpack.c.b16 %v241, %v240
      %v261 = vpack.c.b16 %v243, %v242
      %v262 = vpack.c.b16 %v245, %v244
      %v263 = vpack.c.b16 %v247, %v246
      %v268 = vunpack.c.l.b16 %v180
      %v269 = vunpack.c.l.b16 %v181
      %v270 = vunpack.c.l.b16 %v182
      %v271 = vunpack.c.l.b16 %v183
      %v272 = vpack.c.b16 %v269, %v268
      %v273 = vpack.c.b16 %v271, %v270
      %vm275 = vcmask 220160
      %v277 = vsel %vm275, %v248, 0
      %v280 = vsel %vm275, %v249, 0
      %v283 = vsel %vm275, %v250, 0
      %v286 = vsel %vm275, %v251, 0
      %v289 = vsel %vm275, %v252, 0
      %v292 = vsel %vm275, %v253, 0
      %v295 = vsel %vm275, %v254, 0
      %v298 = vsel %vm275, %v255, 0
      %v301 = vsel %vm275, %v256, 0
      %v304 = vsel %vm275, %v257, 0
      %v307 = vsel %vm275, %v258, 0
      %v310 = vsel %vm275, %v259, 0
      %v313 = vsel %vm275, %v260, 0
      %v316 = vsel %vm275, %v261, 0
      %v319 = vsel %vm275, %v262, 0
      %v322 = vsel %vm275, %v263, 0
      %vm324 = vcmask 1044480
      %vm325 = vcmask 1045504
      %v326 = vsel %vm324, 4294967295, 65535
      %v327 = vsel %vm325, %v326, 0
      %v329 = vand.u32 %v273, %v327
      %331 = vmatprep.subr.bf16.mxu0 0
      %332 = vmatpush1.bf16.msra.mxu0 %v272
      %333 = vmatprep.subr.bf16.mxu0 0
      %334 = vmatpush1.bf16.msra.mxu0 %v329
      %335 = vmatprep.subr.bf16.mxu0 0
      %336 = vmatpush1.bf16.msra.mxu0 0
      %337 = vmatprep.subr.bf16.mxu0 0
      %338 = vmatpush1.bf16.msra.mxu0 0
      %339 = vmatprep.subr.bf16.mxu0 0
      %340 = vmatpush1.bf16.msra.mxu0 0
      %341 = vmatprep.subr.bf16.mxu0 0
      %342 = vmatpush1.bf16.msra.mxu0 0
      %343 = vmatprep.subr.bf16.mxu0 0
      %344 = vmatpush1.bf16.msra.mxu0 0
      %345 = vmatprep.subr.bf16.mxu0 0
      %346 = vmatpush1.bf16.msra.mxu0 0
      %347 = vmatprep.subr.bf16.mxu0 0
      %348 = vmatpush1.bf16.msra.mxu0 0
      %349 = vmatprep.subr.bf16.mxu0 0
      %350 = vmatpush1.bf16.msra.mxu0 0
      %351 = vmatprep.subr.bf16.mxu0 0
      %352 = vmatpush1.bf16.msra.mxu0 0
      %353 = vmatprep.subr.bf16.mxu0 0
      %354 = vmatpush1.bf16.msra.mxu0 0
      %355 = vmatprep.subr.bf16.mxu0 0
      %356 = vmatpush1.bf16.msra.mxu0 0
      %357 = vmatprep.subr.bf16.mxu0 0
      %358 = vmatpush1.bf16.msra.mxu0 0
      %359 = vmatprep.subr.bf16.mxu0 0
      %360 = vmatpush1.bf16.msra.mxu0 0
      %361 = vmatprep.subr.bf16.mxu0 0
      %362 = vmatpush1.bf16.msra.mxu0 0
      %363 = vmatprep.mubr.bf16.mxu0 0
      %364 = vmatmul.mubr.bf16.gmra.mrb[0].mxu0 %v277
      %v365 = vpop.f32.mrb[0].mxu0
      %v366 = vadd.f32 0.0, %v365
      %v367 = vpop.f32.mrb[0].mxu0
      %v368 = vpop.f32.mrb[0].mxu0
      %v369 = vadd.f32 0.0, %v368
      %v370 = vpop.f32.mrb[0].mxu0
      %371 = vmatprep.mubr.bf16.mxu0 0
      %372 = vmatmul.mubr.bf16.gmra.mrb[0].mxu0 %v280
      %v373 = vpop.f32.mrb[0].mxu0
      %v374 = vadd.f32 0.0, %v373
      %v375 = vpop.f32.mrb[0].mxu0
      %v376 = vpop.f32.mrb[0].mxu0
      %v377 = vadd.f32 0.0, %v376
      %v378 = vpop.f32.mrb[0].mxu0
      %379 = vmatprep.mubr.bf16.mxu0 0
      %380 = vmatmul.mubr.bf16.gmra.mrb[0].mxu0 %v283
      %v381 = vpop.f32.mrb[0].mxu0
      %v382 = vadd.f32 0.0, %v381
      %v383 = vpop.f32.mrb[0].mxu0
      %v384 = vpop.f32.mrb[0].mxu0
      %v385 = vadd.f32 0.0, %v384
      %v386 = vpop.f32.mrb[0].mxu0
      %387 = vmatprep.mubr.bf16.mxu0 0
      %388 = vmatmul.mubr.bf16.gmra.mrb[0].mxu0 %v286
      %v389 = vpop.f32.mrb[0].mxu0
      %v390 = vadd.f32 0.0, %v389
      %v391 = vpop.f32.mrb[0].mxu0
      %v392 = vpop.f32.mrb[0].mxu0
      %v393 = vadd.f32 0.0, %v392
      %v394 = vpop.f32.mrb[0].mxu0
      %395 = vmatprep.mubr.bf16.mxu0 0
      %396 = vmatmul.mubr.bf16.gmra.mrb[0].mxu0 %v289
      %v397 = vpop.f32.mrb[0].mxu0
      %v398 = vadd.f32 0.0, %v397
      %v399 = vpop.f32.mrb[0].mxu0
      %v400 = vpop.f32.mrb[0].mxu0
      %v401 = vadd.f32 0.0, %v400
      %v402 = vpop.f32.mrb[0].mxu0
      %403 = vmatprep.mubr.bf16.mxu0 0
      %404 = vmatmul.mubr.bf16.gmra.mrb[0].mxu0 %v292
      %v405 = vpop.f32.mrb[0].mxu0
      %v406 = vadd.f32 0.0, %v405
      %v407 = vpop.f32.mrb[0].mxu0
      %v408 = vpop.f32.mrb[0].mxu0
      %v409 = vadd.f32 0.0, %v408
      %v410 = vpop.f32.mrb[0].mxu0
      %411 = vmatprep.mubr.bf16.mxu0 0
      %412 = vmatmul.mubr.bf16.gmra.mrb[0].mxu0 %v295
      %v413 = vpop.f32.mrb[0].mxu0
      %v414 = vadd.f32 0.0, %v413
      %v415 = vpop.f32.mrb[0].mxu0
      %v416 = vpop.f32.mrb[0].mxu0
      %v417 = vadd.f32 0.0, %v416
      %v418 = vpop.f32.mrb[0].mxu0
      %419 = vmatprep.mubr.bf16.mxu0 0
      %420 = vmatmul.mubr.bf16.gmra.mrb[0].mxu0 %v298
      %v421 = vpop.f32.mrb[0].mxu0
      %v422 = vadd.f32 0.0, %v421
      %v423 = vpop.f32.mrb[0].mxu0
      %v424 = vpop.f32.mrb[0].mxu0
      %v425 = vadd.f32 0.0, %v424
      %v426 = vpop.f32.mrb[0].mxu0
      %427 = vmatprep.mubr.bf16.mxu0 0
      %428 = vmatmul.mubr.bf16.gmra.mrb[0].mxu0 %v301
      %v429 = vpop.f32.mrb[0].mxu0
      %v430 = vadd.f32 0.0, %v429
      %v431 = vpop.f32.mrb[0].mxu0
      %v432 = vpop.f32.mrb[0].mxu0
      %v433 = vadd.f32 0.0, %v432
      %v434 = vpop.f32.mrb[0].mxu0
      %435 = vmatprep.mubr.bf16.mxu0 0
      %436 = vmatmul.mubr.bf16.gmra.mrb[0].mxu0 %v304
      %v437 = vpop.f32.mrb[0].mxu0
      %v438 = vadd.f32 0.0, %v437
      %v439 = vpop.f32.mrb[0].mxu0
      %v440 = vpop.f32.mrb[0].mxu0
      %v441 = vadd.f32 0.0, %v440
      %v442 = vpop.f32.mrb[0].mxu0
      %443 = vmatprep.mubr.bf16.mxu0 0
      %444 = vmatmul.mubr.bf16.gmra.mrb[0].mxu0 %v307
      %v445 = vpop.f32.mrb[0].mxu0
      %v446 = vadd.f32 0.0, %v445
      %v447 = vpop.f32.mrb[0].mxu0
      %v448 = vpop.f32.mrb[0].mxu0
      %v449 = vadd.f32 0.0, %v448
      %v450 = vpop.f32.mrb[0].mxu0
      %451 = vmatprep.mubr.bf16.mxu0 0
      %452 = vmatmul.mubr.bf16.gmra.mrb[0].mxu0 %v310
      %v453 = vpop.f32.mrb[0].mxu0
      %v454 = vadd.f32 0.0, %v453
      %v455 = vpop.f32.mrb[0].mxu0
      %v456 = vpop.f32.mrb[0].mxu0
      %v457 = vadd.f32 0.0, %v456
      %v458 = vpop.f32.mrb[0].mxu0
      %459 = vmatprep.mubr.bf16.mxu0 0
      %460 = vmatmul.mubr.bf16.gmra.mrb[0].mxu0 %v313
      %v461 = vpop.f32.mrb[0].mxu0
      %v462 = vadd.f32 0.0, %v461
      %v463 = vpop.f32.mrb[0].mxu0
      %v464 = vpop.f32.mrb[0].mxu0
      %v465 = vadd.f32 0.0, %v464
      %v466 = vpop.f32.mrb[0].mxu0
      %467 = vmatprep.mubr.bf16.mxu0 0
      %468 = vmatmul.mubr.bf16.gmra.mrb[0].mxu0 %v316
      %v469 = vpop.f32.mrb[0].mxu0
      %v470 = vadd.f32 0.0, %v469
      %v471 = vpop.f32.mrb[0].mxu0
      %v472 = vpop.f32.mrb[0].mxu0
      %v473 = vadd.f32 0.0, %v472
      %v474 = vpop.f32.mrb[0].mxu0
      %475 = vmatprep.mubr.bf16.mxu0 0
      %476 = vmatmul.mubr.bf16.gmra.mrb[0].mxu0 %v319
      %v477 = vpop.f32.mrb[0].mxu0
      %v478 = vadd.f32 0.0, %v477
      %v479 = vpop.f32.mrb[0].mxu0
      %v480 = vpop.f32.mrb[0].mxu0
      %v481 = vadd.f32 0.0, %v480
      %v482 = vpop.f32.mrb[0].mxu0
      %483 = vmatprep.mubr.bf16.mxu0 0
      %484 = vmatmul.mubr.bf16.gmra.mrb[0].mxu0 %v322
      %v485 = vpop.f32.mrb[0].mxu0
      %v486 = vadd.f32 0.0, %v485
      %v487 = vpop.f32.mrb[0].mxu0
      %v488 = vpop.f32.mrb[0].mxu0
      %v489 = vadd.f32 0.0, %v488
      %v490 = vpop.f32.mrb[0].mxu0
      %491 = vdwg.mxu0
      %492 = vst [vmem:[%s145] sm:$0xff] %v366
      %493 = vst [vmem:[%s145 + $0x8] sm:$0xff] %v369
      %494 = vst [vmem:[%s145 + $0x10] sm:$0xff] %v374
      %495 = vst [vmem:[%s145 + $0x18] sm:$0xff] %v377
      %496 = vst [vmem:[%s145 + $0x20] sm:$0xff] %v382
      %497 = vst [vmem:[%s145 + $0x28] sm:$0xff] %v385
      %498 = vst [vmem:[%s145 + $0x30] sm:$0xff] %v390
      %499 = vst [vmem:[%s145 + $0x38] sm:$0xff] %v393
      %500 = vst [vmem:[%s145 + $0x40] sm:$0xff] %v398
      %501 = vst [vmem:[%s145 + $0x48] sm:$0xff] %v401
      %502 = vst [vmem:[%s145 + $0x50] sm:$0xff] %v406
      %503 = vst [vmem:[%s145 + $0x58] sm:$0xff] %v409
      %504 = vst [vmem:[%s145 + $0x60] sm:$0xff] %v414
      %505 = vst [vmem:[%s145 + $0x68] sm:$0xff] %v417
      %506 = vst [vmem:[%s145 + $0x70] sm:$0xff] %v422
      %507 = vst [vmem:[%s145 + $0x78] sm:$0xff] %v425
      %508 = vst [vmem:[%s145 + $0x80] sm:$0xff] %v430
      %509 = vst [vmem:[%s145 + $0x88] sm:$0xff] %v433
      %510 = vst [vmem:[%s145 + $0x90] sm:$0xff] %v438
      %511 = vst [vmem:[%s145 + $0x98] sm:$0xff] %v441
      %512 = vst [vmem:[%s145 + $0xa0] sm:$0xff] %v446
      %513 = vst [vmem:[%s145 + $0xa8] sm:$0xff] %v449
      %514 = vst [vmem:[%s145 + $0xb0] sm:$0xff] %v454
      %515 = vst [vmem:[%s145 + $0xb8] sm:$0xff] %v457
      %516 = vst [vmem:[%s145 + $0xc0] sm:$0xff] %v462
      %517 = vst [vmem:[%s145 + $0xc8] sm:$0xff] %v465
      %518 = vst [vmem:[%s145 + $0xd0] sm:$0xff] %v470
      %519 = vst [vmem:[%s145 + $0xd8] sm:$0xff] %v473
      %520 = vst [vmem:[%s145 + $0xe0] sm:$0xff] %v478
      %521 = vst [vmem:[%s145 + $0xe8] sm:$0xff] %v481
      %522 = vst [vmem:[%s145 + $0xf0] sm:$0xff] %v486
      %523 = vst [vmem:[%s145 + $0xf8] sm:$0xff] %v489
      %s524 = smul.u32 32, %s13
      %p525 = scmp.lt.s32.totalorder %s524, 63
      %s526 = scalar_select %p525, %s524, 63
      %s527 = smul.addr %s526, 8
      %s528 = scalar_lea.vmem %s2, %s527
      // Predicated region
      $region29: #{_lambda_.11} parent=27 // pred_check
        %p529 = pneg %p78
      $region30: #{_lambda_.11} parent=27 // pred_check_branch
        %531 = sbr.rel (%p529) target = $region32
      $region31: #{_lambda_.11} parent=27 // pred_region
        %s532 = smul.u32 32, %s13
      $region32: #{_lambda_.11} parent=27 // pred_fallthru
        _
    $region28: #{_lambda_.11} parent=5 // pred_fallthru
      _
    %p533 = scmp.le.s32.totalorder 2, %s8
    // Predicated region
    $region33: #{_lambda_.11} parent=5 // pred_check
      %p534 = pneg %p533
    $region34: #{_lambda_.11} parent=5 // pred_check_branch
      %536 = sbr.rel (%p534) target = $region36
    $region35: #{_lambda_.11} parent=5 // pred_region
      %s537 = ssub.s32 %s8, 2
      // Predicated region
      $region37: #{_lambda_.11} parent=35 // pred_check
        %p538 = pneg %p84
      $region38: #{_lambda_.11} parent=35 // pred_check_branch
        %540 = sbr.rel (%p538) target = $region40
      $region39: #{_lambda_.11} parent=35 // pred_region
        %s541 = smul.u32 32, %s14
        %p542 = scmp.lt.s32.totalorder %s541, 63
        %s543 = scalar_select %p542, %s541, 63
        %s544 = smul.addr %s543, 8
        %s545 = scalar_lea.vmem %s2, %s544
      $region40: #{_lambda_.11} parent=35 // pred_fallthru
        _
    $region36: #{_lambda_.11} parent=5 // pred_fallthru
      _
  $region6: #{_lambda_.11} parent=0 // loop_footer
    %s12 = sadd.s32 1, %s8
  $region7: #{_lambda_.11} parent=0 // loop_footer_branch
    %7 = sbr.rel target = $region3
  $region8: #{_lambda_.11} parent=0 // loop_exit
    _

// kernel: _lambda_.13
$region0: #{_lambda_.13}
  #allocation0 [shape = 'u32[]', space=smem, size = 0x4, offset = 0x4, fixed_abs, tag = 'smem constant byte address 0x4 - core index']
  #allocation1 [shape = 'u32[144,128]{1,0:T(1,128)}', space=vmem, size = 0x12000, scoped, tag = 'internal scratch']
  %s0 = inlined_call_operand.vmem [shape: bf16[512,1152], index: 0, kind: input, shape index: {}]
  %s1 = inlined_call_operand.vmem [shape: bf16[1152,128], index: 1, kind: input, shape index: {}]
  %s2 = inlined_call_operand.vmem [shape: f32[1,128], index: 2, kind: input, shape index: {}]
  %s3 = inlined_call_operand.vmem [shape: f32[1,128], index: 3, kind: input, shape index: {}]
  %s4 = inlined_call_operand.vmem [shape: f32[512,128], index: 4, kind: output, shape index: {}]
  %s5 = sld [smem:[#allocation0]]
  $region49: #{_lambda_.13} parent=0
    _
  %s7 = ssub.s32 1, %s5
  %s8 = scalar_select 0, %s7, %s5
  loop: start=0, step=1, limit=4
  $region2: #{_lambda_.13} parent=0 // loop_pre_header
    _
  $region3: #{_lambda_.13} parent=0 // loop_header
    %s10 = sphi 0, %s14
    %p11 = scmp.ge.s32.totalorder %s10, 4
    %s20 = sphi 0, %s22
    %s23 = sphi 0, %s20
    %s24 = sphi 0, %s23
    %s40 = sphi 0, %s24
    %s44 = sphi 0, %s44
    %s46 = sphi 0, %s44
    %s47 = sphi 0, %s46
    %s61 = sphi 0, %s47
    %s65 = sphi 0, %s65
    %s67 = sphi 0, %s65
    %s68 = sphi 0, %s67
    %s82 = sphi 0, %s68
    %s86 = sphi 0, %s86
    %s88 = sphi 0, %s86
    %s89 = sphi 0, %s88
    %s103 = sphi 0, %s89
    %s109 = sphi 0, %s111
    %s112 = sphi 0, %s109
    %s113 = sphi 0, %s112
    %s129 = sphi 0, %s113
  $region4: #{_lambda_.13} parent=0 // loop_header_branch
    %13 = sbr.rel (%p11) target = $region8
  $region5: #{_lambda_.13} parent=0 // loop_body
    %s15 = ssub.s32 %s10, 1
    %s16 = ssub.s32 %s10, 2
    %s17 = sadd.s32 %s10, 1
    %s18 = ssub.s32 %s10, %s17
    %p19 = scmp.eq.s32.totalorder %s18, 0
    %s21 = sadd.s32 %s20, 1
    %s22 = scalar_select %p19, %s20, %s21
    %p25 = pneg %p19
    %p26 = scmp.eq.s32.totalorder %s10, 1
    %p27 = por %p25, %p26
    %p28 = scmp.ne.s32.totalorder %s20, %s23
    %p29 = scmp.eq.s32.totalorder %s10, 0
    %p30 = por %p28, %p29
    %p31 = scmp.ne.s32.totalorder %s20, %s23
    %p32 = scmp.eq.s32.totalorder %s15, 1
    %p33 = por %p31, %p32
    %p34 = scmp.ne.s32.totalorder %s23, %s24
    %p35 = scmp.eq.s32.totalorder %s15, 0
    %p36 = por %p34, %p35
    %p37 = scmp.ne.s32.totalorder %s23, %s24
    %p38 = scmp.eq.s32.totalorder %s16, 1
    %p39 = por %p37, %p38
    %p41 = scmp.ne.s32.totalorder %s24, %s40
    %p42 = scmp.eq.s32.totalorder %s16, 0
    %p43 = por %p41, %p42
    %s45 = sadd.s32 %s44, 1
    %p48 = scmp.eq.s32.totalorder %s10, 1
    %p49 = scmp.ne.s32.totalorder %s44, %s46
    %p50 = scmp.eq.s32.totalorder %s10, 0
    %p51 = por %p49, %p50
    %p52 = scmp.ne.s32.totalorder %s44, %s46
    %p53 = scmp.eq.s32.totalorder %s15, 1
    %p54 = por %p52, %p53
    %p55 = scmp.ne.s32.totalorder %s46, %s47
    %p56 = scmp.eq.s32.totalorder %s15, 0
    %p57 = por %p55, %p56
    %p58 = scmp.ne.s32.totalorder %s46, %s47
    %p59 = scmp.eq.s32.totalorder %s16, 1
    %p60 = por %p58, %p59
    %p62 = scmp.ne.s32.totalorder %s47, %s61
    %p63 = scmp.eq.s32.totalorder %s16, 0
    %p64 = por %p62, %p63
    %s66 = sadd.s32 %s65, 1
    %p69 = scmp.eq.s32.totalorder %s10, 1
    %p70 = scmp.ne.s32.totalorder %s65, %s67
    %p71 = scmp.eq.s32.totalorder %s10, 0
    %p72 = por %p70, %p71
    %p73 = scmp.ne.s32.totalorder %s65, %s67
    %p74 = scmp.eq.s32.totalorder %s15, 1
    %p75 = por %p73, %p74
    %p76 = scmp.ne.s32.totalorder %s67, %s68
    %p77 = scmp.eq.s32.totalorder %s15, 0
    %p78 = por %p76, %p77
    %p79 = scmp.ne.s32.totalorder %s67, %s68
    %p80 = scmp.eq.s32.totalorder %s16, 1
    %p81 = por %p79, %p80
    %p83 = scmp.ne.s32.totalorder %s68, %s82
    %p84 = scmp.eq.s32.totalorder %s16, 0
    %p85 = por %p83, %p84
    %s87 = sadd.s32 %s86, 1
    %p90 = scmp.eq.s32.totalorder %s10, 1
    %p91 = scmp.ne.s32.totalorder %s86, %s88
    %p92 = scmp.eq.s32.totalorder %s10, 0
    %p93 = por %p91, %p92
    %p94 = scmp.ne.s32.totalorder %s86, %s88
    %p95 = scmp.eq.s32.totalorder %s15, 1
    %p96 = por %p94, %p95
    %p97 = scmp.ne.s32.totalorder %s88, %s89
    %p98 = scmp.eq.s32.totalorder %s15, 0
    %p99 = por %p97, %p98
    %p100 = scmp.ne.s32.totalorder %s88, %s89
    %p101 = scmp.eq.s32.totalorder %s16, 1
    %p102 = por %p100, %p101
    %p104 = scmp.ne.s32.totalorder %s89, %s103
    %p105 = scmp.eq.s32.totalorder %s16, 0
    %p106 = por %p104, %p105
    %s107 = ssub.s32 %s10, %s17
    %p108 = scmp.eq.s32.totalorder %s107, 0
    %s110 = sadd.s32 %s109, 1
    %s111 = scalar_select %p108, %s109, %s110
    %p114 = pneg %p108
    %p115 = scmp.eq.s32.totalorder %s10, 1
    %p116 = por %p114, %p115
    %p117 = scmp.ne.s32.totalorder %s109, %s112
    %p118 = scmp.eq.s32.totalorder %s10, 0
    %p119 = por %p117, %p118
    %p120 = scmp.ne.s32.totalorder %s109, %s112
    %p121 = scmp.eq.s32.totalorder %s15, 1
    %p122 = por %p120, %p121
    %p123 = scmp.ne.s32.totalorder %s112, %s113
    %p124 = scmp.eq.s32.totalorder %s15, 0
    %p125 = por %p123, %p124
    %p126 = scmp.ne.s32.totalorder %s112, %s113
    %p127 = scmp.eq.s32.totalorder %s16, 1
    %p128 = por %p126, %p127
    %p130 = scmp.ne.s32.totalorder %s113, %s129
    %p131 = scmp.eq.s32.totalorder %s16, 0
    %p132 = por %p130, %p131
    %p133 = scmp.le.s32.totalorder 1, %s10
    %p134 = scmp.lt.s32.totalorder %s10, 3
    %p135 = pnand %p133, %p134
    %p136 = pneg %p135
    // Predicated region
    $region9: #{_lambda_.13} parent=5 // pred_check
      _
    $region10: #{_lambda_.13} parent=5 // pred_check_branch
      %138 = sbr.rel (%p135) target = $region12
    $region11: #{_lambda_.13} parent=5 // pred_region
      %s139 = ssub.s32 %s10, 1
      // Predicated region
      $region13: #{_lambda_.13} parent=11 // pred_check
        %p140 = pneg %p57
      $region14: #{_lambda_.13} parent=11 // pred_check_branch
        %142 = sbr.rel (%p140) target = $region16
      $region15: #{_lambda_.13} parent=11 // pred_region
        _
      $region16: #{_lambda_.13} parent=11 // pred_fallthru
        _
      // Predicated region
      $region17: #{_lambda_.13} parent=11 // pred_check
        %p143 = pneg %p78
      $region18: #{_lambda_.13} parent=11 // pred_check_branch
        %145 = sbr.rel (%p143) target = $region20
      $region19: #{_lambda_.13} parent=11 // pred_region
        _
      $region20: #{_lambda_.13} parent=11 // pred_fallthru
        _
      // Predicated region
      $region21: #{_lambda_.13} parent=11 // pred_check
        %p146 = pneg %p99
      $region22: #{_lambda_.13} parent=11 // pred_check_branch
        %148 = sbr.rel (%p146) target = $region24
      $region23: #{_lambda_.13} parent=11 // pred_region
        _
      $region24: #{_lambda_.13} parent=11 // pred_fallthru
        _
    $region12: #{_lambda_.13} parent=5 // pred_fallthru
      _
    %p149 = scmp.lt.s32.totalorder %s10, 2
    // Predicated region
    $region25: #{_lambda_.13} parent=5 // pred_check
      %p150 = pneg %p149
    $region26: #{_lambda_.13} parent=5 // pred_check_branch
      %152 = sbr.rel (%p150) target = $region28
    $region27: #{_lambda_.13} parent=5 // pred_region
      // Predicated region
      $region29: #{_lambda_.13} parent=27 // pred_check
        %p153 = pneg %p30
      $region30: #{_lambda_.13} parent=27 // pred_check_branch
        %155 = sbr.rel (%p153) target = $region32
      $region31: #{_lambda_.13} parent=27 // pred_region
        %s156 = smul.u32 32, %s10
        %p157 = scmp.lt.s32.totalorder %s156, 63
        %s158 = scalar_select %p157, %s156, 63
        %s159 = smul.addr %s158, 9
        %s160 = smul.addr %s159, 4
        %s161 = scalar_lea.vmem %s0, %s160
        %s162 = smul.u32 32, %s10
      $region32: #{_lambda_.13} parent=27 // pred_fallthru
        _
    $region28: #{_lambda_.13} parent=5 // pred_fallthru
      _
    %p163 = scmp.le.s32.totalorder 1, %s10
    %p164 = scmp.lt.s32.totalorder %s10, 3
    %p165 = pnand %p163, %p164
    %p166 = pneg %p165
    // Predicated region
    $region33: #{_lambda_.13} parent=5 // pred_check
      _
    $region34: #{_lambda_.13} parent=5 // pred_check_branch
      %168 = sbr.rel (%p165) target = $region36
    $region35: #{_lambda_.13} parent=5 // pred_region
      %s169 = ssub.s32 %s10, 1
      %s170 = smul.u32 32, %s15
      %p171 = scmp.lt.s32.totalorder %s170, 63
      %s172 = scalar_select %p171, %s170, 63
      %s173 = smul.addr %s172, 9
      %s174 = smul.addr %s173, 4
      %s175 = scalar_lea.vmem %s0, %s174
      %p176 = pneg %p36
      %p177 = pneg %p33
      %p178 = pneg %p57
      %p179 = pneg %p54
      %p180 = pneg %p78
      %p181 = pneg %p75
      %p182 = pneg %p99
      %p183 = pneg %p96
      %p184 = pneg %p125
      %p185 = pneg %p122
      %s186 = smul.u32 32, %s15
      %p187 = scmp.lt.s32.totalorder %s186, 63
      %s188 = scalar_select %p187, %s186, 63
      %s189 = smul.addr %s188, 8
      %s190 = scalar_lea.vmem %s4, %s189
      %s191 = smul.u32 32, %s15
      %p192 = scmp.lt.s32.totalorder %s191, 63
      %s193 = scalar_select %p192, %s191, 63
      %s194 = smul.addr %s193, 9
      %s195 = smul.addr %s194, 4
      %s196 = scalar_lea.vmem %s0, %s195
      %s197 = smul.u32 32, %s15
      %s198 = smul.u32 32, %s15
      %p199 = scmp.lt.s32.totalorder %s198, 63
      %s200 = scalar_select %p199, %s198, 63
      %s201 = smul.addr %s200, 8
      %s202 = scalar_lea.vmem %s4, %s201
      %s203 = smul.u32 32, %s15
      %v205 = vld [vmem:[%s196] sm:$0xff]
      %v206 = vld [vmem:[%s196 + $0x8] sm:$0xff]
      %v207 = vld [vmem:[%s196 + $0x10] sm:$0xff]
      %v208 = vld [vmem:[%s196 + $0x18] sm:$0xff]
      %v209 = vld [vmem:[%s196 + $0x20] sm:$0xf]
      %v210 = vld [vmem:[%s196 + $0x24] sm:$0xff]
      %v211 = vld [vmem:[%s196 + $0x2c] sm:$0xff]
      %v212 = vld [vmem:[%s196 + $0x34] sm:$0xff]
      %v213 = vld [vmem:[%s196 + $0x3c] sm:$0xff]
      %v214 = vld [vmem:[%s196 + $0x44] sm:$0xf]
      %v215 = vld [vmem:[%s196 + $0x48] sm:$0xff]
      %v216 = vld [vmem:[%s196 + $0x50] sm:$0xff]
      %v217 = vld [vmem:[%s196 + $0x58] sm:$0xff]
      %v218 = vld [vmem:[%s196 + $0x60] sm:$0xff]
      %v219 = vld [vmem:[%s196 + $0x68] sm:$0xf]
      %v220 = vld [vmem:[%s196 + $0x6c] sm:$0xff]
      %v221 = vld [vmem:[%s196 + $0x74] sm:$0xff]
      %v222 = vld [vmem:[%s196 + $0x7c] sm:$0xff]
      %v223 = vld [vmem:[%s196 + $0x84] sm:$0xff]
      %v224 = vld [vmem:[%s196 + $0x8c] sm:$0xf]
      %v225 = vld [vmem:[%s196 + $0x90] sm:$0xff]
      %v226 = vld [vmem:[%s196 + $0x98] sm:$0xff]
      %v227 = vld [vmem:[%s196 + $0xa0] sm:$0xff]
      %v228 = vld [vmem:[%s196 + $0xa8] sm:$0xff]
      %v229 = vld [vmem:[%s196 + $0xb0] sm:$0xf]
      %v230 = vld [vmem:[%s196 + $0xb4] sm:$0xff]
      %v231 = vld [vmem:[%s196 + $0xbc] sm:$0xff]
      %v232 = vld [vmem:[%s196 + $0xc4] sm:$0xff]
      %v233 = vld [vmem:[%s196 + $0xcc] sm:$0xff]
      %v234 = vld [vmem:[%s196 + $0xd4] sm:$0xf]
      %v235 = vld [vmem:[%s196 + $0xd8] sm:$0xff]
      %v236 = vld [vmem:[%s196 + $0xe0] sm:$0xff]
      %v237 = vld [vmem:[%s196 + $0xe8] sm:$0xff]
      %v238 = vld [vmem:[%s196 + $0xf0] sm:$0xff]
      %v239 = vld [vmem:[%s196 + $0xf8] sm:$0xf]
      %v240 = vld [vmem:[%s196 + $0xfc] sm:$0xff]
      %v241 = vld [vmem:[%s196 + $0x104] sm:$0xff]
      %v242 = vld [vmem:[%s196 + $0x10c] sm:$0xff]
      %v243 = vld [vmem:[%s196 + $0x114] sm:$0xff]
      %v244 = vld [vmem:[%s196 + $0x11c] sm:$0xf]
      %v245 = vld [vmem:[%s196 + $0x120] sm:$0xff]
      %v246 = vld [vmem:[%s196 + $0x128] sm:$0xff]
      %v247 = vld [vmem:[%s196 + $0x130] sm:$0xff]
      %v248 = vld [vmem:[%s196 + $0x138] sm:$0xff]
      %v249 = vld [vmem:[%s196 + $0x140] sm:$0xf]
      %v250 = vld [vmem:[%s196 + $0x144] sm:$0xff]
      %v251 = vld [vmem:[%s196 + $0x14c] sm:$0xff]
      %v252 = vld [vmem:[%s196 + $0x154] sm:$0xff]
      %v253 = vld [vmem:[%s196 + $0x15c] sm:$0xff]
      %v254 = vld [vmem:[%s196 + $0x164] sm:$0xf]
      %v255 = vld [vmem:[%s196 + $0x168] sm:$0xff]
      %v256 = vld [vmem:[%s196 + $0x170] sm:$0xff]
      %v257 = vld [vmem:[%s196 + $0x178] sm:$0xff]
      %v258 = vld [vmem:[%s196 + $0x180] sm:$0xff]
      %v259 = vld [vmem:[%s196 + $0x188] sm:$0xf]
      %v260 = vld [vmem:[%s196 + $0x18c] sm:$0xff]
      %v261 = vld [vmem:[%s196 + $0x194] sm:$0xff]
      %v262 = vld [vmem:[%s196 + $0x19c] sm:$0xff]
      %v263 = vld [vmem:[%s196 + $0x1a4] sm:$0xff]
      %v264 = vld [vmem:[%s196 + $0x1ac] sm:$0xf]
      %v265 = vld [vmem:[%s196 + $0x1b0] sm:$0xff]
      %v266 = vld [vmem:[%s196 + $0x1b8] sm:$0xff]
      %v267 = vld [vmem:[%s196 + $0x1c0] sm:$0xff]
      %v268 = vld [vmem:[%s196 + $0x1c8] sm:$0xff]
      %v269 = vld [vmem:[%s196 + $0x1d0] sm:$0xf]
      %v270 = vld [vmem:[%s196 + $0x1d4] sm:$0xff]
      %v271 = vld [vmem:[%s196 + $0x1dc] sm:$0xff]
      %v272 = vld [vmem:[%s196 + $0x1e4] sm:$0xff]
      %v273 = vld [vmem:[%s196 + $0x1ec] sm:$0xff]
      %v274 = vld [vmem:[%s196 + $0x1f4] sm:$0xf]
      %v275 = vld [vmem:[%s196 + $0x1f8] sm:$0xff]
      %v276 = vld [vmem:[%s196 + $0x200] sm:$0xff]
      %v277 = vld [vmem:[%s196 + $0x208] sm:$0xff]
      %v278 = vld [vmem:[%s196 + $0x210] sm:$0xff]
      %v279 = vld [vmem:[%s196 + $0x218] sm:$0xf]
      %v280 = vld [vmem:[%s196 + $0x21c] sm:$0xff]
      %v281 = vld [vmem:[%s196 + $0x224] sm:$0xff]
      %v282 = vld [vmem:[%s196 + $0x22c] sm:$0xff]
      %v283 = vld [vmem:[%s196 + $0x234] sm:$0xff]
      %v284 = vld [vmem:[%s196 + $0x23c] sm:$0xf]
      %v285 = vld [vmem:[%s196 + $0x240] sm:$0xff]
      %v286 = vld [vmem:[%s196 + $0x248] sm:$0xff]
      %v287 = vld [vmem:[%s196 + $0x250] sm:$0xff]
      %v288 = vld [vmem:[%s196 + $0x258] sm:$0xff]
      %v289 = vld [vmem:[%s196 + $0x260] sm:$0xf]
      %v290 = vld [vmem:[%s196 + $0x264] sm:$0xff]
      %v291 = vld [vmem:[%s196 + $0x26c] sm:$0xff]
      %v292 = vld [vmem:[%s196 + $0x274] sm:$0xff]
      %v293 = vld [vmem:[%s196 + $0x27c] sm:$0xff]
      %v294 = vld [vmem:[%s196 + $0x284] sm:$0xf]
      %v295 = vld [vmem:[%s196 + $0x288] sm:$0xff]
      %v296 = vld [vmem:[%s196 + $0x290] sm:$0xff]
      %v297 = vld [vmem:[%s196 + $0x298] sm:$0xff]
      %v298 = vld [vmem:[%s196 + $0x2a0] sm:$0xff]
      %v299 = vld [vmem:[%s196 + $0x2a8] sm:$0xf]
      %v300 = vld [vmem:[%s196 + $0x2ac] sm:$0xff]
      %v301 = vld [vmem:[%s196 + $0x2b4] sm:$0xff]
      %v302 = vld [vmem:[%s196 + $0x2bc] sm:$0xff]
      %v303 = vld [vmem:[%s196 + $0x2c4] sm:$0xff]
      %v304 = vld [vmem:[%s196 + $0x2cc] sm:$0xf]
      %v305 = vld [vmem:[%s196 + $0x2d0] sm:$0xff]
      %v306 = vld [vmem:[%s196 + $0x2d8] sm:$0xff]
      %v307 = vld [vmem:[%s196 + $0x2e0] sm:$0xff]
      %v308 = vld [vmem:[%s196 + $0x2e8] sm:$0xff]
      %v309 = vld [vmem:[%s196 + $0x2f0] sm:$0xf]
      %v310 = vld [vmem:[%s196 + $0x2f4] sm:$0xff]
      %v311 = vld [vmem:[%s196 + $0x2fc] sm:$0xff]
      %v312 = vld [vmem:[%s196 + $0x304] sm:$0xff]
      %v313 = vld [vmem:[%s196 + $0x30c] sm:$0xff]
      %v314 = vld [vmem:[%s196 + $0x314] sm:$0xf]
      %v315 = vld [vmem:[%s196 + $0x318] sm:$0xff]
      %v316 = vld [vmem:[%s196 + $0x320] sm:$0xff]
      %v317 = vld [vmem:[%s196 + $0x328] sm:$0xff]
      %v318 = vld [vmem:[%s196 + $0x330] sm:$0xff]
      %v319 = vld [vmem:[%s196 + $0x338] sm:$0xf]
      %v320 = vld [vmem:[%s196 + $0x33c] sm:$0xff]
      %v321 = vld [vmem:[%s196 + $0x344] sm:$0xff]
      %v322 = vld [vmem:[%s196 + $0x34c] sm:$0xff]
      %v323 = vld [vmem:[%s196 + $0x354] sm:$0xff]
      %v324 = vld [vmem:[%s196 + $0x35c] sm:$0xf]
      %v325 = vld [vmem:[%s196 + $0x360] sm:$0xff]
      %v326 = vld [vmem:[%s196 + $0x368] sm:$0xff]
      %v327 = vld [vmem:[%s196 + $0x370] sm:$0xff]
      %v328 = vld [vmem:[%s196 + $0x378] sm:$0xff]
      %v329 = vld [vmem:[%s196 + $0x380] sm:$0xf]
      %v330 = vld [vmem:[%s196 + $0x384] sm:$0xff]
      %v331 = vld [vmem:[%s196 + $0x38c] sm:$0xff]
      %v332 = vld [vmem:[%s196 + $0x394] sm:$0xff]
      %v333 = vld [vmem:[%s196 + $0x39c] sm:$0xff]
      %v334 = vld [vmem:[%s196 + $0x3a4] sm:$0xf]
      %v335 = vld [vmem:[%s196 + $0x3a8] sm:$0xff]
      %v336 = vld [vmem:[%s196 + $0x3b0] sm:$0xff]
      %v337 = vld [vmem:[%s196 + $0x3b8] sm:$0xff]
      %v338 = vld [vmem:[%s196 + $0x3c0] sm:$0xff]
      %v339 = vld [vmem:[%s196 + $0x3c8] sm:$0xf]
      %v340 = vld [vmem:[%s196 + $0x3cc] sm:$0xff]
      %v341 = vld [vmem:[%s196 + $0x3d4] sm:$0xff]
      %v342 = vld [vmem:[%s196 + $0x3dc] sm:$0xff]
      %v343 = vld [vmem:[%s196 + $0x3e4] sm:$0xff]
      %v344 = vld [vmem:[%s196 + $0x3ec] sm:$0xf]
      %v345 = vld [vmem:[%s196 + $0x3f0] sm:$0xff]
      %v346 = vld [vmem:[%s196 + $0x3f8] sm:$0xff]
      %v347 = vld [vmem:[%s196 + $0x400] sm:$0xff]
      %v348 = vld [vmem:[%s196 + $0x408] sm:$0xff]
      %v349 = vld [vmem:[%s196 + $0x410] sm:$0xf]
      %v350 = vld [vmem:[%s196 + $0x414] sm:$0xff]
      %v351 = vld [vmem:[%s196 + $0x41c] sm:$0xff]
      %v352 = vld [vmem:[%s196 + $0x424] sm:$0xff]
      %v353 = vld [vmem:[%s196 + $0x42c] sm:$0xff]
      %v354 = vld [vmem:[%s196 + $0x434] sm:$0xf]
      %v355 = vld [vmem:[%s196 + $0x438] sm:$0xff]
      %v356 = vld [vmem:[%s196 + $0x440] sm:$0xff]
      %v357 = vld [vmem:[%s196 + $0x448] sm:$0xff]
      %v358 = vld [vmem:[%s196 + $0x450] sm:$0xff]
      %v359 = vld [vmem:[%s196 + $0x458] sm:$0xf]
      %v360 = vld [vmem:[%s196 + $0x45c] sm:$0xff]
      %v361 = vld [vmem:[%s196 + $0x464] sm:$0xff]
      %v362 = vld [vmem:[%s196 + $0x46c] sm:$0xff]
      %v363 = vld [vmem:[%s196 + $0x474] sm:$0xff]
      %v364 = vld [vmem:[%s196 + $0x47c] sm:$0xf]
      %v365 = vld [vmem:[%s1] sm:$0xf]
      %v366 = vld [vmem:[%s1 + $0x4] sm:$0xf]
      %v367 = vld [vmem:[%s1 + $0x8] sm:$0xf]
      %v368 = vld [vmem:[%s1 + $0xc] sm:$0xf]
      %v369 = vld [vmem:[%s1 + $0x10] sm:$0xf]
      %v370 = vld [vmem:[%s1 + $0x14] sm:$0xf]
      %v371 = vld [vmem:[%s1 + $0x18] sm:$0xf]
      %v372 = vld [vmem:[%s1 + $0x1c] sm:$0xf]
      %v373 = vld [vmem:[%s1 + $0x20] sm:$0xf]
      %v374 = vld [vmem:[%s1 + $0x24] sm:$0xf]
      %v375 = vld [vmem:[%s1 + $0x28] sm:$0xf]
      %v376 = vld [vmem:[%s1 + $0x2c] sm:$0xf]
      %v377 = vld [vmem:[%s1 + $0x30] sm:$0xf]
      %v378 = vld [vmem:[%s1 + $0x34] sm:$0xf]
      %v379 = vld [vmem:[%s1 + $0x38] sm:$0xf]
      %v380 = vld [vmem:[%s1 + $0x3c] sm:$0xf]
      %v381 = vld [vmem:[%s1 + $0x40] sm:$0xf]
      %v382 = vld [vmem:[%s1 + $0x44] sm:$0xf]
      %v383 = vld [vmem:[%s1 + $0x48] sm:$0xf]
      %v384 = vld [vmem:[%s1 + $0x4c] sm:$0xf]
      %v385 = vld [vmem:[%s1 + $0x50] sm:$0xf]
      %v386 = vld [vmem:[%s1 + $0x54] sm:$0xf]
      %v387 = vld [vmem:[%s1 + $0x58] sm:$0xf]
      %v388 = vld [vmem:[%s1 + $0x5c] sm:$0xf]
      %v389 = vld [vmem:[%s1 + $0x60] sm:$0xf]
      %v390 = vld [vmem:[%s1 + $0x64] sm:$0xf]
      %v391 = vld [vmem:[%s1 + $0x68] sm:$0xf]
      %v392 = vld [vmem:[%s1 + $0x6c] sm:$0xf]
      %v393 = vld [vmem:[%s1 + $0x70] sm:$0xf]
      %v394 = vld [vmem:[%s1 + $0x74] sm:$0xf]
      %v395 = vld [vmem:[%s1 + $0x78] sm:$0xf]
      %v396 = vld [vmem:[%s1 + $0x7c] sm:$0xf]
      %v397 = vld [vmem:[%s1 + $0x80] sm:$0xf]
      %v398 = vld [vmem:[%s1 + $0x84] sm:$0xf]
      %v399 = vld [vmem:[%s1 + $0x88] sm:$0xf]
      %v400 = vld [vmem:[%s1 + $0x8c] sm:$0xf]
      %v401 = vld [vmem:[%s1 + $0x90] sm:$0xf]
      %v402 = vld [vmem:[%s1 + $0x94] sm:$0xf]
      %v403 = vld [vmem:[%s1 + $0x98] sm:$0xf]
      %v404 = vld [vmem:[%s1 + $0x9c] sm:$0xf]
      %v405 = vld [vmem:[%s1 + $0xa0] sm:$0xf]
      %v406 = vld [vmem:[%s1 + $0xa4] sm:$0xf]
      %v407 = vld [vmem:[%s1 + $0xa8] sm:$0xf]
      %v408 = vld [vmem:[%s1 + $0xac] sm:$0xf]
      %v409 = vld [vmem:[%s1 + $0xb0] sm:$0xf]
      %v410 = vld [vmem:[%s1 + $0xb4] sm:$0xf]
      %v411 = vld [vmem:[%s1 + $0xb8] sm:$0xf]
      %v412 = vld [vmem:[%s1 + $0xbc] sm:$0xf]
      %v413 = vld [vmem:[%s1 + $0xc0] sm:$0xf]
      %v414 = vld [vmem:[%s1 + $0xc4] sm:$0xf]
      %v415 = vld [vmem:[%s1 + $0xc8] sm:$0xf]
      %v416 = vld [vmem:[%s1 + $0xcc] sm:$0xf]
      %v417 = vld [vmem:[%s1 + $0xd0] sm:$0xf]
      %v418 = vld [vmem:[%s1 + $0xd4] sm:$0xf]
      %v419 = vld [vmem:[%s1 + $0xd8] sm:$0xf]
      %v420 = vld [vmem:[%s1 + $0xdc] sm:$0xf]
      %v421 = vld [vmem:[%s1 + $0xe0] sm:$0xf]
      %v422 = vld [vmem:[%s1 + $0xe4] sm:$0xf]
      %v423 = vld [vmem:[%s1 + $0xe8] sm:$0xf]
      %v424 = vld [vmem:[%s1 + $0xec] sm:$0xf]
      %v425 = vld [vmem:[%s1 + $0xf0] sm:$0xf]
      %v426 = vld [vmem:[%s1 + $0xf4] sm:$0xf]
      %v427 = vld [vmem:[%s1 + $0xf8] sm:$0xf]
      %v428 = vld [vmem:[%s1 + $0xfc] sm:$0xf]
      %v429 = vld [vmem:[%s1 + $0x100] sm:$0xf]
      %v430 = vld [vmem:[%s1 + $0x104] sm:$0xf]
      %v431 = vld [vmem:[%s1 + $0x108] sm:$0xf]
      %v432 = vld [vmem:[%s1 + $0x10c] sm:$0xf]
      %v433 = vld [vmem:[%s1 + $0x110] sm:$0xf]
      %v434 = vld [vmem:[%s1 + $0x114] sm:$0xf]
      %v435 = vld [vmem:[%s1 + $0x118] sm:$0xf]
      %v436 = vld [vmem:[%s1 + $0x11c] sm:$0xf]
      %v437 = vld [vmem:[%s1 + $0x120] sm:$0xf]
      %v438 = vld [vmem:[%s1 + $0x124] sm:$0xf]
      %v439 = vld [vmem:[%s1 + $0x128] sm:$0xf]
      %v440 = vld [vmem:[%s1 + $0x12c] sm:$0xf]
      %v441 = vld [vmem:[%s1 + $0x130] sm:$0xf]
      %v442 = vld [vmem:[%s1 + $0x134] sm:$0xf]
      %v443 = vld [vmem:[%s1 + $0x138] sm:$0xf]
      %v444 = vld [vmem:[%s1 + $0x13c] sm:$0xf]
      %v445 = vld [vmem:[%s1 + $0x140] sm:$0xf]
      %v446 = vld [vmem:[%s1 + $0x144] sm:$0xf]
      %v447 = vld [vmem:[%s1 + $0x148] sm:$0xf]
      %v448 = vld [vmem:[%s1 + $0x14c] sm:$0xf]
      %v449 = vld [vmem:[%s1 + $0x150] sm:$0xf]
      %v450 = vld [vmem:[%s1 + $0x154] sm:$0xf]
      %v451 = vld [vmem:[%s1 + $0x158] sm:$0xf]
      %v452 = vld [vmem:[%s1 + $0x15c] sm:$0xf]
      %v453 = vld [vmem:[%s1 + $0x160] sm:$0xf]
      %v454 = vld [vmem:[%s1 + $0x164] sm:$0xf]
      %v455 = vld [vmem:[%s1 + $0x168] sm:$0xf]
      %v456 = vld [vmem:[%s1 + $0x16c] sm:$0xf]
      %v457 = vld [vmem:[%s1 + $0x170] sm:$0xf]
      %v458 = vld [vmem:[%s1 + $0x174] sm:$0xf]
      %v459 = vld [vmem:[%s1 + $0x178] sm:$0xf]
      %v460 = vld [vmem:[%s1 + $0x17c] sm:$0xf]
      %v461 = vld [vmem:[%s1 + $0x180] sm:$0xf]
      %v462 = vld [vmem:[%s1 + $0x184] sm:$0xf]
      %v463 = vld [vmem:[%s1 + $0x188] sm:$0xf]
      %v464 = vld [vmem:[%s1 + $0x18c] sm:$0xf]
      %v465 = vld [vmem:[%s1 + $0x190] sm:$0xf]
      %v466 = vld [vmem:[%s1 + $0x194] sm:$0xf]
      %v467 = vld [vmem:[%s1 + $0x198] sm:$0xf]
      %v468 = vld [vmem:[%s1 + $0x19c] sm:$0xf]
      %v469 = vld [vmem:[%s1 + $0x1a0] sm:$0xf]
      %v470 = vld [vmem:[%s1 + $0x1a4] sm:$0xf]
      %v471 = vld [vmem:[%s1 + $0x1a8] sm:$0xf]
      %v472 = vld [vmem:[%s1 + $0x1ac] sm:$0xf]
      %v473 = vld [vmem:[%s1 + $0x1b0] sm:$0xf]
      %v474 = vld [vmem:[%s1 + $0x1b4] sm:$0xf]
      %v475 = vld [vmem:[%s1 + $0x1b8] sm:$0xf]
      %v476 = vld [vmem:[%s1 + $0x1bc] sm:$0xf]
      %v477 = vld [vmem:[%s1 + $0x1c0] sm:$0xf]
      %v478 = vld [vmem:[%s1 + $0x1c4] sm:$0xf]
      %v479 = vld [vmem:[%s1 + $0x1c8] sm:$0xf]
      %v480 = vld [vmem:[%s1 + $0x1cc] sm:$0xf]
      %v481 = vld [vmem:[%s1 + $0x1d0] sm:$0xf]
      %v482 = vld [vmem:[%s1 + $0x1d4] sm:$0xf]
      %v483 = vld [vmem:[%s1 + $0x1d8] sm:$0xf]
      %v484 = vld [vmem:[%s1 + $0x1dc] sm:$0xf]
      %v485 = vld [vmem:[%s1 + $0x1e0] sm:$0xf]
      %v486 = vld [vmem:[%s1 + $0x1e4] sm:$0xf]
      %v487 = vld [vmem:[%s1 + $0x1e8] sm:$0xf]
      %v488 = vld [vmem:[%s1 + $0x1ec] sm:$0xf]
      %v489 = vld [vmem:[%s1 + $0x1f0] sm:$0xf]
      %v490 = vld [vmem:[%s1 + $0x1f4] sm:$0xf]
      %v491 = vld [vmem:[%s1 + $0x1f8] sm:$0xf]
      %v492 = vld [vmem:[%s1 + $0x1fc] sm:$0xf]
      %v493 = vld [vmem:[%s1 + $0x200] sm:$0xf]
      %v494 = vld [vmem:[%s1 + $0x204] sm:$0xf]
      %v495 = vld [vmem:[%s1 + $0x208] sm:$0xf]
      %v496 = vld [vmem:[%s1 + $0x20c] sm:$0xf]
      %v497 = vld [vmem:[%s1 + $0x210] sm:$0xf]
      %v498 = vld [vmem:[%s1 + $0x214] sm:$0xf]
      %v499 = vld [vmem:[%s1 + $0x218] sm:$0xf]
      %v500 = vld [vmem:[%s1 + $0x21c] sm:$0xf]
      %v501 = vld [vmem:[%s1 + $0x220] sm:$0xf]
      %v502 = vld [vmem:[%s1 + $0x224] sm:$0xf]
      %v503 = vld [vmem:[%s1 + $0x228] sm:$0xf]
      %v504 = vld [vmem:[%s1 + $0x22c] sm:$0xf]
      %v505 = vld [vmem:[%s1 + $0x230] sm:$0xf]
      %v506 = vld [vmem:[%s1 + $0x234] sm:$0xf]
      %v507 = vld [vmem:[%s1 + $0x238] sm:$0xf]
      %v508 = vld [vmem:[%s1 + $0x23c] sm:$0xf]
      %v669 = vunpack.c.l.b16 %v205
      %v670 = vunpack.c.h.b16 %v205
      %v671 = vunpack.c.l.b16 %v206
      %v672 = vunpack.c.h.b16 %v206
      %v673 = vunpack.c.l.b16 %v207
      %v674 = vunpack.c.h.b16 %v207
      %v675 = vunpack.c.l.b16 %v208
      %v676 = vunpack.c.h.b16 %v208
      %v677 = vunpack.c.l.b16 %v209
      %v678 = vunpack.c.l.b16 %v210
      %v679 = vunpack.c.h.b16 %v210
      %v680 = vunpack.c.l.b16 %v211
      %v681 = vunpack.c.h.b16 %v211
      %v682 = vunpack.c.l.b16 %v212
      %v683 = vunpack.c.h.b16 %v212
      %v684 = vunpack.c.l.b16 %v213
      %v685 = vunpack.c.h.b16 %v213
      %v686 = vunpack.c.l.b16 %v214
      %v687 = vunpack.c.l.b16 %v215
      %v688 = vunpack.c.h.b16 %v215
      %v689 = vunpack.c.l.b16 %v216
      %v690 = vunpack.c.h.b16 %v216
      %v691 = vunpack.c.l.b16 %v217
      %v692 = vunpack.c.h.b16 %v217
      %v693 = vunpack.c.l.b16 %v218
      %v694 = vunpack.c.h.b16 %v218
      %v695 = vunpack.c.l.b16 %v219
      %v696 = vunpack.c.l.b16 %v220
      %v697 = vunpack.c.h.b16 %v220
      %v698 = vunpack.c.l.b16 %v221
      %v699 = vunpack.c.h.b16 %v221
      %v700 = vunpack.c.l.b16 %v222
      %v701 = vunpack.c.h.b16 %v222
      %v702 = vunpack.c.l.b16 %v223
      %v703 = vunpack.c.h.b16 %v223
      %v704 = vunpack.c.l.b16 %v224
      %v705 = vunpack.c.l.b16 %v225
      %v706 = vunpack.c.h.b16 %v225
      %v707 = vunpack.c.l.b16 %v226
      %v708 = vunpack.c.h.b16 %v226
      %v709 = vunpack.c.l.b16 %v227
      %v710 = vunpack.c.h.b16 %v227
      %v711 = vunpack.c.l.b16 %v228
      %v712 = vunpack.c.h.b16 %v228
      %v713 = vunpack.c.l.b16 %v229
      %v714 = vunpack.c.l.b16 %v230
      %v715 = vunpack.c.h.b16 %v230
      %v716 = vunpack.c.l.b16 %v231
      %v717 = vunpack.c.h.b16 %v231
      %v718 = vunpack.c.l.b16 %v232
      %v719 = vunpack.c.h.b16 %v232
      %v720 = vunpack.c.l.b16 %v233
      %v721 = vunpack.c.h.b16 %v233
      %v722 = vunpack.c.l.b16 %v234
      %v723 = vunpack.c.l.b16 %v235
      %v724 = vunpack.c.h.b16 %v235
      %v725 = vunpack.c.l.b16 %v236
      %v726 = vunpack.c.h.b16 %v236
      %v727 = vunpack.c.l.b16 %v237
      %v728 = vunpack.c.h.b16 %v237
      %v729 = vunpack.c.l.b16 %v238
      %v730 = vunpack.c.h.b16 %v238
      %v731 = vunpack.c.l.b16 %v239
      %v732 = vunpack.c.l.b16 %v240
      %v733 = vunpack.c.h.b16 %v240
      %v734 = vunpack.c.l.b16 %v241
      %v735 = vunpack.c.h.b16 %v241
      %v736 = vunpack.c.l.b16 %v242
      %v737 = vunpack.c.h.b16 %v242
      %v738 = vunpack.c.l.b16 %v243
      %v739 = vunpack.c.h.b16 %v243
      %v740 = vunpack.c.l.b16 %v244
      %v741 = vunpack.c.l.b16 %v245
      %v742 = vunpack.c.h.b16 %v245
      %v743 = vunpack.c.l.b16 %v246
      %v744 = vunpack.c.h.b16 %v246
      %v745 = vunpack.c.l.b16 %v247
      %v746 = vunpack.c.h.b16 %v247
      %v747 = vunpack.c.l.b16 %v248
      %v748 = vunpack.c.h.b16 %v248
      %v749 = vunpack.c.l.b16 %v249
      %v750 = vunpack.c.l.b16 %v250
      %v751 = vunpack.c.h.b16 %v250
      %v752 = vunpack.c.l.b16 %v251
      %v753 = vunpack.c.h.b16 %v251
      %v754 = vunpack.c.l.b16 %v252
      %v755 = vunpack.c.h.b16 %v252
      %v756 = vunpack.c.l.b16 %v253
      %v757 = vunpack.c.h.b16 %v253
      %v758 = vunpack.c.l.b16 %v254
      %v759 = vunpack.c.l.b16 %v255
      %v760 = vunpack.c.h.b16 %v255
      %v761 = vunpack.c.l.b16 %v256
      %v762 = vunpack.c.h.b16 %v256
      %v763 = vunpack.c.l.b16 %v257
      %v764 = vunpack.c.h.b16 %v257
      %v765 = vunpack.c.l.b16 %v258
      %v766 = vunpack.c.h.b16 %v258
      %v767 = vunpack.c.l.b16 %v259
      %v768 = vunpack.c.l.b16 %v260
      %v769 = vunpack.c.h.b16 %v260
      %v770 = vunpack.c.l.b16 %v261
      %v771 = vunpack.c.h.b16 %v261
      %v772 = vunpack.c.l.b16 %v262
      %v773 = vunpack.c.h.b16 %v262
      %v774 = vunpack.c.l.b16 %v263
      %v775 = vunpack.c.h.b16 %v263
      %v776 = vunpack.c.l.b16 %v264
      %v777 = vunpack.c.l.b16 %v265
      %v778 = vunpack.c.h.b16 %v265
      %v779 = vunpack.c.l.b16 %v266
      %v780 = vunpack.c.h.b16 %v266
      %v781 = vunpack.c.l.b16 %v267
      %v782 = vunpack.c.h.b16 %v267
      %v783 = vunpack.c.l.b16 %v268
      %v784 = vunpack.c.h.b16 %v268
      %v785 = vunpack.c.l.b16 %v269
      %v786 = vunpack.c.l.b16 %v270
      %v787 = vunpack.c.h.b16 %v270
      %v788 = vunpack.c.l.b16 %v271
      %v789 = vunpack.c.h.b16 %v271
      %v790 = vunpack.c.l.b16 %v272
      %v791 = vunpack.c.h.b16 %v272
      %v792 = vunpack.c.l.b16 %v273
      %v793 = vunpack.c.h.b16 %v273
      %v794 = vunpack.c.l.b16 %v274
      %v795 = vunpack.c.l.b16 %v275
      %v796 = vunpack.c.h.b16 %v275
      %v797 = vunpack.c.l.b16 %v276
      %v798 = vunpack.c.h.b16 %v276
      %v799 = vunpack.c.l.b16 %v277
      %v800 = vunpack.c.h.b16 %v277
      %v801 = vunpack.c.l.b16 %v278
      %v802 = vunpack.c.h.b16 %v278
      %v803 = vunpack.c.l.b16 %v279
      %v804 = vunpack.c.l.b16 %v280
      %v805 = vunpack.c.h.b16 %v280
      %v806 = vunpack.c.l.b16 %v281
      %v807 = vunpack.c.h.b16 %v281
      %v808 = vunpack.c.l.b16 %v282
      %v809 = vunpack.c.h.b16 %v282
      %v810 = vunpack.c.l.b16 %v283
      %v811 = vunpack.c.h.b16 %v283
      %v812 = vunpack.c.l.b16 %v284
      %v813 = vunpack.c.l.b16 %v285
      %v814 = vunpack.c.h.b16 %v285
      %v815 = vunpack.c.l.b16 %v286
      %v816 = vunpack.c.h.b16 %v286
      %v817 = vunpack.c.l.b16 %v287
      %v818 = vunpack.c.h.b16 %v287
      %v819 = vunpack.c.l.b16 %v288
      %v820 = vunpack.c.h.b16 %v288
      %v821 = vunpack.c.l.b16 %v289
      %v822 = vunpack.c.l.b16 %v290
      %v823 = vunpack.c.h.b16 %v290
      %v824 = vunpack.c.l.b16 %v291
      %v825 = vunpack.c.h.b16 %v291
      %v826 = vunpack.c.l.b16 %v292
      %v827 = vunpack.c.h.b16 %v292
      %v828 = vunpack.c.l.b16 %v293
      %v829 = vunpack.c.h.b16 %v293
      %v830 = vunpack.c.l.b16 %v294
      %v831 = vunpack.c.l.b16 %v295
      %v832 = vunpack.c.h.b16 %v295
      %v833 = vunpack.c.l.b16 %v296
      %v834 = vunpack.c.h.b16 %v296
      %v835 = vunpack.c.l.b16 %v297
      %v836 = vunpack.c.h.b16 %v297
      %v837 = vunpack.c.l.b16 %v298
      %v838 = vunpack.c.h.b16 %v298
      %v839 = vunpack.c.l.b16 %v299
      %v840 = vunpack.c.l.b16 %v300
      %v841 = vunpack.c.h.b16 %v300
      %v842 = vunpack.c.l.b16 %v301
      %v843 = vunpack.c.h.b16 %v301
      %v844 = vunpack.c.l.b16 %v302
      %v845 = vunpack.c.h.b16 %v302
      %v846 = vunpack.c.l.b16 %v303
      %v847 = vunpack.c.h.b16 %v303
      %v848 = vunpack.c.l.b16 %v304
      %v849 = vunpack.c.l.b16 %v305
      %v850 = vunpack.c.h.b16 %v305
      %v851 = vunpack.c.l.b16 %v306
      %v852 = vunpack.c.h.b16 %v306
      %v853 = vunpack.c.l.b16 %v307
      %v854 = vunpack.c.h.b16 %v307
      %v855 = vunpack.c.l.b16 %v308
      %v856 = vunpack.c.h.b16 %v308
      %v857 = vunpack.c.l.b16 %v309
      %v858 = vunpack.c.l.b16 %v310
      %v859 = vunpack.c.h.b16 %v310
      %v860 = vunpack.c.l.b16 %v311
      %v861 = vunpack.c.h.b16 %v311
      %v862 = vunpack.c.l.b16 %v312
      %v863 = vunpack.c.h.b16 %v312
      %v864 = vunpack.c.l.b16 %v313
      %v865 = vunpack.c.h.b16 %v313
      %v866 = vunpack.c.l.b16 %v314
      %v867 = vunpack.c.l.b16 %v315
      %v868 = vunpack.c.h.b16 %v315
      %v869 = vunpack.c.l.b16 %v316
      %v870 = vunpack.c.h.b16 %v316
      %v871 = vunpack.c.l.b16 %v317
      %v872 = vunpack.c.h.b16 %v317
      %v873 = vunpack.c.l.b16 %v318
      %v874 = vunpack.c.h.b16 %v318
      %v875 = vunpack.c.l.b16 %v319
      %v876 = vunpack.c.l.b16 %v320
      %v877 = vunpack.c.h.b16 %v320
      %v878 = vunpack.c.l.b16 %v321
      %v879 = vunpack.c.h.b16 %v321
      %v880 = vunpack.c.l.b16 %v322
      %v881 = vunpack.c.h.b16 %v322
      %v882 = vunpack.c.l.b16 %v323
      %v883 = vunpack.c.h.b16 %v323
      %v884 = vunpack.c.l.b16 %v324
      %v885 = vunpack.c.l.b16 %v325
      %v886 = vunpack.c.h.b16 %v325
      %v887 = vunpack.c.l.b16 %v326
      %v888 = vunpack.c.h.b16 %v326
      %v889 = vunpack.c.l.b16 %v327
      %v890 = vunpack.c.h.b16 %v327
      %v891 = vunpack.c.l.b16 %v328
      %v892 = vunpack.c.h.b16 %v328
      %v893 = vunpack.c.l.b16 %v329
      %v894 = vunpack.c.l.b16 %v330
      %v895 = vunpack.c.h.b16 %v330
      %v896 = vunpack.c.l.b16 %v331
      %v897 = vunpack.c.h.b16 %v331
      %v898 = vunpack.c.l.b16 %v332
      %v899 = vunpack.c.h.b16 %v332
      %v900 = vunpack.c.l.b16 %v333
      %v901 = vunpack.c.h.b16 %v333
      %v902 = vunpack.c.l.b16 %v334
      %v903 = vunpack.c.l.b16 %v335
      %v904 = vunpack.c.h.b16 %v335
      %v905 = vunpack.c.l.b16 %v336
      %v906 = vunpack.c.h.b16 %v336
      %v907 = vunpack.c.l.b16 %v337
      %v908 = vunpack.c.h.b16 %v337
      %v909 = vunpack.c.l.b16 %v338
      %v910 = vunpack.c.h.b16 %v338
      %v911 = vunpack.c.l.b16 %v339
      %v912 = vunpack.c.l.b16 %v340
      %v913 = vunpack.c.h.b16 %v340
      %v914 = vunpack.c.l.b16 %v341
      %v915 = vunpack.c.h.b16 %v341
      %v916 = vunpack.c.l.b16 %v342
      %v917 = vunpack.c.h.b16 %v342
      %v918 = vunpack.c.l.b16 %v343
      %v919 = vunpack.c.h.b16 %v343
      %v920 = vunpack.c.l.b16 %v344
      %v921 = vunpack.c.l.b16 %v345
      %v922 = vunpack.c.h.b16 %v345
      %v923 = vunpack.c.l.b16 %v346
      %v924 = vunpack.c.h.b16 %v346
      %v925 = vunpack.c.l.b16 %v347
      %v926 = vunpack.c.h.b16 %v347
      %v927 = vunpack.c.l.b16 %v348
      %v928 = vunpack.c.h.b16 %v348
      %v929 = vunpack.c.l.b16 %v349
      %v930 = vunpack.c.l.b16 %v350
      %v931 = vunpack.c.h.b16 %v350
      %v932 = vunpack.c.l.b16 %v351
      %v933 = vunpack.c.h.b16 %v351
      %v934 = vunpack.c.l.b16 %v352
      %v935 = vunpack.c.h.b16 %v352
      %v936 = vunpack.c.l.b16 %v353
      %v937 = vunpack.c.h.b16 %v353
      %v938 = vunpack.c.l.b16 %v354
      %v939 = vunpack.c.l.b16 %v355
      %v940 = vunpack.c.h.b16 %v355
      %v941 = vunpack.c.l.b16 %v356
      %v942 = vunpack.c.h.b16 %v356
      %v943 = vunpack.c.l.b16 %v357
      %v944 = vunpack.c.h.b16 %v357
      %v945 = vunpack.c.l.b16 %v358
      %v946 = vunpack.c.h.b16 %v358
      %v947 = vunpack.c.l.b16 %v359
      %v948 = vunpack.c.l.b16 %v360
      %v949 = vunpack.c.h.b16 %v360
      %v950 = vunpack.c.l.b16 %v361
      %v951 = vunpack.c.h.b16 %v361
      %v952 = vunpack.c.l.b16 %v362
      %v953 = vunpack.c.h.b16 %v362
      %v954 = vunpack.c.l.b16 %v363
      %v955 = vunpack.c.h.b16 %v363
      %v956 = vunpack.c.l.b16 %v364
      %v957 = vpack.c.b16 %v678, %v669
      %v958 = vpack.c.b16 %v679, %v670
      %v959 = vpack.c.b16 %v680, %v671
      %v960 = vpack.c.b16 %v681, %v672
      %v961 = vpack.c.b16 %v682, %v673
      %v962 = vpack.c.b16 %v683, %v674
      %v963 = vpack.c.b16 %v684, %v675
      %v964 = vpack.c.b16 %v685, %v676
      %v965 = vpack.c.b16 %v686, %v677
      %v966 = vpack.c.b16 %v696, %v687
      %v967 = vpack.c.b16 %v697, %v688
      %v968 = vpack.c.b16 %v698, %v689
      %v969 = vpack.c.b16 %v699, %v690
      %v970 = vpack.c.b16 %v700, %v691
      %v971 = vpack.c.b16 %v701, %v692
      %v972 = vpack.c.b16 %v702, %v693
      %v973 = vpack.c.b16 %v703, %v694
      %v974 = vpack.c.b16 %v704, %v695
      %v975 = vpack.c.b16 %v714, %v705
      %v976 = vpack.c.b16 %v715, %v706
      %v977 = vpack.c.b16 %v716, %v707
      %v978 = vpack.c.b16 %v717, %v708
      %v979 = vpack.c.b16 %v718, %v709
      %v980 = vpack.c.b16 %v719, %v710
      %v981 = vpack.c.b16 %v720, %v711
      %v982 = vpack.c.b16 %v721, %v712
      %v983 = vpack.c.b16 %v722, %v713
      %v984 = vpack.c.b16 %v732, %v723
      %v985 = vpack.c.b16 %v733, %v724
      %v986 = vpack.c.b16 %v734, %v725
      %v987 = vpack.c.b16 %v735, %v726
      %v988 = vpack.c.b16 %v736, %v727
      %v989 = vpack.c.b16 %v737, %v728
      %v990 = vpack.c.b16 %v738, %v729
      %v991 = vpack.c.b16 %v739, %v730
      %v992 = vpack.c.b16 %v740, %v731
      %v993 = vpack.c.b16 %v750, %v741
      %v994 = vpack.c.b16 %v751, %v742
      %v995 = vpack.c.b16 %v752, %v743
      %v996 = vpack.c.b16 %v753, %v744
      %v997 = vpack.c.b16 %v754, %v745
      %v998 = vpack.c.b16 %v755, %v746
      %v999 = vpack.c.b16 %v756, %v747
      %v1000 = vpack.c.b16 %v757, %v748
      %v1001 = vpack.c.b16 %v758, %v749
      %v1002 = vpack.c.b16 %v768, %v759
      %v1003 = vpack.c.b16 %v769, %v760
      %v1004 = vpack.c.b16 %v770, %v761
      %v1005 = vpack.c.b16 %v771, %v762
      %v1006 = vpack.c.b16 %v772, %v763
      %v1007 = vpack.c.b16 %v773, %v764
      %v1008 = vpack.c.b16 %v774, %v765
      %v1009 = vpack.c.b16 %v775, %v766
      %v1010 = vpack.c.b16 %v776, %v767
      %v1011 = vpack.c.b16 %v786, %v777
      %v1012 = vpack.c.b16 %v787, %v778
      %v1013 = vpack.c.b16 %v788, %v779
      %v1014 = vpack.c.b16 %v789, %v780
      %v1015 = vpack.c.b16 %v790, %v781
      %v1016 = vpack.c.b16 %v791, %v782
      %v1017 = vpack.c.b16 %v792, %v783
      %v1018 = vpack.c.b16 %v793, %v784
      %v1019 = vpack.c.b16 %v794, %v785
      %v1020 = vpack.c.b16 %v804, %v795
      %v1021 = vpack.c.b16 %v805, %v796
      %v1022 = vpack.c.b16 %v806, %v797
      %v1023 = vpack.c.b16 %v807, %v798
      %v1024 = vpack.c.b16 %v808, %v799
      %v1025 = vpack.c.b16 %v809, %v800
      %v1026 = vpack.c.b16 %v810, %v801
      %v1027 = vpack.c.b16 %v811, %v802
      %v1028 = vpack.c.b16 %v812, %v803
      %v1029 = vpack.c.b16 %v822, %v813
      %v1030 = vpack.c.b16 %v823, %v814
      %v1031 = vpack.c.b16 %v824, %v815
      %v1032 = vpack.c.b16 %v825, %v816
      %v1033 = vpack.c.b16 %v826, %v817
      %v1034 = vpack.c.b16 %v827, %v818
      %v1035 = vpack.c.b16 %v828, %v819
      %v1036 = vpack.c.b16 %v829, %v820
      %v1037 = vpack.c.b16 %v830, %v821
      %v1038 = vpack.c.b16 %v840, %v831
      %v1039 = vpack.c.b16 %v841, %v832
      %v1040 = vpack.c.b16 %v842, %v833
      %v1041 = vpack.c.b16 %v843, %v834
      %v1042 = vpack.c.b16 %v844, %v835
      %v1043 = vpack.c.b16 %v845, %v836
      %v1044 = vpack.c.b16 %v846, %v837
      %v1045 = vpack.c.b16 %v847, %v838
      %v1046 = vpack.c.b16 %v848, %v839
      %v1047 = vpack.c.b16 %v858, %v849
      %v1048 = vpack.c.b16 %v859, %v850
      %v1049 = vpack.c.b16 %v860, %v851
      %v1050 = vpack.c.b16 %v861, %v852
      %v1051 = vpack.c.b16 %v862, %v853
      %v1052 = vpack.c.b16 %v863, %v854
      %v1053 = vpack.c.b16 %v864, %v855
      %v1054 = vpack.c.b16 %v865, %v856
      %v1055 = vpack.c.b16 %v866, %v857
      %v1056 = vpack.c.b16 %v876, %v867
      %v1057 = vpack.c.b16 %v877, %v868
      %v1058 = vpack.c.b16 %v878, %v869
      %v1059 = vpack.c.b16 %v879, %v870
      %v1060 = vpack.c.b16 %v880, %v871
      %v1061 = vpack.c.b16 %v881, %v872
      %v1062 = vpack.c.b16 %v882, %v873
      %v1063 = vpack.c.b16 %v883, %v874
      %v1064 = vpack.c.b16 %v884, %v875
      %v1065 = vpack.c.b16 %v894, %v885
      %v1066 = vpack.c.b16 %v895, %v886
      %v1067 = vpack.c.b16 %v896, %v887
      %v1068 = vpack.c.b16 %v897, %v888
      %v1069 = vpack.c.b16 %v898, %v889
      %v1070 = vpack.c.b16 %v899, %v890
      %v1071 = vpack.c.b16 %v900, %v891
      %v1072 = vpack.c.b16 %v901, %v892
      %v1073 = vpack.c.b16 %v902, %v893
      %v1074 = vpack.c.b16 %v912, %v903
      %v1075 = vpack.c.b16 %v913, %v904
      %v1076 = vpack.c.b16 %v914, %v905
      %v1077 = vpack.c.b16 %v915, %v906
      %v1078 = vpack.c.b16 %v916, %v907
      %v1079 = vpack.c.b16 %v917, %v908
      %v1080 = vpack.c.b16 %v918, %v909
      %v1081 = vpack.c.b16 %v919, %v910
      %v1082 = vpack.c.b16 %v920, %v911
      %v1083 = vpack.c.b16 %v930, %v921
      %v1084 = vpack.c.b16 %v931, %v922
      %v1085 = vpack.c.b16 %v932, %v923
      %v1086 = vpack.c.b16 %v933, %v924
      %v1087 = vpack.c.b16 %v934, %v925
      %v1088 = vpack.c.b16 %v935, %v926
      %v1089 = vpack.c.b16 %v936, %v927
      %v1090 = vpack.c.b16 %v937, %v928
      %v1091 = vpack.c.b16 %v938, %v929
      %v1092 = vpack.c.b16 %v948, %v939
      %v1093 = vpack.c.b16 %v949, %v940
      %v1094 = vpack.c.b16 %v950, %v941
      %v1095 = vpack.c.b16 %v951, %v942
      %v1096 = vpack.c.b16 %v952, %v943
      %v1097 = vpack.c.b16 %v953, %v944
      %v1098 = vpack.c.b16 %v954, %v945
      %v1099 = vpack.c.b16 %v955, %v946
      %v1100 = vpack.c.b16 %v956, %v947
      %v1389 = vunpack.c.l.b16 %v365
      %v1390 = vunpack.c.l.b16 %v366
      %v1391 = vunpack.c.l.b16 %v367
      %v1392 = vunpack.c.l.b16 %v368
      %v1393 = vunpack.c.l.b16 %v369
      %v1394 = vunpack.c.l.b16 %v370
      %v1395 = vunpack.c.l.b16 %v371
      %v1396 = vunpack.c.l.b16 %v372
      %v1397 = vunpack.c.l.b16 %v373
      %v1398 = vunpack.c.l.b16 %v374
      %v1399 = vunpack.c.l.b16 %v375
      %v1400 = vunpack.c.l.b16 %v376
      %v1401 = vunpack.c.l.b16 %v377
      %v1402 = vunpack.c.l.b16 %v378
      %v1403 = vunpack.c.l.b16 %v379
      %v1404 = vunpack.c.l.b16 %v380
      %v1405 = vunpack.c.l.b16 %v381
      %v1406 = vunpack.c.l.b16 %v382
      %v1407 = vunpack.c.l.b16 %v383
      %v1408 = vunpack.c.l.b16 %v384
      %v1409 = vunpack.c.l.b16 %v385
      %v1410 = vunpack.c.l.b16 %v386
      %v1411 = vunpack.c.l.b16 %v387
      %v1412 = vunpack.c.l.b16 %v388
      %v1413 = vunpack.c.l.b16 %v389
      %v1414 = vunpack.c.l.b16 %v390
      %v1415 = vunpack.c.l.b16 %v391
      %v1416 = vunpack.c.l.b16 %v392
      %v1417 = vunpack.c.l.b16 %v393
      %v1418 = vunpack.c.l.b16 %v394
      %v1419 = vunpack.c.l.b16 %v395
      %v1420 = vunpack.c.l.b16 %v396
      %v1421 = vunpack.c.l.b16 %v397
      %v1422 = vunpack.c.l.b16 %v398
      %v1423 = vunpack.c.l.b16 %v399
      %v1424 = vunpack.c.l.b16 %v400
      %v1425 = vunpack.c.l.b16 %v401
      %v1426 = vunpack.c.l.b16 %v402
      %v1427 = vunpack.c.l.b16 %v403
      %v1428 = vunpack.c.l.b16 %v404
      %v1429 = vunpack.c.l.b16 %v405
      %v1430 = vunpack.c.l.b16 %v406
      %v1431 = vunpack.c.l.b16 %v407
      %v1432 = vunpack.c.l.b16 %v408
      %v1433 = vunpack.c.l.b16 %v409
      %v1434 = vunpack.c.l.b16 %v410
      %v1435 = vunpack.c.l.b16 %v411
      %v1436 = vunpack.c.l.b16 %v412
      %v1437 = vunpack.c.l.b16 %v413
      %v1438 = vunpack.c.l.b16 %v414
      %v1439 = vunpack.c.l.b16 %v415
      %v1440 = vunpack.c.l.b16 %v416
      %v1441 = vunpack.c.l.b16 %v417
      %v1442 = vunpack.c.l.b16 %v418
      %v1443 = vunpack.c.l.b16 %v419
      %v1444 = vunpack.c.l.b16 %v420
      %v1445 = vunpack.c.l.b16 %v421
      %v1446 = vunpack.c.l.b16 %v422
      %v1447 = vunpack.c.l.b16 %v423
      %v1448 = vunpack.c.l.b16 %v424
      %v1449 = vunpack.c.l.b16 %v425
      %v1450 = vunpack.c.l.b16 %v426
      %v1451 = vunpack.c.l.b16 %v427
      %v1452 = vunpack.c.l.b16 %v428
      %v1453 = vunpack.c.l.b16 %v429
      %v1454 = vunpack.c.l.b16 %v430
      %v1455 = vunpack.c.l.b16 %v431
      %v1456 = vunpack.c.l.b16 %v432
      %v1457 = vunpack.c.l.b16 %v433
      %v1458 = vunpack.c.l.b16 %v434
      %v1459 = vunpack.c.l.b16 %v435
      %v1460 = vunpack.c.l.b16 %v436
      %v1461 = vunpack.c.l.b16 %v437
      %v1462 = vunpack.c.l.b16 %v438
      %v1463 = vunpack.c.l.b16 %v439
      %v1464 = vunpack.c.l.b16 %v440
      %v1465 = vunpack.c.l.b16 %v441
      %v1466 = vunpack.c.l.b16 %v442
      %v1467 = vunpack.c.l.b16 %v443
      %v1468 = vunpack.c.l.b16 %v444
      %v1469 = vunpack.c.l.b16 %v445
      %v1470 = vunpack.c.l.b16 %v446
      %v1471 = vunpack.c.l.b16 %v447
      %v1472 = vunpack.c.l.b16 %v448
      %v1473 = vunpack.c.l.b16 %v449
      %v1474 = vunpack.c.l.b16 %v450
      %v1475 = vunpack.c.l.b16 %v451
      %v1476 = vunpack.c.l.b16 %v452
      %v1477 = vunpack.c.l.b16 %v453
      %v1478 = vunpack.c.l.b16 %v454
      %v1479 = vunpack.c.l.b16 %v455
      %v1480 = vunpack.c.l.b16 %v456
      %v1481 = vunpack.c.l.b16 %v457
      %v1482 = vunpack.c.l.b16 %v458
      %v1483 = vunpack.c.l.b16 %v459
      %v1484 = vunpack.c.l.b16 %v460
      %v1485 = vunpack.c.l.b16 %v461
      %v1486 = vunpack.c.l.b16 %v462
      %v1487 = vunpack.c.l.b16 %v463
      %v1488 = vunpack.c.l.b16 %v464
      %v1489 = vunpack.c.l.b16 %v465
      %v1490 = vunpack.c.l.b16 %v466
      %v1491 = vunpack.c.l.b16 %v467
      %v1492 = vunpack.c.l.b16 %v468
      %v1493 = vunpack.c.l.b16 %v469
      %v1494 = vunpack.c.l.b16 %v470
      %v1495 = vunpack.c.l.b16 %v471
      %v1496 = vunpack.c.l.b16 %v472
      %v1497 = vunpack.c.l.b16 %v473
      %v1498 = vunpack.c.l.b16 %v474
      %v1499 = vunpack.c.l.b16 %v475
      %v1500 = vunpack.c.l.b16 %v476
      %v1501 = vunpack.c.l.b16 %v477
      %v1502 = vunpack.c.l.b16 %v478
      %v1503 = vunpack.c.l.b16 %v479
      %v1504 = vunpack.c.l.b16 %v480
      %v1505 = vunpack.c.l.b16 %v481
      %v1506 = vunpack.c.l.b16 %v482
      %v1507 = vunpack.c.l.b16 %v483
      %v1508 = vunpack.c.l.b16 %v484
      %v1509 = vunpack.c.l.b16 %v485
      %v1510 = vunpack.c.l.b16 %v486
      %v1511 = vunpack.c.l.b16 %v487
      %v1512 = vunpack.c.l.b16 %v488
      %v1513 = vunpack.c.l.b16 %v489
      %v1514 = vunpack.c.l.b16 %v490
      %v1515 = vunpack.c.l.b16 %v491
      %v1516 = vunpack.c.l.b16 %v492
      %v1517 = vunpack.c.l.b16 %v493
      %v1518 = vunpack.c.l.b16 %v494
      %v1519 = vunpack.c.l.b16 %v495
      %v1520 = vunpack.c.l.b16 %v496
      %v1521 = vunpack.c.l.b16 %v497
      %v1522 = vunpack.c.l.b16 %v498
      %v1523 = vunpack.c.l.b16 %v499
      %v1524 = vunpack.c.l.b16 %v500
      %v1525 = vunpack.c.l.b16 %v501
      %v1526 = vunpack.c.l.b16 %v502
      %v1527 = vunpack.c.l.b16 %v503
      %v1528 = vunpack.c.l.b16 %v504
      %v1529 = vunpack.c.l.b16 %v505
      %v1530 = vunpack.c.l.b16 %v506
      %v1531 = vunpack.c.l.b16 %v507
      %v1532 = vunpack.c.l.b16 %v508
      %v1533 = vpack.c.b16 %v1390, %v1389
      %v1534 = vpack.c.b16 %v1392, %v1391
      %v1535 = vpack.c.b16 %v1394, %v1393
      %v1536 = vpack.c.b16 %v1396, %v1395
      %v1537 = vpack.c.b16 %v1398, %v1397
      %v1538 = vpack.c.b16 %v1400, %v1399
      %v1539 = vpack.c.b16 %v1402, %v1401
      %v1540 = vpack.c.b16 %v1404, %v1403
      %v1541 = vpack.c.b16 %v1406, %v1405
      %v1542 = vpack.c.b16 %v1408, %v1407
      %v1543 = vpack.c.b16 %v1410, %v1409
      %v1544 = vpack.c.b16 %v1412, %v1411
      %v1545 = vpack.c.b16 %v1414, %v1413
      %v1546 = vpack.c.b16 %v1416, %v1415
      %v1547 = vpack.c.b16 %v1418, %v1417
      %v1548 = vpack.c.b16 %v1420, %v1419
      %v1549 = vpack.c.b16 %v1422, %v1421
      %v1550 = vpack.c.b16 %v1424, %v1423
      %v1551 = vpack.c.b16 %v1426, %v1425
      %v1552 = vpack.c.b16 %v1428, %v1427
      %v1553 = vpack.c.b16 %v1430, %v1429
      %v1554 = vpack.c.b16 %v1432, %v1431
      %v1555 = vpack.c.b16 %v1434, %v1433
      %v1556 = vpack.c.b16 %v1436, %v1435
      %v1557 = vpack.c.b16 %v1438, %v1437
      %v1558 = vpack.c.b16 %v1440, %v1439
      %v1559 = vpack.c.b16 %v1442, %v1441
      %v1560 = vpack.c.b16 %v1444, %v1443
      %v1561 = vpack.c.b16 %v1446, %v1445
      %v1562 = vpack.c.b16 %v1448, %v1447
      %v1563 = vpack.c.b16 %v1450, %v1449
      %v1564 = vpack.c.b16 %v1452, %v1451
      %v1565 = vpack.c.b16 %v1454, %v1453
      %v1566 = vpack.c.b16 %v1456, %v1455
      %v1567 = vpack.c.b16 %v1458, %v1457
      %v1568 = vpack.c.b16 %v1460, %v1459
      %v1569 = vpack.c.b16 %v1462, %v1461
      %v1570 = vpack.c.b16 %v1464, %v1463
      %v1571 = vpack.c.b16 %v1466, %v1465
      %v1572 = vpack.c.b16 %v1468, %v1467
      %v1573 = vpack.c.b16 %v1470, %v1469
      %v1574 = vpack.c.b16 %v1472, %v1471
      %v1575 = vpack.c.b16 %v1474, %v1473
      %v1576 = vpack.c.b16 %v1476, %v1475
      %v1577 = vpack.c.b16 %v1478, %v1477
      %v1578 = vpack.c.b16 %v1480, %v1479
      %v1579 = vpack.c.b16 %v1482, %v1481
      %v1580 = vpack.c.b16 %v1484, %v1483
      %v1581 = vpack.c.b16 %v1486, %v1485
      %v1582 = vpack.c.b16 %v1488, %v1487
      %v1583 = vpack.c.b16 %v1490, %v1489
      %v1584 = vpack.c.b16 %v1492, %v1491
      %v1585 = vpack.c.b16 %v1494, %v1493
      %v1586 = vpack.c.b16 %v1496, %v1495
      %v1587 = vpack.c.b16 %v1498, %v1497
      %v1588 = vpack.c.b16 %v1500, %v1499
      %v1589 = vpack.c.b16 %v1502, %v1501
      %v1590 = vpack.c.b16 %v1504, %v1503
      %v1591 = vpack.c.b16 %v1506, %v1505
      %v1592 = vpack.c.b16 %v1508, %v1507
      %v1593 = vpack.c.b16 %v1510, %v1509
      %v1594 = vpack.c.b16 %v1512, %v1511
      %v1595 = vpack.c.b16 %v1514, %v1513
      %v1596 = vpack.c.b16 %v1516, %v1515
      %v1597 = vpack.c.b16 %v1518, %v1517
      %v1598 = vpack.c.b16 %v1520, %v1519
      %v1599 = vpack.c.b16 %v1522, %v1521
      %v1600 = vpack.c.b16 %v1524, %v1523
      %v1601 = vpack.c.b16 %v1526, %v1525
      %v1602 = vpack.c.b16 %v1528, %v1527
      %v1603 = vpack.c.b16 %v1530, %v1529
      %v1604 = vpack.c.b16 %v1532, %v1531
      %1677 = vmatprep.subr.bf16.mxu0 0
      %1678 = vmatpush1.bf16.msra.mxu0 %v1533
      %1679 = vmatprep.subr.bf16.mxu0 0
      %1680 = vmatpush1.bf16.msra.mxu0 %v1534
      %1681 = vmatprep.subr.bf16.mxu0 0
      %1682 = vmatpush1.bf16.msra.mxu0 %v1535
      %1683 = vmatprep.subr.bf16.mxu0 0
      %1684 = vmatpush1.bf16.msra.mxu0 %v1536
      %1685 = vmatprep.subr.bf16.mxu0 0
      %1686 = vmatpush1.bf16.msra.mxu0 %v1537
      %1687 = vmatprep.subr.bf16.mxu0 0
      %1688 = vmatpush1.bf16.msra.mxu0 %v1538
      %1689 = vmatprep.subr.bf16.mxu0 0
      %1690 = vmatpush1.bf16.msra.mxu0 %v1539
      %1691 = vmatprep.subr.bf16.mxu0 0
      %1692 = vmatpush1.bf16.msra.mxu0 %v1540
      %1693 = vmatprep.subr.bf16.mxu0 0
      %1694 = vmatpush1.bf16.msra.mxu0 %v1541
      %1695 = vmatprep.subr.bf16.mxu0 0
      %1696 = vmatpush1.bf16.msra.mxu0 %v1542
      %1697 = vmatprep.subr.bf16.mxu0 0
      %1698 = vmatpush1.bf16.msra.mxu0 %v1543
      %1699 = vmatprep.subr.bf16.mxu0 0
      %1700 = vmatpush1.bf16.msra.mxu0 %v1544
      %1701 = vmatprep.subr.bf16.mxu0 0
      %1702 = vmatpush1.bf16.msra.mxu0 %v1545
      %1703 = vmatprep.subr.bf16.mxu0 0
      %1704 = vmatpush1.bf16.msra.mxu0 %v1546
      %1705 = vmatprep.subr.bf16.mxu0 0
      %1706 = vmatpush1.bf16.msra.mxu0 %v1547
      %1707 = vmatprep.subr.bf16.mxu0 0
      %1708 = vmatpush1.bf16.msra.mxu0 %v1548
      %1709 = vmatprep.mubr.bf16.mxu0 %v958
      %1710 = vmatmul.mubr.bf16.gmra.mrb[0].mxu0 %v957
      %v1711 = vpop.f32.mrb[0].mxu0
      %v1712 = vadd.f32 0.0, %v1711
      %v1713 = vpop.f32.mrb[0].mxu0
      %v1714 = vpop.f32.mrb[0].mxu0
      %v1715 = vadd.f32 0.0, %v1714
      %v1716 = vpop.f32.mrb[0].mxu0
      %1717 = vmatprep.mubr.bf16.mxu0 %v967
      %1718 = vmatmul.mubr.bf16.gmra.mrb[0].mxu0 %v966
      %v1719 = vpop.f32.mrb[0].mxu0
      %v1720 = vadd.f32 0.0, %v1719
      %v1721 = vpop.f32.mrb[0].mxu0
      %v1722 = vpop.f32.mrb[0].mxu0
      %v1723 = vadd.f32 0.0, %v1722
      %v1724 = vpop.f32.mrb[0].mxu0
      %1725 = vmatprep.mubr.bf16.mxu0 %v976
      %1726 = vmatmul.mubr.bf16.gmra.mrb[0].mxu0 %v975
      %v1727 = vpop.f32.mrb[0].mxu0
      %v1728 = vadd.f32 0.0, %v1727
      %v1729 = vpop.f32.mrb[0].mxu0
      %v1730 = vpop.f32.mrb[0].mxu0
      %v1731 = vadd.f32 0.0, %v1730
      %v1732 = vpop.f32.mrb[0].mxu0
      %1733 = vmatprep.mubr.bf16.mxu0 %v985
      %1734 = vmatmul.mubr.bf16.gmra.mrb[0].mxu0 %v984
      %v1735 = vpop.f32.mrb[0].mxu0
      %v1736 = vadd.f32 0.0, %v1735
      %v1737 = vpop.f32.mrb[0].mxu0
      %v1738 = vpop.f32.mrb[0].mxu0
      %v1739 = vadd.f32 0.0, %v1738
      %v1740 = vpop.f32.mrb[0].mxu0
      %1741 = vmatprep.mubr.bf16.mxu0 %v994
      %1742 = vmatmul.mubr.bf16.gmra.mrb[0].mxu0 %v993
      %v1743 = vpop.f32.mrb[0].mxu0
      %v1744 = vadd.f32 0.0, %v1743
      %v1745 = vpop.f32.mrb[0].mxu0
      %v1746 = vpop.f32.mrb[0].mxu0
      %v1747 = vadd.f32 0.0, %v1746
      %v1748 = vpop.f32.mrb[0].mxu0
      %1749 = vmatprep.mubr.bf16.mxu0 %v1003
      %1750 = vmatmul.mubr.bf16.gmra.mrb[0].mxu0 %v1002
      %v1751 = vpop.f32.mrb[0].mxu0
      %v1752 = vadd.f32 0.0, %v1751
      %v1753 = vpop.f32.mrb[0].mxu0
      %v1754 = vpop.f32.mrb[0].mxu0
      %v1755 = vadd.f32 0.0, %v1754
      %v1756 = vpop.f32.mrb[0].mxu0
      %1757 = vmatprep.mubr.bf16.mxu0 %v1012
      %1758 = vmatmul.mubr.bf16.gmra.mrb[0].mxu0 %v1011
      %v1759 = vpop.f32.mrb[0].mxu0
      %v1760 = vadd.f32 0.0, %v1759
      %v1761 = vpop.f32.mrb[0].mxu0
      %v1762 = vpop.f32.mrb[0].mxu0
      %v1763 = vadd.f32 0.0, %v1762
      %v1764 = vpop.f32.mrb[0].mxu0
      %1765 = vmatprep.mubr.bf16.mxu0 %v1021
      %1766 = vmatmul.mubr.bf16.gmra.mrb[0].mxu0 %v1020
      %v1767 = vpop.f32.mrb[0].mxu0
      %v1768 = vadd.f32 0.0, %v1767
      %v1769 = vpop.f32.mrb[0].mxu0
      %v1770 = vpop.f32.mrb[0].mxu0
      %v1771 = vadd.f32 0.0, %v1770
      %v1772 = vpop.f32.mrb[0].mxu0
      %1773 = vmatprep.mubr.bf16.mxu0 %v1030
      %1774 = vmatmul.mubr.bf16.gmra.mrb[0].mxu0 %v1029
      %v1775 = vpop.f32.mrb[0].mxu0
      %v1776 = vadd.f32 0.0, %v1775
      %v1777 = vpop.f32.mrb[0].mxu0
      %v1778 = vpop.f32.mrb[0].mxu0
      %v1779 = vadd.f32 0.0, %v1778
      %v1780 = vpop.f32.mrb[0].mxu0
      %1781 = vmatprep.mubr.bf16.mxu0 %v1039
      %1782 = vmatmul.mubr.bf16.gmra.mrb[0].mxu0 %v1038
      %v1783 = vpop.f32.mrb[0].mxu0
      %v1784 = vadd.f32 0.0, %v1783
      %v1785 = vpop.f32.mrb[0].mxu0
      %v1786 = vpop.f32.mrb[0].mxu0
      %v1787 = vadd.f32 0.0, %v1786
      %v1788 = vpop.f32.mrb[0].mxu0
      %1789 = vmatprep.mubr.bf16.mxu0 %v1048
      %1790 = vmatmul.mubr.bf16.gmra.mrb[0].mxu0 %v1047
      %v1791 = vpop.f32.mrb[0].mxu0
      %v1792 = vadd.f32 0.0, %v1791
      %v1793 = vpop.f32.mrb[0].mxu0
      %v1794 = vpop.f32.mrb[0].mxu0
      %v1795 = vadd.f32 0.0, %v1794
      %v1796 = vpop.f32.mrb[0].mxu0
      %1797 = vmatprep.mubr.bf16.mxu0 %v1057
      %1798 = vmatmul.mubr.bf16.gmra.mrb[0].mxu0 %v1056
      %v1799 = vpop.f32.mrb[0].mxu0
      %v1800 = vadd.f32 0.0, %v1799
      %v1801 = vpop.f32.mrb[0].mxu0
      %v1802 = vpop.f32.mrb[0].mxu0
      %v1803 = vadd.f32 0.0, %v1802
      %v1804 = vpop.f32.mrb[0].mxu0
      %1805 = vmatprep.mubr.bf16.mxu0 %v1066
      %1806 = vmatmul.mubr.bf16.gmra.mrb[0].mxu0 %v1065
      %v1807 = vpop.f32.mrb[0].mxu0
      %v1808 = vadd.f32 0.0, %v1807
      %v1809 = vpop.f32.mrb[0].mxu0
      %v1810 = vpop.f32.mrb[0].mxu0
      %v1811 = vadd.f32 0.0, %v1810
      %v1812 = vpop.f32.mrb[0].mxu0
      %1813 = vmatprep.mubr.bf16.mxu0 %v1075
      %1814 = vmatmul.mubr.bf16.gmra.mrb[0].mxu0 %v1074
      %v1815 = vpop.f32.mrb[0].mxu0
      %v1816 = vadd.f32 0.0, %v1815
      %v1817 = vpop.f32.mrb[0].mxu0
      %v1818 = vpop.f32.mrb[0].mxu0
      %v1819 = vadd.f32 0.0, %v1818
      %v1820 = vpop.f32.mrb[0].mxu0
      %1821 = vmatprep.mubr.bf16.mxu0 %v1084
      %1822 = vmatmul.mubr.bf16.gmra.mrb[0].mxu0 %v1083
      %v1823 = vpop.f32.mrb[0].mxu0
      %v1824 = vadd.f32 0.0, %v1823
      %v1825 = vpop.f32.mrb[0].mxu0
      %v1826 = vpop.f32.mrb[0].mxu0
      %v1827 = vadd.f32 0.0, %v1826
      %v1828 = vpop.f32.mrb[0].mxu0
      %1829 = vmatprep.mubr.bf16.mxu0 %v1093
      %1830 = vmatmul.mubr.bf16.gmra.mrb[0].mxu0 %v1092
      %v1831 = vpop.f32.mrb[0].mxu0
      %v1832 = vadd.f32 0.0, %v1831
      %v1833 = vpop.f32.mrb[0].mxu0
      %v1834 = vpop.f32.mrb[0].mxu0
      %v1835 = vadd.f32 0.0, %v1834
      %v1836 = vpop.f32.mrb[0].mxu0
      %1837 = vdwg.mxu0
      %1838 = vmatprep.subr.bf16.mxu0 0
      %1839 = vmatpush1.bf16.msra.mxu0 %v1549
      %1840 = vmatprep.subr.bf16.mxu0 0
      %1841 = vmatpush1.bf16.msra.mxu0 %v1550
      %1842 = vmatprep.subr.bf16.mxu0 0
      %1843 = vmatpush1.bf16.msra.mxu0 %v1551
      %1844 = vmatprep.subr.bf16.mxu0 0
      %1845 = vmatpush1.bf16.msra.mxu0 %v1552
      %1846 = vmatprep.subr.bf16.mxu0 0
      %1847 = vmatpush1.bf16.msra.mxu0 %v1553
      %1848 = vmatprep.subr.bf16.mxu0 0
      %1849 = vmatpush1.bf16.msra.mxu0 %v1554
      %1850 = vmatprep.subr.bf16.mxu0 0
      %1851 = vmatpush1.bf16.msra.mxu0 %v1555
      %1852 = vmatprep.subr.bf16.mxu0 0
      %1853 = vmatpush1.bf16.msra.mxu0 %v1556
      %1854 = vmatprep.subr.bf16.mxu0 0
      %1855 = vmatpush1.bf16.msra.mxu0 %v1557
      %1856 = vmatprep.subr.bf16.mxu0 0
      %1857 = vmatpush1.bf16.msra.mxu0 %v1558
      %1858 = vmatprep.subr.bf16.mxu0 0
      %1859 = vmatpush1.bf16.msra.mxu0 %v1559
      %1860 = vmatprep.subr.bf16.mxu0 0
      %1861 = vmatpush1.bf16.msra.mxu0 %v1560
      %1862 = vmatprep.subr.bf16.mxu0 0
      %1863 = vmatpush1.bf16.msra.mxu0 %v1561
      %1864 = vmatprep.subr.bf16.mxu0 0
      %1865 = vmatpush1.bf16.msra.mxu0 %v1562
      %1866 = vmatprep.subr.bf16.mxu0 0
      %1867 = vmatpush1.bf16.msra.mxu0 %v1563
      %1868 = vmatprep.subr.bf16.mxu0 0
      %1869 = vmatpush1.bf16.msra.mxu0 %v1564
      %1870 = vmatprep.mubr.bf16.mxu0 %v960
      %1871 = vmatmul.mubr.bf16.gmra.mrb[0].mxu0 %v959
      %v1872 = vpop.f32.mrb[0].mxu0
      %v1873 = vadd.f32 %v1712, %v1872
      %v1874 = vpop.f32.mrb[0].mxu0
      %v1875 = vpop.f32.mrb[0].mxu0
      %v1876 = vadd.f32 %v1715, %v1875
      %v1877 = vpop.f32.mrb[0].mxu0
      %1878 = vmatprep.mubr.bf16.mxu0 %v969
      %1879 = vmatmul.mubr.bf16.gmra.mrb[0].mxu0 %v968
      %v1880 = vpop.f32.mrb[0].mxu0
      %v1881 = vadd.f32 %v1720, %v1880
      %v1882 = vpop.f32.mrb[0].mxu0
      %v1883 = vpop.f32.mrb[0].mxu0
      %v1884 = vadd.f32 %v1723, %v1883
      %v1885 = vpop.f32.mrb[0].mxu0
      %1886 = vmatprep.mubr.bf16.mxu0 %v978
      %1887 = vmatmul.mubr.bf16.gmra.mrb[0].mxu0 %v977
      %v1888 = vpop.f32.mrb[0].mxu0
      %v1889 = vadd.f32 %v1728, %v1888
      %v1890 = vpop.f32.mrb[0].mxu0
      %v1891 = vpop.f32.mrb[0].mxu0
      %v1892 = vadd.f32 %v1731, %v1891
      %v1893 = vpop.f32.mrb[0].mxu0
      %1894 = vmatprep.mubr.bf16.mxu0 %v987
      %1895 = vmatmul.mubr.bf16.gmra.mrb[0].mxu0 %v986
      %v1896 = vpop.f32.mrb[0].mxu0
      %v1897 = vadd.f32 %v1736, %v1896
      %v1898 = vpop.f32.mrb[0].mxu0
      %v1899 = vpop.f32.mrb[0].mxu0
      %v1900 = vadd.f32 %v1739, %v1899
      %v1901 = vpop.f32.mrb[0].mxu0
      %1902 = vmatprep.mubr.bf16.mxu0 %v996
      %1903 = vmatmul.mubr.bf16.gmra.mrb[0].mxu0 %v995
      %v1904 = vpop.f32.mrb[0].mxu0
      %v1905 = vadd.f32 %v1744, %v1904
      %v1906 = vpop.f32.mrb[0].mxu0
      %v1907 = vpop.f32.mrb[0].mxu0
      %v1908 = vadd.f32 %v1747, %v1907
      %v1909 = vpop.f32.mrb[0].mxu0
      %1910 = vmatprep.mubr.bf16.mxu0 %v1005
      %1911 = vmatmul.mubr.bf16.gmra.mrb[0].mxu0 %v1004
      %v1912 = vpop.f32.mrb[0].mxu0
      %v1913 = vadd.f32 %v1752, %v1912
      %v1914 = vpop.f32.mrb[0].mxu0
      %v1915 = vpop.f32.mrb[0].mxu0
      %v1916 = vadd.f32 %v1755, %v1915
      %v1917 = vpop.f32.mrb[0].mxu0
      %1918 = vmatprep.mubr.bf16.mxu0 %v1014
      %1919 = vmatmul.mubr.bf16.gmra.mrb[0].mxu0 %v1013
      %v1920 = vpop.f32.mrb[0].mxu0
      %v1921 = vadd.f32 %v1760, %v1920
      %v1922 = vpop.f32.mrb[0].mxu0
      %v1923 = vpop.f32.mrb[0].mxu0
      %v1924 = vadd.f32 %v1763, %v1923
      %v1925 = vpop.f32.mrb[0].mxu0
      %1926 = vmatprep.mubr.bf16.mxu0 %v1023
      %1927 = vmatmul.mubr.bf16.gmra.mrb[0].mxu0 %v1022
      %v1928 = vpop.f32.mrb[0].mxu0
      %v1929 = vadd.f32 %v1768, %v1928
      %v1930 = vpop.f32.mrb[0].mxu0
      %v1931 = vpop.f32.mrb[0].mxu0
      %v1932 = vadd.f32 %v1771, %v1931
      %v1933 = vpop.f32.mrb[0].mxu0
      %1934 = vmatprep.mubr.bf16.mxu0 %v1032
      %1935 = vmatmul.mubr.bf16.gmra.mrb[0].mxu0 %v1031
      %v1936 = vpop.f32.mrb[0].mxu0
      %v1937 = vadd.f32 %v1776, %v1936
      %v1938 = vpop.f32.mrb[0].mxu0
      %v1939 = vpop.f32.mrb[0].mxu0
      %v1940 = vadd.f32 %v1779, %v1939
      %v1941 = vpop.f32.mrb[0].mxu0
      %1942 = vmatprep.mubr.bf16.mxu0 %v1041
      %1943 = vmatmul.mubr.bf16.gmra.mrb[0].mxu0 %v1040
      %v1944 = vpop.f32.mrb[0].mxu0
      %v1945 = vadd.f32 %v1784, %v1944
      %v1946 = vpop.f32.mrb[0].mxu0
      %v1947 = vpop.f32.mrb[0].mxu0
      %v1948 = vadd.f32 %v1787, %v1947
      %v1949 = vpop.f32.mrb[0].mxu0
      %1950 = vmatprep.mubr.bf16.mxu0 %v1050
      %1951 = vmatmul.mubr.bf16.gmra.mrb[0].mxu0 %v1049
      %v1952 = vpop.f32.mrb[0].mxu0
      %v1953 = vadd.f32 %v1792, %v1952
      %v1954 = vpop.f32.mrb[0].mxu0
      %v1955 = vpop.f32.mrb[0].mxu0
      %v1956 = vadd.f32 %v1795, %v1955
      %v1957 = vpop.f32.mrb[0].mxu0
      %1958 = vmatprep.mubr.bf16.mxu0 %v1059
      %1959 = vmatmul.mubr.bf16.gmra.mrb[0].mxu0 %v1058
      %v1960 = vpop.f32.mrb[0].mxu0
      %v1961 = vadd.f32 %v1800, %v1960
      %v1962 = vpop.f32.mrb[0].mxu0
      %v1963 = vpop.f32.mrb[0].mxu0
      %v1964 = vadd.f32 %v1803, %v1963
      %v1965 = vpop.f32.mrb[0].mxu0
      %1966 = vmatprep.mubr.bf16.mxu0 %v1068
      %1967 = vmatmul.mubr.bf16.gmra.mrb[0].mxu0 %v1067
      %v1968 = vpop.f32.mrb[0].mxu0
      %v1969 = vadd.f32 %v1808, %v1968
      %v1970 = vpop.f32.mrb[0].mxu0
      %v1971 = vpop.f32.mrb[0].mxu0
      %v1972 = vadd.f32 %v1811, %v1971
      %v1973 = vpop.f32.mrb[0].mxu0
      %1974 = vmatprep.mubr.bf16.mxu0 %v1077
      %1975 = vmatmul.mubr.bf16.gmra.mrb[0].mxu0 %v1076
      %v1976 = vpop.f32.mrb[0].mxu0
      %v1977 = vadd.f32 %v1816, %v1976
      %v1978 = vpop.f32.mrb[0].mxu0
      %v1979 = vpop.f32.mrb[0].mxu0
      %v1980 = vadd.f32 %v1819, %v1979
      %v1981 = vpop.f32.mrb[0].mxu0
      %1982 = vmatprep.mubr.bf16.mxu0 %v1086
      %1983 = vmatmul.mubr.bf16.gmra.mrb[0].mxu0 %v1085
      %v1984 = vpop.f32.mrb[0].mxu0
      %v1985 = vadd.f32 %v1824, %v1984
      %v1986 = vpop.f32.mrb[0].mxu0
      %v1987 = vpop.f32.mrb[0].mxu0
      %v1988 = vadd.f32 %v1827, %v1987
      %v1989 = vpop.f32.mrb[0].mxu0
      %1990 = vmatprep.mubr.bf16.mxu0 %v1095
      %1991 = vmatmul.mubr.bf16.gmra.mrb[0].mxu0 %v1094
      %v1992 = vpop.f32.mrb[0].mxu0
      %v1993 = vadd.f32 %v1832, %v1992
      %v1994 = vpop.f32.mrb[0].mxu0
      %v1995 = vpop.f32.mrb[0].mxu0
      %v1996 = vadd.f32 %v1835, %v1995
      %v1997 = vpop.f32.mrb[0].mxu0
      %1998 = vdwg.mxu0
      %1999 = vmatprep.subr.bf16.mxu0 0
      %2000 = vmatpush1.bf16.msra.mxu0 %v1565
      %2001 = vmatprep.subr.bf16.mxu0 0
      %2002 = vmatpush1.bf16.msra.mxu0 %v1566
      %2003 = vmatprep.subr.bf16.mxu0 0
      %2004 = vmatpush1.bf16.msra.mxu0 %v1567
      %2005 = vmatprep.subr.bf16.mxu0 0
      %2006 = vmatpush1.bf16.msra.mxu0 %v1568
      %2007 = vmatprep.subr.bf16.mxu0 0
      %2008 = vmatpush1.bf16.msra.mxu0 %v1569
      %2009 = vmatprep.subr.bf16.mxu0 0
      %2010 = vmatpush1.bf16.msra.mxu0 %v1570
      %2011 = vmatprep.subr.bf16.mxu0 0
      %2012 = vmatpush1.bf16.msra.mxu0 %v1571
      %2013 = vmatprep.subr.bf16.mxu0 0
      %2014 = vmatpush1.bf16.msra.mxu0 %v1572
      %2015 = vmatprep.subr.bf16.mxu0 0
      %2016 = vmatpush1.bf16.msra.mxu0 %v1573
      %2017 = vmatprep.subr.bf16.mxu0 0
      %2018 = vmatpush1.bf16.msra.mxu0 %v1574
      %2019 = vmatprep.subr.bf16.mxu0 0
      %2020 = vmatpush1.bf16.msra.mxu0 %v1575
      %2021 = vmatprep.subr.bf16.mxu0 0
      %2022 = vmatpush1.bf16.msra.mxu0 %v1576
      %2023 = vmatprep.subr.bf16.mxu0 0
      %2024 = vmatpush1.bf16.msra.mxu0 %v1577
      %2025 = vmatprep.subr.bf16.mxu0 0
      %2026 = vmatpush1.bf16.msra.mxu0 %v1578
      %2027 = vmatprep.subr.bf16.mxu0 0
      %2028 = vmatpush1.bf16.msra.mxu0 %v1579
      %2029 = vmatprep.subr.bf16.mxu0 0
      %2030 = vmatpush1.bf16.msra.mxu0 %v1580
      %2031 = vmatprep.mubr.bf16.mxu0 %v962
      %2032 = vmatmul.mubr.bf16.gmra.mrb[0].mxu0 %v961
      %v2033 = vpop.f32.mrb[0].mxu0
      %v2034 = vadd.f32 %v1873, %v2033
      %v2035 = vpop.f32.mrb[0].mxu0
      %v2036 = vpop.f32.mrb[0].mxu0
      %v2037 = vadd.f32 %v1876, %v2036
      %v2038 = vpop.f32.mrb[0].mxu0
      %2039 = vmatprep.mubr.bf16.mxu0 %v971
      %2040 = vmatmul.mubr.bf16.gmra.mrb[0].mxu0 %v970
      %v2041 = vpop.f32.mrb[0].mxu0
      %v2042 = vadd.f32 %v1881, %v2041
      %v2043 = vpop.f32.mrb[0].mxu0
      %v2044 = vpop.f32.mrb[0].mxu0
      %v2045 = vadd.f32 %v1884, %v2044
      %v2046 = vpop.f32.mrb[0].mxu0
      %2047 = vmatprep.mubr.bf16.mxu0 %v980
      %2048 = vmatmul.mubr.bf16.gmra.mrb[0].mxu0 %v979
      %v2049 = vpop.f32.mrb[0].mxu0
      %v2050 = vadd.f32 %v1889, %v2049
      %v2051 = vpop.f32.mrb[0].mxu0
      %v2052 = vpop.f32.mrb[0].mxu0
      %v2053 = vadd.f32 %v1892, %v2052
      %v2054 = vpop.f32.mrb[0].mxu0
      %2055 = vmatprep.mubr.bf16.mxu0 %v989
      %2056 = vmatmul.mubr.bf16.gmra.mrb[0].mxu0 %v988
      %v2057 = vpop.f32.mrb[0].mxu0
      %v2058 = vadd.f32 %v1897, %v2057
      %v2059 = vpop.f32.mrb[0].mxu0
      %v2060 = vpop.f32.mrb[0].mxu0
      %v2061 = vadd.f32 %v1900, %v2060
      %v2062 = vpop.f32.mrb[0].mxu0
      %2063 = vmatprep.mubr.bf16.mxu0 %v998
      %2064 = vmatmul.mubr.bf16.gmra.mrb[0].mxu0 %v997
      %v2065 = vpop.f32.mrb[0].mxu0
      %v2066 = vadd.f32 %v1905, %v2065
      %v2067 = vpop.f32.mrb[0].mxu0
      %v2068 = vpop.f32.mrb[0].mxu0
      %v2069 = vadd.f32 %v1908, %v2068
      %v2070 = vpop.f32.mrb[0].mxu0
      %2071 = vmatprep.mubr.bf16.mxu0 %v1007
      %2072 = vmatmul.mubr.bf16.gmra.mrb[0].mxu0 %v1006
      %v2073 = vpop.f32.mrb[0].mxu0
      %v2074 = vadd.f32 %v1913, %v2073
      %v2075 = vpop.f32.mrb[0].mxu0
      %v2076 = vpop.f32.mrb[0].mxu0
      %v2077 = vadd.f32 %v1916, %v2076
      %v2078 = vpop.f32.mrb[0].mxu0
      %2079 = vmatprep.mubr.bf16.mxu0 %v1016
      %2080 = vmatmul.mubr.bf16.gmra.mrb[0].mxu0 %v1015
      %v2081 = vpop.f32.mrb[0].mxu0
      %v2082 = vadd.f32 %v1921, %v2081
      %v2083 = vpop.f32.mrb[0].mxu0
      %v2084 = vpop.f32.mrb[0].mxu0
      %v2085 = vadd.f32 %v1924, %v2084
      %v2086 = vpop.f32.mrb[0].mxu0
      %2087 = vmatprep.mubr.bf16.mxu0 %v1025
      %2088 = vmatmul.mubr.bf16.gmra.mrb[0].mxu0 %v1024
      %v2089 = vpop.f32.mrb[0].mxu0
      %v2090 = vadd.f32 %v1929, %v2089
      %v2091 = vpop.f32.mrb[0].mxu0
      %v2092 = vpop.f32.mrb[0].mxu0
      %v2093 = vadd.f32 %v1932, %v2092
      %v2094 = vpop.f32.mrb[0].mxu0
      %2095 = vmatprep.mubr.bf16.mxu0 %v1034
      %2096 = vmatmul.mubr.bf16.gmra.mrb[0].mxu0 %v1033
      %v2097 = vpop.f32.mrb[0].mxu0
      %v2098 = vadd.f32 %v1937, %v2097
      %v2099 = vpop.f32.mrb[0].mxu0
      %v2100 = vpop.f32.mrb[0].mxu0
      %v2101 = vadd.f32 %v1940, %v2100
      %v2102 = vpop.f32.mrb[0].mxu0
      %2103 = vmatprep.mubr.bf16.mxu0 %v1043
      %2104 = vmatmul.mubr.bf16.gmra.mrb[0].mxu0 %v1042
      %v2105 = vpop.f32.mrb[0].mxu0
      %v2106 = vadd.f32 %v1945, %v2105
      %v2107 = vpop.f32.mrb[0].mxu0
      %v2108 = vpop.f32.mrb[0].mxu0
      %v2109 = vadd.f32 %v1948, %v2108
      %v2110 = vpop.f32.mrb[0].mxu0
      %2111 = vmatprep.mubr.bf16.mxu0 %v1052
      %2112 = vmatmul.mubr.bf16.gmra.mrb[0].mxu0 %v1051
      %v2113 = vpop.f32.mrb[0].mxu0
      %v2114 = vadd.f32 %v1953, %v2113
      %v2115 = vpop.f32.mrb[0].mxu0
      %v2116 = vpop.f32.mrb[0].mxu0
      %v2117 = vadd.f32 %v1956, %v2116
      %v2118 = vpop.f32.mrb[0].mxu0
      %2119 = vmatprep.mubr.bf16.mxu0 %v1061
      %2120 = vmatmul.mubr.bf16.gmra.mrb[0].mxu0 %v1060
      %v2121 = vpop.f32.mrb[0].mxu0
      %v2122 = vadd.f32 %v1961, %v2121
      %v2123 = vpop.f32.mrb[0].mxu0
      %v2124 = vpop.f32.mrb[0].mxu0
      %v2125 = vadd.f32 %v1964, %v2124
      %v2126 = vpop.f32.mrb[0].mxu0
      %2127 = vmatprep.mubr.bf16.mxu0 %v1070
      %2128 = vmatmul.mubr.bf16.gmra.mrb[0].mxu0 %v1069
      %v2129 = vpop.f32.mrb[0].mxu0
      %v2130 = vadd.f32 %v1969, %v2129
      %v2131 = vpop.f32.mrb[0].mxu0
      %v2132 = vpop.f32.mrb[0].mxu0
      %v2133 = vadd.f32 %v1972, %v2132
      %v2134 = vpop.f32.mrb[0].mxu0
      %2135 = vmatprep.mubr.bf16.mxu0 %v1079
      %2136 = vmatmul.mubr.bf16.gmra.mrb[0].mxu0 %v1078
      %v2137 = vpop.f32.mrb[0].mxu0
      %v2138 = vadd.f32 %v1977, %v2137
      %v2139 = vpop.f32.mrb[0].mxu0
      %v2140 = vpop.f32.mrb[0].mxu0
      %v2141 = vadd.f32 %v1980, %v2140
      %v2142 = vpop.f32.mrb[0].mxu0
      %2143 = vmatprep.mubr.bf16.mxu0 %v1088
      %2144 = vmatmul.mubr.bf16.gmra.mrb[0].mxu0 %v1087
      %v2145 = vpop.f32.mrb[0].mxu0
      %v2146 = vadd.f32 %v1985, %v2145
      %v2147 = vpop.f32.mrb[0].mxu0
      %v2148 = vpop.f32.mrb[0].mxu0
      %v2149 = vadd.f32 %v1988, %v2148
      %v2150 = vpop.f32.mrb[0].mxu0
      %2151 = vmatprep.mubr.bf16.mxu0 %v1097
      %2152 = vmatmul.mubr.bf16.gmra.mrb[0].mxu0 %v1096
      %v2153 = vpop.f32.mrb[0].mxu0
      %v2154 = vadd.f32 %v1993, %v2153
      %v2155 = vpop.f32.mrb[0].mxu0
      %v2156 = vpop.f32.mrb[0].mxu0
      %v2157 = vadd.f32 %v1996, %v2156
      %v2158 = vpop.f32.mrb[0].mxu0
      %2159 = vdwg.mxu0
      %2160 = vmatprep.subr.bf16.mxu0 0
      %2161 = vmatpush1.bf16.msra.mxu0 %v1581
      %2162 = vmatprep.subr.bf16.mxu0 0
      %2163 = vmatpush1.bf16.msra.mxu0 %v1582
      %2164 = vmatprep.subr.bf16.mxu0 0
      %2165 = vmatpush1.bf16.msra.mxu0 %v1583
      %2166 = vmatprep.subr.bf16.mxu0 0
      %2167 = vmatpush1.bf16.msra.mxu0 %v1584
      %2168 = vmatprep.subr.bf16.mxu0 0
      %2169 = vmatpush1.bf16.msra.mxu0 %v1585
      %2170 = vmatprep.subr.bf16.mxu0 0
      %2171 = vmatpush1.bf16.msra.mxu0 %v1586
      %2172 = vmatprep.subr.bf16.mxu0 0
      %2173 = vmatpush1.bf16.msra.mxu0 %v1587
      %2174 = vmatprep.subr.bf16.mxu0 0
      %2175 = vmatpush1.bf16.msra.mxu0 %v1588
      %2176 = vmatprep.subr.bf16.mxu0 0
      %2177 = vmatpush1.bf16.msra.mxu0 %v1589
      %2178 = vmatprep.subr.bf16.mxu0 0
      %2179 = vmatpush1.bf16.msra.mxu0 %v1590
      %2180 = vmatprep.subr.bf16.mxu0 0
      %2181 = vmatpush1.bf16.msra.mxu0 %v1591
      %2182 = vmatprep.subr.bf16.mxu0 0
      %2183 = vmatpush1.bf16.msra.mxu0 %v1592
      %2184 = vmatprep.subr.bf16.mxu0 0
      %2185 = vmatpush1.bf16.msra.mxu0 %v1593
      %2186 = vmatprep.subr.bf16.mxu0 0
      %2187 = vmatpush1.bf16.msra.mxu0 %v1594
      %2188 = vmatprep.subr.bf16.mxu0 0
      %2189 = vmatpush1.bf16.msra.mxu0 %v1595
      %2190 = vmatprep.subr.bf16.mxu0 0
      %2191 = vmatpush1.bf16.msra.mxu0 %v1596
      %2192 = vmatprep.mubr.bf16.mxu0 %v964
      %2193 = vmatmul.mubr.bf16.gmra.mrb[0].mxu0 %v963
      %v2194 = vpop.f32.mrb[0].mxu0
      %v2195 = vadd.f32 %v2034, %v2194
      %v2196 = vpop.f32.mrb[0].mxu0
      %v2197 = vpop.f32.mrb[0].mxu0
      %v2198 = vadd.f32 %v2037, %v2197
      %v2199 = vpop.f32.mrb[0].mxu0
      %2200 = vmatprep.mubr.bf16.mxu0 %v973
      %2201 = vmatmul.mubr.bf16.gmra.mrb[0].mxu0 %v972
      %v2202 = vpop.f32.mrb[0].mxu0
      %v2203 = vadd.f32 %v2042, %v2202
      %v2204 = vpop.f32.mrb[0].mxu0
      %v2205 = vpop.f32.mrb[0].mxu0
      %v2206 = vadd.f32 %v2045, %v2205
      %v2207 = vpop.f32.mrb[0].mxu0
      %2208 = vmatprep.mubr.bf16.mxu0 %v982
      %2209 = vmatmul.mubr.bf16.gmra.mrb[0].mxu0 %v981
      %v2210 = vpop.f32.mrb[0].mxu0
      %v2211 = vadd.f32 %v2050, %v2210
      %v2212 = vpop.f32.mrb[0].mxu0
      %v2213 = vpop.f32.mrb[0].mxu0
      %v2214 = vadd.f32 %v2053, %v2213
      %v2215 = vpop.f32.mrb[0].mxu0
      %2216 = vmatprep.mubr.bf16.mxu0 %v991
      %2217 = vmatmul.mubr.bf16.gmra.mrb[0].mxu0 %v990
      %v2218 = vpop.f32.mrb[0].mxu0
      %v2219 = vadd.f32 %v2058, %v2218
      %v2220 = vpop.f32.mrb[0].mxu0
      %v2221 = vpop.f32.mrb[0].mxu0
      %v2222 = vadd.f32 %v2061, %v2221
      %v2223 = vpop.f32.mrb[0].mxu0
      %2224 = vmatprep.mubr.bf16.mxu0 %v1000
      %2225 = vmatmul.mubr.bf16.gmra.mrb[0].mxu0 %v999
      %v2226 = vpop.f32.mrb[0].mxu0
      %v2227 = vadd.f32 %v2066, %v2226
      %v2228 = vpop.f32.mrb[0].mxu0
      %v2229 = vpop.f32.mrb[0].mxu0
      %v2230 = vadd.f32 %v2069, %v2229
      %v2231 = vpop.f32.mrb[0].mxu0
      %2232 = vmatprep.mubr.bf16.mxu0 %v1009
      %2233 = vmatmul.mubr.bf16.gmra.mrb[0].mxu0 %v1008
      %v2234 = vpop.f32.mrb[0].mxu0
      %v2235 = vadd.f32 %v2074, %v2234
      %v2236 = vpop.f32.mrb[0].mxu0
      %v2237 = vpop.f32.mrb[0].mxu0
      %v2238 = vadd.f32 %v2077, %v2237
      %v2239 = vpop.f32.mrb[0].mxu0
      %2240 = vmatprep.mubr.bf16.mxu0 %v1018
      %2241 = vmatmul.mubr.bf16.gmra.mrb[0].mxu0 %v1017
      %v2242 = vpop.f32.mrb[0].mxu0
      %v2243 = vadd.f32 %v2082, %v2242
      %v2244 = vpop.f32.mrb[0].mxu0
      %v2245 = vpop.f32.mrb[0].mxu0
      %v2246 = vadd.f32 %v2085, %v2245
      %v2247 = vpop.f32.mrb[0].mxu0
      %2248 = vmatprep.mubr.bf16.mxu0 %v1027
      %2249 = vmatmul.mubr.bf16.gmra.mrb[0].mxu0 %v1026
      %v2250 = vpop.f32.mrb[0].mxu0
      %v2251 = vadd.f32 %v2090, %v2250
      %v2252 = vpop.f32.mrb[0].mxu0
      %v2253 = vpop.f32.mrb[0].mxu0
      %v2254 = vadd.f32 %v2093, %v2253
      %v2255 = vpop.f32.mrb[0].mxu0
      %2256 = vmatprep.mubr.bf16.mxu0 %v1036
      %2257 = vmatmul.mubr.bf16.gmra.mrb[0].mxu0 %v1035
      %v2258 = vpop.f32.mrb[0].mxu0
      %v2259 = vadd.f32 %v2098, %v2258
      %v2260 = vpop.f32.mrb[0].mxu0
      %v2261 = vpop.f32.mrb[0].mxu0
      %v2262 = vadd.f32 %v2101, %v2261
      %v2263 = vpop.f32.mrb[0].mxu0
      %2264 = vmatprep.mubr.bf16.mxu0 %v1045
      %2265 = vmatmul.mubr.bf16.gmra.mrb[0].mxu0 %v1044
      %v2266 = vpop.f32.mrb[0].mxu0
      %v2267 = vadd.f32 %v2106, %v2266
      %v2268 = vpop.f32.mrb[0].mxu0
      %v2269 = vpop.f32.mrb[0].mxu0
      %v2270 = vadd.f32 %v2109, %v2269
      %v2271 = vpop.f32.mrb[0].mxu0
      %2272 = vmatprep.mubr.bf16.mxu0 %v1054
      %2273 = vmatmul.mubr.bf16.gmra.mrb[0].mxu0 %v1053
      %v2274 = vpop.f32.mrb[0].mxu0
      %v2275 = vadd.f32 %v2114, %v2274
      %v2276 = vpop.f32.mrb[0].mxu0
      %v2277 = vpop.f32.mrb[0].mxu0
      %v2278 = vadd.f32 %v2117, %v2277
      %v2279 = vpop.f32.mrb[0].mxu0
      %2280 = vmatprep.mubr.bf16.mxu0 %v1063
      %2281 = vmatmul.mubr.bf16.gmra.mrb[0].mxu0 %v1062
      %v2282 = vpop.f32.mrb[0].mxu0
      %v2283 = vadd.f32 %v2122, %v2282
      %v2284 = vpop.f32.mrb[0].mxu0
      %v2285 = vpop.f32.mrb[0].mxu0
      %v2286 = vadd.f32 %v2125, %v2285
      %v2287 = vpop.f32.mrb[0].mxu0
      %2288 = vmatprep.mubr.bf16.mxu0 %v1072
      %2289 = vmatmul.mubr.bf16.gmra.mrb[0].mxu0 %v1071
      %v2290 = vpop.f32.mrb[0].mxu0
      %v2291 = vadd.f32 %v2130, %v2290
      %v2292 = vpop.f32.mrb[0].mxu0
      %v2293 = vpop.f32.mrb[0].mxu0
      %v2294 = vadd.f32 %v2133, %v2293
      %v2295 = vpop.f32.mrb[0].mxu0
      %2296 = vmatprep.mubr.bf16.mxu0 %v1081
      %2297 = vmatmul.mubr.bf16.gmra.mrb[0].mxu0 %v1080
      %v2298 = vpop.f32.mrb[0].mxu0
      %v2299 = vadd.f32 %v2138, %v2298
      %v2300 = vpop.f32.mrb[0].mxu0
      %v2301 = vpop.f32.mrb[0].mxu0
      %v2302 = vadd.f32 %v2141, %v2301
      %v2303 = vpop.f32.mrb[0].mxu0
      %2304 = vmatprep.mubr.bf16.mxu0 %v1090
      %2305 = vmatmul.mubr.bf16.gmra.mrb[0].mxu0 %v1089
      %v2306 = vpop.f32.mrb[0].mxu0
      %v2307 = vadd.f32 %v2146, %v2306
      %v2308 = vpop.f32.mrb[0].mxu0
      %v2309 = vpop.f32.mrb[0].mxu0
      %v2310 = vadd.f32 %v2149, %v2309
      %v2311 = vpop.f32.mrb[0].mxu0
      %2312 = vmatprep.mubr.bf16.mxu0 %v1099
      %2313 = vmatmul.mubr.bf16.gmra.mrb[0].mxu0 %v1098
      %v2314 = vpop.f32.mrb[0].mxu0
      %v2315 = vadd.f32 %v2154, %v2314
      %v2316 = vpop.f32.mrb[0].mxu0
      %v2317 = vpop.f32.mrb[0].mxu0
      %v2318 = vadd.f32 %v2157, %v2317
      %v2319 = vpop.f32.mrb[0].mxu0
      %2320 = vdwg.mxu0
      %2321 = vmatprep.subr.bf16.mxu0 0
      %2322 = vmatpush1.bf16.msra.mxu0 %v1597
      %2323 = vmatprep.subr.bf16.mxu0 0
      %2324 = vmatpush1.bf16.msra.mxu0 %v1598
      %2325 = vmatprep.subr.bf16.mxu0 0
      %2326 = vmatpush1.bf16.msra.mxu0 %v1599
      %2327 = vmatprep.subr.bf16.mxu0 0
      %2328 = vmatpush1.bf16.msra.mxu0 %v1600
      %2329 = vmatprep.subr.bf16.mxu0 0
      %2330 = vmatpush1.bf16.msra.mxu0 %v1601
      %2331 = vmatprep.subr.bf16.mxu0 0
      %2332 = vmatpush1.bf16.msra.mxu0 %v1602
      %2333 = vmatprep.subr.bf16.mxu0 0
      %2334 = vmatpush1.bf16.msra.mxu0 %v1603
      %2335 = vmatprep.subr.bf16.mxu0 0
      %2336 = vmatpush1.bf16.msra.mxu0 %v1604
      %2337 = vmatprep.subr.bf16.mxu0 0
      %2338 = vmatpush1.bf16.msra.mxu0 0
      %2339 = vmatprep.subr.bf16.mxu0 0
      %2340 = vmatpush1.bf16.msra.mxu0 0
      %2341 = vmatprep.subr.bf16.mxu0 0
      %2342 = vmatpush1.bf16.msra.mxu0 0
      %2343 = vmatprep.subr.bf16.mxu0 0
      %2344 = vmatpush1.bf16.msra.mxu0 0
      %2345 = vmatprep.subr.bf16.mxu0 0
      %2346 = vmatpush1.bf16.msra.mxu0 0
      %2347 = vmatprep.subr.bf16.mxu0 0
      %2348 = vmatpush1.bf16.msra.mxu0 0
      %2349 = vmatprep.subr.bf16.mxu0 0
      %2350 = vmatpush1.bf16.msra.mxu0 0
      %2351 = vmatprep.subr.bf16.mxu0 0
      %2352 = vmatpush1.bf16.msra.mxu0 0
      %2353 = vmatprep.mubr.bf16.mxu0 0
      %2354 = vmatmul.mubr.bf16.gmra.mrb[0].mxu0 %v965
      %v2355 = vpop.f32.mrb[0].mxu0
      %v2356 = vadd.f32 %v2195, %v2355
      %v2357 = vpop.f32.mrb[0].mxu0
      %v2358 = vpop.f32.mrb[0].mxu0
      %v2359 = vadd.f32 %v2198, %v2358
      %v2360 = vpop.f32.mrb[0].mxu0
      %2361 = vmatprep.mubr.bf16.mxu0 0
      %2362 = vmatmul.mubr.bf16.gmra.mrb[0].mxu0 %v974
      %v2363 = vpop.f32.mrb[0].mxu0
      %v2364 = vadd.f32 %v2203, %v2363
      %v2365 = vpop.f32.mrb[0].mxu0
      %v2366 = vpop.f32.mrb[0].mxu0
      %v2367 = vadd.f32 %v2206, %v2366
      %v2368 = vpop.f32.mrb[0].mxu0
      %2369 = vmatprep.mubr.bf16.mxu0 0
      %2370 = vmatmul.mubr.bf16.gmra.mrb[0].mxu0 %v983
      %v2371 = vpop.f32.mrb[0].mxu0
      %v2372 = vadd.f32 %v2211, %v2371
      %v2373 = vpop.f32.mrb[0].mxu0
      %v2374 = vpop.f32.mrb[0].mxu0
      %v2375 = vadd.f32 %v2214, %v2374
      %v2376 = vpop.f32.mrb[0].mxu0
      %2377 = vmatprep.mubr.bf16.mxu0 0
      %2378 = vmatmul.mubr.bf16.gmra.mrb[0].mxu0 %v992
      %v2379 = vpop.f32.mrb[0].mxu0
      %v2380 = vadd.f32 %v2219, %v2379
      %v2381 = vpop.f32.mrb[0].mxu0
      %v2382 = vpop.f32.mrb[0].mxu0
      %v2383 = vadd.f32 %v2222, %v2382
      %v2384 = vpop.f32.mrb[0].mxu0
      %2385 = vmatprep.mubr.bf16.mxu0 0
      %2386 = vmatmul.mubr.bf16.gmra.mrb[0].mxu0 %v1001
      %v2387 = vpop.f32.mrb[0].mxu0
      %v2388 = vadd.f32 %v2227, %v2387
      %v2389 = vpop.f32.mrb[0].mxu0
      %v2390 = vpop.f32.mrb[0].mxu0
      %v2391 = vadd.f32 %v2230, %v2390
      %v2392 = vpop.f32.mrb[0].mxu0
      %2393 = vmatprep.mubr.bf16.mxu0 0
      %2394 = vmatmul.mubr.bf16.gmra.mrb[0].mxu0 %v1010
      %v2395 = vpop.f32.mrb[0].mxu0
      %v2396 = vadd.f32 %v2235, %v2395
      %v2397 = vpop.f32.mrb[0].mxu0
      %v2398 = vpop.f32.mrb[0].mxu0
      %v2399 = vadd.f32 %v2238, %v2398
      %v2400 = vpop.f32.mrb[0].mxu0
      %2401 = vmatprep.mubr.bf16.mxu0 0
      %2402 = vmatmul.mubr.bf16.gmra.mrb[0].mxu0 %v1019
      %v2403 = vpop.f32.mrb[0].mxu0
      %v2404 = vadd.f32 %v2243, %v2403
      %v2405 = vpop.f32.mrb[0].mxu0
      %v2406 = vpop.f32.mrb[0].mxu0
      %v2407 = vadd.f32 %v2246, %v2406
      %v2408 = vpop.f32.mrb[0].mxu0
      %2409 = vmatprep.mubr.bf16.mxu0 0
      %2410 = vmatmul.mubr.bf16.gmra.mrb[0].mxu0 %v1028
      %v2411 = vpop.f32.mrb[0].mxu0
      %v2412 = vadd.f32 %v2251, %v2411
      %v2413 = vpop.f32.mrb[0].mxu0
      %v2414 = vpop.f32.mrb[0].mxu0
      %v2415 = vadd.f32 %v2254, %v2414
      %v2416 = vpop.f32.mrb[0].mxu0
      %2417 = vmatprep.mubr.bf16.mxu0 0
      %2418 = vmatmul.mubr.bf16.gmra.mrb[0].mxu0 %v1037
      %v2419 = vpop.f32.mrb[0].mxu0
      %v2420 = vadd.f32 %v2259, %v2419
      %v2421 = vpop.f32.mrb[0].mxu0
      %v2422 = vpop.f32.mrb[0].mxu0
      %v2423 = vadd.f32 %v2262, %v2422
      %v2424 = vpop.f32.mrb[0].mxu0
      %2425 = vmatprep.mubr.bf16.mxu0 0
      %2426 = vmatmul.mubr.bf16.gmra.mrb[0].mxu0 %v1046
      %v2427 = vpop.f32.mrb[0].mxu0
      %v2428 = vadd.f32 %v2267, %v2427
      %v2429 = vpop.f32.mrb[0].mxu0
      %v2430 = vpop.f32.mrb[0].mxu0
      %v2431 = vadd.f32 %v2270, %v2430
      %v2432 = vpop.f32.mrb[0].mxu0
      %2433 = vmatprep.mubr.bf16.mxu0 0
      %2434 = vmatmul.mubr.bf16.gmra.mrb[0].mxu0 %v1055
      %v2435 = vpop.f32.mrb[0].mxu0
      %v2436 = vadd.f32 %v2275, %v2435
      %v2437 = vpop.f32.mrb[0].mxu0
      %v2438 = vpop.f32.mrb[0].mxu0
      %v2439 = vadd.f32 %v2278, %v2438
      %v2440 = vpop.f32.mrb[0].mxu0
      %2441 = vmatprep.mubr.bf16.mxu0 0
      %2442 = vmatmul.mubr.bf16.gmra.mrb[0].mxu0 %v1064
      %v2443 = vpop.f32.mrb[0].mxu0
      %v2444 = vadd.f32 %v2283, %v2443
      %v2445 = vpop.f32.mrb[0].mxu0
      %v2446 = vpop.f32.mrb[0].mxu0
      %v2447 = vadd.f32 %v2286, %v2446
      %v2448 = vpop.f32.mrb[0].mxu0
      %2449 = vmatprep.mubr.bf16.mxu0 0
      %2450 = vmatmul.mubr.bf16.gmra.mrb[0].mxu0 %v1073
      %v2451 = vpop.f32.mrb[0].mxu0
      %v2452 = vadd.f32 %v2291, %v2451
      %v2453 = vpop.f32.mrb[0].mxu0
      %v2454 = vpop.f32.mrb[0].mxu0
      %v2455 = vadd.f32 %v2294, %v2454
      %v2456 = vpop.f32.mrb[0].mxu0
      %2457 = vmatprep.mubr.bf16.mxu0 0
      %2458 = vmatmul.mubr.bf16.gmra.mrb[0].mxu0 %v1082
      %v2459 = vpop.f32.mrb[0].mxu0
      %v2460 = vadd.f32 %v2299, %v2459
      %v2461 = vpop.f32.mrb[0].mxu0
      %v2462 = vpop.f32.mrb[0].mxu0
      %v2463 = vadd.f32 %v2302, %v2462
      %v2464 = vpop.f32.mrb[0].mxu0
      %2465 = vmatprep.mubr.bf16.mxu0 0
      %2466 = vmatmul.mubr.bf16.gmra.mrb[0].mxu0 %v1091
      %v2467 = vpop.f32.mrb[0].mxu0
      %v2468 = vadd.f32 %v2307, %v2467
      %v2469 = vpop.f32.mrb[0].mxu0
      %v2470 = vpop.f32.mrb[0].mxu0
      %v2471 = vadd.f32 %v2310, %v2470
      %v2472 = vpop.f32.mrb[0].mxu0
      %2473 = vmatprep.mubr.bf16.mxu0 0
      %2474 = vmatmul.mubr.bf16.gmra.mrb[0].mxu0 %v1100
      %v2475 = vpop.f32.mrb[0].mxu0
      %v2476 = vadd.f32 %v2315, %v2475
      %v2477 = vpop.f32.mrb[0].mxu0
      %v2478 = vpop.f32.mrb[0].mxu0
      %v2479 = vadd.f32 %v2318, %v2478
      %v2480 = vpop.f32.mrb[0].mxu0
      %2481 = vdwg.mxu0
      %v2482 = vld [vmem:[%s2] sm:$0x1]
      %v2484 = vlaneseq
      %v2485 = vshrl.u32 %v2484, 7
      %v2486 = vsub.s32 0, %v2485
      %v2487 = vrot.slane %v2482, %v2486
      %v2489 = vmul.f32 %v2356, %v2487
      %v2490 = vmul.f32 %v2359, %v2487
      %v2491 = vmul.f32 %v2364, %v2487
      %v2492 = vmul.f32 %v2367, %v2487
      %v2493 = vmul.f32 %v2372, %v2487
      %v2494 = vmul.f32 %v2375, %v2487
      %v2495 = vmul.f32 %v2380, %v2487
      %v2496 = vmul.f32 %v2383, %v2487
      %v2497 = vmul.f32 %v2388, %v2487
      %v2498 = vmul.f32 %v2391, %v2487
      %v2499 = vmul.f32 %v2396, %v2487
      %v2500 = vmul.f32 %v2399, %v2487
      %v2501 = vmul.f32 %v2404, %v2487
      %v2502 = vmul.f32 %v2407, %v2487
      %v2503 = vmul.f32 %v2412, %v2487
      %v2504 = vmul.f32 %v2415, %v2487
      %v2505 = vmul.f32 %v2420, %v2487
      %v2506 = vmul.f32 %v2423, %v2487
      %v2507 = vmul.f32 %v2428, %v2487
      %v2508 = vmul.f32 %v2431, %v2487
      %v2509 = vmul.f32 %v2436, %v2487
      %v2510 = vmul.f32 %v2439, %v2487
      %v2511 = vmul.f32 %v2444, %v2487
      %v2512 = vmul.f32 %v2447, %v2487
      %v2513 = vmul.f32 %v2452, %v2487
      %v2514 = vmul.f32 %v2455, %v2487
      %v2515 = vmul.f32 %v2460, %v2487
      %v2516 = vmul.f32 %v2463, %v2487
      %v2517 = vmul.f32 %v2468, %v2487
      %v2518 = vmul.f32 %v2471, %v2487
      %v2519 = vmul.f32 %v2476, %v2487
      %v2520 = vmul.f32 %v2479, %v2487
      %v2521 = vld [vmem:[%s3] sm:$0x1]
      %v2523 = vlaneseq
      %v2524 = vshrl.u32 %v2523, 7
      %v2525 = vsub.s32 0, %v2524
      %v2526 = vrot.slane %v2521, %v2525
      %v2528 = vadd.f32 %v2489, %v2526
      %v2529 = vadd.f32 %v2490, %v2526
      %v2530 = vadd.f32 %v2491, %v2526
      %v2531 = vadd.f32 %v2492, %v2526
      %v2532 = vadd.f32 %v2493, %v2526
      %v2533 = vadd.f32 %v2494, %v2526
      %v2534 = vadd.f32 %v2495, %v2526
      %v2535 = vadd.f32 %v2496, %v2526
      %v2536 = vadd.f32 %v2497, %v2526
      %v2537 = vadd.f32 %v2498, %v2526
      %v2538 = vadd.f32 %v2499, %v2526
      %v2539 = vadd.f32 %v2500, %v2526
      %v2540 = vadd.f32 %v2501, %v2526
      %v2541 = vadd.f32 %v2502, %v2526
      %v2542 = vadd.f32 %v2503, %v2526
      %v2543 = vadd.f32 %v2504, %v2526
      %v2544 = vadd.f32 %v2505, %v2526
      %v2545 = vadd.f32 %v2506, %v2526
      %v2546 = vadd.f32 %v2507, %v2526
      %v2547 = vadd.f32 %v2508, %v2526
      %v2548 = vadd.f32 %v2509, %v2526
      %v2549 = vadd.f32 %v2510, %v2526
      %v2550 = vadd.f32 %v2511, %v2526
      %v2551 = vadd.f32 %v2512, %v2526
      %v2552 = vadd.f32 %v2513, %v2526
      %v2553 = vadd.f32 %v2514, %v2526
      %v2554 = vadd.f32 %v2515, %v2526
      %v2555 = vadd.f32 %v2516, %v2526
      %v2556 = vadd.f32 %v2517, %v2526
      %v2557 = vadd.f32 %v2518, %v2526
      %v2558 = vadd.f32 %v2519, %v2526
      %v2559 = vadd.f32 %v2520, %v2526
      %v2560 = vmax.f32 %v2528, 0.0
      %v2561 = vmax.f32 %v2529, 0.0
      %v2562 = vmax.f32 %v2530, 0.0
      %v2563 = vmax.f32 %v2531, 0.0
      %v2564 = vmax.f32 %v2532, 0.0
      %v2565 = vmax.f32 %v2533, 0.0
      %v2566 = vmax.f32 %v2534, 0.0
      %v2567 = vmax.f32 %v2535, 0.0
      %v2568 = vmax.f32 %v2536, 0.0
      %v2569 = vmax.f32 %v2537, 0.0
      %v2570 = vmax.f32 %v2538, 0.0
      %v2571 = vmax.f32 %v2539, 0.0
      %v2572 = vmax.f32 %v2540, 0.0
      %v2573 = vmax.f32 %v2541, 0.0
      %v2574 = vmax.f32 %v2542, 0.0
      %v2575 = vmax.f32 %v2543, 0.0
      %v2576 = vmax.f32 %v2544, 0.0
      %v2577 = vmax.f32 %v2545, 0.0
      %v2578 = vmax.f32 %v2546, 0.0
      %v2579 = vmax.f32 %v2547, 0.0
      %v2580 = vmax.f32 %v2548, 0.0
      %v2581 = vmax.f32 %v2549, 0.0
      %v2582 = vmax.f32 %v2550, 0.0
      %v2583 = vmax.f32 %v2551, 0.0
      %v2584 = vmax.f32 %v2552, 0.0
      %v2585 = vmax.f32 %v2553, 0.0
      %v2586 = vmax.f32 %v2554, 0.0
      %v2587 = vmax.f32 %v2555, 0.0
      %v2588 = vmax.f32 %v2556, 0.0
      %v2589 = vmax.f32 %v2557, 0.0
      %v2590 = vmax.f32 %v2558, 0.0
      %v2591 = vmax.f32 %v2559, 0.0
      %2592 = vst [vmem:[%s202] sm:$0xff] %v2560
      %2593 = vst [vmem:[%s202 + $0x8] sm:$0xff] %v2561
      %2594 = vst [vmem:[%s202 + $0x10] sm:$0xff] %v2562
      %2595 = vst [vmem:[%s202 + $0x18] sm:$0xff] %v2563
      %2596 = vst [vmem:[%s202 + $0x20] sm:$0xff] %v2564
      %2597 = vst [vmem:[%s202 + $0x28] sm:$0xff] %v2565
      %2598 = vst [vmem:[%s202 + $0x30] sm:$0xff] %v2566
      %2599 = vst [vmem:[%s202 + $0x38] sm:$0xff] %v2567
      %2600 = vst [vmem:[%s202 + $0x40] sm:$0xff] %v2568
      %2601 = vst [vmem:[%s202 + $0x48] sm:$0xff] %v2569
      %2602 = vst [vmem:[%s202 + $0x50] sm:$0xff] %v2570
      %2603 = vst [vmem:[%s202 + $0x58] sm:$0xff] %v2571
      %2604 = vst [vmem:[%s202 + $0x60] sm:$0xff] %v2572
      %2605 = vst [vmem:[%s202 + $0x68] sm:$0xff] %v2573
      %2606 = vst [vmem:[%s202 + $0x70] sm:$0xff] %v2574
      %2607 = vst [vmem:[%s202 + $0x78] sm:$0xff] %v2575
      %2608 = vst [vmem:[%s202 + $0x80] sm:$0xff] %v2576
      %2609 = vst [vmem:[%s202 + $0x88] sm:$0xff] %v2577
      %2610 = vst [vmem:[%s202 + $0x90] sm:$0xff] %v2578
      %2611 = vst [vmem:[%s202 + $0x98] sm:$0xff] %v2579
      %2612 = vst [vmem:[%s202 + $0xa0] sm:$0xff] %v2580
      %2613 = vst [vmem:[%s202 + $0xa8] sm:$0xff] %v2581
      %2614 = vst [vmem:[%s202 + $0xb0] sm:$0xff] %v2582
      %2615 = vst [vmem:[%s202 + $0xb8] sm:$0xff] %v2583
      %2616 = vst [vmem:[%s202 + $0xc0] sm:$0xff] %v2584
      %2617 = vst [vmem:[%s202 + $0xc8] sm:$0xff] %v2585
      %2618 = vst [vmem:[%s202 + $0xd0] sm:$0xff] %v2586
      %2619 = vst [vmem:[%s202 + $0xd8] sm:$0xff] %v2587
      %2620 = vst [vmem:[%s202 + $0xe0] sm:$0xff] %v2588
      %2621 = vst [vmem:[%s202 + $0xe8] sm:$0xff] %v2589
      %2622 = vst [vmem:[%s202 + $0xf0] sm:$0xff] %v2590
      %2623 = vst [vmem:[%s202 + $0xf8] sm:$0xff] %v2591
      %s2624 = smul.u32 32, %s15
      %p2625 = scmp.lt.s32.totalorder %s2624, 63
      %s2626 = scalar_select %p2625, %s2624, 63
      %s2627 = smul.addr %s2626, 8
      %s2628 = scalar_lea.vmem %s4, %s2627
      // Predicated region
      $region37: #{_lambda_.13} parent=35 // pred_check
        %p2629 = pneg %p122
      $region38: #{_lambda_.13} parent=35 // pred_check_branch
        %2631 = sbr.rel (%p2629) target = $region40
      $region39: #{_lambda_.13} parent=35 // pred_region
        %s2632 = smul.u32 32, %s15
      $region40: #{_lambda_.13} parent=35 // pred_fallthru
        _
    $region36: #{_lambda_.13} parent=5 // pred_fallthru
      _
    %p2633 = scmp.le.s32.totalorder 2, %s10
    // Predicated region
    $region41: #{_lambda_.13} parent=5 // pred_check
      %p2634 = pneg %p2633
    $region42: #{_lambda_.13} parent=5 // pred_check_branch
      %2636 = sbr.rel (%p2634) target = $region44
    $region43: #{_lambda_.13} parent=5 // pred_region
      %s2637 = ssub.s32 %s10, 2
      // Predicated region
      $region45: #{_lambda_.13} parent=43 // pred_check
        %p2638 = pneg %p128
      $region46: #{_lambda_.13} parent=43 // pred_check_branch
        %2640 = sbr.rel (%p2638) target = $region48
      $region47: #{_lambda_.13} parent=43 // pred_region
        %s2641 = smul.u32 32, %s16
        %p2642 = scmp.lt.s32.totalorder %s2641, 63
        %s2643 = scalar_select %p2642, %s2641, 63
        %s2644 = smul.addr %s2643, 8
        %s2645 = scalar_lea.vmem %s4, %s2644
      $region48: #{_lambda_.13} parent=43 // pred_fallthru
        _
    $region44: #{_lambda_.13} parent=5 // pred_fallthru
      _
  $region6: #{_lambda_.13} parent=0 // loop_footer
    %s14 = sadd.s32 1, %s10
  $region7: #{_lambda_.13} parent=0 // loop_footer_branch
    %9 = sbr.rel target = $region3
  $region8: #{_lambda_.13} parent=0 // loop_exit
    _

// kernel: _lambda_.14
$region0: #{_lambda_.14}
  #allocation0 [shape = 'u32[]', space=smem, size = 0x4, offset = 0x4, fixed_abs, tag = 'smem constant byte address 0x4 - core index']
  #allocation1 [shape = 'u32[144,128]{1,0:T(1,128)}', space=vmem, size = 0x12000, scoped, tag = 'internal scratch']
  %s0 = inlined_call_operand.vmem [shape: bf16[512,1152], index: 0, kind: input, shape index: {}]
  %s1 = inlined_call_operand.vmem [shape: bf16[1152,128], index: 1, kind: input, shape index: {}]
  %s2 = inlined_call_operand.vmem [shape: bf16[512,128], index: 2, kind: input, shape index: {}]
  %s3 = inlined_call_operand.vmem [shape: bf16[128,128], index: 3, kind: input, shape index: {}]
  %s4 = inlined_call_operand.vmem [shape: f32[512,128], index: 4, kind: output, shape index: {}]
  %s5 = sld [smem:[#allocation0]]
  $region49: #{_lambda_.14} parent=0
    _
  %s7 = ssub.s32 1, %s5
  %s8 = scalar_select 0, %s7, %s5
  loop: start=0, step=1, limit=4
  $region2: #{_lambda_.14} parent=0 // loop_pre_header
    _
  $region3: #{_lambda_.14} parent=0 // loop_header
    %s10 = sphi 0, %s14
    %p11 = scmp.ge.s32.totalorder %s10, 4
    %s20 = sphi 0, %s22
    %s23 = sphi 0, %s20
    %s24 = sphi 0, %s23
    %s40 = sphi 0, %s24
    %s44 = sphi 0, %s44
    %s46 = sphi 0, %s44
    %s47 = sphi 0, %s46
    %s61 = sphi 0, %s47
    %s67 = sphi 0, %s69
    %s70 = sphi 0, %s67
    %s71 = sphi 0, %s70
    %s87 = sphi 0, %s71
    %s91 = sphi 0, %s91
    %s93 = sphi 0, %s91
    %s94 = sphi 0, %s93
    %s108 = sphi 0, %s94
    %s114 = sphi 0, %s116
    %s117 = sphi 0, %s114
    %s118 = sphi 0, %s117
    %s134 = sphi 0, %s118
  $region4: #{_lambda_.14} parent=0 // loop_header_branch
    %13 = sbr.rel (%p11) target = $region8
  $region5: #{_lambda_.14} parent=0 // loop_body
    %s15 = ssub.s32 %s10, 1
    %s16 = ssub.s32 %s10, 2
    %s17 = sadd.s32 %s10, 1
    %s18 = ssub.s32 %s10, %s17
    %p19 = scmp.eq.s32.totalorder %s18, 0
    %s21 = sadd.s32 %s20, 1
    %s22 = scalar_select %p19, %s20, %s21
    %p25 = pneg %p19
    %p26 = scmp.eq.s32.totalorder %s10, 1
    %p27 = por %p25, %p26
    %p28 = scmp.ne.s32.totalorder %s20, %s23
    %p29 = scmp.eq.s32.totalorder %s10, 0
    %p30 = por %p28, %p29
    %p31 = scmp.ne.s32.totalorder %s20, %s23
    %p32 = scmp.eq.s32.totalorder %s15, 1
    %p33 = por %p31, %p32
    %p34 = scmp.ne.s32.totalorder %s23, %s24
    %p35 = scmp.eq.s32.totalorder %s15, 0
    %p36 = por %p34, %p35
    %p37 = scmp.ne.s32.totalorder %s23, %s24
    %p38 = scmp.eq.s32.totalorder %s16, 1
    %p39 = por %p37, %p38
    %p41 = scmp.ne.s32.totalorder %s24, %s40
    %p42 = scmp.eq.s32.totalorder %s16, 0
    %p43 = por %p41, %p42
    %s45 = sadd.s32 %s44, 1
    %p48 = scmp.eq.s32.totalorder %s10, 1
    %p49 = scmp.ne.s32.totalorder %s44, %s46
    %p50 = scmp.eq.s32.totalorder %s10, 0
    %p51 = por %p49, %p50
    %p52 = scmp.ne.s32.totalorder %s44, %s46
    %p53 = scmp.eq.s32.totalorder %s15, 1
    %p54 = por %p52, %p53
    %p55 = scmp.ne.s32.totalorder %s46, %s47
    %p56 = scmp.eq.s32.totalorder %s15, 0
    %p57 = por %p55, %p56
    %p58 = scmp.ne.s32.totalorder %s46, %s47
    %p59 = scmp.eq.s32.totalorder %s16, 1
    %p60 = por %p58, %p59
    %p62 = scmp.ne.s32.totalorder %s47, %s61
    %p63 = scmp.eq.s32.totalorder %s16, 0
    %p64 = por %p62, %p63
    %s65 = ssub.s32 %s10, %s17
    %p66 = scmp.eq.s32.totalorder %s65, 0
    %s68 = sadd.s32 %s67, 1
    %s69 = scalar_select %p66, %s67, %s68
    %p72 = pneg %p66
    %p73 = scmp.eq.s32.totalorder %s10, 1
    %p74 = por %p72, %p73
    %p75 = scmp.ne.s32.totalorder %s67, %s70
    %p76 = scmp.eq.s32.totalorder %s10, 0
    %p77 = por %p75, %p76
    %p78 = scmp.ne.s32.totalorder %s67, %s70
    %p79 = scmp.eq.s32.totalorder %s15, 1
    %p80 = por %p78, %p79
    %p81 = scmp.ne.s32.totalorder %s70, %s71
    %p82 = scmp.eq.s32.totalorder %s15, 0
    %p83 = por %p81, %p82
    %p84 = scmp.ne.s32.totalorder %s70, %s71
    %p85 = scmp.eq.s32.totalorder %s16, 1
    %p86 = por %p84, %p85
    %p88 = scmp.ne.s32.totalorder %s71, %s87
    %p89 = scmp.eq.s32.totalorder %s16, 0
    %p90 = por %p88, %p89
    %s92 = sadd.s32 %s91, 1
    %p95 = scmp.eq.s32.totalorder %s10, 1
    %p96 = scmp.ne.s32.totalorder %s91, %s93
    %p97 = scmp.eq.s32.totalorder %s10, 0
    %p98 = por %p96, %p97
    %p99 = scmp.ne.s32.totalorder %s91, %s93
    %p100 = scmp.eq.s32.totalorder %s15, 1
    %p101 = por %p99, %p100
    %p102 = scmp.ne.s32.totalorder %s93, %s94
    %p103 = scmp.eq.s32.totalorder %s15, 0
    %p104 = por %p102, %p103
    %p105 = scmp.ne.s32.totalorder %s93, %s94
    %p106 = scmp.eq.s32.totalorder %s16, 1
    %p107 = por %p105, %p106
    %p109 = scmp.ne.s32.totalorder %s94, %s108
    %p110 = scmp.eq.s32.totalorder %s16, 0
    %p111 = por %p109, %p110
    %s112 = ssub.s32 %s10, %s17
    %p113 = scmp.eq.s32.totalorder %s112, 0
    %s115 = sadd.s32 %s114, 1
    %s116 = scalar_select %p113, %s114, %s115
    %p119 = pneg %p113
    %p120 = scmp.eq.s32.totalorder %s10, 1
    %p121 = por %p119, %p120
    %p122 = scmp.ne.s32.totalorder %s114, %s117
    %p123 = scmp.eq.s32.totalorder %s10, 0
    %p124 = por %p122, %p123
    %p125 = scmp.ne.s32.totalorder %s114, %s117
    %p126 = scmp.eq.s32.totalorder %s15, 1
    %p127 = por %p125, %p126
    %p128 = scmp.ne.s32.totalorder %s117, %s118
    %p129 = scmp.eq.s32.totalorder %s15, 0
    %p130 = por %p128, %p129
    %p131 = scmp.ne.s32.totalorder %s117, %s118
    %p132 = scmp.eq.s32.totalorder %s16, 1
    %p133 = por %p131, %p132
    %p135 = scmp.ne.s32.totalorder %s118, %s134
    %p136 = scmp.eq.s32.totalorder %s16, 0
    %p137 = por %p135, %p136
    %p138 = scmp.le.s32.totalorder 1, %s10
    %p139 = scmp.lt.s32.totalorder %s10, 3
    %p140 = pnand %p138, %p139
    %p141 = pneg %p140
    // Predicated region
    $region9: #{_lambda_.14} parent=5 // pred_check
      _
    $region10: #{_lambda_.14} parent=5 // pred_check_branch
      %143 = sbr.rel (%p140) target = $region12
    $region11: #{_lambda_.14} parent=5 // pred_region
      %s144 = ssub.s32 %s10, 1
      // Predicated region
      $region13: #{_lambda_.14} parent=11 // pred_check
        %p145 = pneg %p57
      $region14: #{_lambda_.14} parent=11 // pred_check_branch
        %147 = sbr.rel (%p145) target = $region16
      $region15: #{_lambda_.14} parent=11 // pred_region
        _
      $region16: #{_lambda_.14} parent=11 // pred_fallthru
        _
      // Predicated region
      $region17: #{_lambda_.14} parent=11 // pred_check
        %p148 = pneg %p104
      $region18: #{_lambda_.14} parent=11 // pred_check_branch
        %150 = sbr.rel (%p148) target = $region20
      $region19: #{_lambda_.14} parent=11 // pred_region
        _
      $region20: #{_lambda_.14} parent=11 // pred_fallthru
        _
    $region12: #{_lambda_.14} parent=5 // pred_fallthru
      _
    %p151 = scmp.lt.s32.totalorder %s10, 2
    // Predicated region
    $region21: #{_lambda_.14} parent=5 // pred_check
      %p152 = pneg %p151
    $region22: #{_lambda_.14} parent=5 // pred_check_branch
      %154 = sbr.rel (%p152) target = $region24
    $region23: #{_lambda_.14} parent=5 // pred_region
      // Predicated region
      $region25: #{_lambda_.14} parent=23 // pred_check
        %p155 = pneg %p30
      $region26: #{_lambda_.14} parent=23 // pred_check_branch
        %157 = sbr.rel (%p155) target = $region28
      $region27: #{_lambda_.14} parent=23 // pred_region
        %s158 = smul.u32 32, %s10
        %p159 = scmp.lt.s32.totalorder %s158, 63
        %s160 = scalar_select %p159, %s158, 63
        %s161 = smul.addr %s160, 9
        %s162 = smul.addr %s161, 4
        %s163 = scalar_lea.vmem %s0, %s162
        %s164 = smul.u32 32, %s10
      $region28: #{_lambda_.14} parent=23 // pred_fallthru
        _
      // Predicated region
      $region29: #{_lambda_.14} parent=23 // pred_check
        %p165 = pneg %p77
      $region30: #{_lambda_.14} parent=23 // pred_check_branch
        %167 = sbr.rel (%p165) target = $region32
      $region31: #{_lambda_.14} parent=23 // pred_region
        %s168 = smul.u32 32, %s10
        %p169 = scmp.lt.s32.totalorder %s168, 63
        %s170 = scalar_select %p169, %s168, 63
        %s171 = smul.addr %s170, 4
        %s172 = scalar_lea.vmem %s2, %s171
        %s173 = smul.u32 32, %s10
      $region32: #{_lambda_.14} parent=23 // pred_fallthru
        _
    $region24: #{_lambda_.14} parent=5 // pred_fallthru
      _
    %p174 = scmp.le.s32.totalorder 1, %s10
    %p175 = scmp.lt.s32.totalorder %s10, 3
    %p176 = pnand %p174, %p175
    %p177 = pneg %p176
    // Predicated region
    $region33: #{_lambda_.14} parent=5 // pred_check
      _
    $region34: #{_lambda_.14} parent=5 // pred_check_branch
      %179 = sbr.rel (%p176) target = $region36
    $region35: #{_lambda_.14} parent=5 // pred_region
      %s180 = ssub.s32 %s10, 1
      %s181 = smul.u32 32, %s15
      %p182 = scmp.lt.s32.totalorder %s181, 63
      %s183 = scalar_select %p182, %s181, 63
      %s184 = smul.addr %s183, 9
      %s185 = smul.addr %s184, 4
      %s186 = scalar_lea.vmem %s0, %s185
      %p187 = pneg %p36
      %p188 = pneg %p33
      %p189 = pneg %p57
      %p190 = pneg %p54
      %s191 = smul.u32 32, %s15
      %p192 = scmp.lt.s32.totalorder %s191, 63
      %s193 = scalar_select %p192, %s191, 63
      %s194 = smul.addr %s193, 4
      %s195 = scalar_lea.vmem %s2, %s194
      %p196 = pneg %p83
      %p197 = pneg %p80
      %p198 = pneg %p104
      %p199 = pneg %p101
      %p200 = pneg %p130
      %p201 = pneg %p127
      %s202 = smul.u32 32, %s15
      %p203 = scmp.lt.s32.totalorder %s202, 63
      %s204 = scalar_select %p203, %s202, 63
      %s205 = smul.addr %s204, 8
      %s206 = scalar_lea.vmem %s4, %s205
      %s207 = smul.u32 32, %s15
      %p208 = scmp.lt.s32.totalorder %s207, 63
      %s209 = scalar_select %p208, %s207, 63
      %s210 = smul.addr %s209, 9
      %s211 = smul.addr %s210, 4
      %s212 = scalar_lea.vmem %s0, %s211
      %s213 = smul.u32 32, %s15
      %s214 = smul.u32 32, %s15
      %p215 = scmp.lt.s32.totalorder %s214, 63
      %s216 = scalar_select %p215, %s214, 63
      %s217 = smul.addr %s216, 4
      %s218 = scalar_lea.vmem %s2, %s217
      %s219 = smul.u32 32, %s15
      %s220 = smul.u32 32, %s15
      %p221 = scmp.lt.s32.totalorder %s220, 63
      %s222 = scalar_select %p221, %s220, 63
      %s223 = smul.addr %s222, 8
      %s224 = scalar_lea.vmem %s4, %s223
      %s225 = smul.u32 32, %s15
      %v227 = vld [vmem:[%s212] sm:$0xff]
      %v228 = vld [vmem:[%s212 + $0x8] sm:$0xff]
      %v229 = vld [vmem:[%s212 + $0x10] sm:$0xff]
      %v230 = vld [vmem:[%s212 + $0x18] sm:$0xff]
      %v231 = vld [vmem:[%s212 + $0x20] sm:$0xf]
      %v232 = vld [vmem:[%s212 + $0x24] sm:$0xff]
      %v233 = vld [vmem:[%s212 + $0x2c] sm:$0xff]
      %v234 = vld [vmem:[%s212 + $0x34] sm:$0xff]
      %v235 = vld [vmem:[%s212 + $0x3c] sm:$0xff]
      %v236 = vld [vmem:[%s212 + $0x44] sm:$0xf]
      %v237 = vld [vmem:[%s212 + $0x48] sm:$0xff]
      %v238 = vld [vmem:[%s212 + $0x50] sm:$0xff]
      %v239 = vld [vmem:[%s212 + $0x58] sm:$0xff]
      %v240 = vld [vmem:[%s212 + $0x60] sm:$0xff]
      %v241 = vld [vmem:[%s212 + $0x68] sm:$0xf]
      %v242 = vld [vmem:[%s212 + $0x6c] sm:$0xff]
      %v243 = vld [vmem:[%s212 + $0x74] sm:$0xff]
      %v244 = vld [vmem:[%s212 + $0x7c] sm:$0xff]
      %v245 = vld [vmem:[%s212 + $0x84] sm:$0xff]
      %v246 = vld [vmem:[%s212 + $0x8c] sm:$0xf]
      %v247 = vld [vmem:[%s212 + $0x90] sm:$0xff]
      %v248 = vld [vmem:[%s212 + $0x98] sm:$0xff]
      %v249 = vld [vmem:[%s212 + $0xa0] sm:$0xff]
      %v250 = vld [vmem:[%s212 + $0xa8] sm:$0xff]
      %v251 = vld [vmem:[%s212 + $0xb0] sm:$0xf]
      %v252 = vld [vmem:[%s212 + $0xb4] sm:$0xff]
      %v253 = vld [vmem:[%s212 + $0xbc] sm:$0xff]
      %v254 = vld [vmem:[%s212 + $0xc4] sm:$0xff]
      %v255 = vld [vmem:[%s212 + $0xcc] sm:$0xff]
      %v256 = vld [vmem:[%s212 + $0xd4] sm:$0xf]
      %v257 = vld [vmem:[%s212 + $0xd8] sm:$0xff]
      %v258 = vld [vmem:[%s212 + $0xe0] sm:$0xff]
      %v259 = vld [vmem:[%s212 + $0xe8] sm:$0xff]
      %v260 = vld [vmem:[%s212 + $0xf0] sm:$0xff]
      %v261 = vld [vmem:[%s212 + $0xf8] sm:$0xf]
      %v262 = vld [vmem:[%s212 + $0xfc] sm:$0xff]
      %v263 = vld [vmem:[%s212 + $0x104] sm:$0xff]
      %v264 = vld [vmem:[%s212 + $0x10c] sm:$0xff]
      %v265 = vld [vmem:[%s212 + $0x114] sm:$0xff]
      %v266 = vld [vmem:[%s212 + $0x11c] sm:$0xf]
      %v267 = vld [vmem:[%s212 + $0x120] sm:$0xff]
      %v268 = vld [vmem:[%s212 + $0x128] sm:$0xff]
      %v269 = vld [vmem:[%s212 + $0x130] sm:$0xff]
      %v270 = vld [vmem:[%s212 + $0x138] sm:$0xff]
      %v271 = vld [vmem:[%s212 + $0x140] sm:$0xf]
      %v272 = vld [vmem:[%s212 + $0x144] sm:$0xff]
      %v273 = vld [vmem:[%s212 + $0x14c] sm:$0xff]
      %v274 = vld [vmem:[%s212 + $0x154] sm:$0xff]
      %v275 = vld [vmem:[%s212 + $0x15c] sm:$0xff]
      %v276 = vld [vmem:[%s212 + $0x164] sm:$0xf]
      %v277 = vld [vmem:[%s212 + $0x168] sm:$0xff]
      %v278 = vld [vmem:[%s212 + $0x170] sm:$0xff]
      %v279 = vld [vmem:[%s212 + $0x178] sm:$0xff]
      %v280 = vld [vmem:[%s212 + $0x180] sm:$0xff]
      %v281 = vld [vmem:[%s212 + $0x188] sm:$0xf]
      %v282 = vld [vmem:[%s212 + $0x18c] sm:$0xff]
      %v283 = vld [vmem:[%s212 + $0x194] sm:$0xff]
      %v284 = vld [vmem:[%s212 + $0x19c] sm:$0xff]
      %v285 = vld [vmem:[%s212 + $0x1a4] sm:$0xff]
      %v286 = vld [vmem:[%s212 + $0x1ac] sm:$0xf]
      %v287 = vld [vmem:[%s212 + $0x1b0] sm:$0xff]
      %v288 = vld [vmem:[%s212 + $0x1b8] sm:$0xff]
      %v289 = vld [vmem:[%s212 + $0x1c0] sm:$0xff]
      %v290 = vld [vmem:[%s212 + $0x1c8] sm:$0xff]
      %v291 = vld [vmem:[%s212 + $0x1d0] sm:$0xf]
      %v292 = vld [vmem:[%s212 + $0x1d4] sm:$0xff]
      %v293 = vld [vmem:[%s212 + $0x1dc] sm:$0xff]
      %v294 = vld [vmem:[%s212 + $0x1e4] sm:$0xff]
      %v295 = vld [vmem:[%s212 + $0x1ec] sm:$0xff]
      %v296 = vld [vmem:[%s212 + $0x1f4] sm:$0xf]
      %v297 = vld [vmem:[%s212 + $0x1f8] sm:$0xff]
      %v298 = vld [vmem:[%s212 + $0x200] sm:$0xff]
      %v299 = vld [vmem:[%s212 + $0x208] sm:$0xff]
      %v300 = vld [vmem:[%s212 + $0x210] sm:$0xff]
      %v301 = vld [vmem:[%s212 + $0x218] sm:$0xf]
      %v302 = vld [vmem:[%s212 + $0x21c] sm:$0xff]
      %v303 = vld [vmem:[%s212 + $0x224] sm:$0xff]
      %v304 = vld [vmem:[%s212 + $0x22c] sm:$0xff]
      %v305 = vld [vmem:[%s212 + $0x234] sm:$0xff]
      %v306 = vld [vmem:[%s212 + $0x23c] sm:$0xf]
      %v307 = vld [vmem:[%s212 + $0x240] sm:$0xff]
      %v308 = vld [vmem:[%s212 + $0x248] sm:$0xff]
      %v309 = vld [vmem:[%s212 + $0x250] sm:$0xff]
      %v310 = vld [vmem:[%s212 + $0x258] sm:$0xff]
      %v311 = vld [vmem:[%s212 + $0x260] sm:$0xf]
      %v312 = vld [vmem:[%s212 + $0x264] sm:$0xff]
      %v313 = vld [vmem:[%s212 + $0x26c] sm:$0xff]
      %v314 = vld [vmem:[%s212 + $0x274] sm:$0xff]
      %v315 = vld [vmem:[%s212 + $0x27c] sm:$0xff]
      %v316 = vld [vmem:[%s212 + $0x284] sm:$0xf]
      %v317 = vld [vmem:[%s212 + $0x288] sm:$0xff]
      %v318 = vld [vmem:[%s212 + $0x290] sm:$0xff]
      %v319 = vld [vmem:[%s212 + $0x298] sm:$0xff]
      %v320 = vld [vmem:[%s212 + $0x2a0] sm:$0xff]
      %v321 = vld [vmem:[%s212 + $0x2a8] sm:$0xf]
      %v322 = vld [vmem:[%s212 + $0x2ac] sm:$0xff]
      %v323 = vld [vmem:[%s212 + $0x2b4] sm:$0xff]
      %v324 = vld [vmem:[%s212 + $0x2bc] sm:$0xff]
      %v325 = vld [vmem:[%s212 + $0x2c4] sm:$0xff]
      %v326 = vld [vmem:[%s212 + $0x2cc] sm:$0xf]
      %v327 = vld [vmem:[%s212 + $0x2d0] sm:$0xff]
      %v328 = vld [vmem:[%s212 + $0x2d8] sm:$0xff]
      %v329 = vld [vmem:[%s212 + $0x2e0] sm:$0xff]
      %v330 = vld [vmem:[%s212 + $0x2e8] sm:$0xff]
      %v331 = vld [vmem:[%s212 + $0x2f0] sm:$0xf]
      %v332 = vld [vmem:[%s212 + $0x2f4] sm:$0xff]
      %v333 = vld [vmem:[%s212 + $0x2fc] sm:$0xff]
      %v334 = vld [vmem:[%s212 + $0x304] sm:$0xff]
      %v335 = vld [vmem:[%s212 + $0x30c] sm:$0xff]
      %v336 = vld [vmem:[%s212 + $0x314] sm:$0xf]
      %v337 = vld [vmem:[%s212 + $0x318] sm:$0xff]
      %v338 = vld [vmem:[%s212 + $0x320] sm:$0xff]
      %v339 = vld [vmem:[%s212 + $0x328] sm:$0xff]
      %v340 = vld [vmem:[%s212 + $0x330] sm:$0xff]
      %v341 = vld [vmem:[%s212 + $0x338] sm:$0xf]
      %v342 = vld [vmem:[%s212 + $0x33c] sm:$0xff]
      %v343 = vld [vmem:[%s212 + $0x344] sm:$0xff]
      %v344 = vld [vmem:[%s212 + $0x34c] sm:$0xff]
      %v345 = vld [vmem:[%s212 + $0x354] sm:$0xff]
      %v346 = vld [vmem:[%s212 + $0x35c] sm:$0xf]
      %v347 = vld [vmem:[%s212 + $0x360] sm:$0xff]
      %v348 = vld [vmem:[%s212 + $0x368] sm:$0xff]
      %v349 = vld [vmem:[%s212 + $0x370] sm:$0xff]
      %v350 = vld [vmem:[%s212 + $0x378] sm:$0xff]
      %v351 = vld [vmem:[%s212 + $0x380] sm:$0xf]
      %v352 = vld [vmem:[%s212 + $0x384] sm:$0xff]
      %v353 = vld [vmem:[%s212 + $0x38c] sm:$0xff]
      %v354 = vld [vmem:[%s212 + $0x394] sm:$0xff]
      %v355 = vld [vmem:[%s212 + $0x39c] sm:$0xff]
      %v356 = vld [vmem:[%s212 + $0x3a4] sm:$0xf]
      %v357 = vld [vmem:[%s212 + $0x3a8] sm:$0xff]
      %v358 = vld [vmem:[%s212 + $0x3b0] sm:$0xff]
      %v359 = vld [vmem:[%s212 + $0x3b8] sm:$0xff]
      %v360 = vld [vmem:[%s212 + $0x3c0] sm:$0xff]
      %v361 = vld [vmem:[%s212 + $0x3c8] sm:$0xf]
      %v362 = vld [vmem:[%s212 + $0x3cc] sm:$0xff]
      %v363 = vld [vmem:[%s212 + $0x3d4] sm:$0xff]
      %v364 = vld [vmem:[%s212 + $0x3dc] sm:$0xff]
      %v365 = vld [vmem:[%s212 + $0x3e4] sm:$0xff]
      %v366 = vld [vmem:[%s212 + $0x3ec] sm:$0xf]
      %v367 = vld [vmem:[%s212 + $0x3f0] sm:$0xff]
      %v368 = vld [vmem:[%s212 + $0x3f8] sm:$0xff]
      %v369 = vld [vmem:[%s212 + $0x400] sm:$0xff]
      %v370 = vld [vmem:[%s212 + $0x408] sm:$0xff]
      %v371 = vld [vmem:[%s212 + $0x410] sm:$0xf]
      %v372 = vld [vmem:[%s212 + $0x414] sm:$0xff]
      %v373 = vld [vmem:[%s212 + $0x41c] sm:$0xff]
      %v374 = vld [vmem:[%s212 + $0x424] sm:$0xff]
      %v375 = vld [vmem:[%s212 + $0x42c] sm:$0xff]
      %v376 = vld [vmem:[%s212 + $0x434] sm:$0xf]
      %v377 = vld [vmem:[%s212 + $0x438] sm:$0xff]
      %v378 = vld [vmem:[%s212 + $0x440] sm:$0xff]
      %v379 = vld [vmem:[%s212 + $0x448] sm:$0xff]
      %v380 = vld [vmem:[%s212 + $0x450] sm:$0xff]
      %v381 = vld [vmem:[%s212 + $0x458] sm:$0xf]
      %v382 = vld [vmem:[%s212 + $0x45c] sm:$0xff]
      %v383 = vld [vmem:[%s212 + $0x464] sm:$0xff]
      %v384 = vld [vmem:[%s212 + $0x46c] sm:$0xff]
      %v385 = vld [vmem:[%s212 + $0x474] sm:$0xff]
      %v386 = vld [vmem:[%s212 + $0x47c] sm:$0xf]
      %v387 = vld [vmem:[%s1] sm:$0xf]
      %v388 = vld [vmem:[%s1 + $0x4] sm:$0xf]
      %v389 = vld [vmem:[%s1 + $0x8] sm:$0xf]
      %v390 = vld [vmem:[%s1 + $0xc] sm:$0xf]
      %v391 = vld [vmem:[%s1 + $0x10] sm:$0xf]
      %v392 = vld [vmem:[%s1 + $0x14] sm:$0xf]
      %v393 = vld [vmem:[%s1 + $0x18] sm:$0xf]
      %v394 = vld [vmem:[%s1 + $0x1c] sm:$0xf]
      %v395 = vld [vmem:[%s1 + $0x20] sm:$0xf]
      %v396 = vld [vmem:[%s1 + $0x24] sm:$0xf]
      %v397 = vld [vmem:[%s1 + $0x28] sm:$0xf]
      %v398 = vld [vmem:[%s1 + $0x2c] sm:$0xf]
      %v399 = vld [vmem:[%s1 + $0x30] sm:$0xf]
      %v400 = vld [vmem:[%s1 + $0x34] sm:$0xf]
      %v401 = vld [vmem:[%s1 + $0x38] sm:$0xf]
      %v402 = vld [vmem:[%s1 + $0x3c] sm:$0xf]
      %v403 = vld [vmem:[%s1 + $0x40] sm:$0xf]
      %v404 = vld [vmem:[%s1 + $0x44] sm:$0xf]
      %v405 = vld [vmem:[%s1 + $0x48] sm:$0xf]
      %v406 = vld [vmem:[%s1 + $0x4c] sm:$0xf]
      %v407 = vld [vmem:[%s1 + $0x50] sm:$0xf]
      %v408 = vld [vmem:[%s1 + $0x54] sm:$0xf]
      %v409 = vld [vmem:[%s1 + $0x58] sm:$0xf]
      %v410 = vld [vmem:[%s1 + $0x5c] sm:$0xf]
      %v411 = vld [vmem:[%s1 + $0x60] sm:$0xf]
      %v412 = vld [vmem:[%s1 + $0x64] sm:$0xf]
      %v413 = vld [vmem:[%s1 + $0x68] sm:$0xf]
      %v414 = vld [vmem:[%s1 + $0x6c] sm:$0xf]
      %v415 = vld [vmem:[%s1 + $0x70] sm:$0xf]
      %v416 = vld [vmem:[%s1 + $0x74] sm:$0xf]
      %v417 = vld [vmem:[%s1 + $0x78] sm:$0xf]
      %v418 = vld [vmem:[%s1 + $0x7c] sm:$0xf]
      %v419 = vld [vmem:[%s1 + $0x80] sm:$0xf]
      %v420 = vld [vmem:[%s1 + $0x84] sm:$0xf]
      %v421 = vld [vmem:[%s1 + $0x88] sm:$0xf]
      %v422 = vld [vmem:[%s1 + $0x8c] sm:$0xf]
      %v423 = vld [vmem:[%s1 + $0x90] sm:$0xf]
      %v424 = vld [vmem:[%s1 + $0x94] sm:$0xf]
      %v425 = vld [vmem:[%s1 + $0x98] sm:$0xf]
      %v426 = vld [vmem:[%s1 + $0x9c] sm:$0xf]
      %v427 = vld [vmem:[%s1 + $0xa0] sm:$0xf]
      %v428 = vld [vmem:[%s1 + $0xa4] sm:$0xf]
      %v429 = vld [vmem:[%s1 + $0xa8] sm:$0xf]
      %v430 = vld [vmem:[%s1 + $0xac] sm:$0xf]
      %v431 = vld [vmem:[%s1 + $0xb0] sm:$0xf]
      %v432 = vld [vmem:[%s1 + $0xb4] sm:$0xf]
      %v433 = vld [vmem:[%s1 + $0xb8] sm:$0xf]
      %v434 = vld [vmem:[%s1 + $0xbc] sm:$0xf]
      %v435 = vld [vmem:[%s1 + $0xc0] sm:$0xf]
      %v436 = vld [vmem:[%s1 + $0xc4] sm:$0xf]
      %v437 = vld [vmem:[%s1 + $0xc8] sm:$0xf]
      %v438 = vld [vmem:[%s1 + $0xcc] sm:$0xf]
      %v439 = vld [vmem:[%s1 + $0xd0] sm:$0xf]
      %v440 = vld [vmem:[%s1 + $0xd4] sm:$0xf]
      %v441 = vld [vmem:[%s1 + $0xd8] sm:$0xf]
      %v442 = vld [vmem:[%s1 + $0xdc] sm:$0xf]
      %v443 = vld [vmem:[%s1 + $0xe0] sm:$0xf]
      %v444 = vld [vmem:[%s1 + $0xe4] sm:$0xf]
      %v445 = vld [vmem:[%s1 + $0xe8] sm:$0xf]
      %v446 = vld [vmem:[%s1 + $0xec] sm:$0xf]
      %v447 = vld [vmem:[%s1 + $0xf0] sm:$0xf]
      %v448 = vld [vmem:[%s1 + $0xf4] sm:$0xf]
      %v449 = vld [vmem:[%s1 + $0xf8] sm:$0xf]
      %v450 = vld [vmem:[%s1 + $0xfc] sm:$0xf]
      %v451 = vld [vmem:[%s1 + $0x100] sm:$0xf]
      %v452 = vld [vmem:[%s1 + $0x104] sm:$0xf]
      %v453 = vld [vmem:[%s1 + $0x108] sm:$0xf]
      %v454 = vld [vmem:[%s1 + $0x10c] sm:$0xf]
      %v455 = vld [vmem:[%s1 + $0x110] sm:$0xf]
      %v456 = vld [vmem:[%s1 + $0x114] sm:$0xf]
      %v457 = vld [vmem:[%s1 + $0x118] sm:$0xf]
      %v458 = vld [vmem:[%s1 + $0x11c] sm:$0xf]
      %v459 = vld [vmem:[%s1 + $0x120] sm:$0xf]
      %v460 = vld [vmem:[%s1 + $0x124] sm:$0xf]
      %v461 = vld [vmem:[%s1 + $0x128] sm:$0xf]
      %v462 = vld [vmem:[%s1 + $0x12c] sm:$0xf]
      %v463 = vld [vmem:[%s1 + $0x130] sm:$0xf]
      %v464 = vld [vmem:[%s1 + $0x134] sm:$0xf]
      %v465 = vld [vmem:[%s1 + $0x138] sm:$0xf]
      %v466 = vld [vmem:[%s1 + $0x13c] sm:$0xf]
      %v467 = vld [vmem:[%s1 + $0x140] sm:$0xf]
      %v468 = vld [vmem:[%s1 + $0x144] sm:$0xf]
      %v469 = vld [vmem:[%s1 + $0x148] sm:$0xf]
      %v470 = vld [vmem:[%s1 + $0x14c] sm:$0xf]
      %v471 = vld [vmem:[%s1 + $0x150] sm:$0xf]
      %v472 = vld [vmem:[%s1 + $0x154] sm:$0xf]
      %v473 = vld [vmem:[%s1 + $0x158] sm:$0xf]
      %v474 = vld [vmem:[%s1 + $0x15c] sm:$0xf]
      %v475 = vld [vmem:[%s1 + $0x160] sm:$0xf]
      %v476 = vld [vmem:[%s1 + $0x164] sm:$0xf]
      %v477 = vld [vmem:[%s1 + $0x168] sm:$0xf]
      %v478 = vld [vmem:[%s1 + $0x16c] sm:$0xf]
      %v479 = vld [vmem:[%s1 + $0x170] sm:$0xf]
      %v480 = vld [vmem:[%s1 + $0x174] sm:$0xf]
      %v481 = vld [vmem:[%s1 + $0x178] sm:$0xf]
      %v482 = vld [vmem:[%s1 + $0x17c] sm:$0xf]
      %v483 = vld [vmem:[%s1 + $0x180] sm:$0xf]
      %v484 = vld [vmem:[%s1 + $0x184] sm:$0xf]
      %v485 = vld [vmem:[%s1 + $0x188] sm:$0xf]
      %v486 = vld [vmem:[%s1 + $0x18c] sm:$0xf]
      %v487 = vld [vmem:[%s1 + $0x190] sm:$0xf]
      %v488 = vld [vmem:[%s1 + $0x194] sm:$0xf]
      %v489 = vld [vmem:[%s1 + $0x198] sm:$0xf]
      %v490 = vld [vmem:[%s1 + $0x19c] sm:$0xf]
      %v491 = vld [vmem:[%s1 + $0x1a0] sm:$0xf]
      %v492 = vld [vmem:[%s1 + $0x1a4] sm:$0xf]
      %v493 = vld [vmem:[%s1 + $0x1a8] sm:$0xf]
      %v494 = vld [vmem:[%s1 + $0x1ac] sm:$0xf]
      %v495 = vld [vmem:[%s1 + $0x1b0] sm:$0xf]
      %v496 = vld [vmem:[%s1 + $0x1b4] sm:$0xf]
      %v497 = vld [vmem:[%s1 + $0x1b8] sm:$0xf]
      %v498 = vld [vmem:[%s1 + $0x1bc] sm:$0xf]
      %v499 = vld [vmem:[%s1 + $0x1c0] sm:$0xf]
      %v500 = vld [vmem:[%s1 + $0x1c4] sm:$0xf]
      %v501 = vld [vmem:[%s1 + $0x1c8] sm:$0xf]
      %v502 = vld [vmem:[%s1 + $0x1cc] sm:$0xf]
      %v503 = vld [vmem:[%s1 + $0x1d0] sm:$0xf]
      %v504 = vld [vmem:[%s1 + $0x1d4] sm:$0xf]
      %v505 = vld [vmem:[%s1 + $0x1d8] sm:$0xf]
      %v506 = vld [vmem:[%s1 + $0x1dc] sm:$0xf]
      %v507 = vld [vmem:[%s1 + $0x1e0] sm:$0xf]
      %v508 = vld [vmem:[%s1 + $0x1e4] sm:$0xf]
      %v509 = vld [vmem:[%s1 + $0x1e8] sm:$0xf]
      %v510 = vld [vmem:[%s1 + $0x1ec] sm:$0xf]
      %v511 = vld [vmem:[%s1 + $0x1f0] sm:$0xf]
      %v512 = vld [vmem:[%s1 + $0x1f4] sm:$0xf]
      %v513 = vld [vmem:[%s1 + $0x1f8] sm:$0xf]
      %v514 = vld [vmem:[%s1 + $0x1fc] sm:$0xf]
      %v515 = vld [vmem:[%s1 + $0x200] sm:$0xf]
      %v516 = vld [vmem:[%s1 + $0x204] sm:$0xf]
      %v517 = vld [vmem:[%s1 + $0x208] sm:$0xf]
      %v518 = vld [vmem:[%s1 + $0x20c] sm:$0xf]
      %v519 = vld [vmem:[%s1 + $0x210] sm:$0xf]
      %v520 = vld [vmem:[%s1 + $0x214] sm:$0xf]
      %v521 = vld [vmem:[%s1 + $0x218] sm:$0xf]
      %v522 = vld [vmem:[%s1 + $0x21c] sm:$0xf]
      %v523 = vld [vmem:[%s1 + $0x220] sm:$0xf]
      %v524 = vld [vmem:[%s1 + $0x224] sm:$0xf]
      %v525 = vld [vmem:[%s1 + $0x228] sm:$0xf]
      %v526 = vld [vmem:[%s1 + $0x22c] sm:$0xf]
      %v527 = vld [vmem:[%s1 + $0x230] sm:$0xf]
      %v528 = vld [vmem:[%s1 + $0x234] sm:$0xf]
      %v529 = vld [vmem:[%s1 + $0x238] sm:$0xf]
      %v530 = vld [vmem:[%s1 + $0x23c] sm:$0xf]
      %v531 = vld [vmem:[%s218] sm:$0xf]
      %v532 = vld [vmem:[%s218 + $0x4] sm:$0xf]
      %v533 = vld [vmem:[%s218 + $0x8] sm:$0xf]
      %v534 = vld [vmem:[%s218 + $0xc] sm:$0xf]
      %v535 = vld [vmem:[%s218 + $0x10] sm:$0xf]
      %v536 = vld [vmem:[%s218 + $0x14] sm:$0xf]
      %v537 = vld [vmem:[%s218 + $0x18] sm:$0xf]
      %v538 = vld [vmem:[%s218 + $0x1c] sm:$0xf]
      %v539 = vld [vmem:[%s218 + $0x20] sm:$0xf]
      %v540 = vld [vmem:[%s218 + $0x24] sm:$0xf]
      %v541 = vld [vmem:[%s218 + $0x28] sm:$0xf]
      %v542 = vld [vmem:[%s218 + $0x2c] sm:$0xf]
      %v543 = vld [vmem:[%s218 + $0x30] sm:$0xf]
      %v544 = vld [vmem:[%s218 + $0x34] sm:$0xf]
      %v545 = vld [vmem:[%s218 + $0x38] sm:$0xf]
      %v546 = vld [vmem:[%s218 + $0x3c] sm:$0xf]
      %v547 = vld [vmem:[%s218 + $0x40] sm:$0xf]
      %v548 = vld [vmem:[%s218 + $0x44] sm:$0xf]
      %v549 = vld [vmem:[%s218 + $0x48] sm:$0xf]
      %v550 = vld [vmem:[%s218 + $0x4c] sm:$0xf]
      %v551 = vld [vmem:[%s218 + $0x50] sm:$0xf]
      %v552 = vld [vmem:[%s218 + $0x54] sm:$0xf]
      %v553 = vld [vmem:[%s218 + $0x58] sm:$0xf]
      %v554 = vld [vmem:[%s218 + $0x5c] sm:$0xf]
      %v555 = vld [vmem:[%s218 + $0x60] sm:$0xf]
      %v556 = vld [vmem:[%s218 + $0x64] sm:$0xf]
      %v557 = vld [vmem:[%s218 + $0x68] sm:$0xf]
      %v558 = vld [vmem:[%s218 + $0x6c] sm:$0xf]
      %v559 = vld [vmem:[%s218 + $0x70] sm:$0xf]
      %v560 = vld [vmem:[%s218 + $0x74] sm:$0xf]
      %v561 = vld [vmem:[%s218 + $0x78] sm:$0xf]
      %v562 = vld [vmem:[%s218 + $0x7c] sm:$0xf]
      %v563 = vld [vmem:[%s3] sm:$0xf]
      %v564 = vld [vmem:[%s3 + $0x4] sm:$0xf]
      %v565 = vld [vmem:[%s3 + $0x8] sm:$0xf]
      %v566 = vld [vmem:[%s3 + $0xc] sm:$0xf]
      %v567 = vld [vmem:[%s3 + $0x10] sm:$0xf]
      %v568 = vld [vmem:[%s3 + $0x14] sm:$0xf]
      %v569 = vld [vmem:[%s3 + $0x18] sm:$0xf]
      %v570 = vld [vmem:[%s3 + $0x1c] sm:$0xf]
      %v571 = vld [vmem:[%s3 + $0x20] sm:$0xf]
      %v572 = vld [vmem:[%s3 + $0x24] sm:$0xf]
      %v573 = vld [vmem:[%s3 + $0x28] sm:$0xf]
      %v574 = vld [vmem:[%s3 + $0x2c] sm:$0xf]
      %v575 = vld [vmem:[%s3 + $0x30] sm:$0xf]
      %v576 = vld [vmem:[%s3 + $0x34] sm:$0xf]
      %v577 = vld [vmem:[%s3 + $0x38] sm:$0xf]
      %v578 = vld [vmem:[%s3 + $0x3c] sm:$0xf]
      %v611 = vunpack.c.l.b16 %v531
      %v612 = vunpack.c.l.b16 %v532
      %v613 = vunpack.c.l.b16 %v533
      %v614 = vunpack.c.l.b16 %v534
      %v615 = vunpack.c.l.b16 %v535
      %v616 = vunpack.c.l.b16 %v536
      %v617 = vunpack.c.l.b16 %v537
      %v618 = vunpack.c.l.b16 %v538
      %v619 = vunpack.c.l.b16 %v539
      %v620 = vunpack.c.l.b16 %v540
      %v621 = vunpack.c.l.b16 %v541
      %v622 = vunpack.c.l.b16 %v542
      %v623 = vunpack.c.l.b16 %v543
      %v624 = vunpack.c.l.b16 %v544
      %v625 = vunpack.c.l.b16 %v545
      %v626 = vunpack.c.l.b16 %v546
      %v627 = vunpack.c.l.b16 %v547
      %v628 = vunpack.c.l.b16 %v548
      %v629 = vunpack.c.l.b16 %v549
      %v630 = vunpack.c.l.b16 %v550
      %v631 = vunpack.c.l.b16 %v551
      %v632 = vunpack.c.l.b16 %v552
      %v633 = vunpack.c.l.b16 %v553
      %v634 = vunpack.c.l.b16 %v554
      %v635 = vunpack.c.l.b16 %v555
      %v636 = vunpack.c.l.b16 %v556
      %v637 = vunpack.c.l.b16 %v557
      %v638 = vunpack.c.l.b16 %v558
      %v639 = vunpack.c.l.b16 %v559
      %v640 = vunpack.c.l.b16 %v560
      %v641 = vunpack.c.l.b16 %v561
      %v642 = vunpack.c.l.b16 %v562
      %v643 = vpack.c.b16 %v612, %v611
      %v644 = vpack.c.b16 %v614, %v613
      %v645 = vpack.c.b16 %v616, %v615
      %v646 = vpack.c.b16 %v618, %v617
      %v647 = vpack.c.b16 %v620, %v619
      %v648 = vpack.c.b16 %v622, %v621
      %v649 = vpack.c.b16 %v624, %v623
      %v650 = vpack.c.b16 %v626, %v625
      %v651 = vpack.c.b16 %v628, %v627
      %v652 = vpack.c.b16 %v630, %v629
      %v653 = vpack.c.b16 %v632, %v631
      %v654 = vpack.c.b16 %v634, %v633
      %v655 = vpack.c.b16 %v636, %v635
      %v656 = vpack.c.b16 %v638, %v637
      %v657 = vpack.c.b16 %v640, %v639
      %v658 = vpack.c.b16 %v642, %v641
      %v691 = vunpack.c.l.b16 %v563
      %v692 = vunpack.c.l.b16 %v564
      %v693 = vunpack.c.l.b16 %v565
      %v694 = vunpack.c.l.b16 %v566
      %v695 = vunpack.c.l.b16 %v567
      %v696 = vunpack.c.l.b16 %v568
      %v697 = vunpack.c.l.b16 %v569
      %v698 = vunpack.c.l.b16 %v570
      %v699 = vunpack.c.l.b16 %v571
      %v700 = vunpack.c.l.b16 %v572
      %v701 = vunpack.c.l.b16 %v573
      %v702 = vunpack.c.l.b16 %v574
      %v703 = vunpack.c.l.b16 %v575
      %v704 = vunpack.c.l.b16 %v576
      %v705 = vunpack.c.l.b16 %v577
      %v706 = vunpack.c.l.b16 %v578
      %v707 = vpack.c.b16 %v692, %v691
      %v708 = vpack.c.b16 %v694, %v693
      %v709 = vpack.c.b16 %v696, %v695
      %v710 = vpack.c.b16 %v698, %v697
      %v711 = vpack.c.b16 %v700, %v699
      %v712 = vpack.c.b16 %v702, %v701
      %v713 = vpack.c.b16 %v704, %v703
      %v714 = vpack.c.b16 %v706, %v705
      %723 = vmatprep.subr.bf16.mxu0 0
      %724 = vmatpush1.bf16.msra.mxu0 %v707
      %725 = vmatprep.subr.bf16.mxu0 0
      %726 = vmatpush1.bf16.msra.mxu0 %v708
      %727 = vmatprep.subr.bf16.mxu0 0
      %728 = vmatpush1.bf16.msra.mxu0 %v709
      %729 = vmatprep.subr.bf16.mxu0 0
      %730 = vmatpush1.bf16.msra.mxu0 %v710
      %731 = vmatprep.subr.bf16.mxu0 0
      %732 = vmatpush1.bf16.msra.mxu0 %v711
      %733 = vmatprep.subr.bf16.mxu0 0
      %734 = vmatpush1.bf16.msra.mxu0 %v712
      %735 = vmatprep.subr.bf16.mxu0 0
      %736 = vmatpush1.bf16.msra.mxu0 %v713
      %737 = vmatprep.subr.bf16.mxu0 0
      %738 = vmatpush1.bf16.msra.mxu0 %v714
      %739 = vmatprep.subr.bf16.mxu0 0
      %740 = vmatpush1.bf16.msra.mxu0 0
      %741 = vmatprep.subr.bf16.mxu0 0
      %742 = vmatpush1.bf16.msra.mxu0 0
      %743 = vmatprep.subr.bf16.mxu0 0
      %744 = vmatpush1.bf16.msra.mxu0 0
      %745 = vmatprep.subr.bf16.mxu0 0
      %746 = vmatpush1.bf16.msra.mxu0 0
      %747 = vmatprep.subr.bf16.mxu0 0
      %748 = vmatpush1.bf16.msra.mxu0 0
      %749 = vmatprep.subr.bf16.mxu0 0
      %750 = vmatpush1.bf16.msra.mxu0 0
      %751 = vmatprep.subr.bf16.mxu0 0
      %752 = vmatpush1.bf16.msra.mxu0 0
      %753 = vmatprep.subr.bf16.mxu0 0
      %754 = vmatpush1.bf16.msra.mxu0 0
      %755 = vmatprep.mubr.bf16.mxu0 0
      %756 = vmatmul.mubr.bf16.gmra.mrb[0].mxu0 %v643
      %v757 = vpop.f32.mrb[0].mxu0
      %v758 = vadd.f32 0.0, %v757
      %v759 = vpop.f32.mrb[0].mxu0
      %v760 = vpop.f32.mrb[0].mxu0
      %v761 = vadd.f32 0.0, %v760
      %v762 = vpop.f32.mrb[0].mxu0
      %763 = vmatprep.mubr.bf16.mxu0 0
      %764 = vmatmul.mubr.bf16.gmra.mrb[0].mxu0 %v644
      %v765 = vpop.f32.mrb[0].mxu0
      %v766 = vadd.f32 0.0, %v765
      %v767 = vpop.f32.mrb[0].mxu0
      %v768 = vpop.f32.mrb[0].mxu0
      %v769 = vadd.f32 0.0, %v768
      %v770 = vpop.f32.mrb[0].mxu0
      %771 = vmatprep.mubr.bf16.mxu0 0
      %772 = vmatmul.mubr.bf16.gmra.mrb[0].mxu0 %v645
      %v773 = vpop.f32.mrb[0].mxu0
      %v774 = vadd.f32 0.0, %v773
      %v775 = vpop.f32.mrb[0].mxu0
      %v776 = vpop.f32.mrb[0].mxu0
      %v777 = vadd.f32 0.0, %v776
      %v778 = vpop.f32.mrb[0].mxu0
      %779 = vmatprep.mubr.bf16.mxu0 0
      %780 = vmatmul.mubr.bf16.gmra.mrb[0].mxu0 %v646
      %v781 = vpop.f32.mrb[0].mxu0
      %v782 = vadd.f32 0.0, %v781
      %v783 = vpop.f32.mrb[0].mxu0
      %v784 = vpop.f32.mrb[0].mxu0
      %v785 = vadd.f32 0.0, %v784
      %v786 = vpop.f32.mrb[0].mxu0
      %787 = vmatprep.mubr.bf16.mxu0 0
      %788 = vmatmul.mubr.bf16.gmra.mrb[0].mxu0 %v647
      %v789 = vpop.f32.mrb[0].mxu0
      %v790 = vadd.f32 0.0, %v789
      %v791 = vpop.f32.mrb[0].mxu0
      %v792 = vpop.f32.mrb[0].mxu0
      %v793 = vadd.f32 0.0, %v792
      %v794 = vpop.f32.mrb[0].mxu0
      %795 = vmatprep.mubr.bf16.mxu0 0
      %796 = vmatmul.mubr.bf16.gmra.mrb[0].mxu0 %v648
      %v797 = vpop.f32.mrb[0].mxu0
      %v798 = vadd.f32 0.0, %v797
      %v799 = vpop.f32.mrb[0].mxu0
      %v800 = vpop.f32.mrb[0].mxu0
      %v801 = vadd.f32 0.0, %v800
      %v802 = vpop.f32.mrb[0].mxu0
      %803 = vmatprep.mubr.bf16.mxu0 0
      %804 = vmatmul.mubr.bf16.gmra.mrb[0].mxu0 %v649
      %v805 = vpop.f32.mrb[0].mxu0
      %v806 = vadd.f32 0.0, %v805
      %v807 = vpop.f32.mrb[0].mxu0
      %v808 = vpop.f32.mrb[0].mxu0
      %v809 = vadd.f32 0.0, %v808
      %v810 = vpop.f32.mrb[0].mxu0
      %811 = vmatprep.mubr.bf16.mxu0 0
      %812 = vmatmul.mubr.bf16.gmra.mrb[0].mxu0 %v650
      %v813 = vpop.f32.mrb[0].mxu0
      %v814 = vadd.f32 0.0, %v813
      %v815 = vpop.f32.mrb[0].mxu0
      %v816 = vpop.f32.mrb[0].mxu0
      %v817 = vadd.f32 0.0, %v816
      %v818 = vpop.f32.mrb[0].mxu0
      %819 = vmatprep.mubr.bf16.mxu0 0
      %820 = vmatmul.mubr.bf16.gmra.mrb[0].mxu0 %v651
      %v821 = vpop.f32.mrb[0].mxu0
      %v822 = vadd.f32 0.0, %v821
      %v823 = vpop.f32.mrb[0].mxu0
      %v824 = vpop.f32.mrb[0].mxu0
      %v825 = vadd.f32 0.0, %v824
      %v826 = vpop.f32.mrb[0].mxu0
      %827 = vmatprep.mubr.bf16.mxu0 0
      %828 = vmatmul.mubr.bf16.gmra.mrb[0].mxu0 %v652
      %v829 = vpop.f32.mrb[0].mxu0
      %v830 = vadd.f32 0.0, %v829
      %v831 = vpop.f32.mrb[0].mxu0
      %v832 = vpop.f32.mrb[0].mxu0
      %v833 = vadd.f32 0.0, %v832
      %v834 = vpop.f32.mrb[0].mxu0
      %835 = vmatprep.mubr.bf16.mxu0 0
      %836 = vmatmul.mubr.bf16.gmra.mrb[0].mxu0 %v653
      %v837 = vpop.f32.mrb[0].mxu0
      %v838 = vadd.f32 0.0, %v837
      %v839 = vpop.f32.mrb[0].mxu0
      %v840 = vpop.f32.mrb[0].mxu0
      %v841 = vadd.f32 0.0, %v840
      %v842 = vpop.f32.mrb[0].mxu0
      %843 = vmatprep.mubr.bf16.mxu0 0
      %844 = vmatmul.mubr.bf16.gmra.mrb[0].mxu0 %v654
      %v845 = vpop.f32.mrb[0].mxu0
      %v846 = vadd.f32 0.0, %v845
      %v847 = vpop.f32.mrb[0].mxu0
      %v848 = vpop.f32.mrb[0].mxu0
      %v849 = vadd.f32 0.0, %v848
      %v850 = vpop.f32.mrb[0].mxu0
      %851 = vmatprep.mubr.bf16.mxu0 0
      %852 = vmatmul.mubr.bf16.gmra.mrb[0].mxu0 %v655
      %v853 = vpop.f32.mrb[0].mxu0
      %v854 = vadd.f32 0.0, %v853
      %v855 = vpop.f32.mrb[0].mxu0
      %v856 = vpop.f32.mrb[0].mxu0
      %v857 = vadd.f32 0.0, %v856
      %v858 = vpop.f32.mrb[0].mxu0
      %859 = vmatprep.mubr.bf16.mxu0 0
      %860 = vmatmul.mubr.bf16.gmra.mrb[0].mxu0 %v656
      %v861 = vpop.f32.mrb[0].mxu0
      %v862 = vadd.f32 0.0, %v861
      %v863 = vpop.f32.mrb[0].mxu0
      %v864 = vpop.f32.mrb[0].mxu0
      %v865 = vadd.f32 0.0, %v864
      %v866 = vpop.f32.mrb[0].mxu0
      %867 = vmatprep.mubr.bf16.mxu0 0
      %868 = vmatmul.mubr.bf16.gmra.mrb[0].mxu0 %v657
      %v869 = vpop.f32.mrb[0].mxu0
      %v870 = vadd.f32 0.0, %v869
      %v871 = vpop.f32.mrb[0].mxu0
      %v872 = vpop.f32.mrb[0].mxu0
      %v873 = vadd.f32 0.0, %v872
      %v874 = vpop.f32.mrb[0].mxu0
      %875 = vmatprep.mubr.bf16.mxu0 0
      %876 = vmatmul.mubr.bf16.gmra.mrb[0].mxu0 %v658
      %v877 = vpop.f32.mrb[0].mxu0
      %v878 = vadd.f32 0.0, %v877
      %v879 = vpop.f32.mrb[0].mxu0
      %v880 = vpop.f32.mrb[0].mxu0
      %v881 = vadd.f32 0.0, %v880
      %v882 = vpop.f32.mrb[0].mxu0
      %883 = vdwg.mxu0
      %v1044 = vunpack.c.l.b16 %v227
      %v1045 = vunpack.c.h.b16 %v227
      %v1046 = vunpack.c.l.b16 %v228
      %v1047 = vunpack.c.h.b16 %v228
      %v1048 = vunpack.c.l.b16 %v229
      %v1049 = vunpack.c.h.b16 %v229
      %v1050 = vunpack.c.l.b16 %v230
      %v1051 = vunpack.c.h.b16 %v230
      %v1052 = vunpack.c.l.b16 %v231
      %v1053 = vunpack.c.l.b16 %v232
      %v1054 = vunpack.c.h.b16 %v232
      %v1055 = vunpack.c.l.b16 %v233
      %v1056 = vunpack.c.h.b16 %v233
      %v1057 = vunpack.c.l.b16 %v234
      %v1058 = vunpack.c.h.b16 %v234
      %v1059 = vunpack.c.l.b16 %v235
      %v1060 = vunpack.c.h.b16 %v235
      %v1061 = vunpack.c.l.b16 %v236
      %v1062 = vunpack.c.l.b16 %v237
      %v1063 = vunpack.c.h.b16 %v237
      %v1064 = vunpack.c.l.b16 %v238
      %v1065 = vunpack.c.h.b16 %v238
      %v1066 = vunpack.c.l.b16 %v239
      %v1067 = vunpack.c.h.b16 %v239
      %v1068 = vunpack.c.l.b16 %v240
      %v1069 = vunpack.c.h.b16 %v240
      %v1070 = vunpack.c.l.b16 %v241
      %v1071 = vunpack.c.l.b16 %v242
      %v1072 = vunpack.c.h.b16 %v242
      %v1073 = vunpack.c.l.b16 %v243
      %v1074 = vunpack.c.h.b16 %v243
      %v1075 = vunpack.c.l.b16 %v244
      %v1076 = vunpack.c.h.b16 %v244
      %v1077 = vunpack.c.l.b16 %v245
      %v1078 = vunpack.c.h.b16 %v245
      %v1079 = vunpack.c.l.b16 %v246
      %v1080 = vunpack.c.l.b16 %v247
      %v1081 = vunpack.c.h.b16 %v247
      %v1082 = vunpack.c.l.b16 %v248
      %v1083 = vunpack.c.h.b16 %v248
      %v1084 = vunpack.c.l.b16 %v249
      %v1085 = vunpack.c.h.b16 %v249
      %v1086 = vunpack.c.l.b16 %v250
      %v1087 = vunpack.c.h.b16 %v250
      %v1088 = vunpack.c.l.b16 %v251
      %v1089 = vunpack.c.l.b16 %v252
      %v1090 = vunpack.c.h.b16 %v252
      %v1091 = vunpack.c.l.b16 %v253
      %v1092 = vunpack.c.h.b16 %v253
      %v1093 = vunpack.c.l.b16 %v254
      %v1094 = vunpack.c.h.b16 %v254
      %v1095 = vunpack.c.l.b16 %v255
      %v1096 = vunpack.c.h.b16 %v255
      %v1097 = vunpack.c.l.b16 %v256
      %v1098 = vunpack.c.l.b16 %v257
      %v1099 = vunpack.c.h.b16 %v257
      %v1100 = vunpack.c.l.b16 %v258
      %v1101 = vunpack.c.h.b16 %v258
      %v1102 = vunpack.c.l.b16 %v259
      %v1103 = vunpack.c.h.b16 %v259
      %v1104 = vunpack.c.l.b16 %v260
      %v1105 = vunpack.c.h.b16 %v260
      %v1106 = vunpack.c.l.b16 %v261
      %v1107 = vunpack.c.l.b16 %v262
      %v1108 = vunpack.c.h.b16 %v262
      %v1109 = vunpack.c.l.b16 %v263
      %v1110 = vunpack.c.h.b16 %v263
      %v1111 = vunpack.c.l.b16 %v264
      %v1112 = vunpack.c.h.b16 %v264
      %v1113 = vunpack.c.l.b16 %v265
      %v1114 = vunpack.c.h.b16 %v265
      %v1115 = vunpack.c.l.b16 %v266
      %v1116 = vunpack.c.l.b16 %v267
      %v1117 = vunpack.c.h.b16 %v267
      %v1118 = vunpack.c.l.b16 %v268
      %v1119 = vunpack.c.h.b16 %v268
      %v1120 = vunpack.c.l.b16 %v269
      %v1121 = vunpack.c.h.b16 %v269
      %v1122 = vunpack.c.l.b16 %v270
      %v1123 = vunpack.c.h.b16 %v270
      %v1124 = vunpack.c.l.b16 %v271
      %v1125 = vunpack.c.l.b16 %v272
      %v1126 = vunpack.c.h.b16 %v272
      %v1127 = vunpack.c.l.b16 %v273
      %v1128 = vunpack.c.h.b16 %v273
      %v1129 = vunpack.c.l.b16 %v274
      %v1130 = vunpack.c.h.b16 %v274
      %v1131 = vunpack.c.l.b16 %v275
      %v1132 = vunpack.c.h.b16 %v275
      %v1133 = vunpack.c.l.b16 %v276
      %v1134 = vunpack.c.l.b16 %v277
      %v1135 = vunpack.c.h.b16 %v277
      %v1136 = vunpack.c.l.b16 %v278
      %v1137 = vunpack.c.h.b16 %v278
      %v1138 = vunpack.c.l.b16 %v279
      %v1139 = vunpack.c.h.b16 %v279
      %v1140 = vunpack.c.l.b16 %v280
      %v1141 = vunpack.c.h.b16 %v280
      %v1142 = vunpack.c.l.b16 %v281
      %v1143 = vunpack.c.l.b16 %v282
      %v1144 = vunpack.c.h.b16 %v282
      %v1145 = vunpack.c.l.b16 %v283
      %v1146 = vunpack.c.h.b16 %v283
      %v1147 = vunpack.c.l.b16 %v284
      %v1148 = vunpack.c.h.b16 %v284
      %v1149 = vunpack.c.l.b16 %v285
      %v1150 = vunpack.c.h.b16 %v285
      %v1151 = vunpack.c.l.b16 %v286
      %v1152 = vunpack.c.l.b16 %v287
      %v1153 = vunpack.c.h.b16 %v287
      %v1154 = vunpack.c.l.b16 %v288
      %v1155 = vunpack.c.h.b16 %v288
      %v1156 = vunpack.c.l.b16 %v289
      %v1157 = vunpack.c.h.b16 %v289
      %v1158 = vunpack.c.l.b16 %v290
      %v1159 = vunpack.c.h.b16 %v290
      %v1160 = vunpack.c.l.b16 %v291
      %v1161 = vunpack.c.l.b16 %v292
      %v1162 = vunpack.c.h.b16 %v292
      %v1163 = vunpack.c.l.b16 %v293
      %v1164 = vunpack.c.h.b16 %v293
      %v1165 = vunpack.c.l.b16 %v294
      %v1166 = vunpack.c.h.b16 %v294
      %v1167 = vunpack.c.l.b16 %v295
      %v1168 = vunpack.c.h.b16 %v295
      %v1169 = vunpack.c.l.b16 %v296
      %v1170 = vunpack.c.l.b16 %v297
      %v1171 = vunpack.c.h.b16 %v297
      %v1172 = vunpack.c.l.b16 %v298
      %v1173 = vunpack.c.h.b16 %v298
      %v1174 = vunpack.c.l.b16 %v299
      %v1175 = vunpack.c.h.b16 %v299
      %v1176 = vunpack.c.l.b16 %v300
      %v1177 = vunpack.c.h.b16 %v300
      %v1178 = vunpack.c.l.b16 %v301
      %v1179 = vunpack.c.l.b16 %v302
      %v1180 = vunpack.c.h.b16 %v302
      %v1181 = vunpack.c.l.b16 %v303
      %v1182 = vunpack.c.h.b16 %v303
      %v1183 = vunpack.c.l.b16 %v304
      %v1184 = vunpack.c.h.b16 %v304
      %v1185 = vunpack.c.l.b16 %v305
      %v1186 = vunpack.c.h.b16 %v305
      %v1187 = vunpack.c.l.b16 %v306
      %v1188 = vunpack.c.l.b16 %v307
      %v1189 = vunpack.c.h.b16 %v307
      %v1190 = vunpack.c.l.b16 %v308
      %v1191 = vunpack.c.h.b16 %v308
      %v1192 = vunpack.c.l.b16 %v309
      %v1193 = vunpack.c.h.b16 %v309
      %v1194 = vunpack.c.l.b16 %v310
      %v1195 = vunpack.c.h.b16 %v310
      %v1196 = vunpack.c.l.b16 %v311
      %v1197 = vunpack.c.l.b16 %v312
      %v1198 = vunpack.c.h.b16 %v312
      %v1199 = vunpack.c.l.b16 %v313
      %v1200 = vunpack.c.h.b16 %v313
      %v1201 = vunpack.c.l.b16 %v314
      %v1202 = vunpack.c.h.b16 %v314
      %v1203 = vunpack.c.l.b16 %v315
      %v1204 = vunpack.c.h.b16 %v315
      %v1205 = vunpack.c.l.b16 %v316
      %v1206 = vunpack.c.l.b16 %v317
      %v1207 = vunpack.c.h.b16 %v317
      %v1208 = vunpack.c.l.b16 %v318
      %v1209 = vunpack.c.h.b16 %v318
      %v1210 = vunpack.c.l.b16 %v319
      %v1211 = vunpack.c.h.b16 %v319
      %v1212 = vunpack.c.l.b16 %v320
      %v1213 = vunpack.c.h.b16 %v320
      %v1214 = vunpack.c.l.b16 %v321
      %v1215 = vunpack.c.l.b16 %v322
      %v1216 = vunpack.c.h.b16 %v322
      %v1217 = vunpack.c.l.b16 %v323
      %v1218 = vunpack.c.h.b16 %v323
      %v1219 = vunpack.c.l.b16 %v324
      %v1220 = vunpack.c.h.b16 %v324
      %v1221 = vunpack.c.l.b16 %v325
      %v1222 = vunpack.c.h.b16 %v325
      %v1223 = vunpack.c.l.b16 %v326
      %v1224 = vunpack.c.l.b16 %v327
      %v1225 = vunpack.c.h.b16 %v327
      %v1226 = vunpack.c.l.b16 %v328
      %v1227 = vunpack.c.h.b16 %v328
      %v1228 = vunpack.c.l.b16 %v329
      %v1229 = vunpack.c.h.b16 %v329
      %v1230 = vunpack.c.l.b16 %v330
      %v1231 = vunpack.c.h.b16 %v330
      %v1232 = vunpack.c.l.b16 %v331
      %v1233 = vunpack.c.l.b16 %v332
      %v1234 = vunpack.c.h.b16 %v332
      %v1235 = vunpack.c.l.b16 %v333
      %v1236 = vunpack.c.h.b16 %v333
      %v1237 = vunpack.c.l.b16 %v334
      %v1238 = vunpack.c.h.b16 %v334
      %v1239 = vunpack.c.l.b16 %v335
      %v1240 = vunpack.c.h.b16 %v335
      %v1241 = vunpack.c.l.b16 %v336
      %v1242 = vunpack.c.l.b16 %v337
      %v1243 = vunpack.c.h.b16 %v337
      %v1244 = vunpack.c.l.b16 %v338
      %v1245 = vunpack.c.h.b16 %v338
      %v1246 = vunpack.c.l.b16 %v339
      %v1247 = vunpack.c.h.b16 %v339
      %v1248 = vunpack.c.l.b16 %v340
      %v1249 = vunpack.c.h.b16 %v340
      %v1250 = vunpack.c.l.b16 %v341
      %v1251 = vunpack.c.l.b16 %v342
      %v1252 = vunpack.c.h.b16 %v342
      %v1253 = vunpack.c.l.b16 %v343
      %v1254 = vunpack.c.h.b16 %v343
      %v1255 = vunpack.c.l.b16 %v344
      %v1256 = vunpack.c.h.b16 %v344
      %v1257 = vunpack.c.l.b16 %v345
      %v1258 = vunpack.c.h.b16 %v345
      %v1259 = vunpack.c.l.b16 %v346
      %v1260 = vunpack.c.l.b16 %v347
      %v1261 = vunpack.c.h.b16 %v347
      %v1262 = vunpack.c.l.b16 %v348
      %v1263 = vunpack.c.h.b16 %v348
      %v1264 = vunpack.c.l.b16 %v349
      %v1265 = vunpack.c.h.b16 %v349
      %v1266 = vunpack.c.l.b16 %v350
      %v1267 = vunpack.c.h.b16 %v350
      %v1268 = vunpack.c.l.b16 %v351
      %v1269 = vunpack.c.l.b16 %v352
      %v1270 = vunpack.c.h.b16 %v352
      %v1271 = vunpack.c.l.b16 %v353
      %v1272 = vunpack.c.h.b16 %v353
      %v1273 = vunpack.c.l.b16 %v354
      %v1274 = vunpack.c.h.b16 %v354
      %v1275 = vunpack.c.l.b16 %v355
      %v1276 = vunpack.c.h.b16 %v355
      %v1277 = vunpack.c.l.b16 %v356
      %v1278 = vunpack.c.l.b16 %v357
      %v1279 = vunpack.c.h.b16 %v357
      %v1280 = vunpack.c.l.b16 %v358
      %v1281 = vunpack.c.h.b16 %v358
      %v1282 = vunpack.c.l.b16 %v359
      %v1283 = vunpack.c.h.b16 %v359
      %v1284 = vunpack.c.l.b16 %v360
      %v1285 = vunpack.c.h.b16 %v360
      %v1286 = vunpack.c.l.b16 %v361
      %v1287 = vunpack.c.l.b16 %v362
      %v1288 = vunpack.c.h.b16 %v362
      %v1289 = vunpack.c.l.b16 %v363
      %v1290 = vunpack.c.h.b16 %v363
      %v1291 = vunpack.c.l.b16 %v364
      %v1292 = vunpack.c.h.b16 %v364
      %v1293 = vunpack.c.l.b16 %v365
      %v1294 = vunpack.c.h.b16 %v365
      %v1295 = vunpack.c.l.b16 %v366
      %v1296 = vunpack.c.l.b16 %v367
      %v1297 = vunpack.c.h.b16 %v367
      %v1298 = vunpack.c.l.b16 %v368
      %v1299 = vunpack.c.h.b16 %v368
      %v1300 = vunpack.c.l.b16 %v369
      %v1301 = vunpack.c.h.b16 %v369
      %v1302 = vunpack.c.l.b16 %v370
      %v1303 = vunpack.c.h.b16 %v370
      %v1304 = vunpack.c.l.b16 %v371
      %v1305 = vunpack.c.l.b16 %v372
      %v1306 = vunpack.c.h.b16 %v372
      %v1307 = vunpack.c.l.b16 %v373
      %v1308 = vunpack.c.h.b16 %v373
      %v1309 = vunpack.c.l.b16 %v374
      %v1310 = vunpack.c.h.b16 %v374
      %v1311 = vunpack.c.l.b16 %v375
      %v1312 = vunpack.c.h.b16 %v375
      %v1313 = vunpack.c.l.b16 %v376
      %v1314 = vunpack.c.l.b16 %v377
      %v1315 = vunpack.c.h.b16 %v377
      %v1316 = vunpack.c.l.b16 %v378
      %v1317 = vunpack.c.h.b16 %v378
      %v1318 = vunpack.c.l.b16 %v379
      %v1319 = vunpack.c.h.b16 %v379
      %v1320 = vunpack.c.l.b16 %v380
      %v1321 = vunpack.c.h.b16 %v380
      %v1322 = vunpack.c.l.b16 %v381
      %v1323 = vunpack.c.l.b16 %v382
      %v1324 = vunpack.c.h.b16 %v382
      %v1325 = vunpack.c.l.b16 %v383
      %v1326 = vunpack.c.h.b16 %v383
      %v1327 = vunpack.c.l.b16 %v384
      %v1328 = vunpack.c.h.b16 %v384
      %v1329 = vunpack.c.l.b16 %v385
      %v1330 = vunpack.c.h.b16 %v385
      %v1331 = vunpack.c.l.b16 %v386
      %v1332 = vpack.c.b16 %v1053, %v1044
      %v1333 = vpack.c.b16 %v1054, %v1045
      %v1334 = vpack.c.b16 %v1055, %v1046
      %v1335 = vpack.c.b16 %v1056, %v1047
      %v1336 = vpack.c.b16 %v1057, %v1048
      %v1337 = vpack.c.b16 %v1058, %v1049
      %v1338 = vpack.c.b16 %v1059, %v1050
      %v1339 = vpack.c.b16 %v1060, %v1051
      %v1340 = vpack.c.b16 %v1061, %v1052
      %v1341 = vpack.c.b16 %v1071, %v1062
      %v1342 = vpack.c.b16 %v1072, %v1063
      %v1343 = vpack.c.b16 %v1073, %v1064
      %v1344 = vpack.c.b16 %v1074, %v1065
      %v1345 = vpack.c.b16 %v1075, %v1066
      %v1346 = vpack.c.b16 %v1076, %v1067
      %v1347 = vpack.c.b16 %v1077, %v1068
      %v1348 = vpack.c.b16 %v1078, %v1069
      %v1349 = vpack.c.b16 %v1079, %v1070
      %v1350 = vpack.c.b16 %v1089, %v1080
      %v1351 = vpack.c.b16 %v1090, %v1081
      %v1352 = vpack.c.b16 %v1091, %v1082
      %v1353 = vpack.c.b16 %v1092, %v1083
      %v1354 = vpack.c.b16 %v1093, %v1084
      %v1355 = vpack.c.b16 %v1094, %v1085
      %v1356 = vpack.c.b16 %v1095, %v1086
      %v1357 = vpack.c.b16 %v1096, %v1087
      %v1358 = vpack.c.b16 %v1097, %v1088
      %v1359 = vpack.c.b16 %v1107, %v1098
      %v1360 = vpack.c.b16 %v1108, %v1099
      %v1361 = vpack.c.b16 %v1109, %v1100
      %v1362 = vpack.c.b16 %v1110, %v1101
      %v1363 = vpack.c.b16 %v1111, %v1102
      %v1364 = vpack.c.b16 %v1112, %v1103
      %v1365 = vpack.c.b16 %v1113, %v1104
      %v1366 = vpack.c.b16 %v1114, %v1105
      %v1367 = vpack.c.b16 %v1115, %v1106
      %v1368 = vpack.c.b16 %v1125, %v1116
      %v1369 = vpack.c.b16 %v1126, %v1117
      %v1370 = vpack.c.b16 %v1127, %v1118
      %v1371 = vpack.c.b16 %v1128, %v1119
      %v1372 = vpack.c.b16 %v1129, %v1120
      %v1373 = vpack.c.b16 %v1130, %v1121
      %v1374 = vpack.c.b16 %v1131, %v1122
      %v1375 = vpack.c.b16 %v1132, %v1123
      %v1376 = vpack.c.b16 %v1133, %v1124
      %v1377 = vpack.c.b16 %v1143, %v1134
      %v1378 = vpack.c.b16 %v1144, %v1135
      %v1379 = vpack.c.b16 %v1145, %v1136
      %v1380 = vpack.c.b16 %v1146, %v1137
      %v1381 = vpack.c.b16 %v1147, %v1138
      %v1382 = vpack.c.b16 %v1148, %v1139
      %v1383 = vpack.c.b16 %v1149, %v1140
      %v1384 = vpack.c.b16 %v1150, %v1141
      %v1385 = vpack.c.b16 %v1151, %v1142
      %v1386 = vpack.c.b16 %v1161, %v1152
      %v1387 = vpack.c.b16 %v1162, %v1153
      %v1388 = vpack.c.b16 %v1163, %v1154
      %v1389 = vpack.c.b16 %v1164, %v1155
      %v1390 = vpack.c.b16 %v1165, %v1156
      %v1391 = vpack.c.b16 %v1166, %v1157
      %v1392 = vpack.c.b16 %v1167, %v1158
      %v1393 = vpack.c.b16 %v1168, %v1159
      %v1394 = vpack.c.b16 %v1169, %v1160
      %v1395 = vpack.c.b16 %v1179, %v1170
      %v1396 = vpack.c.b16 %v1180, %v1171
      %v1397 = vpack.c.b16 %v1181, %v1172
      %v1398 = vpack.c.b16 %v1182, %v1173
      %v1399 = vpack.c.b16 %v1183, %v1174
      %v1400 = vpack.c.b16 %v1184, %v1175
      %v1401 = vpack.c.b16 %v1185, %v1176
      %v1402 = vpack.c.b16 %v1186, %v1177
      %v1403 = vpack.c.b16 %v1187, %v1178
      %v1404 = vpack.c.b16 %v1197, %v1188
      %v1405 = vpack.c.b16 %v1198, %v1189
      %v1406 = vpack.c.b16 %v1199, %v1190
      %v1407 = vpack.c.b16 %v1200, %v1191
      %v1408 = vpack.c.b16 %v1201, %v1192
      %v1409 = vpack.c.b16 %v1202, %v1193
      %v1410 = vpack.c.b16 %v1203, %v1194
      %v1411 = vpack.c.b16 %v1204, %v1195
      %v1412 = vpack.c.b16 %v1205, %v1196
      %v1413 = vpack.c.b16 %v1215, %v1206
      %v1414 = vpack.c.b16 %v1216, %v1207
      %v1415 = vpack.c.b16 %v1217, %v1208
      %v1416 = vpack.c.b16 %v1218, %v1209
      %v1417 = vpack.c.b16 %v1219, %v1210
      %v1418 = vpack.c.b16 %v1220, %v1211
      %v1419 = vpack.c.b16 %v1221, %v1212
      %v1420 = vpack.c.b16 %v1222, %v1213
      %v1421 = vpack.c.b16 %v1223, %v1214
      %v1422 = vpack.c.b16 %v1233, %v1224
      %v1423 = vpack.c.b16 %v1234, %v1225
      %v1424 = vpack.c.b16 %v1235, %v1226
      %v1425 = vpack.c.b16 %v1236, %v1227
      %v1426 = vpack.c.b16 %v1237, %v1228
      %v1427 = vpack.c.b16 %v1238, %v1229
      %v1428 = vpack.c.b16 %v1239, %v1230
      %v1429 = vpack.c.b16 %v1240, %v1231
      %v1430 = vpack.c.b16 %v1241, %v1232
      %v1431 = vpack.c.b16 %v1251, %v1242
      %v1432 = vpack.c.b16 %v1252, %v1243
      %v1433 = vpack.c.b16 %v1253, %v1244
      %v1434 = vpack.c.b16 %v1254, %v1245
      %v1435 = vpack.c.b16 %v1255, %v1246
      %v1436 = vpack.c.b16 %v1256, %v1247
      %v1437 = vpack.c.b16 %v1257, %v1248
      %v1438 = vpack.c.b16 %v1258, %v1249
      %v1439 = vpack.c.b16 %v1259, %v1250
      %v1440 = vpack.c.b16 %v1269, %v1260
      %v1441 = vpack.c.b16 %v1270, %v1261
      %v1442 = vpack.c.b16 %v1271, %v1262
      %v1443 = vpack.c.b16 %v1272, %v1263
      %v1444 = vpack.c.b16 %v1273, %v1264
      %v1445 = vpack.c.b16 %v1274, %v1265
      %v1446 = vpack.c.b16 %v1275, %v1266
      %v1447 = vpack.c.b16 %v1276, %v1267
      %v1448 = vpack.c.b16 %v1277, %v1268
      %v1449 = vpack.c.b16 %v1287, %v1278
      %v1450 = vpack.c.b16 %v1288, %v1279
      %v1451 = vpack.c.b16 %v1289, %v1280
      %v1452 = vpack.c.b16 %v1290, %v1281
      %v1453 = vpack.c.b16 %v1291, %v1282
      %v1454 = vpack.c.b16 %v1292, %v1283
      %v1455 = vpack.c.b16 %v1293, %v1284
      %v1456 = vpack.c.b16 %v1294, %v1285
      %v1457 = vpack.c.b16 %v1295, %v1286
      %v1458 = vpack.c.b16 %v1305, %v1296
      %v1459 = vpack.c.b16 %v1306, %v1297
      %v1460 = vpack.c.b16 %v1307, %v1298
      %v1461 = vpack.c.b16 %v1308, %v1299
      %v1462 = vpack.c.b16 %v1309, %v1300
      %v1463 = vpack.c.b16 %v1310, %v1301
      %v1464 = vpack.c.b16 %v1311, %v1302
      %v1465 = vpack.c.b16 %v1312, %v1303
      %v1466 = vpack.c.b16 %v1313, %v1304
      %v1467 = vpack.c.b16 %v1323, %v1314
      %v1468 = vpack.c.b16 %v1324, %v1315
      %v1469 = vpack.c.b16 %v1325, %v1316
      %v1470 = vpack.c.b16 %v1326, %v1317
      %v1471 = vpack.c.b16 %v1327, %v1318
      %v1472 = vpack.c.b16 %v1328, %v1319
      %v1473 = vpack.c.b16 %v1329, %v1320
      %v1474 = vpack.c.b16 %v1330, %v1321
      %v1475 = vpack.c.b16 %v1331, %v1322
      %v1764 = vunpack.c.l.b16 %v387
      %v1765 = vunpack.c.l.b16 %v388
      %v1766 = vunpack.c.l.b16 %v389
      %v1767 = vunpack.c.l.b16 %v390
      %v1768 = vunpack.c.l.b16 %v391
      %v1769 = vunpack.c.l.b16 %v392
      %v1770 = vunpack.c.l.b16 %v393
      %v1771 = vunpack.c.l.b16 %v394
      %v1772 = vunpack.c.l.b16 %v395
      %v1773 = vunpack.c.l.b16 %v396
      %v1774 = vunpack.c.l.b16 %v397
      %v1775 = vunpack.c.l.b16 %v398
      %v1776 = vunpack.c.l.b16 %v399
      %v1777 = vunpack.c.l.b16 %v400
      %v1778 = vunpack.c.l.b16 %v401
      %v1779 = vunpack.c.l.b16 %v402
      %v1780 = vunpack.c.l.b16 %v403
      %v1781 = vunpack.c.l.b16 %v404
      %v1782 = vunpack.c.l.b16 %v405
      %v1783 = vunpack.c.l.b16 %v406
      %v1784 = vunpack.c.l.b16 %v407
      %v1785 = vunpack.c.l.b16 %v408
      %v1786 = vunpack.c.l.b16 %v409
      %v1787 = vunpack.c.l.b16 %v410
      %v1788 = vunpack.c.l.b16 %v411
      %v1789 = vunpack.c.l.b16 %v412
      %v1790 = vunpack.c.l.b16 %v413
      %v1791 = vunpack.c.l.b16 %v414
      %v1792 = vunpack.c.l.b16 %v415
      %v1793 = vunpack.c.l.b16 %v416
      %v1794 = vunpack.c.l.b16 %v417
      %v1795 = vunpack.c.l.b16 %v418
      %v1796 = vunpack.c.l.b16 %v419
      %v1797 = vunpack.c.l.b16 %v420
      %v1798 = vunpack.c.l.b16 %v421
      %v1799 = vunpack.c.l.b16 %v422
      %v1800 = vunpack.c.l.b16 %v423
      %v1801 = vunpack.c.l.b16 %v424
      %v1802 = vunpack.c.l.b16 %v425
      %v1803 = vunpack.c.l.b16 %v426
      %v1804 = vunpack.c.l.b16 %v427
      %v1805 = vunpack.c.l.b16 %v428
      %v1806 = vunpack.c.l.b16 %v429
      %v1807 = vunpack.c.l.b16 %v430
      %v1808 = vunpack.c.l.b16 %v431
      %v1809 = vunpack.c.l.b16 %v432
      %v1810 = vunpack.c.l.b16 %v433
      %v1811 = vunpack.c.l.b16 %v434
      %v1812 = vunpack.c.l.b16 %v435
      %v1813 = vunpack.c.l.b16 %v436
      %v1814 = vunpack.c.l.b16 %v437
      %v1815 = vunpack.c.l.b16 %v438
      %v1816 = vunpack.c.l.b16 %v439
      %v1817 = vunpack.c.l.b16 %v440
      %v1818 = vunpack.c.l.b16 %v441
      %v1819 = vunpack.c.l.b16 %v442
      %v1820 = vunpack.c.l.b16 %v443
      %v1821 = vunpack.c.l.b16 %v444
      %v1822 = vunpack.c.l.b16 %v445
      %v1823 = vunpack.c.l.b16 %v446
      %v1824 = vunpack.c.l.b16 %v447
      %v1825 = vunpack.c.l.b16 %v448
      %v1826 = vunpack.c.l.b16 %v449
      %v1827 = vunpack.c.l.b16 %v450
      %v1828 = vunpack.c.l.b16 %v451
      %v1829 = vunpack.c.l.b16 %v452
      %v1830 = vunpack.c.l.b16 %v453
      %v1831 = vunpack.c.l.b16 %v454
      %v1832 = vunpack.c.l.b16 %v455
      %v1833 = vunpack.c.l.b16 %v456
      %v1834 = vunpack.c.l.b16 %v457
      %v1835 = vunpack.c.l.b16 %v458
      %v1836 = vunpack.c.l.b16 %v459
      %v1837 = vunpack.c.l.b16 %v460
      %v1838 = vunpack.c.l.b16 %v461
      %v1839 = vunpack.c.l.b16 %v462
      %v1840 = vunpack.c.l.b16 %v463
      %v1841 = vunpack.c.l.b16 %v464
      %v1842 = vunpack.c.l.b16 %v465
      %v1843 = vunpack.c.l.b16 %v466
      %v1844 = vunpack.c.l.b16 %v467
      %v1845 = vunpack.c.l.b16 %v468
      %v1846 = vunpack.c.l.b16 %v469
      %v1847 = vunpack.c.l.b16 %v470
      %v1848 = vunpack.c.l.b16 %v471
      %v1849 = vunpack.c.l.b16 %v472
      %v1850 = vunpack.c.l.b16 %v473
      %v1851 = vunpack.c.l.b16 %v474
      %v1852 = vunpack.c.l.b16 %v475
      %v1853 = vunpack.c.l.b16 %v476
      %v1854 = vunpack.c.l.b16 %v477
      %v1855 = vunpack.c.l.b16 %v478
      %v1856 = vunpack.c.l.b16 %v479
      %v1857 = vunpack.c.l.b16 %v480
      %v1858 = vunpack.c.l.b16 %v481
      %v1859 = vunpack.c.l.b16 %v482
      %v1860 = vunpack.c.l.b16 %v483
      %v1861 = vunpack.c.l.b16 %v484
      %v1862 = vunpack.c.l.b16 %v485
      %v1863 = vunpack.c.l.b16 %v486
      %v1864 = vunpack.c.l.b16 %v487
      %v1865 = vunpack.c.l.b16 %v488
      %v1866 = vunpack.c.l.b16 %v489
      %v1867 = vunpack.c.l.b16 %v490
      %v1868 = vunpack.c.l.b16 %v491
      %v1869 = vunpack.c.l.b16 %v492
      %v1870 = vunpack.c.l.b16 %v493
      %v1871 = vunpack.c.l.b16 %v494
      %v1872 = vunpack.c.l.b16 %v495
      %v1873 = vunpack.c.l.b16 %v496
      %v1874 = vunpack.c.l.b16 %v497
      %v1875 = vunpack.c.l.b16 %v498
      %v1876 = vunpack.c.l.b16 %v499
      %v1877 = vunpack.c.l.b16 %v500
      %v1878 = vunpack.c.l.b16 %v501
      %v1879 = vunpack.c.l.b16 %v502
      %v1880 = vunpack.c.l.b16 %v503
      %v1881 = vunpack.c.l.b16 %v504
      %v1882 = vunpack.c.l.b16 %v505
      %v1883 = vunpack.c.l.b16 %v506
      %v1884 = vunpack.c.l.b16 %v507
      %v1885 = vunpack.c.l.b16 %v508
      %v1886 = vunpack.c.l.b16 %v509
      %v1887 = vunpack.c.l.b16 %v510
      %v1888 = vunpack.c.l.b16 %v511
      %v1889 = vunpack.c.l.b16 %v512
      %v1890 = vunpack.c.l.b16 %v513
      %v1891 = vunpack.c.l.b16 %v514
      %v1892 = vunpack.c.l.b16 %v515
      %v1893 = vunpack.c.l.b16 %v516
      %v1894 = vunpack.c.l.b16 %v517
      %v1895 = vunpack.c.l.b16 %v518
      %v1896 = vunpack.c.l.b16 %v519
      %v1897 = vunpack.c.l.b16 %v520
      %v1898 = vunpack.c.l.b16 %v521
      %v1899 = vunpack.c.l.b16 %v522
      %v1900 = vunpack.c.l.b16 %v523
      %v1901 = vunpack.c.l.b16 %v524
      %v1902 = vunpack.c.l.b16 %v525
      %v1903 = vunpack.c.l.b16 %v526
      %v1904 = vunpack.c.l.b16 %v527
      %v1905 = vunpack.c.l.b16 %v528
      %v1906 = vunpack.c.l.b16 %v529
      %v1907 = vunpack.c.l.b16 %v530
      %v1908 = vpack.c.b16 %v1765, %v1764
      %v1909 = vpack.c.b16 %v1767, %v1766
      %v1910 = vpack.c.b16 %v1769, %v1768
      %v1911 = vpack.c.b16 %v1771, %v1770
      %v1912 = vpack.c.b16 %v1773, %v1772
      %v1913 = vpack.c.b16 %v1775, %v1774
      %v1914 = vpack.c.b16 %v1777, %v1776
      %v1915 = vpack.c.b16 %v1779, %v1778
      %v1916 = vpack.c.b16 %v1781, %v1780
      %v1917 = vpack.c.b16 %v1783, %v1782
      %v1918 = vpack.c.b16 %v1785, %v1784
      %v1919 = vpack.c.b16 %v1787, %v1786
      %v1920 = vpack.c.b16 %v1789, %v1788
      %v1921 = vpack.c.b16 %v1791, %v1790
      %v1922 = vpack.c.b16 %v1793, %v1792
      %v1923 = vpack.c.b16 %v1795, %v1794
      %v1924 = vpack.c.b16 %v1797, %v1796
      %v1925 = vpack.c.b16 %v1799, %v1798
      %v1926 = vpack.c.b16 %v1801, %v1800
      %v1927 = vpack.c.b16 %v1803, %v1802
      %v1928 = vpack.c.b16 %v1805, %v1804
      %v1929 = vpack.c.b16 %v1807, %v1806
      %v1930 = vpack.c.b16 %v1809, %v1808
      %v1931 = vpack.c.b16 %v1811, %v1810
      %v1932 = vpack.c.b16 %v1813, %v1812
      %v1933 = vpack.c.b16 %v1815, %v1814
      %v1934 = vpack.c.b16 %v1817, %v1816
      %v1935 = vpack.c.b16 %v1819, %v1818
      %v1936 = vpack.c.b16 %v1821, %v1820
      %v1937 = vpack.c.b16 %v1823, %v1822
      %v1938 = vpack.c.b16 %v1825, %v1824
      %v1939 = vpack.c.b16 %v1827, %v1826
      %v1940 = vpack.c.b16 %v1829, %v1828
      %v1941 = vpack.c.b16 %v1831, %v1830
      %v1942 = vpack.c.b16 %v1833, %v1832
      %v1943 = vpack.c.b16 %v1835, %v1834
      %v1944 = vpack.c.b16 %v1837, %v1836
      %v1945 = vpack.c.b16 %v1839, %v1838
      %v1946 = vpack.c.b16 %v1841, %v1840
      %v1947 = vpack.c.b16 %v1843, %v1842
      %v1948 = vpack.c.b16 %v1845, %v1844
      %v1949 = vpack.c.b16 %v1847, %v1846
      %v1950 = vpack.c.b16 %v1849, %v1848
      %v1951 = vpack.c.b16 %v1851, %v1850
      %v1952 = vpack.c.b16 %v1853, %v1852
      %v1953 = vpack.c.b16 %v1855, %v1854
      %v1954 = vpack.c.b16 %v1857, %v1856
      %v1955 = vpack.c.b16 %v1859, %v1858
      %v1956 = vpack.c.b16 %v1861, %v1860
      %v1957 = vpack.c.b16 %v1863, %v1862
      %v1958 = vpack.c.b16 %v1865, %v1864
      %v1959 = vpack.c.b16 %v1867, %v1866
      %v1960 = vpack.c.b16 %v1869, %v1868
      %v1961 = vpack.c.b16 %v1871, %v1870
      %v1962 = vpack.c.b16 %v1873, %v1872
      %v1963 = vpack.c.b16 %v1875, %v1874
      %v1964 = vpack.c.b16 %v1877, %v1876
      %v1965 = vpack.c.b16 %v1879, %v1878
      %v1966 = vpack.c.b16 %v1881, %v1880
      %v1967 = vpack.c.b16 %v1883, %v1882
      %v1968 = vpack.c.b16 %v1885, %v1884
      %v1969 = vpack.c.b16 %v1887, %v1886
      %v1970 = vpack.c.b16 %v1889, %v1888
      %v1971 = vpack.c.b16 %v1891, %v1890
      %v1972 = vpack.c.b16 %v1893, %v1892
      %v1973 = vpack.c.b16 %v1895, %v1894
      %v1974 = vpack.c.b16 %v1897, %v1896
      %v1975 = vpack.c.b16 %v1899, %v1898
      %v1976 = vpack.c.b16 %v1901, %v1900
      %v1977 = vpack.c.b16 %v1903, %v1902
      %v1978 = vpack.c.b16 %v1905, %v1904
      %v1979 = vpack.c.b16 %v1907, %v1906
      %2052 = vmatprep.subr.bf16.mxu0 0
      %2053 = vmatpush1.bf16.msra.mxu0 %v1908
      %2054 = vmatprep.subr.bf16.mxu0 0
      %2055 = vmatpush1.bf16.msra.mxu0 %v1909
      %2056 = vmatprep.subr.bf16.mxu0 0
      %2057 = vmatpush1.bf16.msra.mxu0 %v1910
      %2058 = vmatprep.subr.bf16.mxu0 0
      %2059 = vmatpush1.bf16.msra.mxu0 %v1911
      %2060 = vmatprep.subr.bf16.mxu0 0
      %2061 = vmatpush1.bf16.msra.mxu0 %v1912
      %2062 = vmatprep.subr.bf16.mxu0 0
      %2063 = vmatpush1.bf16.msra.mxu0 %v1913
      %2064 = vmatprep.subr.bf16.mxu0 0
      %2065 = vmatpush1.bf16.msra.mxu0 %v1914
      %2066 = vmatprep.subr.bf16.mxu0 0
      %2067 = vmatpush1.bf16.msra.mxu0 %v1915
      %2068 = vmatprep.subr.bf16.mxu0 0
      %2069 = vmatpush1.bf16.msra.mxu0 %v1916
      %2070 = vmatprep.subr.bf16.mxu0 0
      %2071 = vmatpush1.bf16.msra.mxu0 %v1917
      %2072 = vmatprep.subr.bf16.mxu0 0
      %2073 = vmatpush1.bf16.msra.mxu0 %v1918
      %2074 = vmatprep.subr.bf16.mxu0 0
      %2075 = vmatpush1.bf16.msra.mxu0 %v1919
      %2076 = vmatprep.subr.bf16.mxu0 0
      %2077 = vmatpush1.bf16.msra.mxu0 %v1920
      %2078 = vmatprep.subr.bf16.mxu0 0
      %2079 = vmatpush1.bf16.msra.mxu0 %v1921
      %2080 = vmatprep.subr.bf16.mxu0 0
      %2081 = vmatpush1.bf16.msra.mxu0 %v1922
      %2082 = vmatprep.subr.bf16.mxu0 0
      %2083 = vmatpush1.bf16.msra.mxu0 %v1923
      %2084 = vmatprep.mubr.bf16.mxu0 %v1333
      %2085 = vmatmul.mubr.bf16.gmra.mrb[0].mxu0 %v1332
      %v2086 = vpop.f32.mrb[0].mxu0
      %v2087 = vadd.f32 %v758, %v2086
      %v2088 = vpop.f32.mrb[0].mxu0
      %v2089 = vpop.f32.mrb[0].mxu0
      %v2090 = vadd.f32 %v761, %v2089
      %v2091 = vpop.f32.mrb[0].mxu0
      %2092 = vmatprep.mubr.bf16.mxu0 %v1342
      %2093 = vmatmul.mubr.bf16.gmra.mrb[0].mxu0 %v1341
      %v2094 = vpop.f32.mrb[0].mxu0
      %v2095 = vadd.f32 %v766, %v2094
      %v2096 = vpop.f32.mrb[0].mxu0
      %v2097 = vpop.f32.mrb[0].mxu0
      %v2098 = vadd.f32 %v769, %v2097
      %v2099 = vpop.f32.mrb[0].mxu0
      %2100 = vmatprep.mubr.bf16.mxu0 %v1351
      %2101 = vmatmul.mubr.bf16.gmra.mrb[0].mxu0 %v1350
      %v2102 = vpop.f32.mrb[0].mxu0
      %v2103 = vadd.f32 %v774, %v2102
      %v2104 = vpop.f32.mrb[0].mxu0
      %v2105 = vpop.f32.mrb[0].mxu0
      %v2106 = vadd.f32 %v777, %v2105
      %v2107 = vpop.f32.mrb[0].mxu0
      %2108 = vmatprep.mubr.bf16.mxu0 %v1360
      %2109 = vmatmul.mubr.bf16.gmra.mrb[0].mxu0 %v1359
      %v2110 = vpop.f32.mrb[0].mxu0
      %v2111 = vadd.f32 %v782, %v2110
      %v2112 = vpop.f32.mrb[0].mxu0
      %v2113 = vpop.f32.mrb[0].mxu0
      %v2114 = vadd.f32 %v785, %v2113
      %v2115 = vpop.f32.mrb[0].mxu0
      %2116 = vmatprep.mubr.bf16.mxu0 %v1369
      %2117 = vmatmul.mubr.bf16.gmra.mrb[0].mxu0 %v1368
      %v2118 = vpop.f32.mrb[0].mxu0
      %v2119 = vadd.f32 %v790, %v2118
      %v2120 = vpop.f32.mrb[0].mxu0
      %v2121 = vpop.f32.mrb[0].mxu0
      %v2122 = vadd.f32 %v793, %v2121
      %v2123 = vpop.f32.mrb[0].mxu0
      %2124 = vmatprep.mubr.bf16.mxu0 %v1378
      %2125 = vmatmul.mubr.bf16.gmra.mrb[0].mxu0 %v1377
      %v2126 = vpop.f32.mrb[0].mxu0
      %v2127 = vadd.f32 %v798, %v2126
      %v2128 = vpop.f32.mrb[0].mxu0
      %v2129 = vpop.f32.mrb[0].mxu0
      %v2130 = vadd.f32 %v801, %v2129
      %v2131 = vpop.f32.mrb[0].mxu0
      %2132 = vmatprep.mubr.bf16.mxu0 %v1387
      %2133 = vmatmul.mubr.bf16.gmra.mrb[0].mxu0 %v1386
      %v2134 = vpop.f32.mrb[0].mxu0
      %v2135 = vadd.f32 %v806, %v2134
      %v2136 = vpop.f32.mrb[0].mxu0
      %v2137 = vpop.f32.mrb[0].mxu0
      %v2138 = vadd.f32 %v809, %v2137
      %v2139 = vpop.f32.mrb[0].mxu0
      %2140 = vmatprep.mubr.bf16.mxu0 %v1396
      %2141 = vmatmul.mubr.bf16.gmra.mrb[0].mxu0 %v1395
      %v2142 = vpop.f32.mrb[0].mxu0
      %v2143 = vadd.f32 %v814, %v2142
      %v2144 = vpop.f32.mrb[0].mxu0
      %v2145 = vpop.f32.mrb[0].mxu0
      %v2146 = vadd.f32 %v817, %v2145
      %v2147 = vpop.f32.mrb[0].mxu0
      %2148 = vmatprep.mubr.bf16.mxu0 %v1405
      %2149 = vmatmul.mubr.bf16.gmra.mrb[0].mxu0 %v1404
      %v2150 = vpop.f32.mrb[0].mxu0
      %v2151 = vadd.f32 %v822, %v2150
      %v2152 = vpop.f32.mrb[0].mxu0
      %v2153 = vpop.f32.mrb[0].mxu0
      %v2154 = vadd.f32 %v825, %v2153
      %v2155 = vpop.f32.mrb[0].mxu0
      %2156 = vmatprep.mubr.bf16.mxu0 %v1414
      %2157 = vmatmul.mubr.bf16.gmra.mrb[0].mxu0 %v1413
      %v2158 = vpop.f32.mrb[0].mxu0
      %v2159 = vadd.f32 %v830, %v2158
      %v2160 = vpop.f32.mrb[0].mxu0
      %v2161 = vpop.f32.mrb[0].mxu0
      %v2162 = vadd.f32 %v833, %v2161
      %v2163 = vpop.f32.mrb[0].mxu0
      %2164 = vmatprep.mubr.bf16.mxu0 %v1423
      %2165 = vmatmul.mubr.bf16.gmra.mrb[0].mxu0 %v1422
      %v2166 = vpop.f32.mrb[0].mxu0
      %v2167 = vadd.f32 %v838, %v2166
      %v2168 = vpop.f32.mrb[0].mxu0
      %v2169 = vpop.f32.mrb[0].mxu0
      %v2170 = vadd.f32 %v841, %v2169
      %v2171 = vpop.f32.mrb[0].mxu0
      %2172 = vmatprep.mubr.bf16.mxu0 %v1432
      %2173 = vmatmul.mubr.bf16.gmra.mrb[0].mxu0 %v1431
      %v2174 = vpop.f32.mrb[0].mxu0
      %v2175 = vadd.f32 %v846, %v2174
      %v2176 = vpop.f32.mrb[0].mxu0
      %v2177 = vpop.f32.mrb[0].mxu0
      %v2178 = vadd.f32 %v849, %v2177
      %v2179 = vpop.f32.mrb[0].mxu0
      %2180 = vmatprep.mubr.bf16.mxu0 %v1441
      %2181 = vmatmul.mubr.bf16.gmra.mrb[0].mxu0 %v1440
      %v2182 = vpop.f32.mrb[0].mxu0
      %v2183 = vadd.f32 %v854, %v2182
      %v2184 = vpop.f32.mrb[0].mxu0
      %v2185 = vpop.f32.mrb[0].mxu0
      %v2186 = vadd.f32 %v857, %v2185
      %v2187 = vpop.f32.mrb[0].mxu0
      %2188 = vmatprep.mubr.bf16.mxu0 %v1450
      %2189 = vmatmul.mubr.bf16.gmra.mrb[0].mxu0 %v1449
      %v2190 = vpop.f32.mrb[0].mxu0
      %v2191 = vadd.f32 %v862, %v2190
      %v2192 = vpop.f32.mrb[0].mxu0
      %v2193 = vpop.f32.mrb[0].mxu0
      %v2194 = vadd.f32 %v865, %v2193
      %v2195 = vpop.f32.mrb[0].mxu0
      %2196 = vmatprep.mubr.bf16.mxu0 %v1459
      %2197 = vmatmul.mubr.bf16.gmra.mrb[0].mxu0 %v1458
      %v2198 = vpop.f32.mrb[0].mxu0
      %v2199 = vadd.f32 %v870, %v2198
      %v2200 = vpop.f32.mrb[0].mxu0
      %v2201 = vpop.f32.mrb[0].mxu0
      %v2202 = vadd.f32 %v873, %v2201
      %v2203 = vpop.f32.mrb[0].mxu0
      %2204 = vmatprep.mubr.bf16.mxu0 %v1468
      %2205 = vmatmul.mubr.bf16.gmra.mrb[0].mxu0 %v1467
      %v2206 = vpop.f32.mrb[0].mxu0
      %v2207 = vadd.f32 %v878, %v2206
      %v2208 = vpop.f32.mrb[0].mxu0
      %v2209 = vpop.f32.mrb[0].mxu0
      %v2210 = vadd.f32 %v881, %v2209
      %v2211 = vpop.f32.mrb[0].mxu0
      %2212 = vdwg.mxu0
      %2213 = vmatprep.subr.bf16.mxu0 0
      %2214 = vmatpush1.bf16.msra.mxu0 %v1924
      %2215 = vmatprep.subr.bf16.mxu0 0
      %2216 = vmatpush1.bf16.msra.mxu0 %v1925
      %2217 = vmatprep.subr.bf16.mxu0 0
      %2218 = vmatpush1.bf16.msra.mxu0 %v1926
      %2219 = vmatprep.subr.bf16.mxu0 0
      %2220 = vmatpush1.bf16.msra.mxu0 %v1927
      %2221 = vmatprep.subr.bf16.mxu0 0
      %2222 = vmatpush1.bf16.msra.mxu0 %v1928
      %2223 = vmatprep.subr.bf16.mxu0 0
      %2224 = vmatpush1.bf16.msra.mxu0 %v1929
      %2225 = vmatprep.subr.bf16.mxu0 0
      %2226 = vmatpush1.bf16.msra.mxu0 %v1930
      %2227 = vmatprep.subr.bf16.mxu0 0
      %2228 = vmatpush1.bf16.msra.mxu0 %v1931
      %2229 = vmatprep.subr.bf16.mxu0 0
      %2230 = vmatpush1.bf16.msra.mxu0 %v1932
      %2231 = vmatprep.subr.bf16.mxu0 0
      %2232 = vmatpush1.bf16.msra.mxu0 %v1933
      %2233 = vmatprep.subr.bf16.mxu0 0
      %2234 = vmatpush1.bf16.msra.mxu0 %v1934
      %2235 = vmatprep.subr.bf16.mxu0 0
      %2236 = vmatpush1.bf16.msra.mxu0 %v1935
      %2237 = vmatprep.subr.bf16.mxu0 0
      %2238 = vmatpush1.bf16.msra.mxu0 %v1936
      %2239 = vmatprep.subr.bf16.mxu0 0
      %2240 = vmatpush1.bf16.msra.mxu0 %v1937
      %2241 = vmatprep.subr.bf16.mxu0 0
      %2242 = vmatpush1.bf16.msra.mxu0 %v1938
      %2243 = vmatprep.subr.bf16.mxu0 0
      %2244 = vmatpush1.bf16.msra.mxu0 %v1939
      %2245 = vmatprep.mubr.bf16.mxu0 %v1335
      %2246 = vmatmul.mubr.bf16.gmra.mrb[0].mxu0 %v1334
      %v2247 = vpop.f32.mrb[0].mxu0
      %v2248 = vadd.f32 %v2087, %v2247
      %v2249 = vpop.f32.mrb[0].mxu0
      %v2250 = vpop.f32.mrb[0].mxu0
      %v2251 = vadd.f32 %v2090, %v2250
      %v2252 = vpop.f32.mrb[0].mxu0
      %2253 = vmatprep.mubr.bf16.mxu0 %v1344
      %2254 = vmatmul.mubr.bf16.gmra.mrb[0].mxu0 %v1343
      %v2255 = vpop.f32.mrb[0].mxu0
      %v2256 = vadd.f32 %v2095, %v2255
      %v2257 = vpop.f32.mrb[0].mxu0
      %v2258 = vpop.f32.mrb[0].mxu0
      %v2259 = vadd.f32 %v2098, %v2258
      %v2260 = vpop.f32.mrb[0].mxu0
      %2261 = vmatprep.mubr.bf16.mxu0 %v1353
      %2262 = vmatmul.mubr.bf16.gmra.mrb[0].mxu0 %v1352
      %v2263 = vpop.f32.mrb[0].mxu0
      %v2264 = vadd.f32 %v2103, %v2263
      %v2265 = vpop.f32.mrb[0].mxu0
      %v2266 = vpop.f32.mrb[0].mxu0
      %v2267 = vadd.f32 %v2106, %v2266
      %v2268 = vpop.f32.mrb[0].mxu0
      %2269 = vmatprep.mubr.bf16.mxu0 %v1362
      %2270 = vmatmul.mubr.bf16.gmra.mrb[0].mxu0 %v1361
      %v2271 = vpop.f32.mrb[0].mxu0
      %v2272 = vadd.f32 %v2111, %v2271
      %v2273 = vpop.f32.mrb[0].mxu0
      %v2274 = vpop.f32.mrb[0].mxu0
      %v2275 = vadd.f32 %v2114, %v2274
      %v2276 = vpop.f32.mrb[0].mxu0
      %2277 = vmatprep.mubr.bf16.mxu0 %v1371
      %2278 = vmatmul.mubr.bf16.gmra.mrb[0].mxu0 %v1370
      %v2279 = vpop.f32.mrb[0].mxu0
      %v2280 = vadd.f32 %v2119, %v2279
      %v2281 = vpop.f32.mrb[0].mxu0
      %v2282 = vpop.f32.mrb[0].mxu0
      %v2283 = vadd.f32 %v2122, %v2282
      %v2284 = vpop.f32.mrb[0].mxu0
      %2285 = vmatprep.mubr.bf16.mxu0 %v1380
      %2286 = vmatmul.mubr.bf16.gmra.mrb[0].mxu0 %v1379
      %v2287 = vpop.f32.mrb[0].mxu0
      %v2288 = vadd.f32 %v2127, %v2287
      %v2289 = vpop.f32.mrb[0].mxu0
      %v2290 = vpop.f32.mrb[0].mxu0
      %v2291 = vadd.f32 %v2130, %v2290
      %v2292 = vpop.f32.mrb[0].mxu0
      %2293 = vmatprep.mubr.bf16.mxu0 %v1389
      %2294 = vmatmul.mubr.bf16.gmra.mrb[0].mxu0 %v1388
      %v2295 = vpop.f32.mrb[0].mxu0
      %v2296 = vadd.f32 %v2135, %v2295
      %v2297 = vpop.f32.mrb[0].mxu0
      %v2298 = vpop.f32.mrb[0].mxu0
      %v2299 = vadd.f32 %v2138, %v2298
      %v2300 = vpop.f32.mrb[0].mxu0
      %2301 = vmatprep.mubr.bf16.mxu0 %v1398
      %2302 = vmatmul.mubr.bf16.gmra.mrb[0].mxu0 %v1397
      %v2303 = vpop.f32.mrb[0].mxu0
      %v2304 = vadd.f32 %v2143, %v2303
      %v2305 = vpop.f32.mrb[0].mxu0
      %v2306 = vpop.f32.mrb[0].mxu0
      %v2307 = vadd.f32 %v2146, %v2306
      %v2308 = vpop.f32.mrb[0].mxu0
      %2309 = vmatprep.mubr.bf16.mxu0 %v1407
      %2310 = vmatmul.mubr.bf16.gmra.mrb[0].mxu0 %v1406
      %v2311 = vpop.f32.mrb[0].mxu0
      %v2312 = vadd.f32 %v2151, %v2311
      %v2313 = vpop.f32.mrb[0].mxu0
      %v2314 = vpop.f32.mrb[0].mxu0
      %v2315 = vadd.f32 %v2154, %v2314
      %v2316 = vpop.f32.mrb[0].mxu0
      %2317 = vmatprep.mubr.bf16.mxu0 %v1416
      %2318 = vmatmul.mubr.bf16.gmra.mrb[0].mxu0 %v1415
      %v2319 = vpop.f32.mrb[0].mxu0
      %v2320 = vadd.f32 %v2159, %v2319
      %v2321 = vpop.f32.mrb[0].mxu0
      %v2322 = vpop.f32.mrb[0].mxu0
      %v2323 = vadd.f32 %v2162, %v2322
      %v2324 = vpop.f32.mrb[0].mxu0
      %2325 = vmatprep.mubr.bf16.mxu0 %v1425
      %2326 = vmatmul.mubr.bf16.gmra.mrb[0].mxu0 %v1424
      %v2327 = vpop.f32.mrb[0].mxu0
      %v2328 = vadd.f32 %v2167, %v2327
      %v2329 = vpop.f32.mrb[0].mxu0
      %v2330 = vpop.f32.mrb[0].mxu0
      %v2331 = vadd.f32 %v2170, %v2330
      %v2332 = vpop.f32.mrb[0].mxu0
      %2333 = vmatprep.mubr.bf16.mxu0 %v1434
      %2334 = vmatmul.mubr.bf16.gmra.mrb[0].mxu0 %v1433
      %v2335 = vpop.f32.mrb[0].mxu0
      %v2336 = vadd.f32 %v2175, %v2335
      %v2337 = vpop.f32.mrb[0].mxu0
      %v2338 = vpop.f32.mrb[0].mxu0
      %v2339 = vadd.f32 %v2178, %v2338
      %v2340 = vpop.f32.mrb[0].mxu0
      %2341 = vmatprep.mubr.bf16.mxu0 %v1443
      %2342 = vmatmul.mubr.bf16.gmra.mrb[0].mxu0 %v1442
      %v2343 = vpop.f32.mrb[0].mxu0
      %v2344 = vadd.f32 %v2183, %v2343
      %v2345 = vpop.f32.mrb[0].mxu0
      %v2346 = vpop.f32.mrb[0].mxu0
      %v2347 = vadd.f32 %v2186, %v2346
      %v2348 = vpop.f32.mrb[0].mxu0
      %2349 = vmatprep.mubr.bf16.mxu0 %v1452
      %2350 = vmatmul.mubr.bf16.gmra.mrb[0].mxu0 %v1451
      %v2351 = vpop.f32.mrb[0].mxu0
      %v2352 = vadd.f32 %v2191, %v2351
      %v2353 = vpop.f32.mrb[0].mxu0
      %v2354 = vpop.f32.mrb[0].mxu0
      %v2355 = vadd.f32 %v2194, %v2354
      %v2356 = vpop.f32.mrb[0].mxu0
      %2357 = vmatprep.mubr.bf16.mxu0 %v1461
      %2358 = vmatmul.mubr.bf16.gmra.mrb[0].mxu0 %v1460
      %v2359 = vpop.f32.mrb[0].mxu0
      %v2360 = vadd.f32 %v2199, %v2359
      %v2361 = vpop.f32.mrb[0].mxu0
      %v2362 = vpop.f32.mrb[0].mxu0
      %v2363 = vadd.f32 %v2202, %v2362
      %v2364 = vpop.f32.mrb[0].mxu0
      %2365 = vmatprep.mubr.bf16.mxu0 %v1470
      %2366 = vmatmul.mubr.bf16.gmra.mrb[0].mxu0 %v1469
      %v2367 = vpop.f32.mrb[0].mxu0
      %v2368 = vadd.f32 %v2207, %v2367
      %v2369 = vpop.f32.mrb[0].mxu0
      %v2370 = vpop.f32.mrb[0].mxu0
      %v2371 = vadd.f32 %v2210, %v2370
      %v2372 = vpop.f32.mrb[0].mxu0
      %2373 = vdwg.mxu0
      %2374 = vmatprep.subr.bf16.mxu0 0
      %2375 = vmatpush1.bf16.msra.mxu0 %v1940
      %2376 = vmatprep.subr.bf16.mxu0 0
      %2377 = vmatpush1.bf16.msra.mxu0 %v1941
      %2378 = vmatprep.subr.bf16.mxu0 0
      %2379 = vmatpush1.bf16.msra.mxu0 %v1942
      %2380 = vmatprep.subr.bf16.mxu0 0
      %2381 = vmatpush1.bf16.msra.mxu0 %v1943
      %2382 = vmatprep.subr.bf16.mxu0 0
      %2383 = vmatpush1.bf16.msra.mxu0 %v1944
      %2384 = vmatprep.subr.bf16.mxu0 0
      %2385 = vmatpush1.bf16.msra.mxu0 %v1945
      %2386 = vmatprep.subr.bf16.mxu0 0
      %2387 = vmatpush1.bf16.msra.mxu0 %v1946
      %2388 = vmatprep.subr.bf16.mxu0 0
      %2389 = vmatpush1.bf16.msra.mxu0 %v1947
      %2390 = vmatprep.subr.bf16.mxu0 0
      %2391 = vmatpush1.bf16.msra.mxu0 %v1948
      %2392 = vmatprep.subr.bf16.mxu0 0
      %2393 = vmatpush1.bf16.msra.mxu0 %v1949
      %2394 = vmatprep.subr.bf16.mxu0 0
      %2395 = vmatpush1.bf16.msra.mxu0 %v1950
      %2396 = vmatprep.subr.bf16.mxu0 0
      %2397 = vmatpush1.bf16.msra.mxu0 %v1951
      %2398 = vmatprep.subr.bf16.mxu0 0
      %2399 = vmatpush1.bf16.msra.mxu0 %v1952
      %2400 = vmatprep.subr.bf16.mxu0 0
      %2401 = vmatpush1.bf16.msra.mxu0 %v1953
      %2402 = vmatprep.subr.bf16.mxu0 0
      %2403 = vmatpush1.bf16.msra.mxu0 %v1954
      %2404 = vmatprep.subr.bf16.mxu0 0
      %2405 = vmatpush1.bf16.msra.mxu0 %v1955
      %2406 = vmatprep.mubr.bf16.mxu0 %v1337
      %2407 = vmatmul.mubr.bf16.gmra.mrb[0].mxu0 %v1336
      %v2408 = vpop.f32.mrb[0].mxu0
      %v2409 = vadd.f32 %v2248, %v2408
      %v2410 = vpop.f32.mrb[0].mxu0
      %v2411 = vpop.f32.mrb[0].mxu0
      %v2412 = vadd.f32 %v2251, %v2411
      %v2413 = vpop.f32.mrb[0].mxu0
      %2414 = vmatprep.mubr.bf16.mxu0 %v1346
      %2415 = vmatmul.mubr.bf16.gmra.mrb[0].mxu0 %v1345
      %v2416 = vpop.f32.mrb[0].mxu0
      %v2417 = vadd.f32 %v2256, %v2416
      %v2418 = vpop.f32.mrb[0].mxu0
      %v2419 = vpop.f32.mrb[0].mxu0
      %v2420 = vadd.f32 %v2259, %v2419
      %v2421 = vpop.f32.mrb[0].mxu0
      %2422 = vmatprep.mubr.bf16.mxu0 %v1355
      %2423 = vmatmul.mubr.bf16.gmra.mrb[0].mxu0 %v1354
      %v2424 = vpop.f32.mrb[0].mxu0
      %v2425 = vadd.f32 %v2264, %v2424
      %v2426 = vpop.f32.mrb[0].mxu0
      %v2427 = vpop.f32.mrb[0].mxu0
      %v2428 = vadd.f32 %v2267, %v2427
      %v2429 = vpop.f32.mrb[0].mxu0
      %2430 = vmatprep.mubr.bf16.mxu0 %v1364
      %2431 = vmatmul.mubr.bf16.gmra.mrb[0].mxu0 %v1363
      %v2432 = vpop.f32.mrb[0].mxu0
      %v2433 = vadd.f32 %v2272, %v2432
      %v2434 = vpop.f32.mrb[0].mxu0
      %v2435 = vpop.f32.mrb[0].mxu0
      %v2436 = vadd.f32 %v2275, %v2435
      %v2437 = vpop.f32.mrb[0].mxu0
      %2438 = vmatprep.mubr.bf16.mxu0 %v1373
      %2439 = vmatmul.mubr.bf16.gmra.mrb[0].mxu0 %v1372
      %v2440 = vpop.f32.mrb[0].mxu0
      %v2441 = vadd.f32 %v2280, %v2440
      %v2442 = vpop.f32.mrb[0].mxu0
      %v2443 = vpop.f32.mrb[0].mxu0
      %v2444 = vadd.f32 %v2283, %v2443
      %v2445 = vpop.f32.mrb[0].mxu0
      %2446 = vmatprep.mubr.bf16.mxu0 %v1382
      %2447 = vmatmul.mubr.bf16.gmra.mrb[0].mxu0 %v1381
      %v2448 = vpop.f32.mrb[0].mxu0
      %v2449 = vadd.f32 %v2288, %v2448
      %v2450 = vpop.f32.mrb[0].mxu0
      %v2451 = vpop.f32.mrb[0].mxu0
      %v2452 = vadd.f32 %v2291, %v2451
      %v2453 = vpop.f32.mrb[0].mxu0
      %2454 = vmatprep.mubr.bf16.mxu0 %v1391
      %2455 = vmatmul.mubr.bf16.gmra.mrb[0].mxu0 %v1390
      %v2456 = vpop.f32.mrb[0].mxu0
      %v2457 = vadd.f32 %v2296, %v2456
      %v2458 = vpop.f32.mrb[0].mxu0
      %v2459 = vpop.f32.mrb[0].mxu0
      %v2460 = vadd.f32 %v2299, %v2459
      %v2461 = vpop.f32.mrb[0].mxu0
      %2462 = vmatprep.mubr.bf16.mxu0 %v1400
      %2463 = vmatmul.mubr.bf16.gmra.mrb[0].mxu0 %v1399
      %v2464 = vpop.f32.mrb[0].mxu0
      %v2465 = vadd.f32 %v2304, %v2464
      %v2466 = vpop.f32.mrb[0].mxu0
      %v2467 = vpop.f32.mrb[0].mxu0
      %v2468 = vadd.f32 %v2307, %v2467
      %v2469 = vpop.f32.mrb[0].mxu0
      %2470 = vmatprep.mubr.bf16.mxu0 %v1409
      %2471 = vmatmul.mubr.bf16.gmra.mrb[0].mxu0 %v1408
      %v2472 = vpop.f32.mrb[0].mxu0
      %v2473 = vadd.f32 %v2312, %v2472
      %v2474 = vpop.f32.mrb[0].mxu0
      %v2475 = vpop.f32.mrb[0].mxu0
      %v2476 = vadd.f32 %v2315, %v2475
      %v2477 = vpop.f32.mrb[0].mxu0
      %2478 = vmatprep.mubr.bf16.mxu0 %v1418
      %2479 = vmatmul.mubr.bf16.gmra.mrb[0].mxu0 %v1417
      %v2480 = vpop.f32.mrb[0].mxu0
      %v2481 = vadd.f32 %v2320, %v2480
      %v2482 = vpop.f32.mrb[0].mxu0
      %v2483 = vpop.f32.mrb[0].mxu0
      %v2484 = vadd.f32 %v2323, %v2483
      %v2485 = vpop.f32.mrb[0].mxu0
      %2486 = vmatprep.mubr.bf16.mxu0 %v1427
      %2487 = vmatmul.mubr.bf16.gmra.mrb[0].mxu0 %v1426
      %v2488 = vpop.f32.mrb[0].mxu0
      %v2489 = vadd.f32 %v2328, %v2488
      %v2490 = vpop.f32.mrb[0].mxu0
      %v2491 = vpop.f32.mrb[0].mxu0
      %v2492 = vadd.f32 %v2331, %v2491
      %v2493 = vpop.f32.mrb[0].mxu0
      %2494 = vmatprep.mubr.bf16.mxu0 %v1436
      %2495 = vmatmul.mubr.bf16.gmra.mrb[0].mxu0 %v1435
      %v2496 = vpop.f32.mrb[0].mxu0
      %v2497 = vadd.f32 %v2336, %v2496
      %v2498 = vpop.f32.mrb[0].mxu0
      %v2499 = vpop.f32.mrb[0].mxu0
      %v2500 = vadd.f32 %v2339, %v2499
      %v2501 = vpop.f32.mrb[0].mxu0
      %2502 = vmatprep.mubr.bf16.mxu0 %v1445
      %2503 = vmatmul.mubr.bf16.gmra.mrb[0].mxu0 %v1444
      %v2504 = vpop.f32.mrb[0].mxu0
      %v2505 = vadd.f32 %v2344, %v2504
      %v2506 = vpop.f32.mrb[0].mxu0
      %v2507 = vpop.f32.mrb[0].mxu0
      %v2508 = vadd.f32 %v2347, %v2507
      %v2509 = vpop.f32.mrb[0].mxu0
      %2510 = vmatprep.mubr.bf16.mxu0 %v1454
      %2511 = vmatmul.mubr.bf16.gmra.mrb[0].mxu0 %v1453
      %v2512 = vpop.f32.mrb[0].mxu0
      %v2513 = vadd.f32 %v2352, %v2512
      %v2514 = vpop.f32.mrb[0].mxu0
      %v2515 = vpop.f32.mrb[0].mxu0
      %v2516 = vadd.f32 %v2355, %v2515
      %v2517 = vpop.f32.mrb[0].mxu0
      %2518 = vmatprep.mubr.bf16.mxu0 %v1463
      %2519 = vmatmul.mubr.bf16.gmra.mrb[0].mxu0 %v1462
      %v2520 = vpop.f32.mrb[0].mxu0
      %v2521 = vadd.f32 %v2360, %v2520
      %v2522 = vpop.f32.mrb[0].mxu0
      %v2523 = vpop.f32.mrb[0].mxu0
      %v2524 = vadd.f32 %v2363, %v2523
      %v2525 = vpop.f32.mrb[0].mxu0
      %2526 = vmatprep.mubr.bf16.mxu0 %v1472
      %2527 = vmatmul.mubr.bf16.gmra.mrb[0].mxu0 %v1471
      %v2528 = vpop.f32.mrb[0].mxu0
      %v2529 = vadd.f32 %v2368, %v2528
      %v2530 = vpop.f32.mrb[0].mxu0
      %v2531 = vpop.f32.mrb[0].mxu0
      %v2532 = vadd.f32 %v2371, %v2531
      %v2533 = vpop.f32.mrb[0].mxu0
      %2534 = vdwg.mxu0
      %2535 = vmatprep.subr.bf16.mxu0 0
      %2536 = vmatpush1.bf16.msra.mxu0 %v1956
      %2537 = vmatprep.subr.bf16.mxu0 0
      %2538 = vmatpush1.bf16.msra.mxu0 %v1957
      %2539 = vmatprep.subr.bf16.mxu0 0
      %2540 = vmatpush1.bf16.msra.mxu0 %v1958
      %2541 = vmatprep.subr.bf16.mxu0 0
      %2542 = vmatpush1.bf16.msra.mxu0 %v1959
      %2543 = vmatprep.subr.bf16.mxu0 0
      %2544 = vmatpush1.bf16.msra.mxu0 %v1960
      %2545 = vmatprep.subr.bf16.mxu0 0
      %2546 = vmatpush1.bf16.msra.mxu0 %v1961
      %2547 = vmatprep.subr.bf16.mxu0 0
      %2548 = vmatpush1.bf16.msra.mxu0 %v1962
      %2549 = vmatprep.subr.bf16.mxu0 0
      %2550 = vmatpush1.bf16.msra.mxu0 %v1963
      %2551 = vmatprep.subr.bf16.mxu0 0
      %2552 = vmatpush1.bf16.msra.mxu0 %v1964
      %2553 = vmatprep.subr.bf16.mxu0 0
      %2554 = vmatpush1.bf16.msra.mxu0 %v1965
      %2555 = vmatprep.subr.bf16.mxu0 0
      %2556 = vmatpush1.bf16.msra.mxu0 %v1966
      %2557 = vmatprep.subr.bf16.mxu0 0
      %2558 = vmatpush1.bf16.msra.mxu0 %v1967
      %2559 = vmatprep.subr.bf16.mxu0 0
      %2560 = vmatpush1.bf16.msra.mxu0 %v1968
      %2561 = vmatprep.subr.bf16.mxu0 0
      %2562 = vmatpush1.bf16.msra.mxu0 %v1969
      %2563 = vmatprep.subr.bf16.mxu0 0
      %2564 = vmatpush1.bf16.msra.mxu0 %v1970
      %2565 = vmatprep.subr.bf16.mxu0 0
      %2566 = vmatpush1.bf16.msra.mxu0 %v1971
      %2567 = vmatprep.mubr.bf16.mxu0 %v1339
      %2568 = vmatmul.mubr.bf16.gmra.mrb[0].mxu0 %v1338
      %v2569 = vpop.f32.mrb[0].mxu0
      %v2570 = vadd.f32 %v2409, %v2569
      %v2571 = vpop.f32.mrb[0].mxu0
      %v2572 = vpop.f32.mrb[0].mxu0
      %v2573 = vadd.f32 %v2412, %v2572
      %v2574 = vpop.f32.mrb[0].mxu0
      %2575 = vmatprep.mubr.bf16.mxu0 %v1348
      %2576 = vmatmul.mubr.bf16.gmra.mrb[0].mxu0 %v1347
      %v2577 = vpop.f32.mrb[0].mxu0
      %v2578 = vadd.f32 %v2417, %v2577
      %v2579 = vpop.f32.mrb[0].mxu0
      %v2580 = vpop.f32.mrb[0].mxu0
      %v2581 = vadd.f32 %v2420, %v2580
      %v2582 = vpop.f32.mrb[0].mxu0
      %2583 = vmatprep.mubr.bf16.mxu0 %v1357
      %2584 = vmatmul.mubr.bf16.gmra.mrb[0].mxu0 %v1356
      %v2585 = vpop.f32.mrb[0].mxu0
      %v2586 = vadd.f32 %v2425, %v2585
      %v2587 = vpop.f32.mrb[0].mxu0
      %v2588 = vpop.f32.mrb[0].mxu0
      %v2589 = vadd.f32 %v2428, %v2588
      %v2590 = vpop.f32.mrb[0].mxu0
      %2591 = vmatprep.mubr.bf16.mxu0 %v1366
      %2592 = vmatmul.mubr.bf16.gmra.mrb[0].mxu0 %v1365
      %v2593 = vpop.f32.mrb[0].mxu0
      %v2594 = vadd.f32 %v2433, %v2593
      %v2595 = vpop.f32.mrb[0].mxu0
      %v2596 = vpop.f32.mrb[0].mxu0
      %v2597 = vadd.f32 %v2436, %v2596
      %v2598 = vpop.f32.mrb[0].mxu0
      %2599 = vmatprep.mubr.bf16.mxu0 %v1375
      %2600 = vmatmul.mubr.bf16.gmra.mrb[0].mxu0 %v1374
      %v2601 = vpop.f32.mrb[0].mxu0
      %v2602 = vadd.f32 %v2441, %v2601
      %v2603 = vpop.f32.mrb[0].mxu0
      %v2604 = vpop.f32.mrb[0].mxu0
      %v2605 = vadd.f32 %v2444, %v2604
      %v2606 = vpop.f32.mrb[0].mxu0
      %2607 = vmatprep.mubr.bf16.mxu0 %v1384
      %2608 = vmatmul.mubr.bf16.gmra.mrb[0].mxu0 %v1383
      %v2609 = vpop.f32.mrb[0].mxu0
      %v2610 = vadd.f32 %v2449, %v2609
      %v2611 = vpop.f32.mrb[0].mxu0
      %v2612 = vpop.f32.mrb[0].mxu0
      %v2613 = vadd.f32 %v2452, %v2612
      %v2614 = vpop.f32.mrb[0].mxu0
      %2615 = vmatprep.mubr.bf16.mxu0 %v1393
      %2616 = vmatmul.mubr.bf16.gmra.mrb[0].mxu0 %v1392
      %v2617 = vpop.f32.mrb[0].mxu0
      %v2618 = vadd.f32 %v2457, %v2617
      %v2619 = vpop.f32.mrb[0].mxu0
      %v2620 = vpop.f32.mrb[0].mxu0
      %v2621 = vadd.f32 %v2460, %v2620
      %v2622 = vpop.f32.mrb[0].mxu0
      %2623 = vmatprep.mubr.bf16.mxu0 %v1402
      %2624 = vmatmul.mubr.bf16.gmra.mrb[0].mxu0 %v1401
      %v2625 = vpop.f32.mrb[0].mxu0
      %v2626 = vadd.f32 %v2465, %v2625
      %v2627 = vpop.f32.mrb[0].mxu0
      %v2628 = vpop.f32.mrb[0].mxu0
      %v2629 = vadd.f32 %v2468, %v2628
      %v2630 = vpop.f32.mrb[0].mxu0
      %2631 = vmatprep.mubr.bf16.mxu0 %v1411
      %2632 = vmatmul.mubr.bf16.gmra.mrb[0].mxu0 %v1410
      %v2633 = vpop.f32.mrb[0].mxu0
      %v2634 = vadd.f32 %v2473, %v2633
      %v2635 = vpop.f32.mrb[0].mxu0
      %v2636 = vpop.f32.mrb[0].mxu0
      %v2637 = vadd.f32 %v2476, %v2636
      %v2638 = vpop.f32.mrb[0].mxu0
      %2639 = vmatprep.mubr.bf16.mxu0 %v1420
      %2640 = vmatmul.mubr.bf16.gmra.mrb[0].mxu0 %v1419
      %v2641 = vpop.f32.mrb[0].mxu0
      %v2642 = vadd.f32 %v2481, %v2641
      %v2643 = vpop.f32.mrb[0].mxu0
      %v2644 = vpop.f32.mrb[0].mxu0
      %v2645 = vadd.f32 %v2484, %v2644
      %v2646 = vpop.f32.mrb[0].mxu0
      %2647 = vmatprep.mubr.bf16.mxu0 %v1429
      %2648 = vmatmul.mubr.bf16.gmra.mrb[0].mxu0 %v1428
      %v2649 = vpop.f32.mrb[0].mxu0
      %v2650 = vadd.f32 %v2489, %v2649
      %v2651 = vpop.f32.mrb[0].mxu0
      %v2652 = vpop.f32.mrb[0].mxu0
      %v2653 = vadd.f32 %v2492, %v2652
      %v2654 = vpop.f32.mrb[0].mxu0
      %2655 = vmatprep.mubr.bf16.mxu0 %v1438
      %2656 = vmatmul.mubr.bf16.gmra.mrb[0].mxu0 %v1437
      %v2657 = vpop.f32.mrb[0].mxu0
      %v2658 = vadd.f32 %v2497, %v2657
      %v2659 = vpop.f32.mrb[0].mxu0
      %v2660 = vpop.f32.mrb[0].mxu0
      %v2661 = vadd.f32 %v2500, %v2660
      %v2662 = vpop.f32.mrb[0].mxu0
      %2663 = vmatprep.mubr.bf16.mxu0 %v1447
      %2664 = vmatmul.mubr.bf16.gmra.mrb[0].mxu0 %v1446
      %v2665 = vpop.f32.mrb[0].mxu0
      %v2666 = vadd.f32 %v2505, %v2665
      %v2667 = vpop.f32.mrb[0].mxu0
      %v2668 = vpop.f32.mrb[0].mxu0
      %v2669 = vadd.f32 %v2508, %v2668
      %v2670 = vpop.f32.mrb[0].mxu0
      %2671 = vmatprep.mubr.bf16.mxu0 %v1456
      %2672 = vmatmul.mubr.bf16.gmra.mrb[0].mxu0 %v1455
      %v2673 = vpop.f32.mrb[0].mxu0
      %v2674 = vadd.f32 %v2513, %v2673
      %v2675 = vpop.f32.mrb[0].mxu0
      %v2676 = vpop.f32.mrb[0].mxu0
      %v2677 = vadd.f32 %v2516, %v2676
      %v2678 = vpop.f32.mrb[0].mxu0
      %2679 = vmatprep.mubr.bf16.mxu0 %v1465
      %2680 = vmatmul.mubr.bf16.gmra.mrb[0].mxu0 %v1464
      %v2681 = vpop.f32.mrb[0].mxu0
      %v2682 = vadd.f32 %v2521, %v2681
      %v2683 = vpop.f32.mrb[0].mxu0
      %v2684 = vpop.f32.mrb[0].mxu0
      %v2685 = vadd.f32 %v2524, %v2684
      %v2686 = vpop.f32.mrb[0].mxu0
      %2687 = vmatprep.mubr.bf16.mxu0 %v1474
      %2688 = vmatmul.mubr.bf16.gmra.mrb[0].mxu0 %v1473
      %v2689 = vpop.f32.mrb[0].mxu0
      %v2690 = vadd.f32 %v2529, %v2689
      %v2691 = vpop.f32.mrb[0].mxu0
      %v2692 = vpop.f32.mrb[0].mxu0
      %v2693 = vadd.f32 %v2532, %v2692
      %v2694 = vpop.f32.mrb[0].mxu0
      %2695 = vdwg.mxu0
      %2696 = vmatprep.subr.bf16.mxu0 0
      %2697 = vmatpush1.bf16.msra.mxu0 %v1972
      %2698 = vmatprep.subr.bf16.mxu0 0
      %2699 = vmatpush1.bf16.msra.mxu0 %v1973
      %2700 = vmatprep.subr.bf16.mxu0 0
      %2701 = vmatpush1.bf16.msra.mxu0 %v1974
      %2702 = vmatprep.subr.bf16.mxu0 0
      %2703 = vmatpush1.bf16.msra.mxu0 %v1975
      %2704 = vmatprep.subr.bf16.mxu0 0
      %2705 = vmatpush1.bf16.msra.mxu0 %v1976
      %2706 = vmatprep.subr.bf16.mxu0 0
      %2707 = vmatpush1.bf16.msra.mxu0 %v1977
      %2708 = vmatprep.subr.bf16.mxu0 0
      %2709 = vmatpush1.bf16.msra.mxu0 %v1978
      %2710 = vmatprep.subr.bf16.mxu0 0
      %2711 = vmatpush1.bf16.msra.mxu0 %v1979
      %2712 = vmatprep.subr.bf16.mxu0 0
      %2713 = vmatpush1.bf16.msra.mxu0 0
      %2714 = vmatprep.subr.bf16.mxu0 0
      %2715 = vmatpush1.bf16.msra.mxu0 0
      %2716 = vmatprep.subr.bf16.mxu0 0
      %2717 = vmatpush1.bf16.msra.mxu0 0
      %2718 = vmatprep.subr.bf16.mxu0 0
      %2719 = vmatpush1.bf16.msra.mxu0 0
      %2720 = vmatprep.subr.bf16.mxu0 0
      %2721 = vmatpush1.bf16.msra.mxu0 0
      %2722 = vmatprep.subr.bf16.mxu0 0
      %2723 = vmatpush1.bf16.msra.mxu0 0
      %2724 = vmatprep.subr.bf16.mxu0 0
      %2725 = vmatpush1.bf16.msra.mxu0 0
      %2726 = vmatprep.subr.bf16.mxu0 0
      %2727 = vmatpush1.bf16.msra.mxu0 0
      %2728 = vmatprep.mubr.bf16.mxu0 0
      %2729 = vmatmul.mubr.bf16.gmra.mrb[0].mxu0 %v1340
      %v2730 = vpop.f32.mrb[0].mxu0
      %v2731 = vadd.f32 %v2570, %v2730
      %v2732 = vpop.f32.mrb[0].mxu0
      %v2733 = vpop.f32.mrb[0].mxu0
      %v2734 = vadd.f32 %v2573, %v2733
      %v2735 = vpop.f32.mrb[0].mxu0
      %2736 = vmatprep.mubr.bf16.mxu0 0
      %2737 = vmatmul.mubr.bf16.gmra.mrb[0].mxu0 %v1349
      %v2738 = vpop.f32.mrb[0].mxu0
      %v2739 = vadd.f32 %v2578, %v2738
      %v2740 = vpop.f32.mrb[0].mxu0
      %v2741 = vpop.f32.mrb[0].mxu0
      %v2742 = vadd.f32 %v2581, %v2741
      %v2743 = vpop.f32.mrb[0].mxu0
      %2744 = vmatprep.mubr.bf16.mxu0 0
      %2745 = vmatmul.mubr.bf16.gmra.mrb[0].mxu0 %v1358
      %v2746 = vpop.f32.mrb[0].mxu0
      %v2747 = vadd.f32 %v2586, %v2746
      %v2748 = vpop.f32.mrb[0].mxu0
      %v2749 = vpop.f32.mrb[0].mxu0
      %v2750 = vadd.f32 %v2589, %v2749
      %v2751 = vpop.f32.mrb[0].mxu0
      %2752 = vmatprep.mubr.bf16.mxu0 0
      %2753 = vmatmul.mubr.bf16.gmra.mrb[0].mxu0 %v1367
      %v2754 = vpop.f32.mrb[0].mxu0
      %v2755 = vadd.f32 %v2594, %v2754
      %v2756 = vpop.f32.mrb[0].mxu0
      %v2757 = vpop.f32.mrb[0].mxu0
      %v2758 = vadd.f32 %v2597, %v2757
      %v2759 = vpop.f32.mrb[0].mxu0
      %2760 = vmatprep.mubr.bf16.mxu0 0
      %2761 = vmatmul.mubr.bf16.gmra.mrb[0].mxu0 %v1376
      %v2762 = vpop.f32.mrb[0].mxu0
      %v2763 = vadd.f32 %v2602, %v2762
      %v2764 = vpop.f32.mrb[0].mxu0
      %v2765 = vpop.f32.mrb[0].mxu0
      %v2766 = vadd.f32 %v2605, %v2765
      %v2767 = vpop.f32.mrb[0].mxu0
      %2768 = vmatprep.mubr.bf16.mxu0 0
      %2769 = vmatmul.mubr.bf16.gmra.mrb[0].mxu0 %v1385
      %v2770 = vpop.f32.mrb[0].mxu0
      %v2771 = vadd.f32 %v2610, %v2770
      %v2772 = vpop.f32.mrb[0].mxu0
      %v2773 = vpop.f32.mrb[0].mxu0
      %v2774 = vadd.f32 %v2613, %v2773
      %v2775 = vpop.f32.mrb[0].mxu0
      %2776 = vmatprep.mubr.bf16.mxu0 0
      %2777 = vmatmul.mubr.bf16.gmra.mrb[0].mxu0 %v1394
      %v2778 = vpop.f32.mrb[0].mxu0
      %v2779 = vadd.f32 %v2618, %v2778
      %v2780 = vpop.f32.mrb[0].mxu0
      %v2781 = vpop.f32.mrb[0].mxu0
      %v2782 = vadd.f32 %v2621, %v2781
      %v2783 = vpop.f32.mrb[0].mxu0
      %2784 = vmatprep.mubr.bf16.mxu0 0
      %2785 = vmatmul.mubr.bf16.gmra.mrb[0].mxu0 %v1403
      %v2786 = vpop.f32.mrb[0].mxu0
      %v2787 = vadd.f32 %v2626, %v2786
      %v2788 = vpop.f32.mrb[0].mxu0
      %v2789 = vpop.f32.mrb[0].mxu0
      %v2790 = vadd.f32 %v2629, %v2789
      %v2791 = vpop.f32.mrb[0].mxu0
      %2792 = vmatprep.mubr.bf16.mxu0 0
      %2793 = vmatmul.mubr.bf16.gmra.mrb[0].mxu0 %v1412
      %v2794 = vpop.f32.mrb[0].mxu0
      %v2795 = vadd.f32 %v2634, %v2794
      %v2796 = vpop.f32.mrb[0].mxu0
      %v2797 = vpop.f32.mrb[0].mxu0
      %v2798 = vadd.f32 %v2637, %v2797
      %v2799 = vpop.f32.mrb[0].mxu0
      %2800 = vmatprep.mubr.bf16.mxu0 0
      %2801 = vmatmul.mubr.bf16.gmra.mrb[0].mxu0 %v1421
      %v2802 = vpop.f32.mrb[0].mxu0
      %v2803 = vadd.f32 %v2642, %v2802
      %v2804 = vpop.f32.mrb[0].mxu0
      %v2805 = vpop.f32.mrb[0].mxu0
      %v2806 = vadd.f32 %v2645, %v2805
      %v2807 = vpop.f32.mrb[0].mxu0
      %2808 = vmatprep.mubr.bf16.mxu0 0
      %2809 = vmatmul.mubr.bf16.gmra.mrb[0].mxu0 %v1430
      %v2810 = vpop.f32.mrb[0].mxu0
      %v2811 = vadd.f32 %v2650, %v2810
      %v2812 = vpop.f32.mrb[0].mxu0
      %v2813 = vpop.f32.mrb[0].mxu0
      %v2814 = vadd.f32 %v2653, %v2813
      %v2815 = vpop.f32.mrb[0].mxu0
      %2816 = vmatprep.mubr.bf16.mxu0 0
      %2817 = vmatmul.mubr.bf16.gmra.mrb[0].mxu0 %v1439
      %v2818 = vpop.f32.mrb[0].mxu0
      %v2819 = vadd.f32 %v2658, %v2818
      %v2820 = vpop.f32.mrb[0].mxu0
      %v2821 = vpop.f32.mrb[0].mxu0
      %v2822 = vadd.f32 %v2661, %v2821
      %v2823 = vpop.f32.mrb[0].mxu0
      %2824 = vmatprep.mubr.bf16.mxu0 0
      %2825 = vmatmul.mubr.bf16.gmra.mrb[0].mxu0 %v1448
      %v2826 = vpop.f32.mrb[0].mxu0
      %v2827 = vadd.f32 %v2666, %v2826
      %v2828 = vpop.f32.mrb[0].mxu0
      %v2829 = vpop.f32.mrb[0].mxu0
      %v2830 = vadd.f32 %v2669, %v2829
      %v2831 = vpop.f32.mrb[0].mxu0
      %2832 = vmatprep.mubr.bf16.mxu0 0
      %2833 = vmatmul.mubr.bf16.gmra.mrb[0].mxu0 %v1457
      %v2834 = vpop.f32.mrb[0].mxu0
      %v2835 = vadd.f32 %v2674, %v2834
      %v2836 = vpop.f32.mrb[0].mxu0
      %v2837 = vpop.f32.mrb[0].mxu0
      %v2838 = vadd.f32 %v2677, %v2837
      %v2839 = vpop.f32.mrb[0].mxu0
      %2840 = vmatprep.mubr.bf16.mxu0 0
      %2841 = vmatmul.mubr.bf16.gmra.mrb[0].mxu0 %v1466
      %v2842 = vpop.f32.mrb[0].mxu0
      %v2843 = vadd.f32 %v2682, %v2842
      %v2844 = vpop.f32.mrb[0].mxu0
      %v2845 = vpop.f32.mrb[0].mxu0
      %v2846 = vadd.f32 %v2685, %v2845
      %v2847 = vpop.f32.mrb[0].mxu0
      %2848 = vmatprep.mubr.bf16.mxu0 0
      %2849 = vmatmul.mubr.bf16.gmra.mrb[0].mxu0 %v1475
      %v2850 = vpop.f32.mrb[0].mxu0
      %v2851 = vadd.f32 %v2690, %v2850
      %v2852 = vpop.f32.mrb[0].mxu0
      %v2853 = vpop.f32.mrb[0].mxu0
      %v2854 = vadd.f32 %v2693, %v2853
      %v2855 = vpop.f32.mrb[0].mxu0
      %2856 = vdwg.mxu0
      %2857 = vst [vmem:[%s224] sm:$0xff] %v2731
      %2858 = vst [vmem:[%s224 + $0x8] sm:$0xff] %v2734
      %2859 = vst [vmem:[%s224 + $0x10] sm:$0xff] %v2739
      %2860 = vst [vmem:[%s224 + $0x18] sm:$0xff] %v2742
      %2861 = vst [vmem:[%s224 + $0x20] sm:$0xff] %v2747
      %2862 = vst [vmem:[%s224 + $0x28] sm:$0xff] %v2750
      %2863 = vst [vmem:[%s224 + $0x30] sm:$0xff] %v2755
      %2864 = vst [vmem:[%s224 + $0x38] sm:$0xff] %v2758
      %2865 = vst [vmem:[%s224 + $0x40] sm:$0xff] %v2763
      %2866 = vst [vmem:[%s224 + $0x48] sm:$0xff] %v2766
      %2867 = vst [vmem:[%s224 + $0x50] sm:$0xff] %v2771
      %2868 = vst [vmem:[%s224 + $0x58] sm:$0xff] %v2774
      %2869 = vst [vmem:[%s224 + $0x60] sm:$0xff] %v2779
      %2870 = vst [vmem:[%s224 + $0x68] sm:$0xff] %v2782
      %2871 = vst [vmem:[%s224 + $0x70] sm:$0xff] %v2787
      %2872 = vst [vmem:[%s224 + $0x78] sm:$0xff] %v2790
      %2873 = vst [vmem:[%s224 + $0x80] sm:$0xff] %v2795
      %2874 = vst [vmem:[%s224 + $0x88] sm:$0xff] %v2798
      %2875 = vst [vmem:[%s224 + $0x90] sm:$0xff] %v2803
      %2876 = vst [vmem:[%s224 + $0x98] sm:$0xff] %v2806
      %2877 = vst [vmem:[%s224 + $0xa0] sm:$0xff] %v2811
      %2878 = vst [vmem:[%s224 + $0xa8] sm:$0xff] %v2814
      %2879 = vst [vmem:[%s224 + $0xb0] sm:$0xff] %v2819
      %2880 = vst [vmem:[%s224 + $0xb8] sm:$0xff] %v2822
      %2881 = vst [vmem:[%s224 + $0xc0] sm:$0xff] %v2827
      %2882 = vst [vmem:[%s224 + $0xc8] sm:$0xff] %v2830
      %2883 = vst [vmem:[%s224 + $0xd0] sm:$0xff] %v2835
      %2884 = vst [vmem:[%s224 + $0xd8] sm:$0xff] %v2838
      %2885 = vst [vmem:[%s224 + $0xe0] sm:$0xff] %v2843
      %2886 = vst [vmem:[%s224 + $0xe8] sm:$0xff] %v2846
      %2887 = vst [vmem:[%s224 + $0xf0] sm:$0xff] %v2851
      %2888 = vst [vmem:[%s224 + $0xf8] sm:$0xff] %v2854
      %s2889 = smul.u32 32, %s15
      %p2890 = scmp.lt.s32.totalorder %s2889, 63
      %s2891 = scalar_select %p2890, %s2889, 63
      %s2892 = smul.addr %s2891, 8
      %s2893 = scalar_lea.vmem %s4, %s2892
      // Predicated region
      $region37: #{_lambda_.14} parent=35 // pred_check
        %p2894 = pneg %p127
      $region38: #{_lambda_.14} parent=35 // pred_check_branch
        %2896 = sbr.rel (%p2894) target = $region40
      $region39: #{_lambda_.14} parent=35 // pred_region
        %s2897 = smul.u32 32, %s15
      $region40: #{_lambda_.14} parent=35 // pred_fallthru
        _
    $region36: #{_lambda_.14} parent=5 // pred_fallthru
      _
    %p2898 = scmp.le.s32.totalorder 2, %s10
    // Predicated region
    $region41: #{_lambda_.14} parent=5 // pred_check
      %p2899 = pneg %p2898
    $region42: #{_lambda_.14} parent=5 // pred_check_branch
      %2901 = sbr.rel (%p2899) target = $region44
    $region43: #{_lambda_.14} parent=5 // pred_region
      %s2902 = ssub.s32 %s10, 2
      // Predicated region
      $region45: #{_lambda_.14} parent=43 // pred_check
        %p2903 = pneg %p133
      $region46: #{_lambda_.14} parent=43 // pred_check_branch
        %2905 = sbr.rel (%p2903) target = $region48
      $region47: #{_lambda_.14} parent=43 // pred_region
        %s2906 = smul.u32 32, %s16
        %p2907 = scmp.lt.s32.totalorder %s2906, 63
        %s2908 = scalar_select %p2907, %s2906, 63
        %s2909 = smul.addr %s2908, 8
        %s2910 = scalar_lea.vmem %s4, %s2909
      $region48: #{_lambda_.14} parent=43 // pred_fallthru
        _
    $region44: #{_lambda_.14} parent=5 // pred_fallthru
      _
  $region6: #{_lambda_.14} parent=0 // loop_footer
    %s14 = sadd.s32 1, %s10
  $region7: #{_lambda_.14} parent=0 // loop_footer_branch
    %9 = sbr.rel target = $region3
  $region8: #{_lambda_.14} parent=0 // loop_exit
    _

// kernel: _lambda_.16
$region0: #{_lambda_.16}
  #allocation0 [shape = 'u32[]', space=smem, size = 0x4, offset = 0x4, fixed_abs, tag = 'smem constant byte address 0x4 - core index']
  #allocation1 [shape = 'u32[144,128]{1,0:T(1,128)}', space=vmem, size = 0x12000, scoped, tag = 'internal scratch']
  %s0 = inlined_call_operand.vmem [shape: bf16[128,1152], index: 0, kind: input, shape index: {}]
  %s1 = inlined_call_operand.vmem [shape: bf16[1152,128], index: 1, kind: input, shape index: {}]
  %s2 = inlined_call_operand.vmem [shape: f32[1,128], index: 2, kind: input, shape index: {}]
  %s3 = inlined_call_operand.vmem [shape: f32[1,128], index: 3, kind: input, shape index: {}]
  %s4 = inlined_call_operand.vmem [shape: f32[128,128], index: 4, kind: output, shape index: {}]
  %s5 = sld [smem:[#allocation0]]
  $region26: #{_lambda_.16} parent=0
    _
  %s7 = ssub.s32 1, %s5
  %s8 = scalar_select 0, %s7, %s5
  // Predicated region
  $region2: #{_lambda_.16} parent=0 // pred_check
    _
  $region3: #{_lambda_.16} parent=0 // pred_check_branch
    %10 = sbr.rel (0) target = $region5
  $region4: #{_lambda_.16} parent=0 // pred_region
    _
  $region5: #{_lambda_.16} parent=0 // pred_fallthru
    _
  // Predicated region
  $region6: #{_lambda_.16} parent=0 // pred_check
    _
  $region7: #{_lambda_.16} parent=0 // pred_check_branch
    %12 = sbr.rel (0) target = $region9
  $region8: #{_lambda_.16} parent=0 // pred_region
    _
  $region9: #{_lambda_.16} parent=0 // pred_fallthru
    _
  // Predicated region
  $region10: #{_lambda_.16} parent=0 // pred_check
    _
  $region11: #{_lambda_.16} parent=0 // pred_check_branch
    %14 = sbr.rel (0) target = $region13
  $region12: #{_lambda_.16} parent=0 // pred_region
    _
  $region13: #{_lambda_.16} parent=0 // pred_fallthru
    _
  // Predicated region
  $region14: #{_lambda_.16} parent=0 // pred_check
    _
  $region15: #{_lambda_.16} parent=0 // pred_check_branch
    %16 = sbr.rel (0) target = $region17
  $region16: #{_lambda_.16} parent=0 // pred_region
    _
  $region17: #{_lambda_.16} parent=0 // pred_fallthru
    _
  %v18 = vld [vmem:[%s0] sm:$0xff]
  %v19 = vld [vmem:[%s0 + $0x8] sm:$0xff]
  %v20 = vld [vmem:[%s0 + $0x10] sm:$0xff]
  %v21 = vld [vmem:[%s0 + $0x18] sm:$0xff]
  %v22 = vld [vmem:[%s0 + $0x20] sm:$0xf]
  %v23 = vld [vmem:[%s0 + $0x24] sm:$0xff]
  %v24 = vld [vmem:[%s0 + $0x2c] sm:$0xff]
  %v25 = vld [vmem:[%s0 + $0x34] sm:$0xff]
  %v26 = vld [vmem:[%s0 + $0x3c] sm:$0xff]
  %v27 = vld [vmem:[%s0 + $0x44] sm:$0xf]
  %v28 = vld [vmem:[%s0 + $0x48] sm:$0xff]
  %v29 = vld [vmem:[%s0 + $0x50] sm:$0xff]
  %v30 = vld [vmem:[%s0 + $0x58] sm:$0xff]
  %v31 = vld [vmem:[%s0 + $0x60] sm:$0xff]
  %v32 = vld [vmem:[%s0 + $0x68] sm:$0xf]
  %v33 = vld [vmem:[%s0 + $0x6c] sm:$0xff]
  %v34 = vld [vmem:[%s0 + $0x74] sm:$0xff]
  %v35 = vld [vmem:[%s0 + $0x7c] sm:$0xff]
  %v36 = vld [vmem:[%s0 + $0x84] sm:$0xff]
  %v37 = vld [vmem:[%s0 + $0x8c] sm:$0xf]
  %v38 = vld [vmem:[%s0 + $0x90] sm:$0xff]
  %v39 = vld [vmem:[%s0 + $0x98] sm:$0xff]
  %v40 = vld [vmem:[%s0 + $0xa0] sm:$0xff]
  %v41 = vld [vmem:[%s0 + $0xa8] sm:$0xff]
  %v42 = vld [vmem:[%s0 + $0xb0] sm:$0xf]
  %v43 = vld [vmem:[%s0 + $0xb4] sm:$0xff]
  %v44 = vld [vmem:[%s0 + $0xbc] sm:$0xff]
  %v45 = vld [vmem:[%s0 + $0xc4] sm:$0xff]
  %v46 = vld [vmem:[%s0 + $0xcc] sm:$0xff]
  %v47 = vld [vmem:[%s0 + $0xd4] sm:$0xf]
  %v48 = vld [vmem:[%s0 + $0xd8] sm:$0xff]
  %v49 = vld [vmem:[%s0 + $0xe0] sm:$0xff]
  %v50 = vld [vmem:[%s0 + $0xe8] sm:$0xff]
  %v51 = vld [vmem:[%s0 + $0xf0] sm:$0xff]
  %v52 = vld [vmem:[%s0 + $0xf8] sm:$0xf]
  %v53 = vld [vmem:[%s0 + $0xfc] sm:$0xff]
  %v54 = vld [vmem:[%s0 + $0x104] sm:$0xff]
  %v55 = vld [vmem:[%s0 + $0x10c] sm:$0xff]
  %v56 = vld [vmem:[%s0 + $0x114] sm:$0xff]
  %v57 = vld [vmem:[%s0 + $0x11c] sm:$0xf]
  %v58 = vld [vmem:[%s0 + $0x120] sm:$0xff]
  %v59 = vld [vmem:[%s0 + $0x128] sm:$0xff]
  %v60 = vld [vmem:[%s0 + $0x130] sm:$0xff]
  %v61 = vld [vmem:[%s0 + $0x138] sm:$0xff]
  %v62 = vld [vmem:[%s0 + $0x140] sm:$0xf]
  %v63 = vld [vmem:[%s0 + $0x144] sm:$0xff]
  %v64 = vld [vmem:[%s0 + $0x14c] sm:$0xff]
  %v65 = vld [vmem:[%s0 + $0x154] sm:$0xff]
  %v66 = vld [vmem:[%s0 + $0x15c] sm:$0xff]
  %v67 = vld [vmem:[%s0 + $0x164] sm:$0xf]
  %v68 = vld [vmem:[%s0 + $0x168] sm:$0xff]
  %v69 = vld [vmem:[%s0 + $0x170] sm:$0xff]
  %v70 = vld [vmem:[%s0 + $0x178] sm:$0xff]
  %v71 = vld [vmem:[%s0 + $0x180] sm:$0xff]
  %v72 = vld [vmem:[%s0 + $0x188] sm:$0xf]
  %v73 = vld [vmem:[%s0 + $0x18c] sm:$0xff]
  %v74 = vld [vmem:[%s0 + $0x194] sm:$0xff]
  %v75 = vld [vmem:[%s0 + $0x19c] sm:$0xff]
  %v76 = vld [vmem:[%s0 + $0x1a4] sm:$0xff]
  %v77 = vld [vmem:[%s0 + $0x1ac] sm:$0xf]
  %v78 = vld [vmem:[%s0 + $0x1b0] sm:$0xff]
  %v79 = vld [vmem:[%s0 + $0x1b8] sm:$0xff]
  %v80 = vld [vmem:[%s0 + $0x1c0] sm:$0xff]
  %v81 = vld [vmem:[%s0 + $0x1c8] sm:$0xff]
  %v82 = vld [vmem:[%s0 + $0x1d0] sm:$0xf]
  %v83 = vld [vmem:[%s0 + $0x1d4] sm:$0xff]
  %v84 = vld [vmem:[%s0 + $0x1dc] sm:$0xff]
  %v85 = vld [vmem:[%s0 + $0x1e4] sm:$0xff]
  %v86 = vld [vmem:[%s0 + $0x1ec] sm:$0xff]
  %v87 = vld [vmem:[%s0 + $0x1f4] sm:$0xf]
  %v88 = vld [vmem:[%s0 + $0x1f8] sm:$0xff]
  %v89 = vld [vmem:[%s0 + $0x200] sm:$0xff]
  %v90 = vld [vmem:[%s0 + $0x208] sm:$0xff]
  %v91 = vld [vmem:[%s0 + $0x210] sm:$0xff]
  %v92 = vld [vmem:[%s0 + $0x218] sm:$0xf]
  %v93 = vld [vmem:[%s0 + $0x21c] sm:$0xff]
  %v94 = vld [vmem:[%s0 + $0x224] sm:$0xff]
  %v95 = vld [vmem:[%s0 + $0x22c] sm:$0xff]
  %v96 = vld [vmem:[%s0 + $0x234] sm:$0xff]
  %v97 = vld [vmem:[%s0 + $0x23c] sm:$0xf]
  %v98 = vld [vmem:[%s1] sm:$0xf]
  %v99 = vld [vmem:[%s1 + $0x4] sm:$0xf]
  %v100 = vld [vmem:[%s1 + $0x8] sm:$0xf]
  %v101 = vld [vmem:[%s1 + $0xc] sm:$0xf]
  %v102 = vld [vmem:[%s1 + $0x10] sm:$0xf]
  %v103 = vld [vmem:[%s1 + $0x14] sm:$0xf]
  %v104 = vld [vmem:[%s1 + $0x18] sm:$0xf]
  %v105 = vld [vmem:[%s1 + $0x1c] sm:$0xf]
  %v106 = vld [vmem:[%s1 + $0x20] sm:$0xf]
  %v107 = vld [vmem:[%s1 + $0x24] sm:$0xf]
  %v108 = vld [vmem:[%s1 + $0x28] sm:$0xf]
  %v109 = vld [vmem:[%s1 + $0x2c] sm:$0xf]
  %v110 = vld [vmem:[%s1 + $0x30] sm:$0xf]
  %v111 = vld [vmem:[%s1 + $0x34] sm:$0xf]
  %v112 = vld [vmem:[%s1 + $0x38] sm:$0xf]
  %v113 = vld [vmem:[%s1 + $0x3c] sm:$0xf]
  %v114 = vld [vmem:[%s1 + $0x40] sm:$0xf]
  %v115 = vld [vmem:[%s1 + $0x44] sm:$0xf]
  %v116 = vld [vmem:[%s1 + $0x48] sm:$0xf]
  %v117 = vld [vmem:[%s1 + $0x4c] sm:$0xf]
  %v118 = vld [vmem:[%s1 + $0x50] sm:$0xf]
  %v119 = vld [vmem:[%s1 + $0x54] sm:$0xf]
  %v120 = vld [vmem:[%s1 + $0x58] sm:$0xf]
  %v121 = vld [vmem:[%s1 + $0x5c] sm:$0xf]
  %v122 = vld [vmem:[%s1 + $0x60] sm:$0xf]
  %v123 = vld [vmem:[%s1 + $0x64] sm:$0xf]
  %v124 = vld [vmem:[%s1 + $0x68] sm:$0xf]
  %v125 = vld [vmem:[%s1 + $0x6c] sm:$0xf]
  %v126 = vld [vmem:[%s1 + $0x70] sm:$0xf]
  %v127 = vld [vmem:[%s1 + $0x74] sm:$0xf]
  %v128 = vld [vmem:[%s1 + $0x78] sm:$0xf]
  %v129 = vld [vmem:[%s1 + $0x7c] sm:$0xf]
  %v130 = vld [vmem:[%s1 + $0x80] sm:$0xf]
  %v131 = vld [vmem:[%s1 + $0x84] sm:$0xf]
  %v132 = vld [vmem:[%s1 + $0x88] sm:$0xf]
  %v133 = vld [vmem:[%s1 + $0x8c] sm:$0xf]
  %v134 = vld [vmem:[%s1 + $0x90] sm:$0xf]
  %v135 = vld [vmem:[%s1 + $0x94] sm:$0xf]
  %v136 = vld [vmem:[%s1 + $0x98] sm:$0xf]
  %v137 = vld [vmem:[%s1 + $0x9c] sm:$0xf]
  %v138 = vld [vmem:[%s1 + $0xa0] sm:$0xf]
  %v139 = vld [vmem:[%s1 + $0xa4] sm:$0xf]
  %v140 = vld [vmem:[%s1 + $0xa8] sm:$0xf]
  %v141 = vld [vmem:[%s1 + $0xac] sm:$0xf]
  %v142 = vld [vmem:[%s1 + $0xb0] sm:$0xf]
  %v143 = vld [vmem:[%s1 + $0xb4] sm:$0xf]
  %v144 = vld [vmem:[%s1 + $0xb8] sm:$0xf]
  %v145 = vld [vmem:[%s1 + $0xbc] sm:$0xf]
  %v146 = vld [vmem:[%s1 + $0xc0] sm:$0xf]
  %v147 = vld [vmem:[%s1 + $0xc4] sm:$0xf]
  %v148 = vld [vmem:[%s1 + $0xc8] sm:$0xf]
  %v149 = vld [vmem:[%s1 + $0xcc] sm:$0xf]
  %v150 = vld [vmem:[%s1 + $0xd0] sm:$0xf]
  %v151 = vld [vmem:[%s1 + $0xd4] sm:$0xf]
  %v152 = vld [vmem:[%s1 + $0xd8] sm:$0xf]
  %v153 = vld [vmem:[%s1 + $0xdc] sm:$0xf]
  %v154 = vld [vmem:[%s1 + $0xe0] sm:$0xf]
  %v155 = vld [vmem:[%s1 + $0xe4] sm:$0xf]
  %v156 = vld [vmem:[%s1 + $0xe8] sm:$0xf]
  %v157 = vld [vmem:[%s1 + $0xec] sm:$0xf]
  %v158 = vld [vmem:[%s1 + $0xf0] sm:$0xf]
  %v159 = vld [vmem:[%s1 + $0xf4] sm:$0xf]
  %v160 = vld [vmem:[%s1 + $0xf8] sm:$0xf]
  %v161 = vld [vmem:[%s1 + $0xfc] sm:$0xf]
  %v162 = vld [vmem:[%s1 + $0x100] sm:$0xf]
  %v163 = vld [vmem:[%s1 + $0x104] sm:$0xf]
  %v164 = vld [vmem:[%s1 + $0x108] sm:$0xf]
  %v165 = vld [vmem:[%s1 + $0x10c] sm:$0xf]
  %v166 = vld [vmem:[%s1 + $0x110] sm:$0xf]
  %v167 = vld [vmem:[%s1 + $0x114] sm:$0xf]
  %v168 = vld [vmem:[%s1 + $0x118] sm:$0xf]
  %v169 = vld [vmem:[%s1 + $0x11c] sm:$0xf]
  %v170 = vld [vmem:[%s1 + $0x120] sm:$0xf]
  %v171 = vld [vmem:[%s1 + $0x124] sm:$0xf]
  %v172 = vld [vmem:[%s1 + $0x128] sm:$0xf]
  %v173 = vld [vmem:[%s1 + $0x12c] sm:$0xf]
  %v174 = vld [vmem:[%s1 + $0x130] sm:$0xf]
  %v175 = vld [vmem:[%s1 + $0x134] sm:$0xf]
  %v176 = vld [vmem:[%s1 + $0x138] sm:$0xf]
  %v177 = vld [vmem:[%s1 + $0x13c] sm:$0xf]
  %v178 = vld [vmem:[%s1 + $0x140] sm:$0xf]
  %v179 = vld [vmem:[%s1 + $0x144] sm:$0xf]
  %v180 = vld [vmem:[%s1 + $0x148] sm:$0xf]
  %v181 = vld [vmem:[%s1 + $0x14c] sm:$0xf]
  %v182 = vld [vmem:[%s1 + $0x150] sm:$0xf]
  %v183 = vld [vmem:[%s1 + $0x154] sm:$0xf]
  %v184 = vld [vmem:[%s1 + $0x158] sm:$0xf]
  %v185 = vld [vmem:[%s1 + $0x15c] sm:$0xf]
  %v186 = vld [vmem:[%s1 + $0x160] sm:$0xf]
  %v187 = vld [vmem:[%s1 + $0x164] sm:$0xf]
  %v188 = vld [vmem:[%s1 + $0x168] sm:$0xf]
  %v189 = vld [vmem:[%s1 + $0x16c] sm:$0xf]
  %v190 = vld [vmem:[%s1 + $0x170] sm:$0xf]
  %v191 = vld [vmem:[%s1 + $0x174] sm:$0xf]
  %v192 = vld [vmem:[%s1 + $0x178] sm:$0xf]
  %v193 = vld [vmem:[%s1 + $0x17c] sm:$0xf]
  %v194 = vld [vmem:[%s1 + $0x180] sm:$0xf]
  %v195 = vld [vmem:[%s1 + $0x184] sm:$0xf]
  %v196 = vld [vmem:[%s1 + $0x188] sm:$0xf]
  %v197 = vld [vmem:[%s1 + $0x18c] sm:$0xf]
  %v198 = vld [vmem:[%s1 + $0x190] sm:$0xf]
  %v199 = vld [vmem:[%s1 + $0x194] sm:$0xf]
  %v200 = vld [vmem:[%s1 + $0x198] sm:$0xf]
  %v201 = vld [vmem:[%s1 + $0x19c] sm:$0xf]
  %v202 = vld [vmem:[%s1 + $0x1a0] sm:$0xf]
  %v203 = vld [vmem:[%s1 + $0x1a4] sm:$0xf]
  %v204 = vld [vmem:[%s1 + $0x1a8] sm:$0xf]
  %v205 = vld [vmem:[%s1 + $0x1ac] sm:$0xf]
  %v206 = vld [vmem:[%s1 + $0x1b0] sm:$0xf]
  %v207 = vld [vmem:[%s1 + $0x1b4] sm:$0xf]
  %v208 = vld [vmem:[%s1 + $0x1b8] sm:$0xf]
  %v209 = vld [vmem:[%s1 + $0x1bc] sm:$0xf]
  %v210 = vld [vmem:[%s1 + $0x1c0] sm:$0xf]
  %v211 = vld [vmem:[%s1 + $0x1c4] sm:$0xf]
  %v212 = vld [vmem:[%s1 + $0x1c8] sm:$0xf]
  %v213 = vld [vmem:[%s1 + $0x1cc] sm:$0xf]
  %v214 = vld [vmem:[%s1 + $0x1d0] sm:$0xf]
  %v215 = vld [vmem:[%s1 + $0x1d4] sm:$0xf]
  %v216 = vld [vmem:[%s1 + $0x1d8] sm:$0xf]
  %v217 = vld [vmem:[%s1 + $0x1dc] sm:$0xf]
  %v218 = vld [vmem:[%s1 + $0x1e0] sm:$0xf]
  %v219 = vld [vmem:[%s1 + $0x1e4] sm:$0xf]
  %v220 = vld [vmem:[%s1 + $0x1e8] sm:$0xf]
  %v221 = vld [vmem:[%s1 + $0x1ec] sm:$0xf]
  %v222 = vld [vmem:[%s1 + $0x1f0] sm:$0xf]
  %v223 = vld [vmem:[%s1 + $0x1f4] sm:$0xf]
  %v224 = vld [vmem:[%s1 + $0x1f8] sm:$0xf]
  %v225 = vld [vmem:[%s1 + $0x1fc] sm:$0xf]
  %v226 = vld [vmem:[%s1 + $0x200] sm:$0xf]
  %v227 = vld [vmem:[%s1 + $0x204] sm:$0xf]
  %v228 = vld [vmem:[%s1 + $0x208] sm:$0xf]
  %v229 = vld [vmem:[%s1 + $0x20c] sm:$0xf]
  %v230 = vld [vmem:[%s1 + $0x210] sm:$0xf]
  %v231 = vld [vmem:[%s1 + $0x214] sm:$0xf]
  %v232 = vld [vmem:[%s1 + $0x218] sm:$0xf]
  %v233 = vld [vmem:[%s1 + $0x21c] sm:$0xf]
  %v234 = vld [vmem:[%s1 + $0x220] sm:$0xf]
  %v235 = vld [vmem:[%s1 + $0x224] sm:$0xf]
  %v236 = vld [vmem:[%s1 + $0x228] sm:$0xf]
  %v237 = vld [vmem:[%s1 + $0x22c] sm:$0xf]
  %v238 = vld [vmem:[%s1 + $0x230] sm:$0xf]
  %v239 = vld [vmem:[%s1 + $0x234] sm:$0xf]
  %v240 = vld [vmem:[%s1 + $0x238] sm:$0xf]
  %v241 = vld [vmem:[%s1 + $0x23c] sm:$0xf]
  %v322 = vunpack.c.l.b16 %v18
  %v323 = vunpack.c.h.b16 %v18
  %v324 = vunpack.c.l.b16 %v19
  %v325 = vunpack.c.h.b16 %v19
  %v326 = vunpack.c.l.b16 %v20
  %v327 = vunpack.c.h.b16 %v20
  %v328 = vunpack.c.l.b16 %v21
  %v329 = vunpack.c.h.b16 %v21
  %v330 = vunpack.c.l.b16 %v22
  %v331 = vunpack.c.l.b16 %v23
  %v332 = vunpack.c.h.b16 %v23
  %v333 = vunpack.c.l.b16 %v24
  %v334 = vunpack.c.h.b16 %v24
  %v335 = vunpack.c.l.b16 %v25
  %v336 = vunpack.c.h.b16 %v25
  %v337 = vunpack.c.l.b16 %v26
  %v338 = vunpack.c.h.b16 %v26
  %v339 = vunpack.c.l.b16 %v27
  %v340 = vunpack.c.l.b16 %v28
  %v341 = vunpack.c.h.b16 %v28
  %v342 = vunpack.c.l.b16 %v29
  %v343 = vunpack.c.h.b16 %v29
  %v344 = vunpack.c.l.b16 %v30
  %v345 = vunpack.c.h.b16 %v30
  %v346 = vunpack.c.l.b16 %v31
  %v347 = vunpack.c.h.b16 %v31
  %v348 = vunpack.c.l.b16 %v32
  %v349 = vunpack.c.l.b16 %v33
  %v350 = vunpack.c.h.b16 %v33
  %v351 = vunpack.c.l.b16 %v34
  %v352 = vunpack.c.h.b16 %v34
  %v353 = vunpack.c.l.b16 %v35
  %v354 = vunpack.c.h.b16 %v35
  %v355 = vunpack.c.l.b16 %v36
  %v356 = vunpack.c.h.b16 %v36
  %v357 = vunpack.c.l.b16 %v37
  %v358 = vunpack.c.l.b16 %v38
  %v359 = vunpack.c.h.b16 %v38
  %v360 = vunpack.c.l.b16 %v39
  %v361 = vunpack.c.h.b16 %v39
  %v362 = vunpack.c.l.b16 %v40
  %v363 = vunpack.c.h.b16 %v40
  %v364 = vunpack.c.l.b16 %v41
  %v365 = vunpack.c.h.b16 %v41
  %v366 = vunpack.c.l.b16 %v42
  %v367 = vunpack.c.l.b16 %v43
  %v368 = vunpack.c.h.b16 %v43
  %v369 = vunpack.c.l.b16 %v44
  %v370 = vunpack.c.h.b16 %v44
  %v371 = vunpack.c.l.b16 %v45
  %v372 = vunpack.c.h.b16 %v45
  %v373 = vunpack.c.l.b16 %v46
  %v374 = vunpack.c.h.b16 %v46
  %v375 = vunpack.c.l.b16 %v47
  %v376 = vunpack.c.l.b16 %v48
  %v377 = vunpack.c.h.b16 %v48
  %v378 = vunpack.c.l.b16 %v49
  %v379 = vunpack.c.h.b16 %v49
  %v380 = vunpack.c.l.b16 %v50
  %v381 = vunpack.c.h.b16 %v50
  %v382 = vunpack.c.l.b16 %v51
  %v383 = vunpack.c.h.b16 %v51
  %v384 = vunpack.c.l.b16 %v52
  %v385 = vunpack.c.l.b16 %v53
  %v386 = vunpack.c.h.b16 %v53
  %v387 = vunpack.c.l.b16 %v54
  %v388 = vunpack.c.h.b16 %v54
  %v389 = vunpack.c.l.b16 %v55
  %v390 = vunpack.c.h.b16 %v55
  %v391 = vunpack.c.l.b16 %v56
  %v392 = vunpack.c.h.b16 %v56
  %v393 = vunpack.c.l.b16 %v57
  %v394 = vunpack.c.l.b16 %v58
  %v395 = vunpack.c.h.b16 %v58
  %v396 = vunpack.c.l.b16 %v59
  %v397 = vunpack.c.h.b16 %v59
  %v398 = vunpack.c.l.b16 %v60
  %v399 = vunpack.c.h.b16 %v60
  %v400 = vunpack.c.l.b16 %v61
  %v401 = vunpack.c.h.b16 %v61
  %v402 = vunpack.c.l.b16 %v62
  %v403 = vunpack.c.l.b16 %v63
  %v404 = vunpack.c.h.b16 %v63
  %v405 = vunpack.c.l.b16 %v64
  %v406 = vunpack.c.h.b16 %v64
  %v407 = vunpack.c.l.b16 %v65
  %v408 = vunpack.c.h.b16 %v65
  %v409 = vunpack.c.l.b16 %v66
  %v410 = vunpack.c.h.b16 %v66
  %v411 = vunpack.c.l.b16 %v67
  %v412 = vunpack.c.l.b16 %v68
  %v413 = vunpack.c.h.b16 %v68
  %v414 = vunpack.c.l.b16 %v69
  %v415 = vunpack.c.h.b16 %v69
  %v416 = vunpack.c.l.b16 %v70
  %v417 = vunpack.c.h.b16 %v70
  %v418 = vunpack.c.l.b16 %v71
  %v419 = vunpack.c.h.b16 %v71
  %v420 = vunpack.c.l.b16 %v72
  %v421 = vunpack.c.l.b16 %v73
  %v422 = vunpack.c.h.b16 %v73
  %v423 = vunpack.c.l.b16 %v74
  %v424 = vunpack.c.h.b16 %v74
  %v425 = vunpack.c.l.b16 %v75
  %v426 = vunpack.c.h.b16 %v75
  %v427 = vunpack.c.l.b16 %v76
  %v428 = vunpack.c.h.b16 %v76
  %v429 = vunpack.c.l.b16 %v77
  %v430 = vunpack.c.l.b16 %v78
  %v431 = vunpack.c.h.b16 %v78
  %v432 = vunpack.c.l.b16 %v79
  %v433 = vunpack.c.h.b16 %v79
  %v434 = vunpack.c.l.b16 %v80
  %v435 = vunpack.c.h.b16 %v80
  %v436 = vunpack.c.l.b16 %v81
  %v437 = vunpack.c.h.b16 %v81
  %v438 = vunpack.c.l.b16 %v82
  %v439 = vunpack.c.l.b16 %v83
  %v440 = vunpack.c.h.b16 %v83
  %v441 = vunpack.c.l.b16 %v84
  %v442 = vunpack.c.h.b16 %v84
  %v443 = vunpack.c.l.b16 %v85
  %v444 = vunpack.c.h.b16 %v85
  %v445 = vunpack.c.l.b16 %v86
  %v446 = vunpack.c.h.b16 %v86
  %v447 = vunpack.c.l.b16 %v87
  %v448 = vunpack.c.l.b16 %v88
  %v449 = vunpack.c.h.b16 %v88
  %v450 = vunpack.c.l.b16 %v89
  %v451 = vunpack.c.h.b16 %v89
  %v452 = vunpack.c.l.b16 %v90
  %v453 = vunpack.c.h.b16 %v90
  %v454 = vunpack.c.l.b16 %v91
  %v455 = vunpack.c.h.b16 %v91
  %v456 = vunpack.c.l.b16 %v92
  %v457 = vunpack.c.l.b16 %v93
  %v458 = vunpack.c.h.b16 %v93
  %v459 = vunpack.c.l.b16 %v94
  %v460 = vunpack.c.h.b16 %v94
  %v461 = vunpack.c.l.b16 %v95
  %v462 = vunpack.c.h.b16 %v95
  %v463 = vunpack.c.l.b16 %v96
  %v464 = vunpack.c.h.b16 %v96
  %v465 = vunpack.c.l.b16 %v97
  %v466 = vpack.c.b16 %v331, %v322
  %v467 = vpack.c.b16 %v332, %v323
  %v468 = vpack.c.b16 %v333, %v324
  %v469 = vpack.c.b16 %v334, %v325
  %v470 = vpack.c.b16 %v335, %v326
  %v471 = vpack.c.b16 %v336, %v327
  %v472 = vpack.c.b16 %v337, %v328
  %v473 = vpack.c.b16 %v338, %v329
  %v474 = vpack.c.b16 %v339, %v330
  %v475 = vpack.c.b16 %v349, %v340
  %v476 = vpack.c.b16 %v350, %v341
  %v477 = vpack.c.b16 %v351, %v342
  %v478 = vpack.c.b16 %v352, %v343
  %v479 = vpack.c.b16 %v353, %v344
  %v480 = vpack.c.b16 %v354, %v345
  %v481 = vpack.c.b16 %v355, %v346
  %v482 = vpack.c.b16 %v356, %v347
  %v483 = vpack.c.b16 %v357, %v348
  %v484 = vpack.c.b16 %v367, %v358
  %v485 = vpack.c.b16 %v368, %v359
  %v486 = vpack.c.b16 %v369, %v360
  %v487 = vpack.c.b16 %v370, %v361
  %v488 = vpack.c.b16 %v371, %v362
  %v489 = vpack.c.b16 %v372, %v363
  %v490 = vpack.c.b16 %v373, %v364
  %v491 = vpack.c.b16 %v374, %v365
  %v492 = vpack.c.b16 %v375, %v366
  %v493 = vpack.c.b16 %v385, %v376
  %v494 = vpack.c.b16 %v386, %v377
  %v495 = vpack.c.b16 %v387, %v378
  %v496 = vpack.c.b16 %v388, %v379
  %v497 = vpack.c.b16 %v389, %v380
  %v498 = vpack.c.b16 %v390, %v381
  %v499 = vpack.c.b16 %v391, %v382
  %v500 = vpack.c.b16 %v392, %v383
  %v501 = vpack.c.b16 %v393, %v384
  %v502 = vpack.c.b16 %v403, %v394
  %v503 = vpack.c.b16 %v404, %v395
  %v504 = vpack.c.b16 %v405, %v396
  %v505 = vpack.c.b16 %v406, %v397
  %v506 = vpack.c.b16 %v407, %v398
  %v507 = vpack.c.b16 %v408, %v399
  %v508 = vpack.c.b16 %v409, %v400
  %v509 = vpack.c.b16 %v410, %v401
  %v510 = vpack.c.b16 %v411, %v402
  %v511 = vpack.c.b16 %v421, %v412
  %v512 = vpack.c.b16 %v422, %v413
  %v513 = vpack.c.b16 %v423, %v414
  %v514 = vpack.c.b16 %v424, %v415
  %v515 = vpack.c.b16 %v425, %v416
  %v516 = vpack.c.b16 %v426, %v417
  %v517 = vpack.c.b16 %v427, %v418
  %v518 = vpack.c.b16 %v428, %v419
  %v519 = vpack.c.b16 %v429, %v420
  %v520 = vpack.c.b16 %v439, %v430
  %v521 = vpack.c.b16 %v440, %v431
  %v522 = vpack.c.b16 %v441, %v432
  %v523 = vpack.c.b16 %v442, %v433
  %v524 = vpack.c.b16 %v443, %v434
  %v525 = vpack.c.b16 %v444, %v435
  %v526 = vpack.c.b16 %v445, %v436
  %v527 = vpack.c.b16 %v446, %v437
  %v528 = vpack.c.b16 %v447, %v438
  %v529 = vpack.c.b16 %v457, %v448
  %v530 = vpack.c.b16 %v458, %v449
  %v531 = vpack.c.b16 %v459, %v450
  %v532 = vpack.c.b16 %v460, %v451
  %v533 = vpack.c.b16 %v461, %v452
  %v534 = vpack.c.b16 %v462, %v453
  %v535 = vpack.c.b16 %v463, %v454
  %v536 = vpack.c.b16 %v464, %v455
  %v537 = vpack.c.b16 %v465, %v456
  %v754 = vunpack.c.l.b16 %v98
  %v755 = vunpack.c.l.b16 %v99
  %v756 = vunpack.c.l.b16 %v100
  %v757 = vunpack.c.l.b16 %v101
  %v758 = vunpack.c.l.b16 %v102
  %v759 = vunpack.c.l.b16 %v103
  %v760 = vunpack.c.l.b16 %v104
  %v761 = vunpack.c.l.b16 %v105
  %v762 = vunpack.c.l.b16 %v106
  %v763 = vunpack.c.l.b16 %v107
  %v764 = vunpack.c.l.b16 %v108
  %v765 = vunpack.c.l.b16 %v109
  %v766 = vunpack.c.l.b16 %v110
  %v767 = vunpack.c.l.b16 %v111
  %v768 = vunpack.c.l.b16 %v112
  %v769 = vunpack.c.l.b16 %v113
  %v770 = vunpack.c.l.b16 %v114
  %v771 = vunpack.c.l.b16 %v115
  %v772 = vunpack.c.l.b16 %v116
  %v773 = vunpack.c.l.b16 %v117
  %v774 = vunpack.c.l.b16 %v118
  %v775 = vunpack.c.l.b16 %v119
  %v776 = vunpack.c.l.b16 %v120
  %v777 = vunpack.c.l.b16 %v121
  %v778 = vunpack.c.l.b16 %v122
  %v779 = vunpack.c.l.b16 %v123
  %v780 = vunpack.c.l.b16 %v124
  %v781 = vunpack.c.l.b16 %v125
  %v782 = vunpack.c.l.b16 %v126
  %v783 = vunpack.c.l.b16 %v127
  %v784 = vunpack.c.l.b16 %v128
  %v785 = vunpack.c.l.b16 %v129
  %v786 = vunpack.c.l.b16 %v130
  %v787 = vunpack.c.l.b16 %v131
  %v788 = vunpack.c.l.b16 %v132
  %v789 = vunpack.c.l.b16 %v133
  %v790 = vunpack.c.l.b16 %v134
  %v791 = vunpack.c.l.b16 %v135
  %v792 = vunpack.c.l.b16 %v136
  %v793 = vunpack.c.l.b16 %v137
  %v794 = vunpack.c.l.b16 %v138
  %v795 = vunpack.c.l.b16 %v139
  %v796 = vunpack.c.l.b16 %v140
  %v797 = vunpack.c.l.b16 %v141
  %v798 = vunpack.c.l.b16 %v142
  %v799 = vunpack.c.l.b16 %v143
  %v800 = vunpack.c.l.b16 %v144
  %v801 = vunpack.c.l.b16 %v145
  %v802 = vunpack.c.l.b16 %v146
  %v803 = vunpack.c.l.b16 %v147
  %v804 = vunpack.c.l.b16 %v148
  %v805 = vunpack.c.l.b16 %v149
  %v806 = vunpack.c.l.b16 %v150
  %v807 = vunpack.c.l.b16 %v151
  %v808 = vunpack.c.l.b16 %v152
  %v809 = vunpack.c.l.b16 %v153
  %v810 = vunpack.c.l.b16 %v154
  %v811 = vunpack.c.l.b16 %v155
  %v812 = vunpack.c.l.b16 %v156
  %v813 = vunpack.c.l.b16 %v157
  %v814 = vunpack.c.l.b16 %v158
  %v815 = vunpack.c.l.b16 %v159
  %v816 = vunpack.c.l.b16 %v160
  %v817 = vunpack.c.l.b16 %v161
  %v818 = vunpack.c.l.b16 %v162
  %v819 = vunpack.c.l.b16 %v163
  %v820 = vunpack.c.l.b16 %v164
  %v821 = vunpack.c.l.b16 %v165
  %v822 = vunpack.c.l.b16 %v166
  %v823 = vunpack.c.l.b16 %v167
  %v824 = vunpack.c.l.b16 %v168
  %v825 = vunpack.c.l.b16 %v169
  %v826 = vunpack.c.l.b16 %v170
  %v827 = vunpack.c.l.b16 %v171
  %v828 = vunpack.c.l.b16 %v172
  %v829 = vunpack.c.l.b16 %v173
  %v830 = vunpack.c.l.b16 %v174
  %v831 = vunpack.c.l.b16 %v175
  %v832 = vunpack.c.l.b16 %v176
  %v833 = vunpack.c.l.b16 %v177
  %v834 = vunpack.c.l.b16 %v178
  %v835 = vunpack.c.l.b16 %v179
  %v836 = vunpack.c.l.b16 %v180
  %v837 = vunpack.c.l.b16 %v181
  %v838 = vunpack.c.l.b16 %v182
  %v839 = vunpack.c.l.b16 %v183
  %v840 = vunpack.c.l.b16 %v184
  %v841 = vunpack.c.l.b16 %v185
  %v842 = vunpack.c.l.b16 %v186
  %v843 = vunpack.c.l.b16 %v187
  %v844 = vunpack.c.l.b16 %v188
  %v845 = vunpack.c.l.b16 %v189
  %v846 = vunpack.c.l.b16 %v190
  %v847 = vunpack.c.l.b16 %v191
  %v848 = vunpack.c.l.b16 %v192
  %v849 = vunpack.c.l.b16 %v193
  %v850 = vunpack.c.l.b16 %v194
  %v851 = vunpack.c.l.b16 %v195
  %v852 = vunpack.c.l.b16 %v196
  %v853 = vunpack.c.l.b16 %v197
  %v854 = vunpack.c.l.b16 %v198
  %v855 = vunpack.c.l.b16 %v199
  %v856 = vunpack.c.l.b16 %v200
  %v857 = vunpack.c.l.b16 %v201
  %v858 = vunpack.c.l.b16 %v202
  %v859 = vunpack.c.l.b16 %v203
  %v860 = vunpack.c.l.b16 %v204
  %v861 = vunpack.c.l.b16 %v205
  %v862 = vunpack.c.l.b16 %v206
  %v863 = vunpack.c.l.b16 %v207
  %v864 = vunpack.c.l.b16 %v208
  %v865 = vunpack.c.l.b16 %v209
  %v866 = vunpack.c.l.b16 %v210
  %v867 = vunpack.c.l.b16 %v211
  %v868 = vunpack.c.l.b16 %v212
  %v869 = vunpack.c.l.b16 %v213
  %v870 = vunpack.c.l.b16 %v214
  %v871 = vunpack.c.l.b16 %v215
  %v872 = vunpack.c.l.b16 %v216
  %v873 = vunpack.c.l.b16 %v217
  %v874 = vunpack.c.l.b16 %v218
  %v875 = vunpack.c.l.b16 %v219
  %v876 = vunpack.c.l.b16 %v220
  %v877 = vunpack.c.l.b16 %v221
  %v878 = vunpack.c.l.b16 %v222
  %v879 = vunpack.c.l.b16 %v223
  %v880 = vunpack.c.l.b16 %v224
  %v881 = vunpack.c.l.b16 %v225
  %v882 = vunpack.c.l.b16 %v226
  %v883 = vunpack.c.l.b16 %v227
  %v884 = vunpack.c.l.b16 %v228
  %v885 = vunpack.c.l.b16 %v229
  %v886 = vunpack.c.l.b16 %v230
  %v887 = vunpack.c.l.b16 %v231
  %v888 = vunpack.c.l.b16 %v232
  %v889 = vunpack.c.l.b16 %v233
  %v890 = vunpack.c.l.b16 %v234
  %v891 = vunpack.c.l.b16 %v235
  %v892 = vunpack.c.l.b16 %v236
  %v893 = vunpack.c.l.b16 %v237
  %v894 = vunpack.c.l.b16 %v238
  %v895 = vunpack.c.l.b16 %v239
  %v896 = vunpack.c.l.b16 %v240
  %v897 = vunpack.c.l.b16 %v241
  %v898 = vpack.c.b16 %v755, %v754
  %v899 = vpack.c.b16 %v757, %v756
  %v900 = vpack.c.b16 %v759, %v758
  %v901 = vpack.c.b16 %v761, %v760
  %v902 = vpack.c.b16 %v763, %v762
  %v903 = vpack.c.b16 %v765, %v764
  %v904 = vpack.c.b16 %v767, %v766
  %v905 = vpack.c.b16 %v769, %v768
  %v906 = vpack.c.b16 %v771, %v770
  %v907 = vpack.c.b16 %v773, %v772
  %v908 = vpack.c.b16 %v775, %v774
  %v909 = vpack.c.b16 %v777, %v776
  %v910 = vpack.c.b16 %v779, %v778
  %v911 = vpack.c.b16 %v781, %v780
  %v912 = vpack.c.b16 %v783, %v782
  %v913 = vpack.c.b16 %v785, %v784
  %v914 = vpack.c.b16 %v787, %v786
  %v915 = vpack.c.b16 %v789, %v788
  %v916 = vpack.c.b16 %v791, %v790
  %v917 = vpack.c.b16 %v793, %v792
  %v918 = vpack.c.b16 %v795, %v794
  %v919 = vpack.c.b16 %v797, %v796
  %v920 = vpack.c.b16 %v799, %v798
  %v921 = vpack.c.b16 %v801, %v800
  %v922 = vpack.c.b16 %v803, %v802
  %v923 = vpack.c.b16 %v805, %v804
  %v924 = vpack.c.b16 %v807, %v806
  %v925 = vpack.c.b16 %v809, %v808
  %v926 = vpack.c.b16 %v811, %v810
  %v927 = vpack.c.b16 %v813, %v812
  %v928 = vpack.c.b16 %v815, %v814
  %v929 = vpack.c.b16 %v817, %v816
  %v930 = vpack.c.b16 %v819, %v818
  %v931 = vpack.c.b16 %v821, %v820
  %v932 = vpack.c.b16 %v823, %v822
  %v933 = vpack.c.b16 %v825, %v824
  %v934 = vpack.c.b16 %v827, %v826
  %v935 = vpack.c.b16 %v829, %v828
  %v936 = vpack.c.b16 %v831, %v830
  %v937 = vpack.c.b16 %v833, %v832
  %v938 = vpack.c.b16 %v835, %v834
  %v939 = vpack.c.b16 %v837, %v836
  %v940 = vpack.c.b16 %v839, %v838
  %v941 = vpack.c.b16 %v841, %v840
  %v942 = vpack.c.b16 %v843, %v842
  %v943 = vpack.c.b16 %v845, %v844
  %v944 = vpack.c.b16 %v847, %v846
  %v945 = vpack.c.b16 %v849, %v848
  %v946 = vpack.c.b16 %v851, %v850
  %v947 = vpack.c.b16 %v853, %v852
  %v948 = vpack.c.b16 %v855, %v854
  %v949 = vpack.c.b16 %v857, %v856
  %v950 = vpack.c.b16 %v859, %v858
  %v951 = vpack.c.b16 %v861, %v860
  %v952 = vpack.c.b16 %v863, %v862
  %v953 = vpack.c.b16 %v865, %v864
  %v954 = vpack.c.b16 %v867, %v866
  %v955 = vpack.c.b16 %v869, %v868
  %v956 = vpack.c.b16 %v871, %v870
  %v957 = vpack.c.b16 %v873, %v872
  %v958 = vpack.c.b16 %v875, %v874
  %v959 = vpack.c.b16 %v877, %v876
  %v960 = vpack.c.b16 %v879, %v878
  %v961 = vpack.c.b16 %v881, %v880
  %v962 = vpack.c.b16 %v883, %v882
  %v963 = vpack.c.b16 %v885, %v884
  %v964 = vpack.c.b16 %v887, %v886
  %v965 = vpack.c.b16 %v889, %v888
  %v966 = vpack.c.b16 %v891, %v890
  %v967 = vpack.c.b16 %v893, %v892
  %v968 = vpack.c.b16 %v895, %v894
  %v969 = vpack.c.b16 %v897, %v896
  %1042 = vmatprep.subr.bf16.mxu0 0
  %1043 = vmatpush1.bf16.msra.mxu0 %v898
  %1044 = vmatprep.subr.bf16.mxu0 0
  %1045 = vmatpush1.bf16.msra.mxu0 %v899
  %1046 = vmatprep.subr.bf16.mxu0 0
  %1047 = vmatpush1.bf16.msra.mxu0 %v900
  %1048 = vmatprep.subr.bf16.mxu0 0
  %1049 = vmatpush1.bf16.msra.mxu0 %v901
  %1050 = vmatprep.subr.bf16.mxu0 0
  %1051 = vmatpush1.bf16.msra.mxu0 %v902
  %1052 = vmatprep.subr.bf16.mxu0 0
  %1053 = vmatpush1.bf16.msra.mxu0 %v903
  %1054 = vmatprep.subr.bf16.mxu0 0
  %1055 = vmatpush1.bf16.msra.mxu0 %v904
  %1056 = vmatprep.subr.bf16.mxu0 0
  %1057 = vmatpush1.bf16.msra.mxu0 %v905
  %1058 = vmatprep.subr.bf16.mxu0 0
  %1059 = vmatpush1.bf16.msra.mxu0 %v906
  %1060 = vmatprep.subr.bf16.mxu0 0
  %1061 = vmatpush1.bf16.msra.mxu0 %v907
  %1062 = vmatprep.subr.bf16.mxu0 0
  %1063 = vmatpush1.bf16.msra.mxu0 %v908
  %1064 = vmatprep.subr.bf16.mxu0 0
  %1065 = vmatpush1.bf16.msra.mxu0 %v909
  %1066 = vmatprep.subr.bf16.mxu0 0
  %1067 = vmatpush1.bf16.msra.mxu0 %v910
  %1068 = vmatprep.subr.bf16.mxu0 0
  %1069 = vmatpush1.bf16.msra.mxu0 %v911
  %1070 = vmatprep.subr.bf16.mxu0 0
  %1071 = vmatpush1.bf16.msra.mxu0 %v912
  %1072 = vmatprep.subr.bf16.mxu0 0
  %1073 = vmatpush1.bf16.msra.mxu0 %v913
  %1074 = vmatprep.mubr.bf16.mxu0 %v467
  %1075 = vmatmul.mubr.bf16.gmra.mrb[0].mxu0 %v466
  %v1076 = vpop.f32.mrb[0].mxu0
  %v1077 = vadd.f32 0.0, %v1076
  %v1078 = vpop.f32.mrb[0].mxu0
  %v1079 = vpop.f32.mrb[0].mxu0
  %v1080 = vadd.f32 0.0, %v1079
  %v1081 = vpop.f32.mrb[0].mxu0
  %1082 = vmatprep.mubr.bf16.mxu0 %v476
  %1083 = vmatmul.mubr.bf16.gmra.mrb[0].mxu0 %v475
  %v1084 = vpop.f32.mrb[0].mxu0
  %v1085 = vadd.f32 0.0, %v1084
  %v1086 = vpop.f32.mrb[0].mxu0
  %v1087 = vpop.f32.mrb[0].mxu0
  %v1088 = vadd.f32 0.0, %v1087
  %v1089 = vpop.f32.mrb[0].mxu0
  %1090 = vmatprep.mubr.bf16.mxu0 %v485
  %1091 = vmatmul.mubr.bf16.gmra.mrb[0].mxu0 %v484
  %v1092 = vpop.f32.mrb[0].mxu0
  %v1093 = vadd.f32 0.0, %v1092
  %v1094 = vpop.f32.mrb[0].mxu0
  %v1095 = vpop.f32.mrb[0].mxu0
  %v1096 = vadd.f32 0.0, %v1095
  %v1097 = vpop.f32.mrb[0].mxu0
  %1098 = vmatprep.mubr.bf16.mxu0 %v494
  %1099 = vmatmul.mubr.bf16.gmra.mrb[0].mxu0 %v493
  %v1100 = vpop.f32.mrb[0].mxu0
  %v1101 = vadd.f32 0.0, %v1100
  %v1102 = vpop.f32.mrb[0].mxu0
  %v1103 = vpop.f32.mrb[0].mxu0
  %v1104 = vadd.f32 0.0, %v1103
  %v1105 = vpop.f32.mrb[0].mxu0
  %1106 = vmatprep.mubr.bf16.mxu0 %v503
  %1107 = vmatmul.mubr.bf16.gmra.mrb[0].mxu0 %v502
  %v1108 = vpop.f32.mrb[0].mxu0
  %v1109 = vadd.f32 0.0, %v1108
  %v1110 = vpop.f32.mrb[0].mxu0
  %v1111 = vpop.f32.mrb[0].mxu0
  %v1112 = vadd.f32 0.0, %v1111
  %v1113 = vpop.f32.mrb[0].mxu0
  %1114 = vmatprep.mubr.bf16.mxu0 %v512
  %1115 = vmatmul.mubr.bf16.gmra.mrb[0].mxu0 %v511
  %v1116 = vpop.f32.mrb[0].mxu0
  %v1117 = vadd.f32 0.0, %v1116
  %v1118 = vpop.f32.mrb[0].mxu0
  %v1119 = vpop.f32.mrb[0].mxu0
  %v1120 = vadd.f32 0.0, %v1119
  %v1121 = vpop.f32.mrb[0].mxu0
  %1122 = vmatprep.mubr.bf16.mxu0 %v521
  %1123 = vmatmul.mubr.bf16.gmra.mrb[0].mxu0 %v520
  %v1124 = vpop.f32.mrb[0].mxu0
  %v1125 = vadd.f32 0.0, %v1124
  %v1126 = vpop.f32.mrb[0].mxu0
  %v1127 = vpop.f32.mrb[0].mxu0
  %v1128 = vadd.f32 0.0, %v1127
  %v1129 = vpop.f32.mrb[0].mxu0
  %1130 = vmatprep.mubr.bf16.mxu0 %v530
  %1131 = vmatmul.mubr.bf16.gmra.mrb[0].mxu0 %v529
  %v1132 = vpop.f32.mrb[0].mxu0
  %v1133 = vadd.f32 0.0, %v1132
  %v1134 = vpop.f32.mrb[0].mxu0
  %v1135 = vpop.f32.mrb[0].mxu0
  %v1136 = vadd.f32 0.0, %v1135
  %v1137 = vpop.f32.mrb[0].mxu0
  %1138 = vdwg.mxu0
  %1139 = vmatprep.subr.bf16.mxu0 0
  %1140 = vmatpush1.bf16.msra.mxu0 %v914
  %1141 = vmatprep.subr.bf16.mxu0 0
  %1142 = vmatpush1.bf16.msra.mxu0 %v915
  %1143 = vmatprep.subr.bf16.mxu0 0
  %1144 = vmatpush1.bf16.msra.mxu0 %v916
  %1145 = vmatprep.subr.bf16.mxu0 0
  %1146 = vmatpush1.bf16.msra.mxu0 %v917
  %1147 = vmatprep.subr.bf16.mxu0 0
  %1148 = vmatpush1.bf16.msra.mxu0 %v918
  %1149 = vmatprep.subr.bf16.mxu0 0
  %1150 = vmatpush1.bf16.msra.mxu0 %v919
  %1151 = vmatprep.subr.bf16.mxu0 0
  %1152 = vmatpush1.bf16.msra.mxu0 %v920
  %1153 = vmatprep.subr.bf16.mxu0 0
  %1154 = vmatpush1.bf16.msra.mxu0 %v921
  %1155 = vmatprep.subr.bf16.mxu0 0
  %1156 = vmatpush1.bf16.msra.mxu0 %v922
  %1157 = vmatprep.subr.bf16.mxu0 0
  %1158 = vmatpush1.bf16.msra.mxu0 %v923
  %1159 = vmatprep.subr.bf16.mxu0 0
  %1160 = vmatpush1.bf16.msra.mxu0 %v924
  %1161 = vmatprep.subr.bf16.mxu0 0
  %1162 = vmatpush1.bf16.msra.mxu0 %v925
  %1163 = vmatprep.subr.bf16.mxu0 0
  %1164 = vmatpush1.bf16.msra.mxu0 %v926
  %1165 = vmatprep.subr.bf16.mxu0 0
  %1166 = vmatpush1.bf16.msra.mxu0 %v927
  %1167 = vmatprep.subr.bf16.mxu0 0
  %1168 = vmatpush1.bf16.msra.mxu0 %v928
  %1169 = vmatprep.subr.bf16.mxu0 0
  %1170 = vmatpush1.bf16.msra.mxu0 %v929
  %1171 = vmatprep.mubr.bf16.mxu0 %v469
  %1172 = vmatmul.mubr.bf16.gmra.mrb[0].mxu0 %v468
  %v1173 = vpop.f32.mrb[0].mxu0
  %v1174 = vadd.f32 %v1077, %v1173
  %v1175 = vpop.f32.mrb[0].mxu0
  %v1176 = vpop.f32.mrb[0].mxu0
  %v1177 = vadd.f32 %v1080, %v1176
  %v1178 = vpop.f32.mrb[0].mxu0
  %1179 = vmatprep.mubr.bf16.mxu0 %v478
  %1180 = vmatmul.mubr.bf16.gmra.mrb[0].mxu0 %v477
  %v1181 = vpop.f32.mrb[0].mxu0
  %v1182 = vadd.f32 %v1085, %v1181
  %v1183 = vpop.f32.mrb[0].mxu0
  %v1184 = vpop.f32.mrb[0].mxu0
  %v1185 = vadd.f32 %v1088, %v1184
  %v1186 = vpop.f32.mrb[0].mxu0
  %1187 = vmatprep.mubr.bf16.mxu0 %v487
  %1188 = vmatmul.mubr.bf16.gmra.mrb[0].mxu0 %v486
  %v1189 = vpop.f32.mrb[0].mxu0
  %v1190 = vadd.f32 %v1093, %v1189
  %v1191 = vpop.f32.mrb[0].mxu0
  %v1192 = vpop.f32.mrb[0].mxu0
  %v1193 = vadd.f32 %v1096, %v1192
  %v1194 = vpop.f32.mrb[0].mxu0
  %1195 = vmatprep.mubr.bf16.mxu0 %v496
  %1196 = vmatmul.mubr.bf16.gmra.mrb[0].mxu0 %v495
  %v1197 = vpop.f32.mrb[0].mxu0
  %v1198 = vadd.f32 %v1101, %v1197
  %v1199 = vpop.f32.mrb[0].mxu0
  %v1200 = vpop.f32.mrb[0].mxu0
  %v1201 = vadd.f32 %v1104, %v1200
  %v1202 = vpop.f32.mrb[0].mxu0
  %1203 = vmatprep.mubr.bf16.mxu0 %v505
  %1204 = vmatmul.mubr.bf16.gmra.mrb[0].mxu0 %v504
  %v1205 = vpop.f32.mrb[0].mxu0
  %v1206 = vadd.f32 %v1109, %v1205
  %v1207 = vpop.f32.mrb[0].mxu0
  %v1208 = vpop.f32.mrb[0].mxu0
  %v1209 = vadd.f32 %v1112, %v1208
  %v1210 = vpop.f32.mrb[0].mxu0
  %1211 = vmatprep.mubr.bf16.mxu0 %v514
  %1212 = vmatmul.mubr.bf16.gmra.mrb[0].mxu0 %v513
  %v1213 = vpop.f32.mrb[0].mxu0
  %v1214 = vadd.f32 %v1117, %v1213
  %v1215 = vpop.f32.mrb[0].mxu0
  %v1216 = vpop.f32.mrb[0].mxu0
  %v1217 = vadd.f32 %v1120, %v1216
  %v1218 = vpop.f32.mrb[0].mxu0
  %1219 = vmatprep.mubr.bf16.mxu0 %v523
  %1220 = vmatmul.mubr.bf16.gmra.mrb[0].mxu0 %v522
  %v1221 = vpop.f32.mrb[0].mxu0
  %v1222 = vadd.f32 %v1125, %v1221
  %v1223 = vpop.f32.mrb[0].mxu0
  %v1224 = vpop.f32.mrb[0].mxu0
  %v1225 = vadd.f32 %v1128, %v1224
  %v1226 = vpop.f32.mrb[0].mxu0
  %1227 = vmatprep.mubr.bf16.mxu0 %v532
  %1228 = vmatmul.mubr.bf16.gmra.mrb[0].mxu0 %v531
  %v1229 = vpop.f32.mrb[0].mxu0
  %v1230 = vadd.f32 %v1133, %v1229
  %v1231 = vpop.f32.mrb[0].mxu0
  %v1232 = vpop.f32.mrb[0].mxu0
  %v1233 = vadd.f32 %v1136, %v1232
  %v1234 = vpop.f32.mrb[0].mxu0
  %1235 = vdwg.mxu0
  %1236 = vmatprep.subr.bf16.mxu0 0
  %1237 = vmatpush1.bf16.msra.mxu0 %v930
  %1238 = vmatprep.subr.bf16.mxu0 0
  %1239 = vmatpush1.bf16.msra.mxu0 %v931
  %1240 = vmatprep.subr.bf16.mxu0 0
  %1241 = vmatpush1.bf16.msra.mxu0 %v932
  %1242 = vmatprep.subr.bf16.mxu0 0
  %1243 = vmatpush1.bf16.msra.mxu0 %v933
  %1244 = vmatprep.subr.bf16.mxu0 0
  %1245 = vmatpush1.bf16.msra.mxu0 %v934
  %1246 = vmatprep.subr.bf16.mxu0 0
  %1247 = vmatpush1.bf16.msra.mxu0 %v935
  %1248 = vmatprep.subr.bf16.mxu0 0
  %1249 = vmatpush1.bf16.msra.mxu0 %v936
  %1250 = vmatprep.subr.bf16.mxu0 0
  %1251 = vmatpush1.bf16.msra.mxu0 %v937
  %1252 = vmatprep.subr.bf16.mxu0 0
  %1253 = vmatpush1.bf16.msra.mxu0 %v938
  %1254 = vmatprep.subr.bf16.mxu0 0
  %1255 = vmatpush1.bf16.msra.mxu0 %v939
  %1256 = vmatprep.subr.bf16.mxu0 0
  %1257 = vmatpush1.bf16.msra.mxu0 %v940
  %1258 = vmatprep.subr.bf16.mxu0 0
  %1259 = vmatpush1.bf16.msra.mxu0 %v941
  %1260 = vmatprep.subr.bf16.mxu0 0
  %1261 = vmatpush1.bf16.msra.mxu0 %v942
  %1262 = vmatprep.subr.bf16.mxu0 0
  %1263 = vmatpush1.bf16.msra.mxu0 %v943
  %1264 = vmatprep.subr.bf16.mxu0 0
  %1265 = vmatpush1.bf16.msra.mxu0 %v944
  %1266 = vmatprep.subr.bf16.mxu0 0
  %1267 = vmatpush1.bf16.msra.mxu0 %v945
  %1268 = vmatprep.mubr.bf16.mxu0 %v471
  %1269 = vmatmul.mubr.bf16.gmra.mrb[0].mxu0 %v470
  %v1270 = vpop.f32.mrb[0].mxu0
  %v1271 = vadd.f32 %v1174, %v1270
  %v1272 = vpop.f32.mrb[0].mxu0
  %v1273 = vpop.f32.mrb[0].mxu0
  %v1274 = vadd.f32 %v1177, %v1273
  %v1275 = vpop.f32.mrb[0].mxu0
  %1276 = vmatprep.mubr.bf16.mxu0 %v480
  %1277 = vmatmul.mubr.bf16.gmra.mrb[0].mxu0 %v479
  %v1278 = vpop.f32.mrb[0].mxu0
  %v1279 = vadd.f32 %v1182, %v1278
  %v1280 = vpop.f32.mrb[0].mxu0
  %v1281 = vpop.f32.mrb[0].mxu0
  %v1282 = vadd.f32 %v1185, %v1281
  %v1283 = vpop.f32.mrb[0].mxu0
  %1284 = vmatprep.mubr.bf16.mxu0 %v489
  %1285 = vmatmul.mubr.bf16.gmra.mrb[0].mxu0 %v488
  %v1286 = vpop.f32.mrb[0].mxu0
  %v1287 = vadd.f32 %v1190, %v1286
  %v1288 = vpop.f32.mrb[0].mxu0
  %v1289 = vpop.f32.mrb[0].mxu0
  %v1290 = vadd.f32 %v1193, %v1289
  %v1291 = vpop.f32.mrb[0].mxu0
  %1292 = vmatprep.mubr.bf16.mxu0 %v498
  %1293 = vmatmul.mubr.bf16.gmra.mrb[0].mxu0 %v497
  %v1294 = vpop.f32.mrb[0].mxu0
  %v1295 = vadd.f32 %v1198, %v1294
  %v1296 = vpop.f32.mrb[0].mxu0
  %v1297 = vpop.f32.mrb[0].mxu0
  %v1298 = vadd.f32 %v1201, %v1297
  %v1299 = vpop.f32.mrb[0].mxu0
  %1300 = vmatprep.mubr.bf16.mxu0 %v507
  %1301 = vmatmul.mubr.bf16.gmra.mrb[0].mxu0 %v506
  %v1302 = vpop.f32.mrb[0].mxu0
  %v1303 = vadd.f32 %v1206, %v1302
  %v1304 = vpop.f32.mrb[0].mxu0
  %v1305 = vpop.f32.mrb[0].mxu0
  %v1306 = vadd.f32 %v1209, %v1305
  %v1307 = vpop.f32.mrb[0].mxu0
  %1308 = vmatprep.mubr.bf16.mxu0 %v516
  %1309 = vmatmul.mubr.bf16.gmra.mrb[0].mxu0 %v515
  %v1310 = vpop.f32.mrb[0].mxu0
  %v1311 = vadd.f32 %v1214, %v1310
  %v1312 = vpop.f32.mrb[0].mxu0
  %v1313 = vpop.f32.mrb[0].mxu0
  %v1314 = vadd.f32 %v1217, %v1313
  %v1315 = vpop.f32.mrb[0].mxu0
  %1316 = vmatprep.mubr.bf16.mxu0 %v525
  %1317 = vmatmul.mubr.bf16.gmra.mrb[0].mxu0 %v524
  %v1318 = vpop.f32.mrb[0].mxu0
  %v1319 = vadd.f32 %v1222, %v1318
  %v1320 = vpop.f32.mrb[0].mxu0
  %v1321 = vpop.f32.mrb[0].mxu0
  %v1322 = vadd.f32 %v1225, %v1321
  %v1323 = vpop.f32.mrb[0].mxu0
  %1324 = vmatprep.mubr.bf16.mxu0 %v534
  %1325 = vmatmul.mubr.bf16.gmra.mrb[0].mxu0 %v533
  %v1326 = vpop.f32.mrb[0].mxu0
  %v1327 = vadd.f32 %v1230, %v1326
  %v1328 = vpop.f32.mrb[0].mxu0
  %v1329 = vpop.f32.mrb[0].mxu0
  %v1330 = vadd.f32 %v1233, %v1329
  %v1331 = vpop.f32.mrb[0].mxu0
  %1332 = vdwg.mxu0
  %1333 = vmatprep.subr.bf16.mxu0 0
  %1334 = vmatpush1.bf16.msra.mxu0 %v946
  %1335 = vmatprep.subr.bf16.mxu0 0
  %1336 = vmatpush1.bf16.msra.mxu0 %v947
  %1337 = vmatprep.subr.bf16.mxu0 0
  %1338 = vmatpush1.bf16.msra.mxu0 %v948
  %1339 = vmatprep.subr.bf16.mxu0 0
  %1340 = vmatpush1.bf16.msra.mxu0 %v949
  %1341 = vmatprep.subr.bf16.mxu0 0
  %1342 = vmatpush1.bf16.msra.mxu0 %v950
  %1343 = vmatprep.subr.bf16.mxu0 0
  %1344 = vmatpush1.bf16.msra.mxu0 %v951
  %1345 = vmatprep.subr.bf16.mxu0 0
  %1346 = vmatpush1.bf16.msra.mxu0 %v952
  %1347 = vmatprep.subr.bf16.mxu0 0
  %1348 = vmatpush1.bf16.msra.mxu0 %v953
  %1349 = vmatprep.subr.bf16.mxu0 0
  %1350 = vmatpush1.bf16.msra.mxu0 %v954
  %1351 = vmatprep.subr.bf16.mxu0 0
  %1352 = vmatpush1.bf16.msra.mxu0 %v955
  %1353 = vmatprep.subr.bf16.mxu0 0
  %1354 = vmatpush1.bf16.msra.mxu0 %v956
  %1355 = vmatprep.subr.bf16.mxu0 0
  %1356 = vmatpush1.bf16.msra.mxu0 %v957
  %1357 = vmatprep.subr.bf16.mxu0 0
  %1358 = vmatpush1.bf16.msra.mxu0 %v958
  %1359 = vmatprep.subr.bf16.mxu0 0
  %1360 = vmatpush1.bf16.msra.mxu0 %v959
  %1361 = vmatprep.subr.bf16.mxu0 0
  %1362 = vmatpush1.bf16.msra.mxu0 %v960
  %1363 = vmatprep.subr.bf16.mxu0 0
  %1364 = vmatpush1.bf16.msra.mxu0 %v961
  %1365 = vmatprep.mubr.bf16.mxu0 %v473
  %1366 = vmatmul.mubr.bf16.gmra.mrb[0].mxu0 %v472
  %v1367 = vpop.f32.mrb[0].mxu0
  %v1368 = vadd.f32 %v1271, %v1367
  %v1369 = vpop.f32.mrb[0].mxu0
  %v1370 = vpop.f32.mrb[0].mxu0
  %v1371 = vadd.f32 %v1274, %v1370
  %v1372 = vpop.f32.mrb[0].mxu0
  %1373 = vmatprep.mubr.bf16.mxu0 %v482
  %1374 = vmatmul.mubr.bf16.gmra.mrb[0].mxu0 %v481
  %v1375 = vpop.f32.mrb[0].mxu0
  %v1376 = vadd.f32 %v1279, %v1375
  %v1377 = vpop.f32.mrb[0].mxu0
  %v1378 = vpop.f32.mrb[0].mxu0
  %v1379 = vadd.f32 %v1282, %v1378
  %v1380 = vpop.f32.mrb[0].mxu0
  %1381 = vmatprep.mubr.bf16.mxu0 %v491
  %1382 = vmatmul.mubr.bf16.gmra.mrb[0].mxu0 %v490
  %v1383 = vpop.f32.mrb[0].mxu0
  %v1384 = vadd.f32 %v1287, %v1383
  %v1385 = vpop.f32.mrb[0].mxu0
  %v1386 = vpop.f32.mrb[0].mxu0
  %v1387 = vadd.f32 %v1290, %v1386
  %v1388 = vpop.f32.mrb[0].mxu0
  %1389 = vmatprep.mubr.bf16.mxu0 %v500
  %1390 = vmatmul.mubr.bf16.gmra.mrb[0].mxu0 %v499
  %v1391 = vpop.f32.mrb[0].mxu0
  %v1392 = vadd.f32 %v1295, %v1391
  %v1393 = vpop.f32.mrb[0].mxu0
  %v1394 = vpop.f32.mrb[0].mxu0
  %v1395 = vadd.f32 %v1298, %v1394
  %v1396 = vpop.f32.mrb[0].mxu0
  %1397 = vmatprep.mubr.bf16.mxu0 %v509
  %1398 = vmatmul.mubr.bf16.gmra.mrb[0].mxu0 %v508
  %v1399 = vpop.f32.mrb[0].mxu0
  %v1400 = vadd.f32 %v1303, %v1399
  %v1401 = vpop.f32.mrb[0].mxu0
  %v1402 = vpop.f32.mrb[0].mxu0
  %v1403 = vadd.f32 %v1306, %v1402
  %v1404 = vpop.f32.mrb[0].mxu0
  %1405 = vmatprep.mubr.bf16.mxu0 %v518
  %1406 = vmatmul.mubr.bf16.gmra.mrb[0].mxu0 %v517
  %v1407 = vpop.f32.mrb[0].mxu0
  %v1408 = vadd.f32 %v1311, %v1407
  %v1409 = vpop.f32.mrb[0].mxu0
  %v1410 = vpop.f32.mrb[0].mxu0
  %v1411 = vadd.f32 %v1314, %v1410
  %v1412 = vpop.f32.mrb[0].mxu0
  %1413 = vmatprep.mubr.bf16.mxu0 %v527
  %1414 = vmatmul.mubr.bf16.gmra.mrb[0].mxu0 %v526
  %v1415 = vpop.f32.mrb[0].mxu0
  %v1416 = vadd.f32 %v1319, %v1415
  %v1417 = vpop.f32.mrb[0].mxu0
  %v1418 = vpop.f32.mrb[0].mxu0
  %v1419 = vadd.f32 %v1322, %v1418
  %v1420 = vpop.f32.mrb[0].mxu0
  %1421 = vmatprep.mubr.bf16.mxu0 %v536
  %1422 = vmatmul.mubr.bf16.gmra.mrb[0].mxu0 %v535
  %v1423 = vpop.f32.mrb[0].mxu0
  %v1424 = vadd.f32 %v1327, %v1423
  %v1425 = vpop.f32.mrb[0].mxu0
  %v1426 = vpop.f32.mrb[0].mxu0
  %v1427 = vadd.f32 %v1330, %v1426
  %v1428 = vpop.f32.mrb[0].mxu0
  %1429 = vdwg.mxu0
  %1430 = vmatprep.subr.bf16.mxu0 0
  %1431 = vmatpush1.bf16.msra.mxu0 %v962
  %1432 = vmatprep.subr.bf16.mxu0 0
  %1433 = vmatpush1.bf16.msra.mxu0 %v963
  %1434 = vmatprep.subr.bf16.mxu0 0
  %1435 = vmatpush1.bf16.msra.mxu0 %v964
  %1436 = vmatprep.subr.bf16.mxu0 0
  %1437 = vmatpush1.bf16.msra.mxu0 %v965
  %1438 = vmatprep.subr.bf16.mxu0 0
  %1439 = vmatpush1.bf16.msra.mxu0 %v966
  %1440 = vmatprep.subr.bf16.mxu0 0
  %1441 = vmatpush1.bf16.msra.mxu0 %v967
  %1442 = vmatprep.subr.bf16.mxu0 0
  %1443 = vmatpush1.bf16.msra.mxu0 %v968
  %1444 = vmatprep.subr.bf16.mxu0 0
  %1445 = vmatpush1.bf16.msra.mxu0 %v969
  %1446 = vmatprep.subr.bf16.mxu0 0
  %1447 = vmatpush1.bf16.msra.mxu0 0
  %1448 = vmatprep.subr.bf16.mxu0 0
  %1449 = vmatpush1.bf16.msra.mxu0 0
  %1450 = vmatprep.subr.bf16.mxu0 0
  %1451 = vmatpush1.bf16.msra.mxu0 0
  %1452 = vmatprep.subr.bf16.mxu0 0
  %1453 = vmatpush1.bf16.msra.mxu0 0
  %1454 = vmatprep.subr.bf16.mxu0 0
  %1455 = vmatpush1.bf16.msra.mxu0 0
  %1456 = vmatprep.subr.bf16.mxu0 0
  %1457 = vmatpush1.bf16.msra.mxu0 0
  %1458 = vmatprep.subr.bf16.mxu0 0
  %1459 = vmatpush1.bf16.msra.mxu0 0
  %1460 = vmatprep.subr.bf16.mxu0 0
  %1461 = vmatpush1.bf16.msra.mxu0 0
  %1462 = vmatprep.mubr.bf16.mxu0 0
  %1463 = vmatmul.mubr.bf16.gmra.mrb[0].mxu0 %v474
  %v1464 = vpop.f32.mrb[0].mxu0
  %v1465 = vadd.f32 %v1368, %v1464
  %v1466 = vpop.f32.mrb[0].mxu0
  %v1467 = vpop.f32.mrb[0].mxu0
  %v1468 = vadd.f32 %v1371, %v1467
  %v1469 = vpop.f32.mrb[0].mxu0
  %1470 = vmatprep.mubr.bf16.mxu0 0
  %1471 = vmatmul.mubr.bf16.gmra.mrb[0].mxu0 %v483
  %v1472 = vpop.f32.mrb[0].mxu0
  %v1473 = vadd.f32 %v1376, %v1472
  %v1474 = vpop.f32.mrb[0].mxu0
  %v1475 = vpop.f32.mrb[0].mxu0
  %v1476 = vadd.f32 %v1379, %v1475
  %v1477 = vpop.f32.mrb[0].mxu0
  %1478 = vmatprep.mubr.bf16.mxu0 0
  %1479 = vmatmul.mubr.bf16.gmra.mrb[0].mxu0 %v492
  %v1480 = vpop.f32.mrb[0].mxu0
  %v1481 = vadd.f32 %v1384, %v1480
  %v1482 = vpop.f32.mrb[0].mxu0
  %v1483 = vpop.f32.mrb[0].mxu0
  %v1484 = vadd.f32 %v1387, %v1483
  %v1485 = vpop.f32.mrb[0].mxu0
  %1486 = vmatprep.mubr.bf16.mxu0 0
  %1487 = vmatmul.mubr.bf16.gmra.mrb[0].mxu0 %v501
  %v1488 = vpop.f32.mrb[0].mxu0
  %v1489 = vadd.f32 %v1392, %v1488
  %v1490 = vpop.f32.mrb[0].mxu0
  %v1491 = vpop.f32.mrb[0].mxu0
  %v1492 = vadd.f32 %v1395, %v1491
  %v1493 = vpop.f32.mrb[0].mxu0
  %1494 = vmatprep.mubr.bf16.mxu0 0
  %1495 = vmatmul.mubr.bf16.gmra.mrb[0].mxu0 %v510
  %v1496 = vpop.f32.mrb[0].mxu0
  %v1497 = vadd.f32 %v1400, %v1496
  %v1498 = vpop.f32.mrb[0].mxu0
  %v1499 = vpop.f32.mrb[0].mxu0
  %v1500 = vadd.f32 %v1403, %v1499
  %v1501 = vpop.f32.mrb[0].mxu0
  %1502 = vmatprep.mubr.bf16.mxu0 0
  %1503 = vmatmul.mubr.bf16.gmra.mrb[0].mxu0 %v519
  %v1504 = vpop.f32.mrb[0].mxu0
  %v1505 = vadd.f32 %v1408, %v1504
  %v1506 = vpop.f32.mrb[0].mxu0
  %v1507 = vpop.f32.mrb[0].mxu0
  %v1508 = vadd.f32 %v1411, %v1507
  %v1509 = vpop.f32.mrb[0].mxu0
  %1510 = vmatprep.mubr.bf16.mxu0 0
  %1511 = vmatmul.mubr.bf16.gmra.mrb[0].mxu0 %v528
  %v1512 = vpop.f32.mrb[0].mxu0
  %v1513 = vadd.f32 %v1416, %v1512
  %v1514 = vpop.f32.mrb[0].mxu0
  %v1515 = vpop.f32.mrb[0].mxu0
  %v1516 = vadd.f32 %v1419, %v1515
  %v1517 = vpop.f32.mrb[0].mxu0
  %1518 = vmatprep.mubr.bf16.mxu0 0
  %1519 = vmatmul.mubr.bf16.gmra.mrb[0].mxu0 %v537
  %v1520 = vpop.f32.mrb[0].mxu0
  %v1521 = vadd.f32 %v1424, %v1520
  %v1522 = vpop.f32.mrb[0].mxu0
  %v1523 = vpop.f32.mrb[0].mxu0
  %v1524 = vadd.f32 %v1427, %v1523
  %v1525 = vpop.f32.mrb[0].mxu0
  %1526 = vdwg.mxu0
  %v1527 = vld [vmem:[%s2] sm:$0x1]
  %v1529 = vlaneseq
  %v1530 = vshrl.u32 %v1529, 7
  %v1531 = vsub.s32 0, %v1530
  %v1532 = vrot.slane %v1527, %v1531
  %v1534 = vmul.f32 %v1465, %v1532
  %v1535 = vmul.f32 %v1468, %v1532
  %v1536 = vmul.f32 %v1473, %v1532
  %v1537 = vmul.f32 %v1476, %v1532
  %v1538 = vmul.f32 %v1481, %v1532
  %v1539 = vmul.f32 %v1484, %v1532
  %v1540 = vmul.f32 %v1489, %v1532
  %v1541 = vmul.f32 %v1492, %v1532
  %v1542 = vmul.f32 %v1497, %v1532
  %v1543 = vmul.f32 %v1500, %v1532
  %v1544 = vmul.f32 %v1505, %v1532
  %v1545 = vmul.f32 %v1508, %v1532
  %v1546 = vmul.f32 %v1513, %v1532
  %v1547 = vmul.f32 %v1516, %v1532
  %v1548 = vmul.f32 %v1521, %v1532
  %v1549 = vmul.f32 %v1524, %v1532
  %v1550 = vld [vmem:[%s3] sm:$0x1]
  %v1552 = vlaneseq
  %v1553 = vshrl.u32 %v1552, 7
  %v1554 = vsub.s32 0, %v1553
  %v1555 = vrot.slane %v1550, %v1554
  %v1557 = vadd.f32 %v1534, %v1555
  %v1558 = vadd.f32 %v1535, %v1555
  %v1559 = vadd.f32 %v1536, %v1555
  %v1560 = vadd.f32 %v1537, %v1555
  %v1561 = vadd.f32 %v1538, %v1555
  %v1562 = vadd.f32 %v1539, %v1555
  %v1563 = vadd.f32 %v1540, %v1555
  %v1564 = vadd.f32 %v1541, %v1555
  %v1565 = vadd.f32 %v1542, %v1555
  %v1566 = vadd.f32 %v1543, %v1555
  %v1567 = vadd.f32 %v1544, %v1555
  %v1568 = vadd.f32 %v1545, %v1555
  %v1569 = vadd.f32 %v1546, %v1555
  %v1570 = vadd.f32 %v1547, %v1555
  %v1571 = vadd.f32 %v1548, %v1555
  %v1572 = vadd.f32 %v1549, %v1555
  %v1573 = vmax.f32 %v1557, 0.0
  %v1574 = vmax.f32 %v1558, 0.0
  %v1575 = vmax.f32 %v1559, 0.0
  %v1576 = vmax.f32 %v1560, 0.0
  %v1577 = vmax.f32 %v1561, 0.0
  %v1578 = vmax.f32 %v1562, 0.0
  %v1579 = vmax.f32 %v1563, 0.0
  %v1580 = vmax.f32 %v1564, 0.0
  %v1581 = vmax.f32 %v1565, 0.0
  %v1582 = vmax.f32 %v1566, 0.0
  %v1583 = vmax.f32 %v1567, 0.0
  %v1584 = vmax.f32 %v1568, 0.0
  %v1585 = vmax.f32 %v1569, 0.0
  %v1586 = vmax.f32 %v1570, 0.0
  %v1587 = vmax.f32 %v1571, 0.0
  %v1588 = vmax.f32 %v1572, 0.0
  %1589 = vst [vmem:[%s4] sm:$0xff] %v1573
  %1590 = vst [vmem:[%s4 + $0x8] sm:$0xff] %v1574
  %1591 = vst [vmem:[%s4 + $0x10] sm:$0xff] %v1575
  %1592 = vst [vmem:[%s4 + $0x18] sm:$0xff] %v1576
  %1593 = vst [vmem:[%s4 + $0x20] sm:$0xff] %v1577
  %1594 = vst [vmem:[%s4 + $0x28] sm:$0xff] %v1578
  %1595 = vst [vmem:[%s4 + $0x30] sm:$0xff] %v1579
  %1596 = vst [vmem:[%s4 + $0x38] sm:$0xff] %v1580
  %1597 = vst [vmem:[%s4 + $0x40] sm:$0xff] %v1581
  %1598 = vst [vmem:[%s4 + $0x48] sm:$0xff] %v1582
  %1599 = vst [vmem:[%s4 + $0x50] sm:$0xff] %v1583
  %1600 = vst [vmem:[%s4 + $0x58] sm:$0xff] %v1584
  %1601 = vst [vmem:[%s4 + $0x60] sm:$0xff] %v1585
  %1602 = vst [vmem:[%s4 + $0x68] sm:$0xff] %v1586
  %1603 = vst [vmem:[%s4 + $0x70] sm:$0xff] %v1587
  %1604 = vst [vmem:[%s4 + $0x78] sm:$0xff] %v1588
  // Predicated region
  $region18: #{_lambda_.16} parent=0 // pred_check
    _
  $region19: #{_lambda_.16} parent=0 // pred_check_branch
    %1606 = sbr.rel (0) target = $region21
  $region20: #{_lambda_.16} parent=0 // pred_region
    _
  $region21: #{_lambda_.16} parent=0 // pred_fallthru
    _
  // Predicated region
  $region22: #{_lambda_.16} parent=0 // pred_check
    _
  $region23: #{_lambda_.16} parent=0 // pred_check_branch
    %1608 = sbr.rel (0) target = $region25
  $region24: #{_lambda_.16} parent=0 // pred_region
    _
  $region25: #{_lambda_.16} parent=0 // pred_fallthru
    _

// kernel: _lambda_.18
$region0: #{_lambda_.18}
  #allocation0 [shape = 'u32[]', space=smem, size = 0x4, offset = 0x4, fixed_abs, tag = 'smem constant byte address 0x4 - core index']
  #allocation1 [shape = 'u32[144,128]{1,0:T(1,128)}', space=vmem, size = 0x12000, scoped, tag = 'internal scratch']
  %s0 = inlined_call_operand.vmem [shape: f32[128,128], index: 0, kind: input, shape index: {}]
  %s1 = inlined_call_operand.vmem [shape: f32[1,128], index: 1, kind: input, shape index: {}]
  %s2 = inlined_call_operand.vmem [shape: f32[1,128], index: 2, kind: input, shape index: {}]
  %s3 = inlined_call_operand.vmem [shape: f32[128,128], index: 3, kind: output, shape index: {}]
  %s4 = sld [smem:[#allocation0]]
  $region22: #{_lambda_.18} parent=0
    _
  %s6 = ssub.s32 1, %s4
  %s7 = scalar_select 0, %s6, %s4
  // Predicated region
  $region2: #{_lambda_.18} parent=0 // pred_check
    _
  $region3: #{_lambda_.18} parent=0 // pred_check_branch
    %9 = sbr.rel (0) target = $region5
  $region4: #{_lambda_.18} parent=0 // pred_region
    _
  $region5: #{_lambda_.18} parent=0 // pred_fallthru
    _
  // Predicated region
  $region6: #{_lambda_.18} parent=0 // pred_check
    _
  $region7: #{_lambda_.18} parent=0 // pred_check_branch
    %11 = sbr.rel (0) target = $region9
  $region8: #{_lambda_.18} parent=0 // pred_region
    _
  $region9: #{_lambda_.18} parent=0 // pred_fallthru
    _
  // Predicated region
  $region10: #{_lambda_.18} parent=0 // pred_check
    _
  $region11: #{_lambda_.18} parent=0 // pred_check_branch
    %13 = sbr.rel (0) target = $region13
  $region12: #{_lambda_.18} parent=0 // pred_region
    _
  $region13: #{_lambda_.18} parent=0 // pred_fallthru
    _
  %v14 = vld [vmem:[%s0] sm:$0xff]
  %v15 = vld [vmem:[%s0 + $0x8] sm:$0xff]
  %v16 = vld [vmem:[%s0 + $0x10] sm:$0xff]
  %v17 = vld [vmem:[%s0 + $0x18] sm:$0xff]
  %v18 = vld [vmem:[%s0 + $0x20] sm:$0xff]
  %v19 = vld [vmem:[%s0 + $0x28] sm:$0xff]
  %v20 = vld [vmem:[%s0 + $0x30] sm:$0xff]
  %v21 = vld [vmem:[%s0 + $0x38] sm:$0xff]
  %v22 = vld [vmem:[%s0 + $0x40] sm:$0xff]
  %v23 = vld [vmem:[%s0 + $0x48] sm:$0xff]
  %v24 = vld [vmem:[%s0 + $0x50] sm:$0xff]
  %v25 = vld [vmem:[%s0 + $0x58] sm:$0xff]
  %v26 = vld [vmem:[%s0 + $0x60] sm:$0xff]
  %v27 = vld [vmem:[%s0 + $0x68] sm:$0xff]
  %v28 = vld [vmem:[%s0 + $0x70] sm:$0xff]
  %v29 = vld [vmem:[%s0 + $0x78] sm:$0xff]
  %v30 = vld [vmem:[%s1] sm:$0x1]
  %v32 = vlaneseq
  %v33 = vshrl.u32 %v32, 7
  %v34 = vsub.s32 0, %v33
  %v35 = vrot.slane %v30, %v34
  %v37 = vmul.f32 %v14, %v35
  %v38 = vmul.f32 %v15, %v35
  %v39 = vmul.f32 %v16, %v35
  %v40 = vmul.f32 %v17, %v35
  %v41 = vmul.f32 %v18, %v35
  %v42 = vmul.f32 %v19, %v35
  %v43 = vmul.f32 %v20, %v35
  %v44 = vmul.f32 %v21, %v35
  %v45 = vmul.f32 %v22, %v35
  %v46 = vmul.f32 %v23, %v35
  %v47 = vmul.f32 %v24, %v35
  %v48 = vmul.f32 %v25, %v35
  %v49 = vmul.f32 %v26, %v35
  %v50 = vmul.f32 %v27, %v35
  %v51 = vmul.f32 %v28, %v35
  %v52 = vmul.f32 %v29, %v35
  %v53 = vld [vmem:[%s2] sm:$0x1]
  %v55 = vlaneseq
  %v56 = vshrl.u32 %v55, 7
  %v57 = vsub.s32 0, %v56
  %v58 = vrot.slane %v53, %v57
  %v60 = vadd.f32 %v37, %v58
  %v61 = vadd.f32 %v38, %v58
  %v62 = vadd.f32 %v39, %v58
  %v63 = vadd.f32 %v40, %v58
  %v64 = vadd.f32 %v41, %v58
  %v65 = vadd.f32 %v42, %v58
  %v66 = vadd.f32 %v43, %v58
  %v67 = vadd.f32 %v44, %v58
  %v68 = vadd.f32 %v45, %v58
  %v69 = vadd.f32 %v46, %v58
  %v70 = vadd.f32 %v47, %v58
  %v71 = vadd.f32 %v48, %v58
  %v72 = vadd.f32 %v49, %v58
  %v73 = vadd.f32 %v50, %v58
  %v74 = vadd.f32 %v51, %v58
  %v75 = vadd.f32 %v52, %v58
  %v76 = vmax.f32 %v60, 0.0
  %v77 = vmax.f32 %v61, 0.0
  %v78 = vmax.f32 %v62, 0.0
  %v79 = vmax.f32 %v63, 0.0
  %v80 = vmax.f32 %v64, 0.0
  %v81 = vmax.f32 %v65, 0.0
  %v82 = vmax.f32 %v66, 0.0
  %v83 = vmax.f32 %v67, 0.0
  %v84 = vmax.f32 %v68, 0.0
  %v85 = vmax.f32 %v69, 0.0
  %v86 = vmax.f32 %v70, 0.0
  %v87 = vmax.f32 %v71, 0.0
  %v88 = vmax.f32 %v72, 0.0
  %v89 = vmax.f32 %v73, 0.0
  %v90 = vmax.f32 %v74, 0.0
  %v91 = vmax.f32 %v75, 0.0
  %92 = vst [vmem:[%s3] sm:$0xff] %v76
  %93 = vst [vmem:[%s3 + $0x8] sm:$0xff] %v77
  %94 = vst [vmem:[%s3 + $0x10] sm:$0xff] %v78
  %95 = vst [vmem:[%s3 + $0x18] sm:$0xff] %v79
  %96 = vst [vmem:[%s3 + $0x20] sm:$0xff] %v80
  %97 = vst [vmem:[%s3 + $0x28] sm:$0xff] %v81
  %98 = vst [vmem:[%s3 + $0x30] sm:$0xff] %v82
  %99 = vst [vmem:[%s3 + $0x38] sm:$0xff] %v83
  %100 = vst [vmem:[%s3 + $0x40] sm:$0xff] %v84
  %101 = vst [vmem:[%s3 + $0x48] sm:$0xff] %v85
  %102 = vst [vmem:[%s3 + $0x50] sm:$0xff] %v86
  %103 = vst [vmem:[%s3 + $0x58] sm:$0xff] %v87
  %104 = vst [vmem:[%s3 + $0x60] sm:$0xff] %v88
  %105 = vst [vmem:[%s3 + $0x68] sm:$0xff] %v89
  %106 = vst [vmem:[%s3 + $0x70] sm:$0xff] %v90
  %107 = vst [vmem:[%s3 + $0x78] sm:$0xff] %v91
  // Predicated region
  $region14: #{_lambda_.18} parent=0 // pred_check
    _
  $region15: #{_lambda_.18} parent=0 // pred_check_branch
    %109 = sbr.rel (0) target = $region17
  $region16: #{_lambda_.18} parent=0 // pred_region
    _
  $region17: #{_lambda_.18} parent=0 // pred_fallthru
    _
  // Predicated region
  $region18: #{_lambda_.18} parent=0 // pred_check
    _
  $region19: #{_lambda_.18} parent=0 // pred_check_branch
    %111 = sbr.rel (0) target = $region21
  $region20: #{_lambda_.18} parent=0 // pred_region
    _
  $region21: #{_lambda_.18} parent=0 // pred_fallthru
    _

// kernel: _lambda_.17
$region0: #{_lambda_.17}
  #allocation0 [shape = 'u32[]', space=smem, size = 0x4, offset = 0x4, fixed_abs, tag = 'smem constant byte address 0x4 - core index']
  #allocation1 [shape = 'u32[144,128]{1,0:T(1,128)}', space=vmem, size = 0x12000, scoped, tag = 'internal scratch']
  %s0 = inlined_call_operand.vmem [shape: bf16[128,1152], index: 0, kind: input, shape index: {}]
  %s1 = inlined_call_operand.vmem [shape: bf16[1152,128], index: 1, kind: input, shape index: {}]
  %s2 = inlined_call_operand.vmem [shape: bf16[128,128], index: 2, kind: input, shape index: {}]
  %s3 = inlined_call_operand.vmem [shape: bf16[128,128], index: 3, kind: input, shape index: {}]
  %s4 = inlined_call_operand.vmem [shape: f32[128,128], index: 4, kind: output, shape index: {}]
  %s5 = sld [smem:[#allocation0]]
  $region26: #{_lambda_.17} parent=0
    _
  %s7 = ssub.s32 1, %s5
  %s8 = scalar_select 0, %s7, %s5
  // Predicated region
  $region2: #{_lambda_.17} parent=0 // pred_check
    _
  $region3: #{_lambda_.17} parent=0 // pred_check_branch
    %10 = sbr.rel (0) target = $region5
  $region4: #{_lambda_.17} parent=0 // pred_region
    _
  $region5: #{_lambda_.17} parent=0 // pred_fallthru
    _
  // Predicated region
  $region6: #{_lambda_.17} parent=0 // pred_check
    _
  $region7: #{_lambda_.17} parent=0 // pred_check_branch
    %12 = sbr.rel (0) target = $region9
  $region8: #{_lambda_.17} parent=0 // pred_region
    _
  $region9: #{_lambda_.17} parent=0 // pred_fallthru
    _
  // Predicated region
  $region10: #{_lambda_.17} parent=0 // pred_check
    _
  $region11: #{_lambda_.17} parent=0 // pred_check_branch
    %14 = sbr.rel (0) target = $region13
  $region12: #{_lambda_.17} parent=0 // pred_region
    _
  $region13: #{_lambda_.17} parent=0 // pred_fallthru
    _
  // Predicated region
  $region14: #{_lambda_.17} parent=0 // pred_check
    _
  $region15: #{_lambda_.17} parent=0 // pred_check_branch
    %16 = sbr.rel (0) target = $region17
  $region16: #{_lambda_.17} parent=0 // pred_region
    _
  $region17: #{_lambda_.17} parent=0 // pred_fallthru
    _
  %v18 = vld [vmem:[%s0] sm:$0xff]
  %v19 = vld [vmem:[%s0 + $0x8] sm:$0xff]
  %v20 = vld [vmem:[%s0 + $0x10] sm:$0xff]
  %v21 = vld [vmem:[%s0 + $0x18] sm:$0xff]
  %v22 = vld [vmem:[%s0 + $0x20] sm:$0xf]
  %v23 = vld [vmem:[%s0 + $0x24] sm:$0xff]
  %v24 = vld [vmem:[%s0 + $0x2c] sm:$0xff]
  %v25 = vld [vmem:[%s0 + $0x34] sm:$0xff]
  %v26 = vld [vmem:[%s0 + $0x3c] sm:$0xff]
  %v27 = vld [vmem:[%s0 + $0x44] sm:$0xf]
  %v28 = vld [vmem:[%s0 + $0x48] sm:$0xff]
  %v29 = vld [vmem:[%s0 + $0x50] sm:$0xff]
  %v30 = vld [vmem:[%s0 + $0x58] sm:$0xff]
  %v31 = vld [vmem:[%s0 + $0x60] sm:$0xff]
  %v32 = vld [vmem:[%s0 + $0x68] sm:$0xf]
  %v33 = vld [vmem:[%s0 + $0x6c] sm:$0xff]
  %v34 = vld [vmem:[%s0 + $0x74] sm:$0xff]
  %v35 = vld [vmem:[%s0 + $0x7c] sm:$0xff]
  %v36 = vld [vmem:[%s0 + $0x84] sm:$0xff]
  %v37 = vld [vmem:[%s0 + $0x8c] sm:$0xf]
  %v38 = vld [vmem:[%s0 + $0x90] sm:$0xff]
  %v39 = vld [vmem:[%s0 + $0x98] sm:$0xff]
  %v40 = vld [vmem:[%s0 + $0xa0] sm:$0xff]
  %v41 = vld [vmem:[%s0 + $0xa8] sm:$0xff]
  %v42 = vld [vmem:[%s0 + $0xb0] sm:$0xf]
  %v43 = vld [vmem:[%s0 + $0xb4] sm:$0xff]
  %v44 = vld [vmem:[%s0 + $0xbc] sm:$0xff]
  %v45 = vld [vmem:[%s0 + $0xc4] sm:$0xff]
  %v46 = vld [vmem:[%s0 + $0xcc] sm:$0xff]
  %v47 = vld [vmem:[%s0 + $0xd4] sm:$0xf]
  %v48 = vld [vmem:[%s0 + $0xd8] sm:$0xff]
  %v49 = vld [vmem:[%s0 + $0xe0] sm:$0xff]
  %v50 = vld [vmem:[%s0 + $0xe8] sm:$0xff]
  %v51 = vld [vmem:[%s0 + $0xf0] sm:$0xff]
  %v52 = vld [vmem:[%s0 + $0xf8] sm:$0xf]
  %v53 = vld [vmem:[%s0 + $0xfc] sm:$0xff]
  %v54 = vld [vmem:[%s0 + $0x104] sm:$0xff]
  %v55 = vld [vmem:[%s0 + $0x10c] sm:$0xff]
  %v56 = vld [vmem:[%s0 + $0x114] sm:$0xff]
  %v57 = vld [vmem:[%s0 + $0x11c] sm:$0xf]
  %v58 = vld [vmem:[%s0 + $0x120] sm:$0xff]
  %v59 = vld [vmem:[%s0 + $0x128] sm:$0xff]
  %v60 = vld [vmem:[%s0 + $0x130] sm:$0xff]
  %v61 = vld [vmem:[%s0 + $0x138] sm:$0xff]
  %v62 = vld [vmem:[%s0 + $0x140] sm:$0xf]
  %v63 = vld [vmem:[%s0 + $0x144] sm:$0xff]
  %v64 = vld [vmem:[%s0 + $0x14c] sm:$0xff]
  %v65 = vld [vmem:[%s0 + $0x154] sm:$0xff]
  %v66 = vld [vmem:[%s0 + $0x15c] sm:$0xff]
  %v67 = vld [vmem:[%s0 + $0x164] sm:$0xf]
  %v68 = vld [vmem:[%s0 + $0x168] sm:$0xff]
  %v69 = vld [vmem:[%s0 + $0x170] sm:$0xff]
  %v70 = vld [vmem:[%s0 + $0x178] sm:$0xff]
  %v71 = vld [vmem:[%s0 + $0x180] sm:$0xff]
  %v72 = vld [vmem:[%s0 + $0x188] sm:$0xf]
  %v73 = vld [vmem:[%s0 + $0x18c] sm:$0xff]
  %v74 = vld [vmem:[%s0 + $0x194] sm:$0xff]
  %v75 = vld [vmem:[%s0 + $0x19c] sm:$0xff]
  %v76 = vld [vmem:[%s0 + $0x1a4] sm:$0xff]
  %v77 = vld [vmem:[%s0 + $0x1ac] sm:$0xf]
  %v78 = vld [vmem:[%s0 + $0x1b0] sm:$0xff]
  %v79 = vld [vmem:[%s0 + $0x1b8] sm:$0xff]
  %v80 = vld [vmem:[%s0 + $0x1c0] sm:$0xff]
  %v81 = vld [vmem:[%s0 + $0x1c8] sm:$0xff]
  %v82 = vld [vmem:[%s0 + $0x1d0] sm:$0xf]
  %v83 = vld [vmem:[%s0 + $0x1d4] sm:$0xff]
  %v84 = vld [vmem:[%s0 + $0x1dc] sm:$0xff]
  %v85 = vld [vmem:[%s0 + $0x1e4] sm:$0xff]
  %v86 = vld [vmem:[%s0 + $0x1ec] sm:$0xff]
  %v87 = vld [vmem:[%s0 + $0x1f4] sm:$0xf]
  %v88 = vld [vmem:[%s0 + $0x1f8] sm:$0xff]
  %v89 = vld [vmem:[%s0 + $0x200] sm:$0xff]
  %v90 = vld [vmem:[%s0 + $0x208] sm:$0xff]
  %v91 = vld [vmem:[%s0 + $0x210] sm:$0xff]
  %v92 = vld [vmem:[%s0 + $0x218] sm:$0xf]
  %v93 = vld [vmem:[%s0 + $0x21c] sm:$0xff]
  %v94 = vld [vmem:[%s0 + $0x224] sm:$0xff]
  %v95 = vld [vmem:[%s0 + $0x22c] sm:$0xff]
  %v96 = vld [vmem:[%s0 + $0x234] sm:$0xff]
  %v97 = vld [vmem:[%s0 + $0x23c] sm:$0xf]
  %v98 = vld [vmem:[%s1] sm:$0xf]
  %v99 = vld [vmem:[%s1 + $0x4] sm:$0xf]
  %v100 = vld [vmem:[%s1 + $0x8] sm:$0xf]
  %v101 = vld [vmem:[%s1 + $0xc] sm:$0xf]
  %v102 = vld [vmem:[%s1 + $0x10] sm:$0xf]
  %v103 = vld [vmem:[%s1 + $0x14] sm:$0xf]
  %v104 = vld [vmem:[%s1 + $0x18] sm:$0xf]
  %v105 = vld [vmem:[%s1 + $0x1c] sm:$0xf]
  %v106 = vld [vmem:[%s1 + $0x20] sm:$0xf]
  %v107 = vld [vmem:[%s1 + $0x24] sm:$0xf]
  %v108 = vld [vmem:[%s1 + $0x28] sm:$0xf]
  %v109 = vld [vmem:[%s1 + $0x2c] sm:$0xf]
  %v110 = vld [vmem:[%s1 + $0x30] sm:$0xf]
  %v111 = vld [vmem:[%s1 + $0x34] sm:$0xf]
  %v112 = vld [vmem:[%s1 + $0x38] sm:$0xf]
  %v113 = vld [vmem:[%s1 + $0x3c] sm:$0xf]
  %v114 = vld [vmem:[%s1 + $0x40] sm:$0xf]
  %v115 = vld [vmem:[%s1 + $0x44] sm:$0xf]
  %v116 = vld [vmem:[%s1 + $0x48] sm:$0xf]
  %v117 = vld [vmem:[%s1 + $0x4c] sm:$0xf]
  %v118 = vld [vmem:[%s1 + $0x50] sm:$0xf]
  %v119 = vld [vmem:[%s1 + $0x54] sm:$0xf]
  %v120 = vld [vmem:[%s1 + $0x58] sm:$0xf]
  %v121 = vld [vmem:[%s1 + $0x5c] sm:$0xf]
  %v122 = vld [vmem:[%s1 + $0x60] sm:$0xf]
  %v123 = vld [vmem:[%s1 + $0x64] sm:$0xf]
  %v124 = vld [vmem:[%s1 + $0x68] sm:$0xf]
  %v125 = vld [vmem:[%s1 + $0x6c] sm:$0xf]
  %v126 = vld [vmem:[%s1 + $0x70] sm:$0xf]
  %v127 = vld [vmem:[%s1 + $0x74] sm:$0xf]
  %v128 = vld [vmem:[%s1 + $0x78] sm:$0xf]
  %v129 = vld [vmem:[%s1 + $0x7c] sm:$0xf]
  %v130 = vld [vmem:[%s1 + $0x80] sm:$0xf]
  %v131 = vld [vmem:[%s1 + $0x84] sm:$0xf]
  %v132 = vld [vmem:[%s1 + $0x88] sm:$0xf]
  %v133 = vld [vmem:[%s1 + $0x8c] sm:$0xf]
  %v134 = vld [vmem:[%s1 + $0x90] sm:$0xf]
  %v135 = vld [vmem:[%s1 + $0x94] sm:$0xf]
  %v136 = vld [vmem:[%s1 + $0x98] sm:$0xf]
  %v137 = vld [vmem:[%s1 + $0x9c] sm:$0xf]
  %v138 = vld [vmem:[%s1 + $0xa0] sm:$0xf]
  %v139 = vld [vmem:[%s1 + $0xa4] sm:$0xf]
  %v140 = vld [vmem:[%s1 + $0xa8] sm:$0xf]
  %v141 = vld [vmem:[%s1 + $0xac] sm:$0xf]
  %v142 = vld [vmem:[%s1 + $0xb0] sm:$0xf]
  %v143 = vld [vmem:[%s1 + $0xb4] sm:$0xf]
  %v144 = vld [vmem:[%s1 + $0xb8] sm:$0xf]
  %v145 = vld [vmem:[%s1 + $0xbc] sm:$0xf]
  %v146 = vld [vmem:[%s1 + $0xc0] sm:$0xf]
  %v147 = vld [vmem:[%s1 + $0xc4] sm:$0xf]
  %v148 = vld [vmem:[%s1 + $0xc8] sm:$0xf]
  %v149 = vld [vmem:[%s1 + $0xcc] sm:$0xf]
  %v150 = vld [vmem:[%s1 + $0xd0] sm:$0xf]
  %v151 = vld [vmem:[%s1 + $0xd4] sm:$0xf]
  %v152 = vld [vmem:[%s1 + $0xd8] sm:$0xf]
  %v153 = vld [vmem:[%s1 + $0xdc] sm:$0xf]
  %v154 = vld [vmem:[%s1 + $0xe0] sm:$0xf]
  %v155 = vld [vmem:[%s1 + $0xe4] sm:$0xf]
  %v156 = vld [vmem:[%s1 + $0xe8] sm:$0xf]
  %v157 = vld [vmem:[%s1 + $0xec] sm:$0xf]
  %v158 = vld [vmem:[%s1 + $0xf0] sm:$0xf]
  %v159 = vld [vmem:[%s1 + $0xf4] sm:$0xf]
  %v160 = vld [vmem:[%s1 + $0xf8] sm:$0xf]
  %v161 = vld [vmem:[%s1 + $0xfc] sm:$0xf]
  %v162 = vld [vmem:[%s1 + $0x100] sm:$0xf]
  %v163 = vld [vmem:[%s1 + $0x104] sm:$0xf]
  %v164 = vld [vmem:[%s1 + $0x108] sm:$0xf]
  %v165 = vld [vmem:[%s1 + $0x10c] sm:$0xf]
  %v166 = vld [vmem:[%s1 + $0x110] sm:$0xf]
  %v167 = vld [vmem:[%s1 + $0x114] sm:$0xf]
  %v168 = vld [vmem:[%s1 + $0x118] sm:$0xf]
  %v169 = vld [vmem:[%s1 + $0x11c] sm:$0xf]
  %v170 = vld [vmem:[%s1 + $0x120] sm:$0xf]
  %v171 = vld [vmem:[%s1 + $0x124] sm:$0xf]
  %v172 = vld [vmem:[%s1 + $0x128] sm:$0xf]
  %v173 = vld [vmem:[%s1 + $0x12c] sm:$0xf]
  %v174 = vld [vmem:[%s1 + $0x130] sm:$0xf]
  %v175 = vld [vmem:[%s1 + $0x134] sm:$0xf]
  %v176 = vld [vmem:[%s1 + $0x138] sm:$0xf]
  %v177 = vld [vmem:[%s1 + $0x13c] sm:$0xf]
  %v178 = vld [vmem:[%s1 + $0x140] sm:$0xf]
  %v179 = vld [vmem:[%s1 + $0x144] sm:$0xf]
  %v180 = vld [vmem:[%s1 + $0x148] sm:$0xf]
  %v181 = vld [vmem:[%s1 + $0x14c] sm:$0xf]
  %v182 = vld [vmem:[%s1 + $0x150] sm:$0xf]
  %v183 = vld [vmem:[%s1 + $0x154] sm:$0xf]
  %v184 = vld [vmem:[%s1 + $0x158] sm:$0xf]
  %v185 = vld [vmem:[%s1 + $0x15c] sm:$0xf]
  %v186 = vld [vmem:[%s1 + $0x160] sm:$0xf]
  %v187 = vld [vmem:[%s1 + $0x164] sm:$0xf]
  %v188 = vld [vmem:[%s1 + $0x168] sm:$0xf]
  %v189 = vld [vmem:[%s1 + $0x16c] sm:$0xf]
  %v190 = vld [vmem:[%s1 + $0x170] sm:$0xf]
  %v191 = vld [vmem:[%s1 + $0x174] sm:$0xf]
  %v192 = vld [vmem:[%s1 + $0x178] sm:$0xf]
  %v193 = vld [vmem:[%s1 + $0x17c] sm:$0xf]
  %v194 = vld [vmem:[%s1 + $0x180] sm:$0xf]
  %v195 = vld [vmem:[%s1 + $0x184] sm:$0xf]
  %v196 = vld [vmem:[%s1 + $0x188] sm:$0xf]
  %v197 = vld [vmem:[%s1 + $0x18c] sm:$0xf]
  %v198 = vld [vmem:[%s1 + $0x190] sm:$0xf]
  %v199 = vld [vmem:[%s1 + $0x194] sm:$0xf]
  %v200 = vld [vmem:[%s1 + $0x198] sm:$0xf]
  %v201 = vld [vmem:[%s1 + $0x19c] sm:$0xf]
  %v202 = vld [vmem:[%s1 + $0x1a0] sm:$0xf]
  %v203 = vld [vmem:[%s1 + $0x1a4] sm:$0xf]
  %v204 = vld [vmem:[%s1 + $0x1a8] sm:$0xf]
  %v205 = vld [vmem:[%s1 + $0x1ac] sm:$0xf]
  %v206 = vld [vmem:[%s1 + $0x1b0] sm:$0xf]
  %v207 = vld [vmem:[%s1 + $0x1b4] sm:$0xf]
  %v208 = vld [vmem:[%s1 + $0x1b8] sm:$0xf]
  %v209 = vld [vmem:[%s1 + $0x1bc] sm:$0xf]
  %v210 = vld [vmem:[%s1 + $0x1c0] sm:$0xf]
  %v211 = vld [vmem:[%s1 + $0x1c4] sm:$0xf]
  %v212 = vld [vmem:[%s1 + $0x1c8] sm:$0xf]
  %v213 = vld [vmem:[%s1 + $0x1cc] sm:$0xf]
  %v214 = vld [vmem:[%s1 + $0x1d0] sm:$0xf]
  %v215 = vld [vmem:[%s1 + $0x1d4] sm:$0xf]
  %v216 = vld [vmem:[%s1 + $0x1d8] sm:$0xf]
  %v217 = vld [vmem:[%s1 + $0x1dc] sm:$0xf]
  %v218 = vld [vmem:[%s1 + $0x1e0] sm:$0xf]
  %v219 = vld [vmem:[%s1 + $0x1e4] sm:$0xf]
  %v220 = vld [vmem:[%s1 + $0x1e8] sm:$0xf]
  %v221 = vld [vmem:[%s1 + $0x1ec] sm:$0xf]
  %v222 = vld [vmem:[%s1 + $0x1f0] sm:$0xf]
  %v223 = vld [vmem:[%s1 + $0x1f4] sm:$0xf]
  %v224 = vld [vmem:[%s1 + $0x1f8] sm:$0xf]
  %v225 = vld [vmem:[%s1 + $0x1fc] sm:$0xf]
  %v226 = vld [vmem:[%s1 + $0x200] sm:$0xf]
  %v227 = vld [vmem:[%s1 + $0x204] sm:$0xf]
  %v228 = vld [vmem:[%s1 + $0x208] sm:$0xf]
  %v229 = vld [vmem:[%s1 + $0x20c] sm:$0xf]
  %v230 = vld [vmem:[%s1 + $0x210] sm:$0xf]
  %v231 = vld [vmem:[%s1 + $0x214] sm:$0xf]
  %v232 = vld [vmem:[%s1 + $0x218] sm:$0xf]
  %v233 = vld [vmem:[%s1 + $0x21c] sm:$0xf]
  %v234 = vld [vmem:[%s1 + $0x220] sm:$0xf]
  %v235 = vld [vmem:[%s1 + $0x224] sm:$0xf]
  %v236 = vld [vmem:[%s1 + $0x228] sm:$0xf]
  %v237 = vld [vmem:[%s1 + $0x22c] sm:$0xf]
  %v238 = vld [vmem:[%s1 + $0x230] sm:$0xf]
  %v239 = vld [vmem:[%s1 + $0x234] sm:$0xf]
  %v240 = vld [vmem:[%s1 + $0x238] sm:$0xf]
  %v241 = vld [vmem:[%s1 + $0x23c] sm:$0xf]
  %v242 = vld [vmem:[%s2] sm:$0xf]
  %v243 = vld [vmem:[%s2 + $0x4] sm:$0xf]
  %v244 = vld [vmem:[%s2 + $0x8] sm:$0xf]
  %v245 = vld [vmem:[%s2 + $0xc] sm:$0xf]
  %v246 = vld [vmem:[%s2 + $0x10] sm:$0xf]
  %v247 = vld [vmem:[%s2 + $0x14] sm:$0xf]
  %v248 = vld [vmem:[%s2 + $0x18] sm:$0xf]
  %v249 = vld [vmem:[%s2 + $0x1c] sm:$0xf]
  %v250 = vld [vmem:[%s2 + $0x20] sm:$0xf]
  %v251 = vld [vmem:[%s2 + $0x24] sm:$0xf]
  %v252 = vld [vmem:[%s2 + $0x28] sm:$0xf]
  %v253 = vld [vmem:[%s2 + $0x2c] sm:$0xf]
  %v254 = vld [vmem:[%s2 + $0x30] sm:$0xf]
  %v255 = vld [vmem:[%s2 + $0x34] sm:$0xf]
  %v256 = vld [vmem:[%s2 + $0x38] sm:$0xf]
  %v257 = vld [vmem:[%s2 + $0x3c] sm:$0xf]
  %v258 = vld [vmem:[%s3] sm:$0xf]
  %v259 = vld [vmem:[%s3 + $0x4] sm:$0xf]
  %v260 = vld [vmem:[%s3 + $0x8] sm:$0xf]
  %v261 = vld [vmem:[%s3 + $0xc] sm:$0xf]
  %v262 = vld [vmem:[%s3 + $0x10] sm:$0xf]
  %v263 = vld [vmem:[%s3 + $0x14] sm:$0xf]
  %v264 = vld [vmem:[%s3 + $0x18] sm:$0xf]
  %v265 = vld [vmem:[%s3 + $0x1c] sm:$0xf]
  %v266 = vld [vmem:[%s3 + $0x20] sm:$0xf]
  %v267 = vld [vmem:[%s3 + $0x24] sm:$0xf]
  %v268 = vld [vmem:[%s3 + $0x28] sm:$0xf]
  %v269 = vld [vmem:[%s3 + $0x2c] sm:$0xf]
  %v270 = vld [vmem:[%s3 + $0x30] sm:$0xf]
  %v271 = vld [vmem:[%s3 + $0x34] sm:$0xf]
  %v272 = vld [vmem:[%s3 + $0x38] sm:$0xf]
  %v273 = vld [vmem:[%s3 + $0x3c] sm:$0xf]
  %v290 = vunpack.c.l.b16 %v242
  %v291 = vunpack.c.l.b16 %v243
  %v292 = vunpack.c.l.b16 %v244
  %v293 = vunpack.c.l.b16 %v245
  %v294 = vunpack.c.l.b16 %v246
  %v295 = vunpack.c.l.b16 %v247
  %v296 = vunpack.c.l.b16 %v248
  %v297 = vunpack.c.l.b16 %v249
  %v298 = vunpack.c.l.b16 %v250
  %v299 = vunpack.c.l.b16 %v251
  %v300 = vunpack.c.l.b16 %v252
  %v301 = vunpack.c.l.b16 %v253
  %v302 = vunpack.c.l.b16 %v254
  %v303 = vunpack.c.l.b16 %v255
  %v304 = vunpack.c.l.b16 %v256
  %v305 = vunpack.c.l.b16 %v257
  %v306 = vpack.c.b16 %v291, %v290
  %v307 = vpack.c.b16 %v293, %v292
  %v308 = vpack.c.b16 %v295, %v294
  %v309 = vpack.c.b16 %v297, %v296
  %v310 = vpack.c.b16 %v299, %v298
  %v311 = vpack.c.b16 %v301, %v300
  %v312 = vpack.c.b16 %v303, %v302
  %v313 = vpack.c.b16 %v305, %v304
  %v338 = vunpack.c.l.b16 %v258
  %v339 = vunpack.c.l.b16 %v259
  %v340 = vunpack.c.l.b16 %v260
  %v341 = vunpack.c.l.b16 %v261
  %v342 = vunpack.c.l.b16 %v262
  %v343 = vunpack.c.l.b16 %v263
  %v344 = vunpack.c.l.b16 %v264
  %v345 = vunpack.c.l.b16 %v265
  %v346 = vunpack.c.l.b16 %v266
  %v347 = vunpack.c.l.b16 %v267
  %v348 = vunpack.c.l.b16 %v268
  %v349 = vunpack.c.l.b16 %v269
  %v350 = vunpack.c.l.b16 %v270
  %v351 = vunpack.c.l.b16 %v271
  %v352 = vunpack.c.l.b16 %v272
  %v353 = vunpack.c.l.b16 %v273
  %v354 = vpack.c.b16 %v339, %v338
  %v355 = vpack.c.b16 %v341, %v340
  %v356 = vpack.c.b16 %v343, %v342
  %v357 = vpack.c.b16 %v345, %v344
  %v358 = vpack.c.b16 %v347, %v346
  %v359 = vpack.c.b16 %v349, %v348
  %v360 = vpack.c.b16 %v351, %v350
  %v361 = vpack.c.b16 %v353, %v352
  %370 = vmatprep.subr.bf16.mxu0 0
  %371 = vmatpush1.bf16.msra.mxu0 %v354
  %372 = vmatprep.subr.bf16.mxu0 0
  %373 = vmatpush1.bf16.msra.mxu0 %v355
  %374 = vmatprep.subr.bf16.mxu0 0
  %375 = vmatpush1.bf16.msra.mxu0 %v356
  %376 = vmatprep.subr.bf16.mxu0 0
  %377 = vmatpush1.bf16.msra.mxu0 %v357
  %378 = vmatprep.subr.bf16.mxu0 0
  %379 = vmatpush1.bf16.msra.mxu0 %v358
  %380 = vmatprep.subr.bf16.mxu0 0
  %381 = vmatpush1.bf16.msra.mxu0 %v359
  %382 = vmatprep.subr.bf16.mxu0 0
  %383 = vmatpush1.bf16.msra.mxu0 %v360
  %384 = vmatprep.subr.bf16.mxu0 0
  %385 = vmatpush1.bf16.msra.mxu0 %v361
  %386 = vmatprep.subr.bf16.mxu0 0
  %387 = vmatpush1.bf16.msra.mxu0 0
  %388 = vmatprep.subr.bf16.mxu0 0
  %389 = vmatpush1.bf16.msra.mxu0 0
  %390 = vmatprep.subr.bf16.mxu0 0
  %391 = vmatpush1.bf16.msra.mxu0 0
  %392 = vmatprep.subr.bf16.mxu0 0
  %393 = vmatpush1.bf16.msra.mxu0 0
  %394 = vmatprep.subr.bf16.mxu0 0
  %395 = vmatpush1.bf16.msra.mxu0 0
  %396 = vmatprep.subr.bf16.mxu0 0
  %397 = vmatpush1.bf16.msra.mxu0 0
  %398 = vmatprep.subr.bf16.mxu0 0
  %399 = vmatpush1.bf16.msra.mxu0 0
  %400 = vmatprep.subr.bf16.mxu0 0
  %401 = vmatpush1.bf16.msra.mxu0 0
  %402 = vmatprep.mubr.bf16.mxu0 0
  %403 = vmatmul.mubr.bf16.gmra.mrb[0].mxu0 %v306
  %v404 = vpop.f32.mrb[0].mxu0
  %v405 = vadd.f32 0.0, %v404
  %v406 = vpop.f32.mrb[0].mxu0
  %v407 = vpop.f32.mrb[0].mxu0
  %v408 = vadd.f32 0.0, %v407
  %v409 = vpop.f32.mrb[0].mxu0
  %410 = vmatprep.mubr.bf16.mxu0 0
  %411 = vmatmul.mubr.bf16.gmra.mrb[0].mxu0 %v307
  %v412 = vpop.f32.mrb[0].mxu0
  %v413 = vadd.f32 0.0, %v412
  %v414 = vpop.f32.mrb[0].mxu0
  %v415 = vpop.f32.mrb[0].mxu0
  %v416 = vadd.f32 0.0, %v415
  %v417 = vpop.f32.mrb[0].mxu0
  %418 = vmatprep.mubr.bf16.mxu0 0
  %419 = vmatmul.mubr.bf16.gmra.mrb[0].mxu0 %v308
  %v420 = vpop.f32.mrb[0].mxu0
  %v421 = vadd.f32 0.0, %v420
  %v422 = vpop.f32.mrb[0].mxu0
  %v423 = vpop.f32.mrb[0].mxu0
  %v424 = vadd.f32 0.0, %v423
  %v425 = vpop.f32.mrb[0].mxu0
  %426 = vmatprep.mubr.bf16.mxu0 0
  %427 = vmatmul.mubr.bf16.gmra.mrb[0].mxu0 %v309
  %v428 = vpop.f32.mrb[0].mxu0
  %v429 = vadd.f32 0.0, %v428
  %v430 = vpop.f32.mrb[0].mxu0
  %v431 = vpop.f32.mrb[0].mxu0
  %v432 = vadd.f32 0.0, %v431
  %v433 = vpop.f32.mrb[0].mxu0
  %434 = vmatprep.mubr.bf16.mxu0 0
  %435 = vmatmul.mubr.bf16.gmra.mrb[0].mxu0 %v310
  %v436 = vpop.f32.mrb[0].mxu0
  %v437 = vadd.f32 0.0, %v436
  %v438 = vpop.f32.mrb[0].mxu0
  %v439 = vpop.f32.mrb[0].mxu0
  %v440 = vadd.f32 0.0, %v439
  %v441 = vpop.f32.mrb[0].mxu0
  %442 = vmatprep.mubr.bf16.mxu0 0
  %443 = vmatmul.mubr.bf16.gmra.mrb[0].mxu0 %v311
  %v444 = vpop.f32.mrb[0].mxu0
  %v445 = vadd.f32 0.0, %v444
  %v446 = vpop.f32.mrb[0].mxu0
  %v447 = vpop.f32.mrb[0].mxu0
  %v448 = vadd.f32 0.0, %v447
  %v449 = vpop.f32.mrb[0].mxu0
  %450 = vmatprep.mubr.bf16.mxu0 0
  %451 = vmatmul.mubr.bf16.gmra.mrb[0].mxu0 %v312
  %v452 = vpop.f32.mrb[0].mxu0
  %v453 = vadd.f32 0.0, %v452
  %v454 = vpop.f32.mrb[0].mxu0
  %v455 = vpop.f32.mrb[0].mxu0
  %v456 = vadd.f32 0.0, %v455
  %v457 = vpop.f32.mrb[0].mxu0
  %458 = vmatprep.mubr.bf16.mxu0 0
  %459 = vmatmul.mubr.bf16.gmra.mrb[0].mxu0 %v313
  %v460 = vpop.f32.mrb[0].mxu0
  %v461 = vadd.f32 0.0, %v460
  %v462 = vpop.f32.mrb[0].mxu0
  %v463 = vpop.f32.mrb[0].mxu0
  %v464 = vadd.f32 0.0, %v463
  %v465 = vpop.f32.mrb[0].mxu0
  %466 = vdwg.mxu0
  %v547 = vunpack.c.l.b16 %v18
  %v548 = vunpack.c.h.b16 %v18
  %v549 = vunpack.c.l.b16 %v19
  %v550 = vunpack.c.h.b16 %v19
  %v551 = vunpack.c.l.b16 %v20
  %v552 = vunpack.c.h.b16 %v20
  %v553 = vunpack.c.l.b16 %v21
  %v554 = vunpack.c.h.b16 %v21
  %v555 = vunpack.c.l.b16 %v22
  %v556 = vunpack.c.l.b16 %v23
  %v557 = vunpack.c.h.b16 %v23
  %v558 = vunpack.c.l.b16 %v24
  %v559 = vunpack.c.h.b16 %v24
  %v560 = vunpack.c.l.b16 %v25
  %v561 = vunpack.c.h.b16 %v25
  %v562 = vunpack.c.l.b16 %v26
  %v563 = vunpack.c.h.b16 %v26
  %v564 = vunpack.c.l.b16 %v27
  %v565 = vunpack.c.l.b16 %v28
  %v566 = vunpack.c.h.b16 %v28
  %v567 = vunpack.c.l.b16 %v29
  %v568 = vunpack.c.h.b16 %v29
  %v569 = vunpack.c.l.b16 %v30
  %v570 = vunpack.c.h.b16 %v30
  %v571 = vunpack.c.l.b16 %v31
  %v572 = vunpack.c.h.b16 %v31
  %v573 = vunpack.c.l.b16 %v32
  %v574 = vunpack.c.l.b16 %v33
  %v575 = vunpack.c.h.b16 %v33
  %v576 = vunpack.c.l.b16 %v34
  %v577 = vunpack.c.h.b16 %v34
  %v578 = vunpack.c.l.b16 %v35
  %v579 = vunpack.c.h.b16 %v35
  %v580 = vunpack.c.l.b16 %v36
  %v581 = vunpack.c.h.b16 %v36
  %v582 = vunpack.c.l.b16 %v37
  %v583 = vunpack.c.l.b16 %v38
  %v584 = vunpack.c.h.b16 %v38
  %v585 = vunpack.c.l.b16 %v39
  %v586 = vunpack.c.h.b16 %v39
  %v587 = vunpack.c.l.b16 %v40
  %v588 = vunpack.c.h.b16 %v40
  %v589 = vunpack.c.l.b16 %v41
  %v590 = vunpack.c.h.b16 %v41
  %v591 = vunpack.c.l.b16 %v42
  %v592 = vunpack.c.l.b16 %v43
  %v593 = vunpack.c.h.b16 %v43
  %v594 = vunpack.c.l.b16 %v44
  %v595 = vunpack.c.h.b16 %v44
  %v596 = vunpack.c.l.b16 %v45
  %v597 = vunpack.c.h.b16 %v45
  %v598 = vunpack.c.l.b16 %v46
  %v599 = vunpack.c.h.b16 %v46
  %v600 = vunpack.c.l.b16 %v47
  %v601 = vunpack.c.l.b16 %v48
  %v602 = vunpack.c.h.b16 %v48
  %v603 = vunpack.c.l.b16 %v49
  %v604 = vunpack.c.h.b16 %v49
  %v605 = vunpack.c.l.b16 %v50
  %v606 = vunpack.c.h.b16 %v50
  %v607 = vunpack.c.l.b16 %v51
  %v608 = vunpack.c.h.b16 %v51
  %v609 = vunpack.c.l.b16 %v52
  %v610 = vunpack.c.l.b16 %v53
  %v611 = vunpack.c.h.b16 %v53
  %v612 = vunpack.c.l.b16 %v54
  %v613 = vunpack.c.h.b16 %v54
  %v614 = vunpack.c.l.b16 %v55
  %v615 = vunpack.c.h.b16 %v55
  %v616 = vunpack.c.l.b16 %v56
  %v617 = vunpack.c.h.b16 %v56
  %v618 = vunpack.c.l.b16 %v57
  %v619 = vunpack.c.l.b16 %v58
  %v620 = vunpack.c.h.b16 %v58
  %v621 = vunpack.c.l.b16 %v59
  %v622 = vunpack.c.h.b16 %v59
  %v623 = vunpack.c.l.b16 %v60
  %v624 = vunpack.c.h.b16 %v60
  %v625 = vunpack.c.l.b16 %v61
  %v626 = vunpack.c.h.b16 %v61
  %v627 = vunpack.c.l.b16 %v62
  %v628 = vunpack.c.l.b16 %v63
  %v629 = vunpack.c.h.b16 %v63
  %v630 = vunpack.c.l.b16 %v64
  %v631 = vunpack.c.h.b16 %v64
  %v632 = vunpack.c.l.b16 %v65
  %v633 = vunpack.c.h.b16 %v65
  %v634 = vunpack.c.l.b16 %v66
  %v635 = vunpack.c.h.b16 %v66
  %v636 = vunpack.c.l.b16 %v67
  %v637 = vunpack.c.l.b16 %v68
  %v638 = vunpack.c.h.b16 %v68
  %v639 = vunpack.c.l.b16 %v69
  %v640 = vunpack.c.h.b16 %v69
  %v641 = vunpack.c.l.b16 %v70
  %v642 = vunpack.c.h.b16 %v70
  %v643 = vunpack.c.l.b16 %v71
  %v644 = vunpack.c.h.b16 %v71
  %v645 = vunpack.c.l.b16 %v72
  %v646 = vunpack.c.l.b16 %v73
  %v647 = vunpack.c.h.b16 %v73
  %v648 = vunpack.c.l.b16 %v74
  %v649 = vunpack.c.h.b16 %v74
  %v650 = vunpack.c.l.b16 %v75
  %v651 = vunpack.c.h.b16 %v75
  %v652 = vunpack.c.l.b16 %v76
  %v653 = vunpack.c.h.b16 %v76
  %v654 = vunpack.c.l.b16 %v77
  %v655 = vunpack.c.l.b16 %v78
  %v656 = vunpack.c.h.b16 %v78
  %v657 = vunpack.c.l.b16 %v79
  %v658 = vunpack.c.h.b16 %v79
  %v659 = vunpack.c.l.b16 %v80
  %v660 = vunpack.c.h.b16 %v80
  %v661 = vunpack.c.l.b16 %v81
  %v662 = vunpack.c.h.b16 %v81
  %v663 = vunpack.c.l.b16 %v82
  %v664 = vunpack.c.l.b16 %v83
  %v665 = vunpack.c.h.b16 %v83
  %v666 = vunpack.c.l.b16 %v84
  %v667 = vunpack.c.h.b16 %v84
  %v668 = vunpack.c.l.b16 %v85
  %v669 = vunpack.c.h.b16 %v85
  %v670 = vunpack.c.l.b16 %v86
  %v671 = vunpack.c.h.b16 %v86
  %v672 = vunpack.c.l.b16 %v87
  %v673 = vunpack.c.l.b16 %v88
  %v674 = vunpack.c.h.b16 %v88
  %v675 = vunpack.c.l.b16 %v89
  %v676 = vunpack.c.h.b16 %v89
  %v677 = vunpack.c.l.b16 %v90
  %v678 = vunpack.c.h.b16 %v90
  %v679 = vunpack.c.l.b16 %v91
  %v680 = vunpack.c.h.b16 %v91
  %v681 = vunpack.c.l.b16 %v92
  %v682 = vunpack.c.l.b16 %v93
  %v683 = vunpack.c.h.b16 %v93
  %v684 = vunpack.c.l.b16 %v94
  %v685 = vunpack.c.h.b16 %v94
  %v686 = vunpack.c.l.b16 %v95
  %v687 = vunpack.c.h.b16 %v95
  %v688 = vunpack.c.l.b16 %v96
  %v689 = vunpack.c.h.b16 %v96
  %v690 = vunpack.c.l.b16 %v97
  %v691 = vpack.c.b16 %v556, %v547
  %v692 = vpack.c.b16 %v557, %v548
  %v693 = vpack.c.b16 %v558, %v549
  %v694 = vpack.c.b16 %v559, %v550
  %v695 = vpack.c.b16 %v560, %v551
  %v696 = vpack.c.b16 %v561, %v552
  %v697 = vpack.c.b16 %v562, %v553
  %v698 = vpack.c.b16 %v563, %v554
  %v699 = vpack.c.b16 %v564, %v555
  %v700 = vpack.c.b16 %v574, %v565
  %v701 = vpack.c.b16 %v575, %v566
  %v702 = vpack.c.b16 %v576, %v567
  %v703 = vpack.c.b16 %v577, %v568
  %v704 = vpack.c.b16 %v578, %v569
  %v705 = vpack.c.b16 %v579, %v570
  %v706 = vpack.c.b16 %v580, %v571
  %v707 = vpack.c.b16 %v581, %v572
  %v708 = vpack.c.b16 %v582, %v573
  %v709 = vpack.c.b16 %v592, %v583
  %v710 = vpack.c.b16 %v593, %v584
  %v711 = vpack.c.b16 %v594, %v585
  %v712 = vpack.c.b16 %v595, %v586
  %v713 = vpack.c.b16 %v596, %v587
  %v714 = vpack.c.b16 %v597, %v588
  %v715 = vpack.c.b16 %v598, %v589
  %v716 = vpack.c.b16 %v599, %v590
  %v717 = vpack.c.b16 %v600, %v591
  %v718 = vpack.c.b16 %v610, %v601
  %v719 = vpack.c.b16 %v611, %v602
  %v720 = vpack.c.b16 %v612, %v603
  %v721 = vpack.c.b16 %v613, %v604
  %v722 = vpack.c.b16 %v614, %v605
  %v723 = vpack.c.b16 %v615, %v606
  %v724 = vpack.c.b16 %v616, %v607
  %v725 = vpack.c.b16 %v617, %v608
  %v726 = vpack.c.b16 %v618, %v609
  %v727 = vpack.c.b16 %v628, %v619
  %v728 = vpack.c.b16 %v629, %v620
  %v729 = vpack.c.b16 %v630, %v621
  %v730 = vpack.c.b16 %v631, %v622
  %v731 = vpack.c.b16 %v632, %v623
  %v732 = vpack.c.b16 %v633, %v624
  %v733 = vpack.c.b16 %v634, %v625
  %v734 = vpack.c.b16 %v635, %v626
  %v735 = vpack.c.b16 %v636, %v627
  %v736 = vpack.c.b16 %v646, %v637
  %v737 = vpack.c.b16 %v647, %v638
  %v738 = vpack.c.b16 %v648, %v639
  %v739 = vpack.c.b16 %v649, %v640
  %v740 = vpack.c.b16 %v650, %v641
  %v741 = vpack.c.b16 %v651, %v642
  %v742 = vpack.c.b16 %v652, %v643
  %v743 = vpack.c.b16 %v653, %v644
  %v744 = vpack.c.b16 %v654, %v645
  %v745 = vpack.c.b16 %v664, %v655
  %v746 = vpack.c.b16 %v665, %v656
  %v747 = vpack.c.b16 %v666, %v657
  %v748 = vpack.c.b16 %v667, %v658
  %v749 = vpack.c.b16 %v668, %v659
  %v750 = vpack.c.b16 %v669, %v660
  %v751 = vpack.c.b16 %v670, %v661
  %v752 = vpack.c.b16 %v671, %v662
  %v753 = vpack.c.b16 %v672, %v663
  %v754 = vpack.c.b16 %v682, %v673
  %v755 = vpack.c.b16 %v683, %v674
  %v756 = vpack.c.b16 %v684, %v675
  %v757 = vpack.c.b16 %v685, %v676
  %v758 = vpack.c.b16 %v686, %v677
  %v759 = vpack.c.b16 %v687, %v678
  %v760 = vpack.c.b16 %v688, %v679
  %v761 = vpack.c.b16 %v689, %v680
  %v762 = vpack.c.b16 %v690, %v681
  %v979 = vunpack.c.l.b16 %v98
  %v980 = vunpack.c.l.b16 %v99
  %v981 = vunpack.c.l.b16 %v100
  %v982 = vunpack.c.l.b16 %v101
  %v983 = vunpack.c.l.b16 %v102
  %v984 = vunpack.c.l.b16 %v103
  %v985 = vunpack.c.l.b16 %v104
  %v986 = vunpack.c.l.b16 %v105
  %v987 = vunpack.c.l.b16 %v106
  %v988 = vunpack.c.l.b16 %v107
  %v989 = vunpack.c.l.b16 %v108
  %v990 = vunpack.c.l.b16 %v109
  %v991 = vunpack.c.l.b16 %v110
  %v992 = vunpack.c.l.b16 %v111
  %v993 = vunpack.c.l.b16 %v112
  %v994 = vunpack.c.l.b16 %v113
  %v995 = vunpack.c.l.b16 %v114
  %v996 = vunpack.c.l.b16 %v115
  %v997 = vunpack.c.l.b16 %v116
  %v998 = vunpack.c.l.b16 %v117
  %v999 = vunpack.c.l.b16 %v118
  %v1000 = vunpack.c.l.b16 %v119
  %v1001 = vunpack.c.l.b16 %v120
  %v1002 = vunpack.c.l.b16 %v121
  %v1003 = vunpack.c.l.b16 %v122
  %v1004 = vunpack.c.l.b16 %v123
  %v1005 = vunpack.c.l.b16 %v124
  %v1006 = vunpack.c.l.b16 %v125
  %v1007 = vunpack.c.l.b16 %v126
  %v1008 = vunpack.c.l.b16 %v127
  %v1009 = vunpack.c.l.b16 %v128
  %v1010 = vunpack.c.l.b16 %v129
  %v1011 = vunpack.c.l.b16 %v130
  %v1012 = vunpack.c.l.b16 %v131
  %v1013 = vunpack.c.l.b16 %v132
  %v1014 = vunpack.c.l.b16 %v133
  %v1015 = vunpack.c.l.b16 %v134
  %v1016 = vunpack.c.l.b16 %v135
  %v1017 = vunpack.c.l.b16 %v136
  %v1018 = vunpack.c.l.b16 %v137
  %v1019 = vunpack.c.l.b16 %v138
  %v1020 = vunpack.c.l.b16 %v139
  %v1021 = vunpack.c.l.b16 %v140
  %v1022 = vunpack.c.l.b16 %v141
  %v1023 = vunpack.c.l.b16 %v142
  %v1024 = vunpack.c.l.b16 %v143
  %v1025 = vunpack.c.l.b16 %v144
  %v1026 = vunpack.c.l.b16 %v145
  %v1027 = vunpack.c.l.b16 %v146
  %v1028 = vunpack.c.l.b16 %v147
  %v1029 = vunpack.c.l.b16 %v148
  %v1030 = vunpack.c.l.b16 %v149
  %v1031 = vunpack.c.l.b16 %v150
  %v1032 = vunpack.c.l.b16 %v151
  %v1033 = vunpack.c.l.b16 %v152
  %v1034 = vunpack.c.l.b16 %v153
  %v1035 = vunpack.c.l.b16 %v154
  %v1036 = vunpack.c.l.b16 %v155
  %v1037 = vunpack.c.l.b16 %v156
  %v1038 = vunpack.c.l.b16 %v157
  %v1039 = vunpack.c.l.b16 %v158
  %v1040 = vunpack.c.l.b16 %v159
  %v1041 = vunpack.c.l.b16 %v160
  %v1042 = vunpack.c.l.b16 %v161
  %v1043 = vunpack.c.l.b16 %v162
  %v1044 = vunpack.c.l.b16 %v163
  %v1045 = vunpack.c.l.b16 %v164
  %v1046 = vunpack.c.l.b16 %v165
  %v1047 = vunpack.c.l.b16 %v166
  %v1048 = vunpack.c.l.b16 %v167
  %v1049 = vunpack.c.l.b16 %v168
  %v1050 = vunpack.c.l.b16 %v169
  %v1051 = vunpack.c.l.b16 %v170
  %v1052 = vunpack.c.l.b16 %v171
  %v1053 = vunpack.c.l.b16 %v172
  %v1054 = vunpack.c.l.b16 %v173
  %v1055 = vunpack.c.l.b16 %v174
  %v1056 = vunpack.c.l.b16 %v175
  %v1057 = vunpack.c.l.b16 %v176
  %v1058 = vunpack.c.l.b16 %v177
  %v1059 = vunpack.c.l.b16 %v178
  %v1060 = vunpack.c.l.b16 %v179
  %v1061 = vunpack.c.l.b16 %v180
  %v1062 = vunpack.c.l.b16 %v181
  %v1063 = vunpack.c.l.b16 %v182
  %v1064 = vunpack.c.l.b16 %v183
  %v1065 = vunpack.c.l.b16 %v184
  %v1066 = vunpack.c.l.b16 %v185
  %v1067 = vunpack.c.l.b16 %v186
  %v1068 = vunpack.c.l.b16 %v187
  %v1069 = vunpack.c.l.b16 %v188
  %v1070 = vunpack.c.l.b16 %v189
  %v1071 = vunpack.c.l.b16 %v190
  %v1072 = vunpack.c.l.b16 %v191
  %v1073 = vunpack.c.l.b16 %v192
  %v1074 = vunpack.c.l.b16 %v193
  %v1075 = vunpack.c.l.b16 %v194
  %v1076 = vunpack.c.l.b16 %v195
  %v1077 = vunpack.c.l.b16 %v196
  %v1078 = vunpack.c.l.b16 %v197
  %v1079 = vunpack.c.l.b16 %v198
  %v1080 = vunpack.c.l.b16 %v199
  %v1081 = vunpack.c.l.b16 %v200
  %v1082 = vunpack.c.l.b16 %v201
  %v1083 = vunpack.c.l.b16 %v202
  %v1084 = vunpack.c.l.b16 %v203
  %v1085 = vunpack.c.l.b16 %v204
  %v1086 = vunpack.c.l.b16 %v205
  %v1087 = vunpack.c.l.b16 %v206
  %v1088 = vunpack.c.l.b16 %v207
  %v1089 = vunpack.c.l.b16 %v208
  %v1090 = vunpack.c.l.b16 %v209
  %v1091 = vunpack.c.l.b16 %v210
  %v1092 = vunpack.c.l.b16 %v211
  %v1093 = vunpack.c.l.b16 %v212
  %v1094 = vunpack.c.l.b16 %v213
  %v1095 = vunpack.c.l.b16 %v214
  %v1096 = vunpack.c.l.b16 %v215
  %v1097 = vunpack.c.l.b16 %v216
  %v1098 = vunpack.c.l.b16 %v217
  %v1099 = vunpack.c.l.b16 %v218
  %v1100 = vunpack.c.l.b16 %v219
  %v1101 = vunpack.c.l.b16 %v220
  %v1102 = vunpack.c.l.b16 %v221
  %v1103 = vunpack.c.l.b16 %v222
  %v1104 = vunpack.c.l.b16 %v223
  %v1105 = vunpack.c.l.b16 %v224
  %v1106 = vunpack.c.l.b16 %v225
  %v1107 = vunpack.c.l.b16 %v226
  %v1108 = vunpack.c.l.b16 %v227
  %v1109 = vunpack.c.l.b16 %v228
  %v1110 = vunpack.c.l.b16 %v229
  %v1111 = vunpack.c.l.b16 %v230
  %v1112 = vunpack.c.l.b16 %v231
  %v1113 = vunpack.c.l.b16 %v232
  %v1114 = vunpack.c.l.b16 %v233
  %v1115 = vunpack.c.l.b16 %v234
  %v1116 = vunpack.c.l.b16 %v235
  %v1117 = vunpack.c.l.b16 %v236
  %v1118 = vunpack.c.l.b16 %v237
  %v1119 = vunpack.c.l.b16 %v238
  %v1120 = vunpack.c.l.b16 %v239
  %v1121 = vunpack.c.l.b16 %v240
  %v1122 = vunpack.c.l.b16 %v241
  %v1123 = vpack.c.b16 %v980, %v979
  %v1124 = vpack.c.b16 %v982, %v981
  %v1125 = vpack.c.b16 %v984, %v983
  %v1126 = vpack.c.b16 %v986, %v985
  %v1127 = vpack.c.b16 %v988, %v987
  %v1128 = vpack.c.b16 %v990, %v989
  %v1129 = vpack.c.b16 %v992, %v991
  %v1130 = vpack.c.b16 %v994, %v993
  %v1131 = vpack.c.b16 %v996, %v995
  %v1132 = vpack.c.b16 %v998, %v997
  %v1133 = vpack.c.b16 %v1000, %v999
  %v1134 = vpack.c.b16 %v1002, %v1001
  %v1135 = vpack.c.b16 %v1004, %v1003
  %v1136 = vpack.c.b16 %v1006, %v1005
  %v1137 = vpack.c.b16 %v1008, %v1007
  %v1138 = vpack.c.b16 %v1010, %v1009
  %v1139 = vpack.c.b16 %v1012, %v1011
  %v1140 = vpack.c.b16 %v1014, %v1013
  %v1141 = vpack.c.b16 %v1016, %v1015
  %v1142 = vpack.c.b16 %v1018, %v1017
  %v1143 = vpack.c.b16 %v1020, %v1019
  %v1144 = vpack.c.b16 %v1022, %v1021
  %v1145 = vpack.c.b16 %v1024, %v1023
  %v1146 = vpack.c.b16 %v1026, %v1025
  %v1147 = vpack.c.b16 %v1028, %v1027
  %v1148 = vpack.c.b16 %v1030, %v1029
  %v1149 = vpack.c.b16 %v1032, %v1031
  %v1150 = vpack.c.b16 %v1034, %v1033
  %v1151 = vpack.c.b16 %v1036, %v1035
  %v1152 = vpack.c.b16 %v1038, %v1037
  %v1153 = vpack.c.b16 %v1040, %v1039
  %v1154 = vpack.c.b16 %v1042, %v1041
  %v1155 = vpack.c.b16 %v1044, %v1043
  %v1156 = vpack.c.b16 %v1046, %v1045
  %v1157 = vpack.c.b16 %v1048, %v1047
  %v1158 = vpack.c.b16 %v1050, %v1049
  %v1159 = vpack.c.b16 %v1052, %v1051
  %v1160 = vpack.c.b16 %v1054, %v1053
  %v1161 = vpack.c.b16 %v1056, %v1055
  %v1162 = vpack.c.b16 %v1058, %v1057
  %v1163 = vpack.c.b16 %v1060, %v1059
  %v1164 = vpack.c.b16 %v1062, %v1061
  %v1165 = vpack.c.b16 %v1064, %v1063
  %v1166 = vpack.c.b16 %v1066, %v1065
  %v1167 = vpack.c.b16 %v1068, %v1067
  %v1168 = vpack.c.b16 %v1070, %v1069
  %v1169 = vpack.c.b16 %v1072, %v1071
  %v1170 = vpack.c.b16 %v1074, %v1073
  %v1171 = vpack.c.b16 %v1076, %v1075
  %v1172 = vpack.c.b16 %v1078, %v1077
  %v1173 = vpack.c.b16 %v1080, %v1079
  %v1174 = vpack.c.b16 %v1082, %v1081
  %v1175 = vpack.c.b16 %v1084, %v1083
  %v1176 = vpack.c.b16 %v1086, %v1085
  %v1177 = vpack.c.b16 %v1088, %v1087
  %v1178 = vpack.c.b16 %v1090, %v1089
  %v1179 = vpack.c.b16 %v1092, %v1091
  %v1180 = vpack.c.b16 %v1094, %v1093
  %v1181 = vpack.c.b16 %v1096, %v1095
  %v1182 = vpack.c.b16 %v1098, %v1097
  %v1183 = vpack.c.b16 %v1100, %v1099
  %v1184 = vpack.c.b16 %v1102, %v1101
  %v1185 = vpack.c.b16 %v1104, %v1103
  %v1186 = vpack.c.b16 %v1106, %v1105
  %v1187 = vpack.c.b16 %v1108, %v1107
  %v1188 = vpack.c.b16 %v1110, %v1109
  %v1189 = vpack.c.b16 %v1112, %v1111
  %v1190 = vpack.c.b16 %v1114, %v1113
  %v1191 = vpack.c.b16 %v1116, %v1115
  %v1192 = vpack.c.b16 %v1118, %v1117
  %v1193 = vpack.c.b16 %v1120, %v1119
  %v1194 = vpack.c.b16 %v1122, %v1121
  %1267 = vmatprep.subr.bf16.mxu0 0
  %1268 = vmatpush1.bf16.msra.mxu0 %v1123
  %1269 = vmatprep.subr.bf16.mxu0 0
  %1270 = vmatpush1.bf16.msra.mxu0 %v1124
  %1271 = vmatprep.subr.bf16.mxu0 0
  %1272 = vmatpush1.bf16.msra.mxu0 %v1125
  %1273 = vmatprep.subr.bf16.mxu0 0
  %1274 = vmatpush1.bf16.msra.mxu0 %v1126
  %1275 = vmatprep.subr.bf16.mxu0 0
  %1276 = vmatpush1.bf16.msra.mxu0 %v1127
  %1277 = vmatprep.subr.bf16.mxu0 0
  %1278 = vmatpush1.bf16.msra.mxu0 %v1128
  %1279 = vmatprep.subr.bf16.mxu0 0
  %1280 = vmatpush1.bf16.msra.mxu0 %v1129
  %1281 = vmatprep.subr.bf16.mxu0 0
  %1282 = vmatpush1.bf16.msra.mxu0 %v1130
  %1283 = vmatprep.subr.bf16.mxu0 0
  %1284 = vmatpush1.bf16.msra.mxu0 %v1131
  %1285 = vmatprep.subr.bf16.mxu0 0
  %1286 = vmatpush1.bf16.msra.mxu0 %v1132
  %1287 = vmatprep.subr.bf16.mxu0 0
  %1288 = vmatpush1.bf16.msra.mxu0 %v1133
  %1289 = vmatprep.subr.bf16.mxu0 0
  %1290 = vmatpush1.bf16.msra.mxu0 %v1134
  %1291 = vmatprep.subr.bf16.mxu0 0
  %1292 = vmatpush1.bf16.msra.mxu0 %v1135
  %1293 = vmatprep.subr.bf16.mxu0 0
  %1294 = vmatpush1.bf16.msra.mxu0 %v1136
  %1295 = vmatprep.subr.bf16.mxu0 0
  %1296 = vmatpush1.bf16.msra.mxu0 %v1137
  %1297 = vmatprep.subr.bf16.mxu0 0
  %1298 = vmatpush1.bf16.msra.mxu0 %v1138
  %1299 = vmatprep.mubr.bf16.mxu0 %v692
  %1300 = vmatmul.mubr.bf16.gmra.mrb[0].mxu0 %v691
  %v1301 = vpop.f32.mrb[0].mxu0
  %v1302 = vadd.f32 %v405, %v1301
  %v1303 = vpop.f32.mrb[0].mxu0
  %v1304 = vpop.f32.mrb[0].mxu0
  %v1305 = vadd.f32 %v408, %v1304
  %v1306 = vpop.f32.mrb[0].mxu0
  %1307 = vmatprep.mubr.bf16.mxu0 %v701
  %1308 = vmatmul.mubr.bf16.gmra.mrb[0].mxu0 %v700
  %v1309 = vpop.f32.mrb[0].mxu0
  %v1310 = vadd.f32 %v413, %v1309
  %v1311 = vpop.f32.mrb[0].mxu0
  %v1312 = vpop.f32.mrb[0].mxu0
  %v1313 = vadd.f32 %v416, %v1312
  %v1314 = vpop.f32.mrb[0].mxu0
  %1315 = vmatprep.mubr.bf16.mxu0 %v710
  %1316 = vmatmul.mubr.bf16.gmra.mrb[0].mxu0 %v709
  %v1317 = vpop.f32.mrb[0].mxu0
  %v1318 = vadd.f32 %v421, %v1317
  %v1319 = vpop.f32.mrb[0].mxu0
  %v1320 = vpop.f32.mrb[0].mxu0
  %v1321 = vadd.f32 %v424, %v1320
  %v1322 = vpop.f32.mrb[0].mxu0
  %1323 = vmatprep.mubr.bf16.mxu0 %v719
  %1324 = vmatmul.mubr.bf16.gmra.mrb[0].mxu0 %v718
  %v1325 = vpop.f32.mrb[0].mxu0
  %v1326 = vadd.f32 %v429, %v1325
  %v1327 = vpop.f32.mrb[0].mxu0
  %v1328 = vpop.f32.mrb[0].mxu0
  %v1329 = vadd.f32 %v432, %v1328
  %v1330 = vpop.f32.mrb[0].mxu0
  %1331 = vmatprep.mubr.bf16.mxu0 %v728
  %1332 = vmatmul.mubr.bf16.gmra.mrb[0].mxu0 %v727
  %v1333 = vpop.f32.mrb[0].mxu0
  %v1334 = vadd.f32 %v437, %v1333
  %v1335 = vpop.f32.mrb[0].mxu0
  %v1336 = vpop.f32.mrb[0].mxu0
  %v1337 = vadd.f32 %v440, %v1336
  %v1338 = vpop.f32.mrb[0].mxu0
  %1339 = vmatprep.mubr.bf16.mxu0 %v737
  %1340 = vmatmul.mubr.bf16.gmra.mrb[0].mxu0 %v736
  %v1341 = vpop.f32.mrb[0].mxu0
  %v1342 = vadd.f32 %v445, %v1341
  %v1343 = vpop.f32.mrb[0].mxu0
  %v1344 = vpop.f32.mrb[0].mxu0
  %v1345 = vadd.f32 %v448, %v1344
  %v1346 = vpop.f32.mrb[0].mxu0
  %1347 = vmatprep.mubr.bf16.mxu0 %v746
  %1348 = vmatmul.mubr.bf16.gmra.mrb[0].mxu0 %v745
  %v1349 = vpop.f32.mrb[0].mxu0
  %v1350 = vadd.f32 %v453, %v1349
  %v1351 = vpop.f32.mrb[0].mxu0
  %v1352 = vpop.f32.mrb[0].mxu0
  %v1353 = vadd.f32 %v456, %v1352
  %v1354 = vpop.f32.mrb[0].mxu0
  %1355 = vmatprep.mubr.bf16.mxu0 %v755
  %1356 = vmatmul.mubr.bf16.gmra.mrb[0].mxu0 %v754
  %v1357 = vpop.f32.mrb[0].mxu0
  %v1358 = vadd.f32 %v461, %v1357
  %v1359 = vpop.f32.mrb[0].mxu0
  %v1360 = vpop.f32.mrb[0].mxu0
  %v1361 = vadd.f32 %v464, %v1360
  %v1362 = vpop.f32.mrb[0].mxu0
  %1363 = vdwg.mxu0
  %1364 = vmatprep.subr.bf16.mxu0 0
  %1365 = vmatpush1.bf16.msra.mxu0 %v1139
  %1366 = vmatprep.subr.bf16.mxu0 0
  %1367 = vmatpush1.bf16.msra.mxu0 %v1140
  %1368 = vmatprep.subr.bf16.mxu0 0
  %1369 = vmatpush1.bf16.msra.mxu0 %v1141
  %1370 = vmatprep.subr.bf16.mxu0 0
  %1371 = vmatpush1.bf16.msra.mxu0 %v1142
  %1372 = vmatprep.subr.bf16.mxu0 0
  %1373 = vmatpush1.bf16.msra.mxu0 %v1143
  %1374 = vmatprep.subr.bf16.mxu0 0
  %1375 = vmatpush1.bf16.msra.mxu0 %v1144
  %1376 = vmatprep.subr.bf16.mxu0 0
  %1377 = vmatpush1.bf16.msra.mxu0 %v1145
  %1378 = vmatprep.subr.bf16.mxu0 0
  %1379 = vmatpush1.bf16.msra.mxu0 %v1146
  %1380 = vmatprep.subr.bf16.mxu0 0
  %1381 = vmatpush1.bf16.msra.mxu0 %v1147
  %1382 = vmatprep.subr.bf16.mxu0 0
  %1383 = vmatpush1.bf16.msra.mxu0 %v1148
  %1384 = vmatprep.subr.bf16.mxu0 0
  %1385 = vmatpush1.bf16.msra.mxu0 %v1149
  %1386 = vmatprep.subr.bf16.mxu0 0
  %1387 = vmatpush1.bf16.msra.mxu0 %v1150
  %1388 = vmatprep.subr.bf16.mxu0 0
  %1389 = vmatpush1.bf16.msra.mxu0 %v1151
  %1390 = vmatprep.subr.bf16.mxu0 0
  %1391 = vmatpush1.bf16.msra.mxu0 %v1152
  %1392 = vmatprep.subr.bf16.mxu0 0
  %1393 = vmatpush1.bf16.msra.mxu0 %v1153
  %1394 = vmatprep.subr.bf16.mxu0 0
  %1395 = vmatpush1.bf16.msra.mxu0 %v1154
  %1396 = vmatprep.mubr.bf16.mxu0 %v694
  %1397 = vmatmul.mubr.bf16.gmra.mrb[0].mxu0 %v693
  %v1398 = vpop.f32.mrb[0].mxu0
  %v1399 = vadd.f32 %v1302, %v1398
  %v1400 = vpop.f32.mrb[0].mxu0
  %v1401 = vpop.f32.mrb[0].mxu0
  %v1402 = vadd.f32 %v1305, %v1401
  %v1403 = vpop.f32.mrb[0].mxu0
  %1404 = vmatprep.mubr.bf16.mxu0 %v703
  %1405 = vmatmul.mubr.bf16.gmra.mrb[0].mxu0 %v702
  %v1406 = vpop.f32.mrb[0].mxu0
  %v1407 = vadd.f32 %v1310, %v1406
  %v1408 = vpop.f32.mrb[0].mxu0
  %v1409 = vpop.f32.mrb[0].mxu0
  %v1410 = vadd.f32 %v1313, %v1409
  %v1411 = vpop.f32.mrb[0].mxu0
  %1412 = vmatprep.mubr.bf16.mxu0 %v712
  %1413 = vmatmul.mubr.bf16.gmra.mrb[0].mxu0 %v711
  %v1414 = vpop.f32.mrb[0].mxu0
  %v1415 = vadd.f32 %v1318, %v1414
  %v1416 = vpop.f32.mrb[0].mxu0
  %v1417 = vpop.f32.mrb[0].mxu0
  %v1418 = vadd.f32 %v1321, %v1417
  %v1419 = vpop.f32.mrb[0].mxu0
  %1420 = vmatprep.mubr.bf16.mxu0 %v721
  %1421 = vmatmul.mubr.bf16.gmra.mrb[0].mxu0 %v720
  %v1422 = vpop.f32.mrb[0].mxu0
  %v1423 = vadd.f32 %v1326, %v1422
  %v1424 = vpop.f32.mrb[0].mxu0
  %v1425 = vpop.f32.mrb[0].mxu0
  %v1426 = vadd.f32 %v1329, %v1425
  %v1427 = vpop.f32.mrb[0].mxu0
  %1428 = vmatprep.mubr.bf16.mxu0 %v730
  %1429 = vmatmul.mubr.bf16.gmra.mrb[0].mxu0 %v729
  %v1430 = vpop.f32.mrb[0].mxu0
  %v1431 = vadd.f32 %v1334, %v1430
  %v1432 = vpop.f32.mrb[0].mxu0
  %v1433 = vpop.f32.mrb[0].mxu0
  %v1434 = vadd.f32 %v1337, %v1433
  %v1435 = vpop.f32.mrb[0].mxu0
  %1436 = vmatprep.mubr.bf16.mxu0 %v739
  %1437 = vmatmul.mubr.bf16.gmra.mrb[0].mxu0 %v738
  %v1438 = vpop.f32.mrb[0].mxu0
  %v1439 = vadd.f32 %v1342, %v1438
  %v1440 = vpop.f32.mrb[0].mxu0
  %v1441 = vpop.f32.mrb[0].mxu0
  %v1442 = vadd.f32 %v1345, %v1441
  %v1443 = vpop.f32.mrb[0].mxu0
  %1444 = vmatprep.mubr.bf16.mxu0 %v748
  %1445 = vmatmul.mubr.bf16.gmra.mrb[0].mxu0 %v747
  %v1446 = vpop.f32.mrb[0].mxu0
  %v1447 = vadd.f32 %v1350, %v1446
  %v1448 = vpop.f32.mrb[0].mxu0
  %v1449 = vpop.f32.mrb[0].mxu0
  %v1450 = vadd.f32 %v1353, %v1449
  %v1451 = vpop.f32.mrb[0].mxu0
  %1452 = vmatprep.mubr.bf16.mxu0 %v757
  %1453 = vmatmul.mubr.bf16.gmra.mrb[0].mxu0 %v756
  %v1454 = vpop.f32.mrb[0].mxu0
  %v1455 = vadd.f32 %v1358, %v1454
  %v1456 = vpop.f32.mrb[0].mxu0
  %v1457 = vpop.f32.mrb[0].mxu0
  %v1458 = vadd.f32 %v1361, %v1457
  %v1459 = vpop.f32.mrb[0].mxu0
  %1460 = vdwg.mxu0
  %1461 = vmatprep.subr.bf16.mxu0 0
  %1462 = vmatpush1.bf16.msra.mxu0 %v1155
  %1463 = vmatprep.subr.bf16.mxu0 0
  %1464 = vmatpush1.bf16.msra.mxu0 %v1156
  %1465 = vmatprep.subr.bf16.mxu0 0
  %1466 = vmatpush1.bf16.msra.mxu0 %v1157
  %1467 = vmatprep.subr.bf16.mxu0 0
  %1468 = vmatpush1.bf16.msra.mxu0 %v1158
  %1469 = vmatprep.subr.bf16.mxu0 0
  %1470 = vmatpush1.bf16.msra.mxu0 %v1159
  %1471 = vmatprep.subr.bf16.mxu0 0
  %1472 = vmatpush1.bf16.msra.mxu0 %v1160
  %1473 = vmatprep.subr.bf16.mxu0 0
  %1474 = vmatpush1.bf16.msra.mxu0 %v1161
  %1475 = vmatprep.subr.bf16.mxu0 0
  %1476 = vmatpush1.bf16.msra.mxu0 %v1162
  %1477 = vmatprep.subr.bf16.mxu0 0
  %1478 = vmatpush1.bf16.msra.mxu0 %v1163
  %1479 = vmatprep.subr.bf16.mxu0 0
  %1480 = vmatpush1.bf16.msra.mxu0 %v1164
  %1481 = vmatprep.subr.bf16.mxu0 0
  %1482 = vmatpush1.bf16.msra.mxu0 %v1165
  %1483 = vmatprep.subr.bf16.mxu0 0
  %1484 = vmatpush1.bf16.msra.mxu0 %v1166
  %1485 = vmatprep.subr.bf16.mxu0 0
  %1486 = vmatpush1.bf16.msra.mxu0 %v1167
  %1487 = vmatprep.subr.bf16.mxu0 0
  %1488 = vmatpush1.bf16.msra.mxu0 %v1168
  %1489 = vmatprep.subr.bf16.mxu0 0
  %1490 = vmatpush1.bf16.msra.mxu0 %v1169
  %1491 = vmatprep.subr.bf16.mxu0 0
  %1492 = vmatpush1.bf16.msra.mxu0 %v1170
  %1493 = vmatprep.mubr.bf16.mxu0 %v696
  %1494 = vmatmul.mubr.bf16.gmra.mrb[0].mxu0 %v695
  %v1495 = vpop.f32.mrb[0].mxu0
  %v1496 = vadd.f32 %v1399, %v1495
  %v1497 = vpop.f32.mrb[0].mxu0
  %v1498 = vpop.f32.mrb[0].mxu0
  %v1499 = vadd.f32 %v1402, %v1498
  %v1500 = vpop.f32.mrb[0].mxu0
  %1501 = vmatprep.mubr.bf16.mxu0 %v705
  %1502 = vmatmul.mubr.bf16.gmra.mrb[0].mxu0 %v704
  %v1503 = vpop.f32.mrb[0].mxu0
  %v1504 = vadd.f32 %v1407, %v1503
  %v1505 = vpop.f32.mrb[0].mxu0
  %v1506 = vpop.f32.mrb[0].mxu0
  %v1507 = vadd.f32 %v1410, %v1506
  %v1508 = vpop.f32.mrb[0].mxu0
  %1509 = vmatprep.mubr.bf16.mxu0 %v714
  %1510 = vmatmul.mubr.bf16.gmra.mrb[0].mxu0 %v713
  %v1511 = vpop.f32.mrb[0].mxu0
  %v1512 = vadd.f32 %v1415, %v1511
  %v1513 = vpop.f32.mrb[0].mxu0
  %v1514 = vpop.f32.mrb[0].mxu0
  %v1515 = vadd.f32 %v1418, %v1514
  %v1516 = vpop.f32.mrb[0].mxu0
  %1517 = vmatprep.mubr.bf16.mxu0 %v723
  %1518 = vmatmul.mubr.bf16.gmra.mrb[0].mxu0 %v722
  %v1519 = vpop.f32.mrb[0].mxu0
  %v1520 = vadd.f32 %v1423, %v1519
  %v1521 = vpop.f32.mrb[0].mxu0
  %v1522 = vpop.f32.mrb[0].mxu0
  %v1523 = vadd.f32 %v1426, %v1522
  %v1524 = vpop.f32.mrb[0].mxu0
  %1525 = vmatprep.mubr.bf16.mxu0 %v732
  %1526 = vmatmul.mubr.bf16.gmra.mrb[0].mxu0 %v731
  %v1527 = vpop.f32.mrb[0].mxu0
  %v1528 = vadd.f32 %v1431, %v1527
  %v1529 = vpop.f32.mrb[0].mxu0
  %v1530 = vpop.f32.mrb[0].mxu0
  %v1531 = vadd.f32 %v1434, %v1530
  %v1532 = vpop.f32.mrb[0].mxu0
  %1533 = vmatprep.mubr.bf16.mxu0 %v741
  %1534 = vmatmul.mubr.bf16.gmra.mrb[0].mxu0 %v740
  %v1535 = vpop.f32.mrb[0].mxu0
  %v1536 = vadd.f32 %v1439, %v1535
  %v1537 = vpop.f32.mrb[0].mxu0
  %v1538 = vpop.f32.mrb[0].mxu0
  %v1539 = vadd.f32 %v1442, %v1538
  %v1540 = vpop.f32.mrb[0].mxu0
  %1541 = vmatprep.mubr.bf16.mxu0 %v750
  %1542 = vmatmul.mubr.bf16.gmra.mrb[0].mxu0 %v749
  %v1543 = vpop.f32.mrb[0].mxu0
  %v1544 = vadd.f32 %v1447, %v1543
  %v1545 = vpop.f32.mrb[0].mxu0
  %v1546 = vpop.f32.mrb[0].mxu0
  %v1547 = vadd.f32 %v1450, %v1546
  %v1548 = vpop.f32.mrb[0].mxu0
  %1549 = vmatprep.mubr.bf16.mxu0 %v759
  %1550 = vmatmul.mubr.bf16.gmra.mrb[0].mxu0 %v758
  %v1551 = vpop.f32.mrb[0].mxu0
  %v1552 = vadd.f32 %v1455, %v1551
  %v1553 = vpop.f32.mrb[0].mxu0
  %v1554 = vpop.f32.mrb[0].mxu0
  %v1555 = vadd.f32 %v1458, %v1554
  %v1556 = vpop.f32.mrb[0].mxu0
  %1557 = vdwg.mxu0
  %1558 = vmatprep.subr.bf16.mxu0 0
  %1559 = vmatpush1.bf16.msra.mxu0 %v1171
  %1560 = vmatprep.subr.bf16.mxu0 0
  %1561 = vmatpush1.bf16.msra.mxu0 %v1172
  %1562 = vmatprep.subr.bf16.mxu0 0
  %1563 = vmatpush1.bf16.msra.mxu0 %v1173
  %1564 = vmatprep.subr.bf16.mxu0 0
  %1565 = vmatpush1.bf16.msra.mxu0 %v1174
  %1566 = vmatprep.subr.bf16.mxu0 0
  %1567 = vmatpush1.bf16.msra.mxu0 %v1175
  %1568 = vmatprep.subr.bf16.mxu0 0
  %1569 = vmatpush1.bf16.msra.mxu0 %v1176
  %1570 = vmatprep.subr.bf16.mxu0 0
  %1571 = vmatpush1.bf16.msra.mxu0 %v1177
  %1572 = vmatprep.subr.bf16.mxu0 0
  %1573 = vmatpush1.bf16.msra.mxu0 %v1178
  %1574 = vmatprep.subr.bf16.mxu0 0
  %1575 = vmatpush1.bf16.msra.mxu0 %v1179
  %1576 = vmatprep.subr.bf16.mxu0 0
  %1577 = vmatpush1.bf16.msra.mxu0 %v1180
  %1578 = vmatprep.subr.bf16.mxu0 0
  %1579 = vmatpush1.bf16.msra.mxu0 %v1181
  %1580 = vmatprep.subr.bf16.mxu0 0
  %1581 = vmatpush1.bf16.msra.mxu0 %v1182
  %1582 = vmatprep.subr.bf16.mxu0 0
  %1583 = vmatpush1.bf16.msra.mxu0 %v1183
  %1584 = vmatprep.subr.bf16.mxu0 0
  %1585 = vmatpush1.bf16.msra.mxu0 %v1184
  %1586 = vmatprep.subr.bf16.mxu0 0
  %1587 = vmatpush1.bf16.msra.mxu0 %v1185
  %1588 = vmatprep.subr.bf16.mxu0 0
  %1589 = vmatpush1.bf16.msra.mxu0 %v1186
  %1590 = vmatprep.mubr.bf16.mxu0 %v698
  %1591 = vmatmul.mubr.bf16.gmra.mrb[0].mxu0 %v697
  %v1592 = vpop.f32.mrb[0].mxu0
  %v1593 = vadd.f32 %v1496, %v1592
  %v1594 = vpop.f32.mrb[0].mxu0
  %v1595 = vpop.f32.mrb[0].mxu0
  %v1596 = vadd.f32 %v1499, %v1595
  %v1597 = vpop.f32.mrb[0].mxu0
  %1598 = vmatprep.mubr.bf16.mxu0 %v707
  %1599 = vmatmul.mubr.bf16.gmra.mrb[0].mxu0 %v706
  %v1600 = vpop.f32.mrb[0].mxu0
  %v1601 = vadd.f32 %v1504, %v1600
  %v1602 = vpop.f32.mrb[0].mxu0
  %v1603 = vpop.f32.mrb[0].mxu0
  %v1604 = vadd.f32 %v1507, %v1603
  %v1605 = vpop.f32.mrb[0].mxu0
  %1606 = vmatprep.mubr.bf16.mxu0 %v716
  %1607 = vmatmul.mubr.bf16.gmra.mrb[0].mxu0 %v715
  %v1608 = vpop.f32.mrb[0].mxu0
  %v1609 = vadd.f32 %v1512, %v1608
  %v1610 = vpop.f32.mrb[0].mxu0
  %v1611 = vpop.f32.mrb[0].mxu0
  %v1612 = vadd.f32 %v1515, %v1611
  %v1613 = vpop.f32.mrb[0].mxu0
  %1614 = vmatprep.mubr.bf16.mxu0 %v725
  %1615 = vmatmul.mubr.bf16.gmra.mrb[0].mxu0 %v724
  %v1616 = vpop.f32.mrb[0].mxu0
  %v1617 = vadd.f32 %v1520, %v1616
  %v1618 = vpop.f32.mrb[0].mxu0
  %v1619 = vpop.f32.mrb[0].mxu0
  %v1620 = vadd.f32 %v1523, %v1619
  %v1621 = vpop.f32.mrb[0].mxu0
  %1622 = vmatprep.mubr.bf16.mxu0 %v734
  %1623 = vmatmul.mubr.bf16.gmra.mrb[0].mxu0 %v733
  %v1624 = vpop.f32.mrb[0].mxu0
  %v1625 = vadd.f32 %v1528, %v1624
  %v1626 = vpop.f32.mrb[0].mxu0
  %v1627 = vpop.f32.mrb[0].mxu0
  %v1628 = vadd.f32 %v1531, %v1627
  %v1629 = vpop.f32.mrb[0].mxu0
  %1630 = vmatprep.mubr.bf16.mxu0 %v743
  %1631 = vmatmul.mubr.bf16.gmra.mrb[0].mxu0 %v742
  %v1632 = vpop.f32.mrb[0].mxu0
  %v1633 = vadd.f32 %v1536, %v1632
  %v1634 = vpop.f32.mrb[0].mxu0
  %v1635 = vpop.f32.mrb[0].mxu0
  %v1636 = vadd.f32 %v1539, %v1635
  %v1637 = vpop.f32.mrb[0].mxu0
  %1638 = vmatprep.mubr.bf16.mxu0 %v752
  %1639 = vmatmul.mubr.bf16.gmra.mrb[0].mxu0 %v751
  %v1640 = vpop.f32.mrb[0].mxu0
  %v1641 = vadd.f32 %v1544, %v1640
  %v1642 = vpop.f32.mrb[0].mxu0
  %v1643 = vpop.f32.mrb[0].mxu0
  %v1644 = vadd.f32 %v1547, %v1643
  %v1645 = vpop.f32.mrb[0].mxu0
  %1646 = vmatprep.mubr.bf16.mxu0 %v761
  %1647 = vmatmul.mubr.bf16.gmra.mrb[0].mxu0 %v760
  %v1648 = vpop.f32.mrb[0].mxu0
  %v1649 = vadd.f32 %v1552, %v1648
  %v1650 = vpop.f32.mrb[0].mxu0
  %v1651 = vpop.f32.mrb[0].mxu0
  %v1652 = vadd.f32 %v1555, %v1651
  %v1653 = vpop.f32.mrb[0].mxu0
  %1654 = vdwg.mxu0
  %1655 = vmatprep.subr.bf16.mxu0 0
  %1656 = vmatpush1.bf16.msra.mxu0 %v1187
  %1657 = vmatprep.subr.bf16.mxu0 0
  %1658 = vmatpush1.bf16.msra.mxu0 %v1188
  %1659 = vmatprep.subr.bf16.mxu0 0
  %1660 = vmatpush1.bf16.msra.mxu0 %v1189
  %1661 = vmatprep.subr.bf16.mxu0 0
  %1662 = vmatpush1.bf16.msra.mxu0 %v1190
  %1663 = vmatprep.subr.bf16.mxu0 0
  %1664 = vmatpush1.bf16.msra.mxu0 %v1191
  %1665 = vmatprep.subr.bf16.mxu0 0
  %1666 = vmatpush1.bf16.msra.mxu0 %v1192
  %1667 = vmatprep.subr.bf16.mxu0 0
  %1668 = vmatpush1.bf16.msra.mxu0 %v1193
  %1669 = vmatprep.subr.bf16.mxu0 0
  %1670 = vmatpush1.bf16.msra.mxu0 %v1194
  %1671 = vmatprep.subr.bf16.mxu0 0
  %1672 = vmatpush1.bf16.msra.mxu0 0
  %1673 = vmatprep.subr.bf16.mxu0 0
  %1674 = vmatpush1.bf16.msra.mxu0 0
  %1675 = vmatprep.subr.bf16.mxu0 0
  %1676 = vmatpush1.bf16.msra.mxu0 0
  %1677 = vmatprep.subr.bf16.mxu0 0
  %1678 = vmatpush1.bf16.msra.mxu0 0
  %1679 = vmatprep.subr.bf16.mxu0 0
  %1680 = vmatpush1.bf16.msra.mxu0 0
  %1681 = vmatprep.subr.bf16.mxu0 0
  %1682 = vmatpush1.bf16.msra.mxu0 0
  %1683 = vmatprep.subr.bf16.mxu0 0
  %1684 = vmatpush1.bf16.msra.mxu0 0
  %1685 = vmatprep.subr.bf16.mxu0 0
  %1686 = vmatpush1.bf16.msra.mxu0 0
  %1687 = vmatprep.mubr.bf16.mxu0 0
  %1688 = vmatmul.mubr.bf16.gmra.mrb[0].mxu0 %v699
  %v1689 = vpop.f32.mrb[0].mxu0
  %v1690 = vadd.f32 %v1593, %v1689
  %v1691 = vpop.f32.mrb[0].mxu0
  %v1692 = vpop.f32.mrb[0].mxu0
  %v1693 = vadd.f32 %v1596, %v1692
  %v1694 = vpop.f32.mrb[0].mxu0
  %1695 = vmatprep.mubr.bf16.mxu0 0
  %1696 = vmatmul.mubr.bf16.gmra.mrb[0].mxu0 %v708
  %v1697 = vpop.f32.mrb[0].mxu0
  %v1698 = vadd.f32 %v1601, %v1697
  %v1699 = vpop.f32.mrb[0].mxu0
  %v1700 = vpop.f32.mrb[0].mxu0
  %v1701 = vadd.f32 %v1604, %v1700
  %v1702 = vpop.f32.mrb[0].mxu0
  %1703 = vmatprep.mubr.bf16.mxu0 0
  %1704 = vmatmul.mubr.bf16.gmra.mrb[0].mxu0 %v717
  %v1705 = vpop.f32.mrb[0].mxu0
  %v1706 = vadd.f32 %v1609, %v1705
  %v1707 = vpop.f32.mrb[0].mxu0
  %v1708 = vpop.f32.mrb[0].mxu0
  %v1709 = vadd.f32 %v1612, %v1708
  %v1710 = vpop.f32.mrb[0].mxu0
  %1711 = vmatprep.mubr.bf16.mxu0 0
  %1712 = vmatmul.mubr.bf16.gmra.mrb[0].mxu0 %v726
  %v1713 = vpop.f32.mrb[0].mxu0
  %v1714 = vadd.f32 %v1617, %v1713
  %v1715 = vpop.f32.mrb[0].mxu0
  %v1716 = vpop.f32.mrb[0].mxu0
  %v1717 = vadd.f32 %v1620, %v1716
  %v1718 = vpop.f32.mrb[0].mxu0
  %1719 = vmatprep.mubr.bf16.mxu0 0
  %1720 = vmatmul.mubr.bf16.gmra.mrb[0].mxu0 %v735
  %v1721 = vpop.f32.mrb[0].mxu0
  %v1722 = vadd.f32 %v1625, %v1721
  %v1723 = vpop.f32.mrb[0].mxu0
  %v1724 = vpop.f32.mrb[0].mxu0
  %v1725 = vadd.f32 %v1628, %v1724
  %v1726 = vpop.f32.mrb[0].mxu0
  %1727 = vmatprep.mubr.bf16.mxu0 0
  %1728 = vmatmul.mubr.bf16.gmra.mrb[0].mxu0 %v744
  %v1729 = vpop.f32.mrb[0].mxu0
  %v1730 = vadd.f32 %v1633, %v1729
  %v1731 = vpop.f32.mrb[0].mxu0
  %v1732 = vpop.f32.mrb[0].mxu0
  %v1733 = vadd.f32 %v1636, %v1732
  %v1734 = vpop.f32.mrb[0].mxu0
  %1735 = vmatprep.mubr.bf16.mxu0 0
  %1736 = vmatmul.mubr.bf16.gmra.mrb[0].mxu0 %v753
  %v1737 = vpop.f32.mrb[0].mxu0
  %v1738 = vadd.f32 %v1641, %v1737
  %v1739 = vpop.f32.mrb[0].mxu0
  %v1740 = vpop.f32.mrb[0].mxu0
  %v1741 = vadd.f32 %v1644, %v1740
  %v1742 = vpop.f32.mrb[0].mxu0
  %1743 = vmatprep.mubr.bf16.mxu0 0
  %1744 = vmatmul.mubr.bf16.gmra.mrb[0].mxu0 %v762
  %v1745 = vpop.f32.mrb[0].mxu0
  %v1746 = vadd.f32 %v1649, %v1745
  %v1747 = vpop.f32.mrb[0].mxu0
  %v1748 = vpop.f32.mrb[0].mxu0
  %v1749 = vadd.f32 %v1652, %v1748
  %v1750 = vpop.f32.mrb[0].mxu0
  %1751 = vdwg.mxu0
  %1752 = vst [vmem:[%s4] sm:$0xff] %v1690
  %1753 = vst [vmem:[%s4 + $0x8] sm:$0xff] %v1693
  %1754 = vst [vmem:[%s4 + $0x10] sm:$0xff] %v1698
  %1755 = vst [vmem:[%s4 + $0x18] sm:$0xff] %v1701
  %1756 = vst [vmem:[%s4 + $0x20] sm:$0xff] %v1706
  %1757 = vst [vmem:[%s4 + $0x28] sm:$0xff] %v1709
  %1758 = vst [vmem:[%s4 + $0x30] sm:$0xff] %v1714
  %1759 = vst [vmem:[%s4 + $0x38] sm:$0xff] %v1717
  %1760 = vst [vmem:[%s4 + $0x40] sm:$0xff] %v1722
  %1761 = vst [vmem:[%s4 + $0x48] sm:$0xff] %v1725
  %1762 = vst [vmem:[%s4 + $0x50] sm:$0xff] %v1730
  %1763 = vst [vmem:[%s4 + $0x58] sm:$0xff] %v1733
  %1764 = vst [vmem:[%s4 + $0x60] sm:$0xff] %v1738
  %1765 = vst [vmem:[%s4 + $0x68] sm:$0xff] %v1741
  %1766 = vst [vmem:[%s4 + $0x70] sm:$0xff] %v1746
  %1767 = vst [vmem:[%s4 + $0x78] sm:$0xff] %v1749
  // Predicated region
  $region18: #{_lambda_.17} parent=0 // pred_check
    _
  $region19: #{_lambda_.17} parent=0 // pred_check_branch
    %1769 = sbr.rel (0) target = $region21
  $region20: #{_lambda_.17} parent=0 // pred_region
    _
  $region21: #{_lambda_.17} parent=0 // pred_fallthru
    _
  // Predicated region
  $region22: #{_lambda_.17} parent=0 // pred_check
    _
  $region23: #{_lambda_.17} parent=0 // pred_check_branch
    %1771 = sbr.rel (0) target = $region25
  $region24: #{_lambda_.17} parent=0 // pred_region
    _
  $region25: #{_lambda_.17} parent=0 // pred_fallthru
    _

// kernel: _lambda_.21
$region0: #{_lambda_.21}
  #allocation0 [shape = 'u32[]', space=smem, size = 0x4, offset = 0x4, fixed_abs, tag = 'smem constant byte address 0x4 - core index']
  #allocation1 [shape = 'u32[144,128]{1,0:T(1,128)}', space=vmem, size = 0x12000, scoped, tag = 'internal scratch']
  %s0 = inlined_call_operand.vmem [shape: f32[2,16,128], index: 0, kind: input, shape index: {}]
  %s1 = inlined_call_operand.vmem [shape: f32[1,1,128], index: 1, kind: input, shape index: {}]
  %s2 = inlined_call_operand.vmem [shape: f32[1,1,128], index: 2, kind: input, shape index: {}]
  %s3 = inlined_call_operand.vmem [shape: bf16[128,128], index: 3, kind: input, shape index: {}]
  %s4 = inlined_call_operand.vmem [shape: f32[1,128], index: 4, kind: input, shape index: {}]
  %s5 = inlined_call_operand.hbm [shape: f32[2,128], index: 5, kind: output, shape index: {}]
  %s6 = sld [smem:[#allocation0]]
  $region30: #{_lambda_.21} parent=0
    _
  %s8 = ssub.s32 1, %s6
  %s9 = scalar_select 0, %s8, %s6
  $region1: #{_lambda_.21} parent=0
    #allocation2 [shape = 'u8[1024]{0}', space=vmem, size = 0x400, scoped, tag = 'output window, operand 0, single buffered']
    #allocation3 [shape = 's32[1]{0}', space=sflag, size = 0x4, scoped, tag = 'scoped memory for _lambda_.21']
    %10 = vsyncpa [#allocation3], 0
    // Predicated region
    $region2: #{_lambda_.21} parent=1 // pred_check
      _
    $region3: #{_lambda_.21} parent=1 // pred_check_branch
      %12 = sbr.rel (0) target = $region5
    $region4: #{_lambda_.21} parent=1 // pred_region
      _
    $region5: #{_lambda_.21} parent=1 // pred_fallthru
      _
    // Predicated region
    $region6: #{_lambda_.21} parent=1 // pred_check
      _
    $region7: #{_lambda_.21} parent=1 // pred_check_branch
      %14 = sbr.rel (0) target = $region9
    $region8: #{_lambda_.21} parent=1 // pred_region
      _
    $region9: #{_lambda_.21} parent=1 // pred_fallthru
      _
    // Predicated region
    $region10: #{_lambda_.21} parent=1 // pred_check
      _
    $region11: #{_lambda_.21} parent=1 // pred_check_branch
      %16 = sbr.rel (0) target = $region13
    $region12: #{_lambda_.21} parent=1 // pred_region
      _
    $region13: #{_lambda_.21} parent=1 // pred_fallthru
      _
    // Predicated region
    $region14: #{_lambda_.21} parent=1 // pred_check
      _
    $region15: #{_lambda_.21} parent=1 // pred_check_branch
      %18 = sbr.rel (0) target = $region17
    $region16: #{_lambda_.21} parent=1 // pred_region
      _
    $region17: #{_lambda_.21} parent=1 // pred_fallthru
      _
    // Predicated region
    $region18: #{_lambda_.21} parent=1 // pred_check
      _
    $region19: #{_lambda_.21} parent=1 // pred_check_branch
      %20 = sbr.rel (0) target = $region21
    $region20: #{_lambda_.21} parent=1 // pred_region
      _
    $region21: #{_lambda_.21} parent=1 // pred_fallthru
      _
    %v22 = vld [vmem:[%s0] sm:$0xff]
    %v23 = vld [vmem:[%s0 + $0x8] sm:$0xff]
    %v24 = vld [vmem:[%s0 + $0x10] sm:$0xff]
    %v25 = vld [vmem:[%s0 + $0x18] sm:$0xff]
    %v26 = vld [vmem:[%s1] sm:$0x1]
    %v28 = vlaneseq
    %v29 = vshrl.u32 %v28, 7
    %v30 = vsub.s32 0, %v29
    %v31 = vrot.slane %v26, %v30
    %v33 = vmul.f32 %v22, %v31
    %v34 = vmul.f32 %v23, %v31
    %v35 = vmul.f32 %v24, %v31
    %v36 = vmul.f32 %v25, %v31
    %v37 = vld [vmem:[%s2] sm:$0x1]
    %v39 = vlaneseq
    %v40 = vshrl.u32 %v39, 7
    %v41 = vsub.s32 0, %v40
    %v42 = vrot.slane %v37, %v41
    %v44 = vadd.f32 %v33, %v42
    %v45 = vadd.f32 %v34, %v42
    %v46 = vadd.f32 %v35, %v42
    %v47 = vadd.f32 %v36, %v42
    %v48 = vmax.f32 %v44, 0.0
    %v49 = vmax.f32 %v45, 0.0
    %v50 = vmax.f32 %v46, 0.0
    %v51 = vmax.f32 %v47, 0.0
    %v52 = vadd.f32 %v48, %v49
    %v53 = vrot.slane %v52, 4
    %v54 = vadd.f32 %v52, %v53
    %v55 = vrot.slane %v54, 2
    %v56 = vadd.f32 %v54, %v55
    %v57 = vrot.slane %v56, 1
    %v58 = vadd.f32 %v56, %v57
    %v59 = vadd.f32 %v50, %v51
    %v60 = vrot.slane %v59, 4
    %v61 = vadd.f32 %v59, %v60
    %v62 = vrot.slane %v61, 2
    %v63 = vadd.f32 %v61, %v62
    %v64 = vrot.slane %v63, 1
    %v65 = vadd.f32 %v63, %v64
    %v66 = vrcp.pop 16.0
    %v67 = vmul.f32 %v58, %v66
    %v68 = vmul.f32 %v65, %v66
    %v69 = vpack.c.bf16 %v67, %v67
    %v70 = vpack.c.bf16 %v68, %v68
    %v71 = vld [vmem:[%s3] sm:$0xf]
    %v72 = vld [vmem:[%s3 + $0x4] sm:$0xf]
    %v73 = vld [vmem:[%s3 + $0x8] sm:$0xf]
    %v74 = vld [vmem:[%s3 + $0xc] sm:$0xf]
    %v75 = vld [vmem:[%s3 + $0x10] sm:$0xf]
    %v76 = vld [vmem:[%s3 + $0x14] sm:$0xf]
    %v77 = vld [vmem:[%s3 + $0x18] sm:$0xf]
    %v78 = vld [vmem:[%s3 + $0x1c] sm:$0xf]
    %v79 = vld [vmem:[%s3 + $0x20] sm:$0xf]
    %v80 = vld [vmem:[%s3 + $0x24] sm:$0xf]
    %v81 = vld [vmem:[%s3 + $0x28] sm:$0xf]
    %v82 = vld [vmem:[%s3 + $0x2c] sm:$0xf]
    %v83 = vld [vmem:[%s3 + $0x30] sm:$0xf]
    %v84 = vld [vmem:[%s3 + $0x34] sm:$0xf]
    %v85 = vld [vmem:[%s3 + $0x38] sm:$0xf]
    %v86 = vld [vmem:[%s3 + $0x3c] sm:$0xf]
    %v87 = vld [vmem:[%s4] sm:$0x1]
    %v89 = vlaneseq
    %v90 = vshrl.u32 %v89, 7
    %v91 = vsub.s32 0, %v90
    %v92 = vrot.slane %v87, %v91
    %v96 = vunpack.c.l.b16 %v69
    %v97 = vunpack.c.l.b16 %v70
    %vm98 = vcmask 1041409
    %v99 = vsel %vm98, %v97, %v96
    %v100 = vpack.c.b16 %v99, %v99
    %v118 = vunpack.c.l.b16 %v71
    %v119 = vunpack.c.l.b16 %v72
    %v120 = vunpack.c.l.b16 %v73
    %v121 = vunpack.c.l.b16 %v74
    %v122 = vunpack.c.l.b16 %v75
    %v123 = vunpack.c.l.b16 %v76
    %v124 = vunpack.c.l.b16 %v77
    %v125 = vunpack.c.l.b16 %v78
    %v126 = vunpack.c.l.b16 %v79
    %v127 = vunpack.c.l.b16 %v80
    %v128 = vunpack.c.l.b16 %v81
    %v129 = vunpack.c.l.b16 %v82
    %v130 = vunpack.c.l.b16 %v83
    %v131 = vunpack.c.l.b16 %v84
    %v132 = vunpack.c.l.b16 %v85
    %v133 = vunpack.c.l.b16 %v86
    %v134 = vpack.c.b16 %v119, %v118
    %v135 = vpack.c.b16 %v121, %v120
    %v136 = vpack.c.b16 %v123, %v122
    %v137 = vpack.c.b16 %v125, %v124
    %v138 = vpack.c.b16 %v127, %v126
    %v139 = vpack.c.b16 %v129, %v128
    %v140 = vpack.c.b16 %v131, %v130
    %v141 = vpack.c.b16 %v133, %v132
    %150 = vmatprep.subr.bf16.mxu0 0
    %151 = vmatpush1.bf16.msra.mxu0 %v134
    %152 = vmatprep.subr.bf16.mxu0 0
    %153 = vmatpush1.bf16.msra.mxu0 %v135
    %154 = vmatprep.subr.bf16.mxu0 0
    %155 = vmatpush1.bf16.msra.mxu0 %v136
    %156 = vmatprep.subr.bf16.mxu0 0
    %157 = vmatpush1.bf16.msra.mxu0 %v137
    %158 = vmatprep.subr.bf16.mxu0 0
    %159 = vmatpush1.bf16.msra.mxu0 %v138
    %160 = vmatprep.subr.bf16.mxu0 0
    %161 = vmatpush1.bf16.msra.mxu0 %v139
    %162 = vmatprep.subr.bf16.mxu0 0
    %163 = vmatpush1.bf16.msra.mxu0 %v140
    %164 = vmatprep.subr.bf16.mxu0 0
    %165 = vmatpush1.bf16.msra.mxu0 %v141
    %166 = vmatprep.subr.bf16.mxu0 0
    %167 = vmatpush1.bf16.msra.mxu0 0
    %168 = vmatprep.subr.bf16.mxu0 0
    %169 = vmatpush1.bf16.msra.mxu0 0
    %170 = vmatprep.subr.bf16.mxu0 0
    %171 = vmatpush1.bf16.msra.mxu0 0
    %172 = vmatprep.subr.bf16.mxu0 0
    %173 = vmatpush1.bf16.msra.mxu0 0
    %174 = vmatprep.subr.bf16.mxu0 0
    %175 = vmatpush1.bf16.msra.mxu0 0
    %176 = vmatprep.subr.bf16.mxu0 0
    %177 = vmatpush1.bf16.msra.mxu0 0
    %178 = vmatprep.subr.bf16.mxu0 0
    %179 = vmatpush1.bf16.msra.mxu0 0
    %180 = vmatprep.subr.bf16.mxu0 0
    %181 = vmatpush1.bf16.msra.mxu0 0
    %182 = vmatprep.mubr.bf16.mxu0 0
    %183 = vmatmul.mubr.bf16.gmra.mrb[0].mxu0 %v100
    %v184 = vpop.f32.mrb[0].mxu0
    %v185 = vadd.f32 %v92, %v184
    %v186 = vpop.f32.mrb[0].mxu0
    %v187 = vpop.f32.mrb[0].mxu0
    %v188 = vpop.f32.mrb[0].mxu0
    %189 = vdwg.mxu0
    %190 = vst [vmem:[#allocation2] sm:$0x3] %v185
    // Predicated region
    $region22: #{_lambda_.21} parent=1 // pred_check
      _
    $region23: #{_lambda_.21} parent=1 // pred_check_branch
      %192 = sbr.rel (0) target = $region25
    $region24: #{_lambda_.21} parent=1 // pred_region
      %s194 = ssub.s32 32, 32
      %195 = vsyncadd [#allocation3], %s194
      %s197 = sshll.u32 [#allocation2], 4
      %s198 = int_to_ptr.vmem [resolvable:$true] %s197
      %200 = dma.vmem_to_hbm [thread:$0]  %s198, 32, %s5, [#allocation3]
    $region25: #{_lambda_.21} parent=1 // pred_fallthru
      _
    // Predicated region
    $region26: #{_lambda_.21} parent=1 // pred_check
      _
    $region27: #{_lambda_.21} parent=1 // pred_check_branch
      %202 = sbr.rel (0) target = $region29
    $region28: #{_lambda_.21} parent=1 // pred_region
      %203 = dma.done [#allocation3], 32
    $region29: #{_lambda_.21} parent=1 // pred_fallthru
      _
    %204 = vsyncpa [#allocation3], 1

// kernel: _lambda_.19
$region0: #{_lambda_.19}
  #allocation0 [shape = 'u32[]', space=smem, size = 0x4, offset = 0x4, fixed_abs, tag = 'smem constant byte address 0x4 - core index']
  #allocation1 [shape = 'u32[144,128]{1,0:T(1,128)}', space=vmem, size = 0x12000, scoped, tag = 'internal scratch']
  %s0 = inlined_call_operand.vmem [shape: bf16[32,1152], index: 0, kind: input, shape index: {}]
  %s1 = inlined_call_operand.vmem [shape: bf16[1152,128], index: 1, kind: input, shape index: {}]
  %s2 = inlined_call_operand.vmem [shape: f32[1,128], index: 2, kind: input, shape index: {}]
  %s3 = inlined_call_operand.vmem [shape: f32[1,128], index: 3, kind: input, shape index: {}]
  %s4 = inlined_call_operand.vmem [shape: f32[32,128], index: 4, kind: output, shape index: {}]
  %s5 = sld [smem:[#allocation0]]
  $region26: #{_lambda_.19} parent=0
    _
  %s7 = ssub.s32 1, %s5
  %s8 = scalar_select 0, %s7, %s5
  // Predicated region
  $region2: #{_lambda_.19} parent=0 // pred_check
    _
  $region3: #{_lambda_.19} parent=0 // pred_check_branch
    %10 = sbr.rel (0) target = $region5
  $region4: #{_lambda_.19} parent=0 // pred_region
    _
  $region5: #{_lambda_.19} parent=0 // pred_fallthru
    _
  // Predicated region
  $region6: #{_lambda_.19} parent=0 // pred_check
    _
  $region7: #{_lambda_.19} parent=0 // pred_check_branch
    %12 = sbr.rel (0) target = $region9
  $region8: #{_lambda_.19} parent=0 // pred_region
    _
  $region9: #{_lambda_.19} parent=0 // pred_fallthru
    _
  // Predicated region
  $region10: #{_lambda_.19} parent=0 // pred_check
    _
  $region11: #{_lambda_.19} parent=0 // pred_check_branch
    %14 = sbr.rel (0) target = $region13
  $region12: #{_lambda_.19} parent=0 // pred_region
    _
  $region13: #{_lambda_.19} parent=0 // pred_fallthru
    _
  // Predicated region
  $region14: #{_lambda_.19} parent=0 // pred_check
    _
  $region15: #{_lambda_.19} parent=0 // pred_check_branch
    %16 = sbr.rel (0) target = $region17
  $region16: #{_lambda_.19} parent=0 // pred_region
    _
  $region17: #{_lambda_.19} parent=0 // pred_fallthru
    _
  %v18 = vld [vmem:[%s0] sm:$0xff]
  %v19 = vld [vmem:[%s0 + $0x8] sm:$0xff]
  %v20 = vld [vmem:[%s0 + $0x10] sm:$0xff]
  %v21 = vld [vmem:[%s0 + $0x18] sm:$0xff]
  %v22 = vld [vmem:[%s0 + $0x20] sm:$0xf]
  %v23 = vld [vmem:[%s0 + $0x24] sm:$0xff]
  %v24 = vld [vmem:[%s0 + $0x2c] sm:$0xff]
  %v25 = vld [vmem:[%s0 + $0x34] sm:$0xff]
  %v26 = vld [vmem:[%s0 + $0x3c] sm:$0xff]
  %v27 = vld [vmem:[%s0 + $0x44] sm:$0xf]
  %v28 = vld [vmem:[%s0 + $0x48] sm:$0xff]
  %v29 = vld [vmem:[%s0 + $0x50] sm:$0xff]
  %v30 = vld [vmem:[%s0 + $0x58] sm:$0xff]
  %v31 = vld [vmem:[%s0 + $0x60] sm:$0xff]
  %v32 = vld [vmem:[%s0 + $0x68] sm:$0xf]
  %v33 = vld [vmem:[%s0 + $0x6c] sm:$0xff]
  %v34 = vld [vmem:[%s0 + $0x74] sm:$0xff]
  %v35 = vld [vmem:[%s0 + $0x7c] sm:$0xff]
  %v36 = vld [vmem:[%s0 + $0x84] sm:$0xff]
  %v37 = vld [vmem:[%s0 + $0x8c] sm:$0xf]
  %v38 = vld [vmem:[%s1] sm:$0xf]
  %v39 = vld [vmem:[%s1 + $0x4] sm:$0xf]
  %v40 = vld [vmem:[%s1 + $0x8] sm:$0xf]
  %v41 = vld [vmem:[%s1 + $0xc] sm:$0xf]
  %v42 = vld [vmem:[%s1 + $0x10] sm:$0xf]
  %v43 = vld [vmem:[%s1 + $0x14] sm:$0xf]
  %v44 = vld [vmem:[%s1 + $0x18] sm:$0xf]
  %v45 = vld [vmem:[%s1 + $0x1c] sm:$0xf]
  %v46 = vld [vmem:[%s1 + $0x20] sm:$0xf]
  %v47 = vld [vmem:[%s1 + $0x24] sm:$0xf]
  %v48 = vld [vmem:[%s1 + $0x28] sm:$0xf]
  %v49 = vld [vmem:[%s1 + $0x2c] sm:$0xf]
  %v50 = vld [vmem:[%s1 + $0x30] sm:$0xf]
  %v51 = vld [vmem:[%s1 + $0x34] sm:$0xf]
  %v52 = vld [vmem:[%s1 + $0x38] sm:$0xf]
  %v53 = vld [vmem:[%s1 + $0x3c] sm:$0xf]
  %v54 = vld [vmem:[%s1 + $0x40] sm:$0xf]
  %v55 = vld [vmem:[%s1 + $0x44] sm:$0xf]
  %v56 = vld [vmem:[%s1 + $0x48] sm:$0xf]
  %v57 = vld [vmem:[%s1 + $0x4c] sm:$0xf]
  %v58 = vld [vmem:[%s1 + $0x50] sm:$0xf]
  %v59 = vld [vmem:[%s1 + $0x54] sm:$0xf]
  %v60 = vld [vmem:[%s1 + $0x58] sm:$0xf]
  %v61 = vld [vmem:[%s1 + $0x5c] sm:$0xf]
  %v62 = vld [vmem:[%s1 + $0x60] sm:$0xf]
  %v63 = vld [vmem:[%s1 + $0x64] sm:$0xf]
  %v64 = vld [vmem:[%s1 + $0x68] sm:$0xf]
  %v65 = vld [vmem:[%s1 + $0x6c] sm:$0xf]
  %v66 = vld [vmem:[%s1 + $0x70] sm:$0xf]
  %v67 = vld [vmem:[%s1 + $0x74] sm:$0xf]
  %v68 = vld [vmem:[%s1 + $0x78] sm:$0xf]
  %v69 = vld [vmem:[%s1 + $0x7c] sm:$0xf]
  %v70 = vld [vmem:[%s1 + $0x80] sm:$0xf]
  %v71 = vld [vmem:[%s1 + $0x84] sm:$0xf]
  %v72 = vld [vmem:[%s1 + $0x88] sm:$0xf]
  %v73 = vld [vmem:[%s1 + $0x8c] sm:$0xf]
  %v74 = vld [vmem:[%s1 + $0x90] sm:$0xf]
  %v75 = vld [vmem:[%s1 + $0x94] sm:$0xf]
  %v76 = vld [vmem:[%s1 + $0x98] sm:$0xf]
  %v77 = vld [vmem:[%s1 + $0x9c] sm:$0xf]
  %v78 = vld [vmem:[%s1 + $0xa0] sm:$0xf]
  %v79 = vld [vmem:[%s1 + $0xa4] sm:$0xf]
  %v80 = vld [vmem:[%s1 + $0xa8] sm:$0xf]
  %v81 = vld [vmem:[%s1 + $0xac] sm:$0xf]
  %v82 = vld [vmem:[%s1 + $0xb0] sm:$0xf]
  %v83 = vld [vmem:[%s1 + $0xb4] sm:$0xf]
  %v84 = vld [vmem:[%s1 + $0xb8] sm:$0xf]
  %v85 = vld [vmem:[%s1 + $0xbc] sm:$0xf]
  %v86 = vld [vmem:[%s1 + $0xc0] sm:$0xf]
  %v87 = vld [vmem:[%s1 + $0xc4] sm:$0xf]
  %v88 = vld [vmem:[%s1 + $0xc8] sm:$0xf]
  %v89 = vld [vmem:[%s1 + $0xcc] sm:$0xf]
  %v90 = vld [vmem:[%s1 + $0xd0] sm:$0xf]
  %v91 = vld [vmem:[%s1 + $0xd4] sm:$0xf]
  %v92 = vld [vmem:[%s1 + $0xd8] sm:$0xf]
  %v93 = vld [vmem:[%s1 + $0xdc] sm:$0xf]
  %v94 = vld [vmem:[%s1 + $0xe0] sm:$0xf]
  %v95 = vld [vmem:[%s1 + $0xe4] sm:$0xf]
  %v96 = vld [vmem:[%s1 + $0xe8] sm:$0xf]
  %v97 = vld [vmem:[%s1 + $0xec] sm:$0xf]
  %v98 = vld [vmem:[%s1 + $0xf0] sm:$0xf]
  %v99 = vld [vmem:[%s1 + $0xf4] sm:$0xf]
  %v100 = vld [vmem:[%s1 + $0xf8] sm:$0xf]
  %v101 = vld [vmem:[%s1 + $0xfc] sm:$0xf]
  %v102 = vld [vmem:[%s1 + $0x100] sm:$0xf]
  %v103 = vld [vmem:[%s1 + $0x104] sm:$0xf]
  %v104 = vld [vmem:[%s1 + $0x108] sm:$0xf]
  %v105 = vld [vmem:[%s1 + $0x10c] sm:$0xf]
  %v106 = vld [vmem:[%s1 + $0x110] sm:$0xf]
  %v107 = vld [vmem:[%s1 + $0x114] sm:$0xf]
  %v108 = vld [vmem:[%s1 + $0x118] sm:$0xf]
  %v109 = vld [vmem:[%s1 + $0x11c] sm:$0xf]
  %v110 = vld [vmem:[%s1 + $0x120] sm:$0xf]
  %v111 = vld [vmem:[%s1 + $0x124] sm:$0xf]
  %v112 = vld [vmem:[%s1 + $0x128] sm:$0xf]
  %v113 = vld [vmem:[%s1 + $0x12c] sm:$0xf]
  %v114 = vld [vmem:[%s1 + $0x130] sm:$0xf]
  %v115 = vld [vmem:[%s1 + $0x134] sm:$0xf]
  %v116 = vld [vmem:[%s1 + $0x138] sm:$0xf]
  %v117 = vld [vmem:[%s1 + $0x13c] sm:$0xf]
  %v118 = vld [vmem:[%s1 + $0x140] sm:$0xf]
  %v119 = vld [vmem:[%s1 + $0x144] sm:$0xf]
  %v120 = vld [vmem:[%s1 + $0x148] sm:$0xf]
  %v121 = vld [vmem:[%s1 + $0x14c] sm:$0xf]
  %v122 = vld [vmem:[%s1 + $0x150] sm:$0xf]
  %v123 = vld [vmem:[%s1 + $0x154] sm:$0xf]
  %v124 = vld [vmem:[%s1 + $0x158] sm:$0xf]
  %v125 = vld [vmem:[%s1 + $0x15c] sm:$0xf]
  %v126 = vld [vmem:[%s1 + $0x160] sm:$0xf]
  %v127 = vld [vmem:[%s1 + $0x164] sm:$0xf]
  %v128 = vld [vmem:[%s1 + $0x168] sm:$0xf]
  %v129 = vld [vmem:[%s1 + $0x16c] sm:$0xf]
  %v130 = vld [vmem:[%s1 + $0x170] sm:$0xf]
  %v131 = vld [vmem:[%s1 + $0x174] sm:$0xf]
  %v132 = vld [vmem:[%s1 + $0x178] sm:$0xf]
  %v133 = vld [vmem:[%s1 + $0x17c] sm:$0xf]
  %v134 = vld [vmem:[%s1 + $0x180] sm:$0xf]
  %v135 = vld [vmem:[%s1 + $0x184] sm:$0xf]
  %v136 = vld [vmem:[%s1 + $0x188] sm:$0xf]
  %v137 = vld [vmem:[%s1 + $0x18c] sm:$0xf]
  %v138 = vld [vmem:[%s1 + $0x190] sm:$0xf]
  %v139 = vld [vmem:[%s1 + $0x194] sm:$0xf]
  %v140 = vld [vmem:[%s1 + $0x198] sm:$0xf]
  %v141 = vld [vmem:[%s1 + $0x19c] sm:$0xf]
  %v142 = vld [vmem:[%s1 + $0x1a0] sm:$0xf]
  %v143 = vld [vmem:[%s1 + $0x1a4] sm:$0xf]
  %v144 = vld [vmem:[%s1 + $0x1a8] sm:$0xf]
  %v145 = vld [vmem:[%s1 + $0x1ac] sm:$0xf]
  %v146 = vld [vmem:[%s1 + $0x1b0] sm:$0xf]
  %v147 = vld [vmem:[%s1 + $0x1b4] sm:$0xf]
  %v148 = vld [vmem:[%s1 + $0x1b8] sm:$0xf]
  %v149 = vld [vmem:[%s1 + $0x1bc] sm:$0xf]
  %v150 = vld [vmem:[%s1 + $0x1c0] sm:$0xf]
  %v151 = vld [vmem:[%s1 + $0x1c4] sm:$0xf]
  %v152 = vld [vmem:[%s1 + $0x1c8] sm:$0xf]
  %v153 = vld [vmem:[%s1 + $0x1cc] sm:$0xf]
  %v154 = vld [vmem:[%s1 + $0x1d0] sm:$0xf]
  %v155 = vld [vmem:[%s1 + $0x1d4] sm:$0xf]
  %v156 = vld [vmem:[%s1 + $0x1d8] sm:$0xf]
  %v157 = vld [vmem:[%s1 + $0x1dc] sm:$0xf]
  %v158 = vld [vmem:[%s1 + $0x1e0] sm:$0xf]
  %v159 = vld [vmem:[%s1 + $0x1e4] sm:$0xf]
  %v160 = vld [vmem:[%s1 + $0x1e8] sm:$0xf]
  %v161 = vld [vmem:[%s1 + $0x1ec] sm:$0xf]
  %v162 = vld [vmem:[%s1 + $0x1f0] sm:$0xf]
  %v163 = vld [vmem:[%s1 + $0x1f4] sm:$0xf]
  %v164 = vld [vmem:[%s1 + $0x1f8] sm:$0xf]
  %v165 = vld [vmem:[%s1 + $0x1fc] sm:$0xf]
  %v166 = vld [vmem:[%s1 + $0x200] sm:$0xf]
  %v167 = vld [vmem:[%s1 + $0x204] sm:$0xf]
  %v168 = vld [vmem:[%s1 + $0x208] sm:$0xf]
  %v169 = vld [vmem:[%s1 + $0x20c] sm:$0xf]
  %v170 = vld [vmem:[%s1 + $0x210] sm:$0xf]
  %v171 = vld [vmem:[%s1 + $0x214] sm:$0xf]
  %v172 = vld [vmem:[%s1 + $0x218] sm:$0xf]
  %v173 = vld [vmem:[%s1 + $0x21c] sm:$0xf]
  %v174 = vld [vmem:[%s1 + $0x220] sm:$0xf]
  %v175 = vld [vmem:[%s1 + $0x224] sm:$0xf]
  %v176 = vld [vmem:[%s1 + $0x228] sm:$0xf]
  %v177 = vld [vmem:[%s1 + $0x22c] sm:$0xf]
  %v178 = vld [vmem:[%s1 + $0x230] sm:$0xf]
  %v179 = vld [vmem:[%s1 + $0x234] sm:$0xf]
  %v180 = vld [vmem:[%s1 + $0x238] sm:$0xf]
  %v181 = vld [vmem:[%s1 + $0x23c] sm:$0xf]
  %v202 = vunpack.c.l.b16 %v18
  %v203 = vunpack.c.h.b16 %v18
  %v204 = vunpack.c.l.b16 %v19
  %v205 = vunpack.c.h.b16 %v19
  %v206 = vunpack.c.l.b16 %v20
  %v207 = vunpack.c.h.b16 %v20
  %v208 = vunpack.c.l.b16 %v21
  %v209 = vunpack.c.h.b16 %v21
  %v210 = vunpack.c.l.b16 %v22
  %v211 = vunpack.c.l.b16 %v23
  %v212 = vunpack.c.h.b16 %v23
  %v213 = vunpack.c.l.b16 %v24
  %v214 = vunpack.c.h.b16 %v24
  %v215 = vunpack.c.l.b16 %v25
  %v216 = vunpack.c.h.b16 %v25
  %v217 = vunpack.c.l.b16 %v26
  %v218 = vunpack.c.h.b16 %v26
  %v219 = vunpack.c.l.b16 %v27
  %v220 = vunpack.c.l.b16 %v28
  %v221 = vunpack.c.h.b16 %v28
  %v222 = vunpack.c.l.b16 %v29
  %v223 = vunpack.c.h.b16 %v29
  %v224 = vunpack.c.l.b16 %v30
  %v225 = vunpack.c.h.b16 %v30
  %v226 = vunpack.c.l.b16 %v31
  %v227 = vunpack.c.h.b16 %v31
  %v228 = vunpack.c.l.b16 %v32
  %v229 = vunpack.c.l.b16 %v33
  %v230 = vunpack.c.h.b16 %v33
  %v231 = vunpack.c.l.b16 %v34
  %v232 = vunpack.c.h.b16 %v34
  %v233 = vunpack.c.l.b16 %v35
  %v234 = vunpack.c.h.b16 %v35
  %v235 = vunpack.c.l.b16 %v36
  %v236 = vunpack.c.h.b16 %v36
  %v237 = vunpack.c.l.b16 %v37
  %v238 = vpack.c.b16 %v211, %v202
  %v239 = vpack.c.b16 %v212, %v203
  %v240 = vpack.c.b16 %v213, %v204
  %v241 = vpack.c.b16 %v214, %v205
  %v242 = vpack.c.b16 %v215, %v206
  %v243 = vpack.c.b16 %v216, %v207
  %v244 = vpack.c.b16 %v217, %v208
  %v245 = vpack.c.b16 %v218, %v209
  %v246 = vpack.c.b16 %v219, %v210
  %v247 = vpack.c.b16 %v229, %v220
  %v248 = vpack.c.b16 %v230, %v221
  %v249 = vpack.c.b16 %v231, %v222
  %v250 = vpack.c.b16 %v232, %v223
  %v251 = vpack.c.b16 %v233, %v224
  %v252 = vpack.c.b16 %v234, %v225
  %v253 = vpack.c.b16 %v235, %v226
  %v254 = vpack.c.b16 %v236, %v227
  %v255 = vpack.c.b16 %v237, %v228
  %v418 = vunpack.c.l.b16 %v38
  %v419 = vunpack.c.l.b16 %v39
  %v420 = vunpack.c.l.b16 %v40
  %v421 = vunpack.c.l.b16 %v41
  %v422 = vunpack.c.l.b16 %v42
  %v423 = vunpack.c.l.b16 %v43
  %v424 = vunpack.c.l.b16 %v44
  %v425 = vunpack.c.l.b16 %v45
  %v426 = vunpack.c.l.b16 %v46
  %v427 = vunpack.c.l.b16 %v47
  %v428 = vunpack.c.l.b16 %v48
  %v429 = vunpack.c.l.b16 %v49
  %v430 = vunpack.c.l.b16 %v50
  %v431 = vunpack.c.l.b16 %v51
  %v432 = vunpack.c.l.b16 %v52
  %v433 = vunpack.c.l.b16 %v53
  %v434 = vunpack.c.l.b16 %v54
  %v435 = vunpack.c.l.b16 %v55
  %v436 = vunpack.c.l.b16 %v56
  %v437 = vunpack.c.l.b16 %v57
  %v438 = vunpack.c.l.b16 %v58
  %v439 = vunpack.c.l.b16 %v59
  %v440 = vunpack.c.l.b16 %v60
  %v441 = vunpack.c.l.b16 %v61
  %v442 = vunpack.c.l.b16 %v62
  %v443 = vunpack.c.l.b16 %v63
  %v444 = vunpack.c.l.b16 %v64
  %v445 = vunpack.c.l.b16 %v65
  %v446 = vunpack.c.l.b16 %v66
  %v447 = vunpack.c.l.b16 %v67
  %v448 = vunpack.c.l.b16 %v68
  %v449 = vunpack.c.l.b16 %v69
  %v450 = vunpack.c.l.b16 %v70
  %v451 = vunpack.c.l.b16 %v71
  %v452 = vunpack.c.l.b16 %v72
  %v453 = vunpack.c.l.b16 %v73
  %v454 = vunpack.c.l.b16 %v74
  %v455 = vunpack.c.l.b16 %v75
  %v456 = vunpack.c.l.b16 %v76
  %v457 = vunpack.c.l.b16 %v77
  %v458 = vunpack.c.l.b16 %v78
  %v459 = vunpack.c.l.b16 %v79
  %v460 = vunpack.c.l.b16 %v80
  %v461 = vunpack.c.l.b16 %v81
  %v462 = vunpack.c.l.b16 %v82
  %v463 = vunpack.c.l.b16 %v83
  %v464 = vunpack.c.l.b16 %v84
  %v465 = vunpack.c.l.b16 %v85
  %v466 = vunpack.c.l.b16 %v86
  %v467 = vunpack.c.l.b16 %v87
  %v468 = vunpack.c.l.b16 %v88
  %v469 = vunpack.c.l.b16 %v89
  %v470 = vunpack.c.l.b16 %v90
  %v471 = vunpack.c.l.b16 %v91
  %v472 = vunpack.c.l.b16 %v92
  %v473 = vunpack.c.l.b16 %v93
  %v474 = vunpack.c.l.b16 %v94
  %v475 = vunpack.c.l.b16 %v95
  %v476 = vunpack.c.l.b16 %v96
  %v477 = vunpack.c.l.b16 %v97
  %v478 = vunpack.c.l.b16 %v98
  %v479 = vunpack.c.l.b16 %v99
  %v480 = vunpack.c.l.b16 %v100
  %v481 = vunpack.c.l.b16 %v101
  %v482 = vunpack.c.l.b16 %v102
  %v483 = vunpack.c.l.b16 %v103
  %v484 = vunpack.c.l.b16 %v104
  %v485 = vunpack.c.l.b16 %v105
  %v486 = vunpack.c.l.b16 %v106
  %v487 = vunpack.c.l.b16 %v107
  %v488 = vunpack.c.l.b16 %v108
  %v489 = vunpack.c.l.b16 %v109
  %v490 = vunpack.c.l.b16 %v110
  %v491 = vunpack.c.l.b16 %v111
  %v492 = vunpack.c.l.b16 %v112
  %v493 = vunpack.c.l.b16 %v113
  %v494 = vunpack.c.l.b16 %v114
  %v495 = vunpack.c.l.b16 %v115
  %v496 = vunpack.c.l.b16 %v116
  %v497 = vunpack.c.l.b16 %v117
  %v498 = vunpack.c.l.b16 %v118
  %v499 = vunpack.c.l.b16 %v119
  %v500 = vunpack.c.l.b16 %v120
  %v501 = vunpack.c.l.b16 %v121
  %v502 = vunpack.c.l.b16 %v122
  %v503 = vunpack.c.l.b16 %v123
  %v504 = vunpack.c.l.b16 %v124
  %v505 = vunpack.c.l.b16 %v125
  %v506 = vunpack.c.l.b16 %v126
  %v507 = vunpack.c.l.b16 %v127
  %v508 = vunpack.c.l.b16 %v128
  %v509 = vunpack.c.l.b16 %v129
  %v510 = vunpack.c.l.b16 %v130
  %v511 = vunpack.c.l.b16 %v131
  %v512 = vunpack.c.l.b16 %v132
  %v513 = vunpack.c.l.b16 %v133
  %v514 = vunpack.c.l.b16 %v134
  %v515 = vunpack.c.l.b16 %v135
  %v516 = vunpack.c.l.b16 %v136
  %v517 = vunpack.c.l.b16 %v137
  %v518 = vunpack.c.l.b16 %v138
  %v519 = vunpack.c.l.b16 %v139
  %v520 = vunpack.c.l.b16 %v140
  %v521 = vunpack.c.l.b16 %v141
  %v522 = vunpack.c.l.b16 %v142
  %v523 = vunpack.c.l.b16 %v143
  %v524 = vunpack.c.l.b16 %v144
  %v525 = vunpack.c.l.b16 %v145
  %v526 = vunpack.c.l.b16 %v146
  %v527 = vunpack.c.l.b16 %v147
  %v528 = vunpack.c.l.b16 %v148
  %v529 = vunpack.c.l.b16 %v149
  %v530 = vunpack.c.l.b16 %v150
  %v531 = vunpack.c.l.b16 %v151
  %v532 = vunpack.c.l.b16 %v152
  %v533 = vunpack.c.l.b16 %v153
  %v534 = vunpack.c.l.b16 %v154
  %v535 = vunpack.c.l.b16 %v155
  %v536 = vunpack.c.l.b16 %v156
  %v537 = vunpack.c.l.b16 %v157
  %v538 = vunpack.c.l.b16 %v158
  %v539 = vunpack.c.l.b16 %v159
  %v540 = vunpack.c.l.b16 %v160
  %v541 = vunpack.c.l.b16 %v161
  %v542 = vunpack.c.l.b16 %v162
  %v543 = vunpack.c.l.b16 %v163
  %v544 = vunpack.c.l.b16 %v164
  %v545 = vunpack.c.l.b16 %v165
  %v546 = vunpack.c.l.b16 %v166
  %v547 = vunpack.c.l.b16 %v167
  %v548 = vunpack.c.l.b16 %v168
  %v549 = vunpack.c.l.b16 %v169
  %v550 = vunpack.c.l.b16 %v170
  %v551 = vunpack.c.l.b16 %v171
  %v552 = vunpack.c.l.b16 %v172
  %v553 = vunpack.c.l.b16 %v173
  %v554 = vunpack.c.l.b16 %v174
  %v555 = vunpack.c.l.b16 %v175
  %v556 = vunpack.c.l.b16 %v176
  %v557 = vunpack.c.l.b16 %v177
  %v558 = vunpack.c.l.b16 %v178
  %v559 = vunpack.c.l.b16 %v179
  %v560 = vunpack.c.l.b16 %v180
  %v561 = vunpack.c.l.b16 %v181
  %v562 = vpack.c.b16 %v419, %v418
  %v563 = vpack.c.b16 %v421, %v420
  %v564 = vpack.c.b16 %v423, %v422
  %v565 = vpack.c.b16 %v425, %v424
  %v566 = vpack.c.b16 %v427, %v426
  %v567 = vpack.c.b16 %v429, %v428
  %v568 = vpack.c.b16 %v431, %v430
  %v569 = vpack.c.b16 %v433, %v432
  %v570 = vpack.c.b16 %v435, %v434
  %v571 = vpack.c.b16 %v437, %v436
  %v572 = vpack.c.b16 %v439, %v438
  %v573 = vpack.c.b16 %v441, %v440
  %v574 = vpack.c.b16 %v443, %v442
  %v575 = vpack.c.b16 %v445, %v444
  %v576 = vpack.c.b16 %v447, %v446
  %v577 = vpack.c.b16 %v449, %v448
  %v578 = vpack.c.b16 %v451, %v450
  %v579 = vpack.c.b16 %v453, %v452
  %v580 = vpack.c.b16 %v455, %v454
  %v581 = vpack.c.b16 %v457, %v456
  %v582 = vpack.c.b16 %v459, %v458
  %v583 = vpack.c.b16 %v461, %v460
  %v584 = vpack.c.b16 %v463, %v462
  %v585 = vpack.c.b16 %v465, %v464
  %v586 = vpack.c.b16 %v467, %v466
  %v587 = vpack.c.b16 %v469, %v468
  %v588 = vpack.c.b16 %v471, %v470
  %v589 = vpack.c.b16 %v473, %v472
  %v590 = vpack.c.b16 %v475, %v474
  %v591 = vpack.c.b16 %v477, %v476
  %v592 = vpack.c.b16 %v479, %v478
  %v593 = vpack.c.b16 %v481, %v480
  %v594 = vpack.c.b16 %v483, %v482
  %v595 = vpack.c.b16 %v485, %v484
  %v596 = vpack.c.b16 %v487, %v486
  %v597 = vpack.c.b16 %v489, %v488
  %v598 = vpack.c.b16 %v491, %v490
  %v599 = vpack.c.b16 %v493, %v492
  %v600 = vpack.c.b16 %v495, %v494
  %v601 = vpack.c.b16 %v497, %v496
  %v602 = vpack.c.b16 %v499, %v498
  %v603 = vpack.c.b16 %v501, %v500
  %v604 = vpack.c.b16 %v503, %v502
  %v605 = vpack.c.b16 %v505, %v504
  %v606 = vpack.c.b16 %v507, %v506
  %v607 = vpack.c.b16 %v509, %v508
  %v608 = vpack.c.b16 %v511, %v510
  %v609 = vpack.c.b16 %v513, %v512
  %v610 = vpack.c.b16 %v515, %v514
  %v611 = vpack.c.b16 %v517, %v516
  %v612 = vpack.c.b16 %v519, %v518
  %v613 = vpack.c.b16 %v521, %v520
  %v614 = vpack.c.b16 %v523, %v522
  %v615 = vpack.c.b16 %v525, %v524
  %v616 = vpack.c.b16 %v527, %v526
  %v617 = vpack.c.b16 %v529, %v528
  %v618 = vpack.c.b16 %v531, %v530
  %v619 = vpack.c.b16 %v533, %v532
  %v620 = vpack.c.b16 %v535, %v534
  %v621 = vpack.c.b16 %v537, %v536
  %v622 = vpack.c.b16 %v539, %v538
  %v623 = vpack.c.b16 %v541, %v540
  %v624 = vpack.c.b16 %v543, %v542
  %v625 = vpack.c.b16 %v545, %v544
  %v626 = vpack.c.b16 %v547, %v546
  %v627 = vpack.c.b16 %v549, %v548
  %v628 = vpack.c.b16 %v551, %v550
  %v629 = vpack.c.b16 %v553, %v552
  %v630 = vpack.c.b16 %v555, %v554
  %v631 = vpack.c.b16 %v557, %v556
  %v632 = vpack.c.b16 %v559, %v558
  %v633 = vpack.c.b16 %v561, %v560
  %706 = vmatprep.subr.bf16.mxu0 0
  %707 = vmatpush1.bf16.msra.mxu0 %v562
  %708 = vmatprep.subr.bf16.mxu0 0
  %709 = vmatpush1.bf16.msra.mxu0 %v563
  %710 = vmatprep.subr.bf16.mxu0 0
  %711 = vmatpush1.bf16.msra.mxu0 %v564
  %712 = vmatprep.subr.bf16.mxu0 0
  %713 = vmatpush1.bf16.msra.mxu0 %v565
  %714 = vmatprep.subr.bf16.mxu0 0
  %715 = vmatpush1.bf16.msra.mxu0 %v566
  %716 = vmatprep.subr.bf16.mxu0 0
  %717 = vmatpush1.bf16.msra.mxu0 %v567
  %718 = vmatprep.subr.bf16.mxu0 0
  %719 = vmatpush1.bf16.msra.mxu0 %v568
  %720 = vmatprep.subr.bf16.mxu0 0
  %721 = vmatpush1.bf16.msra.mxu0 %v569
  %722 = vmatprep.subr.bf16.mxu0 0
  %723 = vmatpush1.bf16.msra.mxu0 %v570
  %724 = vmatprep.subr.bf16.mxu0 0
  %725 = vmatpush1.bf16.msra.mxu0 %v571
  %726 = vmatprep.subr.bf16.mxu0 0
  %727 = vmatpush1.bf16.msra.mxu0 %v572
  %728 = vmatprep.subr.bf16.mxu0 0
  %729 = vmatpush1.bf16.msra.mxu0 %v573
  %730 = vmatprep.subr.bf16.mxu0 0
  %731 = vmatpush1.bf16.msra.mxu0 %v574
  %732 = vmatprep.subr.bf16.mxu0 0
  %733 = vmatpush1.bf16.msra.mxu0 %v575
  %734 = vmatprep.subr.bf16.mxu0 0
  %735 = vmatpush1.bf16.msra.mxu0 %v576
  %736 = vmatprep.subr.bf16.mxu0 0
  %737 = vmatpush1.bf16.msra.mxu0 %v577
  %738 = vmatprep.mubr.bf16.mxu0 %v239
  %739 = vmatmul.mubr.bf16.gmra.mrb[0].mxu0 %v238
  %v740 = vpop.f32.mrb[0].mxu0
  %v741 = vadd.f32 0.0, %v740
  %v742 = vpop.f32.mrb[0].mxu0
  %v743 = vpop.f32.mrb[0].mxu0
  %v744 = vadd.f32 0.0, %v743
  %v745 = vpop.f32.mrb[0].mxu0
  %746 = vmatprep.mubr.bf16.mxu0 %v248
  %747 = vmatmul.mubr.bf16.gmra.mrb[0].mxu0 %v247
  %v748 = vpop.f32.mrb[0].mxu0
  %v749 = vadd.f32 0.0, %v748
  %v750 = vpop.f32.mrb[0].mxu0
  %v751 = vpop.f32.mrb[0].mxu0
  %v752 = vadd.f32 0.0, %v751
  %v753 = vpop.f32.mrb[0].mxu0
  %754 = vdwg.mxu0
  %755 = vmatprep.subr.bf16.mxu0 0
  %756 = vmatpush1.bf16.msra.mxu0 %v578
  %757 = vmatprep.subr.bf16.mxu0 0
  %758 = vmatpush1.bf16.msra.mxu0 %v579
  %759 = vmatprep.subr.bf16.mxu0 0
  %760 = vmatpush1.bf16.msra.mxu0 %v580
  %761 = vmatprep.subr.bf16.mxu0 0
  %762 = vmatpush1.bf16.msra.mxu0 %v581
  %763 = vmatprep.subr.bf16.mxu0 0
  %764 = vmatpush1.bf16.msra.mxu0 %v582
  %765 = vmatprep.subr.bf16.mxu0 0
  %766 = vmatpush1.bf16.msra.mxu0 %v583
  %767 = vmatprep.subr.bf16.mxu0 0
  %768 = vmatpush1.bf16.msra.mxu0 %v584
  %769 = vmatprep.subr.bf16.mxu0 0
  %770 = vmatpush1.bf16.msra.mxu0 %v585
  %771 = vmatprep.subr.bf16.mxu0 0
  %772 = vmatpush1.bf16.msra.mxu0 %v586
  %773 = vmatprep.subr.bf16.mxu0 0
  %774 = vmatpush1.bf16.msra.mxu0 %v587
  %775 = vmatprep.subr.bf16.mxu0 0
  %776 = vmatpush1.bf16.msra.mxu0 %v588
  %777 = vmatprep.subr.bf16.mxu0 0
  %778 = vmatpush1.bf16.msra.mxu0 %v589
  %779 = vmatprep.subr.bf16.mxu0 0
  %780 = vmatpush1.bf16.msra.mxu0 %v590
  %781 = vmatprep.subr.bf16.mxu0 0
  %782 = vmatpush1.bf16.msra.mxu0 %v591
  %783 = vmatprep.subr.bf16.mxu0 0
  %784 = vmatpush1.bf16.msra.mxu0 %v592
  %785 = vmatprep.subr.bf16.mxu0 0
  %786 = vmatpush1.bf16.msra.mxu0 %v593
  %787 = vmatprep.mubr.bf16.mxu0 %v241
  %788 = vmatmul.mubr.bf16.gmra.mrb[0].mxu0 %v240
  %v789 = vpop.f32.mrb[0].mxu0
  %v790 = vadd.f32 %v741, %v789
  %v791 = vpop.f32.mrb[0].mxu0
  %v792 = vpop.f32.mrb[0].mxu0
  %v793 = vadd.f32 %v744, %v792
  %v794 = vpop.f32.mrb[0].mxu0
  %795 = vmatprep.mubr.bf16.mxu0 %v250
  %796 = vmatmul.mubr.bf16.gmra.mrb[0].mxu0 %v249
  %v797 = vpop.f32.mrb[0].mxu0
  %v798 = vadd.f32 %v749, %v797
  %v799 = vpop.f32.mrb[0].mxu0
  %v800 = vpop.f32.mrb[0].mxu0
  %v801 = vadd.f32 %v752, %v800
  %v802 = vpop.f32.mrb[0].mxu0
  %803 = vdwg.mxu0
  %804 = vmatprep.subr.bf16.mxu0 0
  %805 = vmatpush1.bf16.msra.mxu0 %v594
  %806 = vmatprep.subr.bf16.mxu0 0
  %807 = vmatpush1.bf16.msra.mxu0 %v595
  %808 = vmatprep.subr.bf16.mxu0 0
  %809 = vmatpush1.bf16.msra.mxu0 %v596
  %810 = vmatprep.subr.bf16.mxu0 0
  %811 = vmatpush1.bf16.msra.mxu0 %v597
  %812 = vmatprep.subr.bf16.mxu0 0
  %813 = vmatpush1.bf16.msra.mxu0 %v598
  %814 = vmatprep.subr.bf16.mxu0 0
  %815 = vmatpush1.bf16.msra.mxu0 %v599
  %816 = vmatprep.subr.bf16.mxu0 0
  %817 = vmatpush1.bf16.msra.mxu0 %v600
  %818 = vmatprep.subr.bf16.mxu0 0
  %819 = vmatpush1.bf16.msra.mxu0 %v601
  %820 = vmatprep.subr.bf16.mxu0 0
  %821 = vmatpush1.bf16.msra.mxu0 %v602
  %822 = vmatprep.subr.bf16.mxu0 0
  %823 = vmatpush1.bf16.msra.mxu0 %v603
  %824 = vmatprep.subr.bf16.mxu0 0
  %825 = vmatpush1.bf16.msra.mxu0 %v604
  %826 = vmatprep.subr.bf16.mxu0 0
  %827 = vmatpush1.bf16.msra.mxu0 %v605
  %828 = vmatprep.subr.bf16.mxu0 0
  %829 = vmatpush1.bf16.msra.mxu0 %v606
  %830 = vmatprep.subr.bf16.mxu0 0
  %831 = vmatpush1.bf16.msra.mxu0 %v607
  %832 = vmatprep.subr.bf16.mxu0 0
  %833 = vmatpush1.bf16.msra.mxu0 %v608
  %834 = vmatprep.subr.bf16.mxu0 0
  %835 = vmatpush1.bf16.msra.mxu0 %v609
  %836 = vmatprep.mubr.bf16.mxu0 %v243
  %837 = vmatmul.mubr.bf16.gmra.mrb[0].mxu0 %v242
  %v838 = vpop.f32.mrb[0].mxu0
  %v839 = vadd.f32 %v790, %v838
  %v840 = vpop.f32.mrb[0].mxu0
  %v841 = vpop.f32.mrb[0].mxu0
  %v842 = vadd.f32 %v793, %v841
  %v843 = vpop.f32.mrb[0].mxu0
  %844 = vmatprep.mubr.bf16.mxu0 %v252
  %845 = vmatmul.mubr.bf16.gmra.mrb[0].mxu0 %v251
  %v846 = vpop.f32.mrb[0].mxu0
  %v847 = vadd.f32 %v798, %v846
  %v848 = vpop.f32.mrb[0].mxu0
  %v849 = vpop.f32.mrb[0].mxu0
  %v850 = vadd.f32 %v801, %v849
  %v851 = vpop.f32.mrb[0].mxu0
  %852 = vdwg.mxu0
  %853 = vmatprep.subr.bf16.mxu0 0
  %854 = vmatpush1.bf16.msra.mxu0 %v610
  %855 = vmatprep.subr.bf16.mxu0 0
  %856 = vmatpush1.bf16.msra.mxu0 %v611
  %857 = vmatprep.subr.bf16.mxu0 0
  %858 = vmatpush1.bf16.msra.mxu0 %v612
  %859 = vmatprep.subr.bf16.mxu0 0
  %860 = vmatpush1.bf16.msra.mxu0 %v613
  %861 = vmatprep.subr.bf16.mxu0 0
  %862 = vmatpush1.bf16.msra.mxu0 %v614
  %863 = vmatprep.subr.bf16.mxu0 0
  %864 = vmatpush1.bf16.msra.mxu0 %v615
  %865 = vmatprep.subr.bf16.mxu0 0
  %866 = vmatpush1.bf16.msra.mxu0 %v616
  %867 = vmatprep.subr.bf16.mxu0 0
  %868 = vmatpush1.bf16.msra.mxu0 %v617
  %869 = vmatprep.subr.bf16.mxu0 0
  %870 = vmatpush1.bf16.msra.mxu0 %v618
  %871 = vmatprep.subr.bf16.mxu0 0
  %872 = vmatpush1.bf16.msra.mxu0 %v619
  %873 = vmatprep.subr.bf16.mxu0 0
  %874 = vmatpush1.bf16.msra.mxu0 %v620
  %875 = vmatprep.subr.bf16.mxu0 0
  %876 = vmatpush1.bf16.msra.mxu0 %v621
  %877 = vmatprep.subr.bf16.mxu0 0
  %878 = vmatpush1.bf16.msra.mxu0 %v622
  %879 = vmatprep.subr.bf16.mxu0 0
  %880 = vmatpush1.bf16.msra.mxu0 %v623
  %881 = vmatprep.subr.bf16.mxu0 0
  %882 = vmatpush1.bf16.msra.mxu0 %v624
  %883 = vmatprep.subr.bf16.mxu0 0
  %884 = vmatpush1.bf16.msra.mxu0 %v625
  %885 = vmatprep.mubr.bf16.mxu0 %v245
  %886 = vmatmul.mubr.bf16.gmra.mrb[0].mxu0 %v244
  %v887 = vpop.f32.mrb[0].mxu0
  %v888 = vadd.f32 %v839, %v887
  %v889 = vpop.f32.mrb[0].mxu0
  %v890 = vpop.f32.mrb[0].mxu0
  %v891 = vadd.f32 %v842, %v890
  %v892 = vpop.f32.mrb[0].mxu0
  %893 = vmatprep.mubr.bf16.mxu0 %v254
  %894 = vmatmul.mubr.bf16.gmra.mrb[0].mxu0 %v253
  %v895 = vpop.f32.mrb[0].mxu0
  %v896 = vadd.f32 %v847, %v895
  %v897 = vpop.f32.mrb[0].mxu0
  %v898 = vpop.f32.mrb[0].mxu0
  %v899 = vadd.f32 %v850, %v898
  %v900 = vpop.f32.mrb[0].mxu0
  %901 = vdwg.mxu0
  %902 = vmatprep.subr.bf16.mxu0 0
  %903 = vmatpush1.bf16.msra.mxu0 %v626
  %904 = vmatprep.subr.bf16.mxu0 0
  %905 = vmatpush1.bf16.msra.mxu0 %v627
  %906 = vmatprep.subr.bf16.mxu0 0
  %907 = vmatpush1.bf16.msra.mxu0 %v628
  %908 = vmatprep.subr.bf16.mxu0 0
  %909 = vmatpush1.bf16.msra.mxu0 %v629
  %910 = vmatprep.subr.bf16.mxu0 0
  %911 = vmatpush1.bf16.msra.mxu0 %v630
  %912 = vmatprep.subr.bf16.mxu0 0
  %913 = vmatpush1.bf16.msra.mxu0 %v631
  %914 = vmatprep.subr.bf16.mxu0 0
  %915 = vmatpush1.bf16.msra.mxu0 %v632
  %916 = vmatprep.subr.bf16.mxu0 0
  %917 = vmatpush1.bf16.msra.mxu0 %v633
  %918 = vmatprep.subr.bf16.mxu0 0
  %919 = vmatpush1.bf16.msra.mxu0 0
  %920 = vmatprep.subr.bf16.mxu0 0
  %921 = vmatpush1.bf16.msra.mxu0 0
  %922 = vmatprep.subr.bf16.mxu0 0
  %923 = vmatpush1.bf16.msra.mxu0 0
  %924 = vmatprep.subr.bf16.mxu0 0
  %925 = vmatpush1.bf16.msra.mxu0 0
  %926 = vmatprep.subr.bf16.mxu0 0
  %927 = vmatpush1.bf16.msra.mxu0 0
  %928 = vmatprep.subr.bf16.mxu0 0
  %929 = vmatpush1.bf16.msra.mxu0 0
  %930 = vmatprep.subr.bf16.mxu0 0
  %931 = vmatpush1.bf16.msra.mxu0 0
  %932 = vmatprep.subr.bf16.mxu0 0
  %933 = vmatpush1.bf16.msra.mxu0 0
  %934 = vmatprep.mubr.bf16.mxu0 0
  %935 = vmatmul.mubr.bf16.gmra.mrb[0].mxu0 %v246
  %v936 = vpop.f32.mrb[0].mxu0
  %v937 = vadd.f32 %v888, %v936
  %v938 = vpop.f32.mrb[0].mxu0
  %v939 = vpop.f32.mrb[0].mxu0
  %v940 = vadd.f32 %v891, %v939
  %v941 = vpop.f32.mrb[0].mxu0
  %942 = vmatprep.mubr.bf16.mxu0 0
  %943 = vmatmul.mubr.bf16.gmra.mrb[0].mxu0 %v255
  %v944 = vpop.f32.mrb[0].mxu0
  %v945 = vadd.f32 %v896, %v944
  %v946 = vpop.f32.mrb[0].mxu0
  %v947 = vpop.f32.mrb[0].mxu0
  %v948 = vadd.f32 %v899, %v947
  %v949 = vpop.f32.mrb[0].mxu0
  %950 = vdwg.mxu0
  %v951 = vld [vmem:[%s2] sm:$0x1]
  %v953 = vlaneseq
  %v954 = vshrl.u32 %v953, 7
  %v955 = vsub.s32 0, %v954
  %v956 = vrot.slane %v951, %v955
  %v958 = vmul.f32 %v937, %v956
  %v959 = vmul.f32 %v940, %v956
  %v960 = vmul.f32 %v945, %v956
  %v961 = vmul.f32 %v948, %v956
  %v962 = vld [vmem:[%s3] sm:$0x1]
  %v964 = vlaneseq
  %v965 = vshrl.u32 %v964, 7
  %v966 = vsub.s32 0, %v965
  %v967 = vrot.slane %v962, %v966
  %v969 = vadd.f32 %v958, %v967
  %v970 = vadd.f32 %v959, %v967
  %v971 = vadd.f32 %v960, %v967
  %v972 = vadd.f32 %v961, %v967
  %v973 = vmax.f32 %v969, 0.0
  %v974 = vmax.f32 %v970, 0.0
  %v975 = vmax.f32 %v971, 0.0
  %v976 = vmax.f32 %v972, 0.0
  %977 = vst [vmem:[%s4] sm:$0xff] %v973
  %978 = vst [vmem:[%s4 + $0x8] sm:$0xff] %v974
  %979 = vst [vmem:[%s4 + $0x10] sm:$0xff] %v975
  %980 = vst [vmem:[%s4 + $0x18] sm:$0xff] %v976
  // Predicated region
  $region18: #{_lambda_.19} parent=0 // pred_check
    _
  $region19: #{_lambda_.19} parent=0 // pred_check_branch
    %982 = sbr.rel (0) target = $region21
  $region20: #{_lambda_.19} parent=0 // pred_region
    _
  $region21: #{_lambda_.19} parent=0 // pred_fallthru
    _
  // Predicated region
  $region22: #{_lambda_.19} parent=0 // pred_check
    _
  $region23: #{_lambda_.19} parent=0 // pred_check_branch
    %984 = sbr.rel (0) target = $region25
  $region24: #{_lambda_.19} parent=0 // pred_region
    _
  $region25: #{_lambda_.19} parent=0 // pred_fallthru
    _

// kernel: _lambda_.20
$region0: #{_lambda_.20}
  #allocation0 [shape = 'u32[]', space=smem, size = 0x4, offset = 0x4, fixed_abs, tag = 'smem constant byte address 0x4 - core index']
  #allocation1 [shape = 'u32[144,128]{1,0:T(1,128)}', space=vmem, size = 0x12000, scoped, tag = 'internal scratch']
  %s0 = inlined_call_operand.vmem [shape: bf16[32,1152], index: 0, kind: input, shape index: {}]
  %s1 = inlined_call_operand.vmem [shape: bf16[1152,128], index: 1, kind: input, shape index: {}]
  %s2 = inlined_call_operand.vmem [shape: bf16[32,128], index: 2, kind: input, shape index: {}]
  %s3 = inlined_call_operand.vmem [shape: bf16[128,128], index: 3, kind: input, shape index: {}]
  %s4 = inlined_call_operand.vmem [shape: f32[32,128], index: 4, kind: output, shape index: {}]
  %s5 = sld [smem:[#allocation0]]
  $region26: #{_lambda_.20} parent=0
    _
  %s7 = ssub.s32 1, %s5
  %s8 = scalar_select 0, %s7, %s5
  // Predicated region
  $region2: #{_lambda_.20} parent=0 // pred_check
    _
  $region3: #{_lambda_.20} parent=0 // pred_check_branch
    %10 = sbr.rel (0) target = $region5
  $region4: #{_lambda_.20} parent=0 // pred_region
    _
  $region5: #{_lambda_.20} parent=0 // pred_fallthru
    _
  // Predicated region
  $region6: #{_lambda_.20} parent=0 // pred_check
    _
  $region7: #{_lambda_.20} parent=0 // pred_check_branch
    %12 = sbr.rel (0) target = $region9
  $region8: #{_lambda_.20} parent=0 // pred_region
    _
  $region9: #{_lambda_.20} parent=0 // pred_fallthru
    _
  // Predicated region
  $region10: #{_lambda_.20} parent=0 // pred_check
    _
  $region11: #{_lambda_.20} parent=0 // pred_check_branch
    %14 = sbr.rel (0) target = $region13
  $region12: #{_lambda_.20} parent=0 // pred_region
    _
  $region13: #{_lambda_.20} parent=0 // pred_fallthru
    _
  // Predicated region
  $region14: #{_lambda_.20} parent=0 // pred_check
    _
  $region15: #{_lambda_.20} parent=0 // pred_check_branch
    %16 = sbr.rel (0) target = $region17
  $region16: #{_lambda_.20} parent=0 // pred_region
    _
  $region17: #{_lambda_.20} parent=0 // pred_fallthru
    _
  %v18 = vld [vmem:[%s0] sm:$0xff]
  %v19 = vld [vmem:[%s0 + $0x8] sm:$0xff]
  %v20 = vld [vmem:[%s0 + $0x10] sm:$0xff]
  %v21 = vld [vmem:[%s0 + $0x18] sm:$0xff]
  %v22 = vld [vmem:[%s0 + $0x20] sm:$0xf]
  %v23 = vld [vmem:[%s0 + $0x24] sm:$0xff]
  %v24 = vld [vmem:[%s0 + $0x2c] sm:$0xff]
  %v25 = vld [vmem:[%s0 + $0x34] sm:$0xff]
  %v26 = vld [vmem:[%s0 + $0x3c] sm:$0xff]
  %v27 = vld [vmem:[%s0 + $0x44] sm:$0xf]
  %v28 = vld [vmem:[%s0 + $0x48] sm:$0xff]
  %v29 = vld [vmem:[%s0 + $0x50] sm:$0xff]
  %v30 = vld [vmem:[%s0 + $0x58] sm:$0xff]
  %v31 = vld [vmem:[%s0 + $0x60] sm:$0xff]
  %v32 = vld [vmem:[%s0 + $0x68] sm:$0xf]
  %v33 = vld [vmem:[%s0 + $0x6c] sm:$0xff]
  %v34 = vld [vmem:[%s0 + $0x74] sm:$0xff]
  %v35 = vld [vmem:[%s0 + $0x7c] sm:$0xff]
  %v36 = vld [vmem:[%s0 + $0x84] sm:$0xff]
  %v37 = vld [vmem:[%s0 + $0x8c] sm:$0xf]
  %v38 = vld [vmem:[%s1] sm:$0xf]
  %v39 = vld [vmem:[%s1 + $0x4] sm:$0xf]
  %v40 = vld [vmem:[%s1 + $0x8] sm:$0xf]
  %v41 = vld [vmem:[%s1 + $0xc] sm:$0xf]
  %v42 = vld [vmem:[%s1 + $0x10] sm:$0xf]
  %v43 = vld [vmem:[%s1 + $0x14] sm:$0xf]
  %v44 = vld [vmem:[%s1 + $0x18] sm:$0xf]
  %v45 = vld [vmem:[%s1 + $0x1c] sm:$0xf]
  %v46 = vld [vmem:[%s1 + $0x20] sm:$0xf]
  %v47 = vld [vmem:[%s1 + $0x24] sm:$0xf]
  %v48 = vld [vmem:[%s1 + $0x28] sm:$0xf]
  %v49 = vld [vmem:[%s1 + $0x2c] sm:$0xf]
  %v50 = vld [vmem:[%s1 + $0x30] sm:$0xf]
  %v51 = vld [vmem:[%s1 + $0x34] sm:$0xf]
  %v52 = vld [vmem:[%s1 + $0x38] sm:$0xf]
  %v53 = vld [vmem:[%s1 + $0x3c] sm:$0xf]
  %v54 = vld [vmem:[%s1 + $0x40] sm:$0xf]
  %v55 = vld [vmem:[%s1 + $0x44] sm:$0xf]
  %v56 = vld [vmem:[%s1 + $0x48] sm:$0xf]
  %v57 = vld [vmem:[%s1 + $0x4c] sm:$0xf]
  %v58 = vld [vmem:[%s1 + $0x50] sm:$0xf]
  %v59 = vld [vmem:[%s1 + $0x54] sm:$0xf]
  %v60 = vld [vmem:[%s1 + $0x58] sm:$0xf]
  %v61 = vld [vmem:[%s1 + $0x5c] sm:$0xf]
  %v62 = vld [vmem:[%s1 + $0x60] sm:$0xf]
  %v63 = vld [vmem:[%s1 + $0x64] sm:$0xf]
  %v64 = vld [vmem:[%s1 + $0x68] sm:$0xf]
  %v65 = vld [vmem:[%s1 + $0x6c] sm:$0xf]
  %v66 = vld [vmem:[%s1 + $0x70] sm:$0xf]
  %v67 = vld [vmem:[%s1 + $0x74] sm:$0xf]
  %v68 = vld [vmem:[%s1 + $0x78] sm:$0xf]
  %v69 = vld [vmem:[%s1 + $0x7c] sm:$0xf]
  %v70 = vld [vmem:[%s1 + $0x80] sm:$0xf]
  %v71 = vld [vmem:[%s1 + $0x84] sm:$0xf]
  %v72 = vld [vmem:[%s1 + $0x88] sm:$0xf]
  %v73 = vld [vmem:[%s1 + $0x8c] sm:$0xf]
  %v74 = vld [vmem:[%s1 + $0x90] sm:$0xf]
  %v75 = vld [vmem:[%s1 + $0x94] sm:$0xf]
  %v76 = vld [vmem:[%s1 + $0x98] sm:$0xf]
  %v77 = vld [vmem:[%s1 + $0x9c] sm:$0xf]
  %v78 = vld [vmem:[%s1 + $0xa0] sm:$0xf]
  %v79 = vld [vmem:[%s1 + $0xa4] sm:$0xf]
  %v80 = vld [vmem:[%s1 + $0xa8] sm:$0xf]
  %v81 = vld [vmem:[%s1 + $0xac] sm:$0xf]
  %v82 = vld [vmem:[%s1 + $0xb0] sm:$0xf]
  %v83 = vld [vmem:[%s1 + $0xb4] sm:$0xf]
  %v84 = vld [vmem:[%s1 + $0xb8] sm:$0xf]
  %v85 = vld [vmem:[%s1 + $0xbc] sm:$0xf]
  %v86 = vld [vmem:[%s1 + $0xc0] sm:$0xf]
  %v87 = vld [vmem:[%s1 + $0xc4] sm:$0xf]
  %v88 = vld [vmem:[%s1 + $0xc8] sm:$0xf]
  %v89 = vld [vmem:[%s1 + $0xcc] sm:$0xf]
  %v90 = vld [vmem:[%s1 + $0xd0] sm:$0xf]
  %v91 = vld [vmem:[%s1 + $0xd4] sm:$0xf]
  %v92 = vld [vmem:[%s1 + $0xd8] sm:$0xf]
  %v93 = vld [vmem:[%s1 + $0xdc] sm:$0xf]
  %v94 = vld [vmem:[%s1 + $0xe0] sm:$0xf]
  %v95 = vld [vmem:[%s1 + $0xe4] sm:$0xf]
  %v96 = vld [vmem:[%s1 + $0xe8] sm:$0xf]
  %v97 = vld [vmem:[%s1 + $0xec] sm:$0xf]
  %v98 = vld [vmem:[%s1 + $0xf0] sm:$0xf]
  %v99 = vld [vmem:[%s1 + $0xf4] sm:$0xf]
  %v100 = vld [vmem:[%s1 + $0xf8] sm:$0xf]
  %v101 = vld [vmem:[%s1 + $0xfc] sm:$0xf]
  %v102 = vld [vmem:[%s1 + $0x100] sm:$0xf]
  %v103 = vld [vmem:[%s1 + $0x104] sm:$0xf]
  %v104 = vld [vmem:[%s1 + $0x108] sm:$0xf]
  %v105 = vld [vmem:[%s1 + $0x10c] sm:$0xf]
  %v106 = vld [vmem:[%s1 + $0x110] sm:$0xf]
  %v107 = vld [vmem:[%s1 + $0x114] sm:$0xf]
  %v108 = vld [vmem:[%s1 + $0x118] sm:$0xf]
  %v109 = vld [vmem:[%s1 + $0x11c] sm:$0xf]
  %v110 = vld [vmem:[%s1 + $0x120] sm:$0xf]
  %v111 = vld [vmem:[%s1 + $0x124] sm:$0xf]
  %v112 = vld [vmem:[%s1 + $0x128] sm:$0xf]
  %v113 = vld [vmem:[%s1 + $0x12c] sm:$0xf]
  %v114 = vld [vmem:[%s1 + $0x130] sm:$0xf]
  %v115 = vld [vmem:[%s1 + $0x134] sm:$0xf]
  %v116 = vld [vmem:[%s1 + $0x138] sm:$0xf]
  %v117 = vld [vmem:[%s1 + $0x13c] sm:$0xf]
  %v118 = vld [vmem:[%s1 + $0x140] sm:$0xf]
  %v119 = vld [vmem:[%s1 + $0x144] sm:$0xf]
  %v120 = vld [vmem:[%s1 + $0x148] sm:$0xf]
  %v121 = vld [vmem:[%s1 + $0x14c] sm:$0xf]
  %v122 = vld [vmem:[%s1 + $0x150] sm:$0xf]
  %v123 = vld [vmem:[%s1 + $0x154] sm:$0xf]
  %v124 = vld [vmem:[%s1 + $0x158] sm:$0xf]
  %v125 = vld [vmem:[%s1 + $0x15c] sm:$0xf]
  %v126 = vld [vmem:[%s1 + $0x160] sm:$0xf]
  %v127 = vld [vmem:[%s1 + $0x164] sm:$0xf]
  %v128 = vld [vmem:[%s1 + $0x168] sm:$0xf]
  %v129 = vld [vmem:[%s1 + $0x16c] sm:$0xf]
  %v130 = vld [vmem:[%s1 + $0x170] sm:$0xf]
  %v131 = vld [vmem:[%s1 + $0x174] sm:$0xf]
  %v132 = vld [vmem:[%s1 + $0x178] sm:$0xf]
  %v133 = vld [vmem:[%s1 + $0x17c] sm:$0xf]
  %v134 = vld [vmem:[%s1 + $0x180] sm:$0xf]
  %v135 = vld [vmem:[%s1 + $0x184] sm:$0xf]
  %v136 = vld [vmem:[%s1 + $0x188] sm:$0xf]
  %v137 = vld [vmem:[%s1 + $0x18c] sm:$0xf]
  %v138 = vld [vmem:[%s1 + $0x190] sm:$0xf]
  %v139 = vld [vmem:[%s1 + $0x194] sm:$0xf]
  %v140 = vld [vmem:[%s1 + $0x198] sm:$0xf]
  %v141 = vld [vmem:[%s1 + $0x19c] sm:$0xf]
  %v142 = vld [vmem:[%s1 + $0x1a0] sm:$0xf]
  %v143 = vld [vmem:[%s1 + $0x1a4] sm:$0xf]
  %v144 = vld [vmem:[%s1 + $0x1a8] sm:$0xf]
  %v145 = vld [vmem:[%s1 + $0x1ac] sm:$0xf]
  %v146 = vld [vmem:[%s1 + $0x1b0] sm:$0xf]
  %v147 = vld [vmem:[%s1 + $0x1b4] sm:$0xf]
  %v148 = vld [vmem:[%s1 + $0x1b8] sm:$0xf]
  %v149 = vld [vmem:[%s1 + $0x1bc] sm:$0xf]
  %v150 = vld [vmem:[%s1 + $0x1c0] sm:$0xf]
  %v151 = vld [vmem:[%s1 + $0x1c4] sm:$0xf]
  %v152 = vld [vmem:[%s1 + $0x1c8] sm:$0xf]
  %v153 = vld [vmem:[%s1 + $0x1cc] sm:$0xf]
  %v154 = vld [vmem:[%s1 + $0x1d0] sm:$0xf]
  %v155 = vld [vmem:[%s1 + $0x1d4] sm:$0xf]
  %v156 = vld [vmem:[%s1 + $0x1d8] sm:$0xf]
  %v157 = vld [vmem:[%s1 + $0x1dc] sm:$0xf]
  %v158 = vld [vmem:[%s1 + $0x1e0] sm:$0xf]
  %v159 = vld [vmem:[%s1 + $0x1e4] sm:$0xf]
  %v160 = vld [vmem:[%s1 + $0x1e8] sm:$0xf]
  %v161 = vld [vmem:[%s1 + $0x1ec] sm:$0xf]
  %v162 = vld [vmem:[%s1 + $0x1f0] sm:$0xf]
  %v163 = vld [vmem:[%s1 + $0x1f4] sm:$0xf]
  %v164 = vld [vmem:[%s1 + $0x1f8] sm:$0xf]
  %v165 = vld [vmem:[%s1 + $0x1fc] sm:$0xf]
  %v166 = vld [vmem:[%s1 + $0x200] sm:$0xf]
  %v167 = vld [vmem:[%s1 + $0x204] sm:$0xf]
  %v168 = vld [vmem:[%s1 + $0x208] sm:$0xf]
  %v169 = vld [vmem:[%s1 + $0x20c] sm:$0xf]
  %v170 = vld [vmem:[%s1 + $0x210] sm:$0xf]
  %v171 = vld [vmem:[%s1 + $0x214] sm:$0xf]
  %v172 = vld [vmem:[%s1 + $0x218] sm:$0xf]
  %v173 = vld [vmem:[%s1 + $0x21c] sm:$0xf]
  %v174 = vld [vmem:[%s1 + $0x220] sm:$0xf]
  %v175 = vld [vmem:[%s1 + $0x224] sm:$0xf]
  %v176 = vld [vmem:[%s1 + $0x228] sm:$0xf]
  %v177 = vld [vmem:[%s1 + $0x22c] sm:$0xf]
  %v178 = vld [vmem:[%s1 + $0x230] sm:$0xf]
  %v179 = vld [vmem:[%s1 + $0x234] sm:$0xf]
  %v180 = vld [vmem:[%s1 + $0x238] sm:$0xf]
  %v181 = vld [vmem:[%s1 + $0x23c] sm:$0xf]
  %v182 = vld [vmem:[%s2] sm:$0xf]
  %v183 = vld [vmem:[%s2 + $0x4] sm:$0xf]
  %v184 = vld [vmem:[%s2 + $0x8] sm:$0xf]
  %v185 = vld [vmem:[%s2 + $0xc] sm:$0xf]
  %v186 = vld [vmem:[%s3] sm:$0xf]
  %v187 = vld [vmem:[%s3 + $0x4] sm:$0xf]
  %v188 = vld [vmem:[%s3 + $0x8] sm:$0xf]
  %v189 = vld [vmem:[%s3 + $0xc] sm:$0xf]
  %v190 = vld [vmem:[%s3 + $0x10] sm:$0xf]
  %v191 = vld [vmem:[%s3 + $0x14] sm:$0xf]
  %v192 = vld [vmem:[%s3 + $0x18] sm:$0xf]
  %v193 = vld [vmem:[%s3 + $0x1c] sm:$0xf]
  %v194 = vld [vmem:[%s3 + $0x20] sm:$0xf]
  %v195 = vld [vmem:[%s3 + $0x24] sm:$0xf]
  %v196 = vld [vmem:[%s3 + $0x28] sm:$0xf]
  %v197 = vld [vmem:[%s3 + $0x2c] sm:$0xf]
  %v198 = vld [vmem:[%s3 + $0x30] sm:$0xf]
  %v199 = vld [vmem:[%s3 + $0x34] sm:$0xf]
  %v200 = vld [vmem:[%s3 + $0x38] sm:$0xf]
  %v201 = vld [vmem:[%s3 + $0x3c] sm:$0xf]
  %v206 = vunpack.c.l.b16 %v182
  %v207 = vunpack.c.l.b16 %v183
  %v208 = vunpack.c.l.b16 %v184
  %v209 = vunpack.c.l.b16 %v185
  %v210 = vpack.c.b16 %v207, %v206
  %v211 = vpack.c.b16 %v209, %v208
  %v230 = vunpack.c.l.b16 %v186
  %v231 = vunpack.c.l.b16 %v187
  %v232 = vunpack.c.l.b16 %v188
  %v233 = vunpack.c.l.b16 %v189
  %v234 = vunpack.c.l.b16 %v190
  %v235 = vunpack.c.l.b16 %v191
  %v236 = vunpack.c.l.b16 %v192
  %v237 = vunpack.c.l.b16 %v193
  %v238 = vunpack.c.l.b16 %v194
  %v239 = vunpack.c.l.b16 %v195
  %v240 = vunpack.c.l.b16 %v196
  %v241 = vunpack.c.l.b16 %v197
  %v242 = vunpack.c.l.b16 %v198
  %v243 = vunpack.c.l.b16 %v199
  %v244 = vunpack.c.l.b16 %v200
  %v245 = vunpack.c.l.b16 %v201
  %v246 = vpack.c.b16 %v231, %v230
  %v247 = vpack.c.b16 %v233, %v232
  %v248 = vpack.c.b16 %v235, %v234
  %v249 = vpack.c.b16 %v237, %v236
  %v250 = vpack.c.b16 %v239, %v238
  %v251 = vpack.c.b16 %v241, %v240
  %v252 = vpack.c.b16 %v243, %v242
  %v253 = vpack.c.b16 %v245, %v244
  %262 = vmatprep.subr.bf16.mxu0 0
  %263 = vmatpush1.bf16.msra.mxu0 %v246
  %264 = vmatprep.subr.bf16.mxu0 0
  %265 = vmatpush1.bf16.msra.mxu0 %v247
  %266 = vmatprep.subr.bf16.mxu0 0
  %267 = vmatpush1.bf16.msra.mxu0 %v248
  %268 = vmatprep.subr.bf16.mxu0 0
  %269 = vmatpush1.bf16.msra.mxu0 %v249
  %270 = vmatprep.subr.bf16.mxu0 0
  %271 = vmatpush1.bf16.msra.mxu0 %v250
  %272 = vmatprep.subr.bf16.mxu0 0
  %273 = vmatpush1.bf16.msra.mxu0 %v251
  %274 = vmatprep.subr.bf16.mxu0 0
  %275 = vmatpush1.bf16.msra.mxu0 %v252
  %276 = vmatprep.subr.bf16.mxu0 0
  %277 = vmatpush1.bf16.msra.mxu0 %v253
  %278 = vmatprep.subr.bf16.mxu0 0
  %279 = vmatpush1.bf16.msra.mxu0 0
  %280 = vmatprep.subr.bf16.mxu0 0
  %281 = vmatpush1.bf16.msra.mxu0 0
  %282 = vmatprep.subr.bf16.mxu0 0
  %283 = vmatpush1.bf16.msra.mxu0 0
  %284 = vmatprep.subr.bf16.mxu0 0
  %285 = vmatpush1.bf16.msra.mxu0 0
  %286 = vmatprep.subr.bf16.mxu0 0
  %287 = vmatpush1.bf16.msra.mxu0 0
  %288 = vmatprep.subr.bf16.mxu0 0
  %289 = vmatpush1.bf16.msra.mxu0 0
  %290 = vmatprep.subr.bf16.mxu0 0
  %291 = vmatpush1.bf16.msra.mxu0 0
  %292 = vmatprep.subr.bf16.mxu0 0
  %293 = vmatpush1.bf16.msra.mxu0 0
  %294 = vmatprep.mubr.bf16.mxu0 0
  %295 = vmatmul.mubr.bf16.gmra.mrb[0].mxu0 %v210
  %v296 = vpop.f32.mrb[0].mxu0
  %v297 = vadd.f32 0.0, %v296
  %v298 = vpop.f32.mrb[0].mxu0
  %v299 = vpop.f32.mrb[0].mxu0
  %v300 = vadd.f32 0.0, %v299
  %v301 = vpop.f32.mrb[0].mxu0
  %302 = vmatprep.mubr.bf16.mxu0 0
  %303 = vmatmul.mubr.bf16.gmra.mrb[0].mxu0 %v211
  %v304 = vpop.f32.mrb[0].mxu0
  %v305 = vadd.f32 0.0, %v304
  %v306 = vpop.f32.mrb[0].mxu0
  %v307 = vpop.f32.mrb[0].mxu0
  %v308 = vadd.f32 0.0, %v307
  %v309 = vpop.f32.mrb[0].mxu0
  %310 = vdwg.mxu0
  %v331 = vunpack.c.l.b16 %v18
  %v332 = vunpack.c.h.b16 %v18
  %v333 = vunpack.c.l.b16 %v19
  %v334 = vunpack.c.h.b16 %v19
  %v335 = vunpack.c.l.b16 %v20
  %v336 = vunpack.c.h.b16 %v20
  %v337 = vunpack.c.l.b16 %v21
  %v338 = vunpack.c.h.b16 %v21
  %v339 = vunpack.c.l.b16 %v22
  %v340 = vunpack.c.l.b16 %v23
  %v341 = vunpack.c.h.b16 %v23
  %v342 = vunpack.c.l.b16 %v24
  %v343 = vunpack.c.h.b16 %v24
  %v344 = vunpack.c.l.b16 %v25
  %v345 = vunpack.c.h.b16 %v25
  %v346 = vunpack.c.l.b16 %v26
  %v347 = vunpack.c.h.b16 %v26
  %v348 = vunpack.c.l.b16 %v27
  %v349 = vunpack.c.l.b16 %v28
  %v350 = vunpack.c.h.b16 %v28
  %v351 = vunpack.c.l.b16 %v29
  %v352 = vunpack.c.h.b16 %v29
  %v353 = vunpack.c.l.b16 %v30
  %v354 = vunpack.c.h.b16 %v30
  %v355 = vunpack.c.l.b16 %v31
  %v356 = vunpack.c.h.b16 %v31
  %v357 = vunpack.c.l.b16 %v32
  %v358 = vunpack.c.l.b16 %v33
  %v359 = vunpack.c.h.b16 %v33
  %v360 = vunpack.c.l.b16 %v34
  %v361 = vunpack.c.h.b16 %v34
  %v362 = vunpack.c.l.b16 %v35
  %v363 = vunpack.c.h.b16 %v35
  %v364 = vunpack.c.l.b16 %v36
  %v365 = vunpack.c.h.b16 %v36
  %v366 = vunpack.c.l.b16 %v37
  %v367 = vpack.c.b16 %v340, %v331
  %v368 = vpack.c.b16 %v341, %v332
  %v369 = vpack.c.b16 %v342, %v333
  %v370 = vpack.c.b16 %v343, %v334
  %v371 = vpack.c.b16 %v344, %v335
  %v372 = vpack.c.b16 %v345, %v336
  %v373 = vpack.c.b16 %v346, %v337
  %v374 = vpack.c.b16 %v347, %v338
  %v375 = vpack.c.b16 %v348, %v339
  %v376 = vpack.c.b16 %v358, %v349
  %v377 = vpack.c.b16 %v359, %v350
  %v378 = vpack.c.b16 %v360, %v351
  %v379 = vpack.c.b16 %v361, %v352
  %v380 = vpack.c.b16 %v362, %v353
  %v381 = vpack.c.b16 %v363, %v354
  %v382 = vpack.c.b16 %v364, %v355
  %v383 = vpack.c.b16 %v365, %v356
  %v384 = vpack.c.b16 %v366, %v357
  %v547 = vunpack.c.l.b16 %v38
  %v548 = vunpack.c.l.b16 %v39
  %v549 = vunpack.c.l.b16 %v40
  %v550 = vunpack.c.l.b16 %v41
  %v551 = vunpack.c.l.b16 %v42
  %v552 = vunpack.c.l.b16 %v43
  %v553 = vunpack.c.l.b16 %v44
  %v554 = vunpack.c.l.b16 %v45
  %v555 = vunpack.c.l.b16 %v46
  %v556 = vunpack.c.l.b16 %v47
  %v557 = vunpack.c.l.b16 %v48
  %v558 = vunpack.c.l.b16 %v49
  %v559 = vunpack.c.l.b16 %v50
  %v560 = vunpack.c.l.b16 %v51
  %v561 = vunpack.c.l.b16 %v52
  %v562 = vunpack.c.l.b16 %v53
  %v563 = vunpack.c.l.b16 %v54
  %v564 = vunpack.c.l.b16 %v55
  %v565 = vunpack.c.l.b16 %v56
  %v566 = vunpack.c.l.b16 %v57
  %v567 = vunpack.c.l.b16 %v58
  %v568 = vunpack.c.l.b16 %v59
  %v569 = vunpack.c.l.b16 %v60
  %v570 = vunpack.c.l.b16 %v61
  %v571 = vunpack.c.l.b16 %v62
  %v572 = vunpack.c.l.b16 %v63
  %v573 = vunpack.c.l.b16 %v64
  %v574 = vunpack.c.l.b16 %v65
  %v575 = vunpack.c.l.b16 %v66
  %v576 = vunpack.c.l.b16 %v67
  %v577 = vunpack.c.l.b16 %v68
  %v578 = vunpack.c.l.b16 %v69
  %v579 = vunpack.c.l.b16 %v70
  %v580 = vunpack.c.l.b16 %v71
  %v581 = vunpack.c.l.b16 %v72
  %v582 = vunpack.c.l.b16 %v73
  %v583 = vunpack.c.l.b16 %v74
  %v584 = vunpack.c.l.b16 %v75
  %v585 = vunpack.c.l.b16 %v76
  %v586 = vunpack.c.l.b16 %v77
  %v587 = vunpack.c.l.b16 %v78
  %v588 = vunpack.c.l.b16 %v79
  %v589 = vunpack.c.l.b16 %v80
  %v590 = vunpack.c.l.b16 %v81
  %v591 = vunpack.c.l.b16 %v82
  %v592 = vunpack.c.l.b16 %v83
  %v593 = vunpack.c.l.b16 %v84
  %v594 = vunpack.c.l.b16 %v85
  %v595 = vunpack.c.l.b16 %v86
  %v596 = vunpack.c.l.b16 %v87
  %v597 = vunpack.c.l.b16 %v88
  %v598 = vunpack.c.l.b16 %v89
  %v599 = vunpack.c.l.b16 %v90
  %v600 = vunpack.c.l.b16 %v91
  %v601 = vunpack.c.l.b16 %v92
  %v602 = vunpack.c.l.b16 %v93
  %v603 = vunpack.c.l.b16 %v94
  %v604 = vunpack.c.l.b16 %v95
  %v605 = vunpack.c.l.b16 %v96
  %v606 = vunpack.c.l.b16 %v97
  %v607 = vunpack.c.l.b16 %v98
  %v608 = vunpack.c.l.b16 %v99
  %v609 = vunpack.c.l.b16 %v100
  %v610 = vunpack.c.l.b16 %v101
  %v611 = vunpack.c.l.b16 %v102
  %v612 = vunpack.c.l.b16 %v103
  %v613 = vunpack.c.l.b16 %v104
  %v614 = vunpack.c.l.b16 %v105
  %v615 = vunpack.c.l.b16 %v106
  %v616 = vunpack.c.l.b16 %v107
  %v617 = vunpack.c.l.b16 %v108
  %v618 = vunpack.c.l.b16 %v109
  %v619 = vunpack.c.l.b16 %v110
  %v620 = vunpack.c.l.b16 %v111
  %v621 = vunpack.c.l.b16 %v112
  %v622 = vunpack.c.l.b16 %v113
  %v623 = vunpack.c.l.b16 %v114
  %v624 = vunpack.c.l.b16 %v115
  %v625 = vunpack.c.l.b16 %v116
  %v626 = vunpack.c.l.b16 %v117
  %v627 = vunpack.c.l.b16 %v118
  %v628 = vunpack.c.l.b16 %v119
  %v629 = vunpack.c.l.b16 %v120
  %v630 = vunpack.c.l.b16 %v121
  %v631 = vunpack.c.l.b16 %v122
  %v632 = vunpack.c.l.b16 %v123
  %v633 = vunpack.c.l.b16 %v124
  %v634 = vunpack.c.l.b16 %v125
  %v635 = vunpack.c.l.b16 %v126
  %v636 = vunpack.c.l.b16 %v127
  %v637 = vunpack.c.l.b16 %v128
  %v638 = vunpack.c.l.b16 %v129
  %v639 = vunpack.c.l.b16 %v130
  %v640 = vunpack.c.l.b16 %v131
  %v641 = vunpack.c.l.b16 %v132
  %v642 = vunpack.c.l.b16 %v133
  %v643 = vunpack.c.l.b16 %v134
  %v644 = vunpack.c.l.b16 %v135
  %v645 = vunpack.c.l.b16 %v136
  %v646 = vunpack.c.l.b16 %v137
  %v647 = vunpack.c.l.b16 %v138
  %v648 = vunpack.c.l.b16 %v139
  %v649 = vunpack.c.l.b16 %v140
  %v650 = vunpack.c.l.b16 %v141
  %v651 = vunpack.c.l.b16 %v142
  %v652 = vunpack.c.l.b16 %v143
  %v653 = vunpack.c.l.b16 %v144
  %v654 = vunpack.c.l.b16 %v145
  %v655 = vunpack.c.l.b16 %v146
  %v656 = vunpack.c.l.b16 %v147
  %v657 = vunpack.c.l.b16 %v148
  %v658 = vunpack.c.l.b16 %v149
  %v659 = vunpack.c.l.b16 %v150
  %v660 = vunpack.c.l.b16 %v151
  %v661 = vunpack.c.l.b16 %v152
  %v662 = vunpack.c.l.b16 %v153
  %v663 = vunpack.c.l.b16 %v154
  %v664 = vunpack.c.l.b16 %v155
  %v665 = vunpack.c.l.b16 %v156
  %v666 = vunpack.c.l.b16 %v157
  %v667 = vunpack.c.l.b16 %v158
  %v668 = vunpack.c.l.b16 %v159
  %v669 = vunpack.c.l.b16 %v160
  %v670 = vunpack.c.l.b16 %v161
  %v671 = vunpack.c.l.b16 %v162
  %v672 = vunpack.c.l.b16 %v163
  %v673 = vunpack.c.l.b16 %v164
  %v674 = vunpack.c.l.b16 %v165
  %v675 = vunpack.c.l.b16 %v166
  %v676 = vunpack.c.l.b16 %v167
  %v677 = vunpack.c.l.b16 %v168
  %v678 = vunpack.c.l.b16 %v169
  %v679 = vunpack.c.l.b16 %v170
  %v680 = vunpack.c.l.b16 %v171
  %v681 = vunpack.c.l.b16 %v172
  %v682 = vunpack.c.l.b16 %v173
  %v683 = vunpack.c.l.b16 %v174
  %v684 = vunpack.c.l.b16 %v175
  %v685 = vunpack.c.l.b16 %v176
  %v686 = vunpack.c.l.b16 %v177
  %v687 = vunpack.c.l.b16 %v178
  %v688 = vunpack.c.l.b16 %v179
  %v689 = vunpack.c.l.b16 %v180
  %v690 = vunpack.c.l.b16 %v181
  %v691 = vpack.c.b16 %v548, %v547
  %v692 = vpack.c.b16 %v550, %v549
  %v693 = vpack.c.b16 %v552, %v551
  %v694 = vpack.c.b16 %v554, %v553
  %v695 = vpack.c.b16 %v556, %v555
  %v696 = vpack.c.b16 %v558, %v557
  %v697 = vpack.c.b16 %v560, %v559
  %v698 = vpack.c.b16 %v562, %v561
  %v699 = vpack.c.b16 %v564, %v563
  %v700 = vpack.c.b16 %v566, %v565
  %v701 = vpack.c.b16 %v568, %v567
  %v702 = vpack.c.b16 %v570, %v569
  %v703 = vpack.c.b16 %v572, %v571
  %v704 = vpack.c.b16 %v574, %v573
  %v705 = vpack.c.b16 %v576, %v575
  %v706 = vpack.c.b16 %v578, %v577
  %v707 = vpack.c.b16 %v580, %v579
  %v708 = vpack.c.b16 %v582, %v581
  %v709 = vpack.c.b16 %v584, %v583
  %v710 = vpack.c.b16 %v586, %v585
  %v711 = vpack.c.b16 %v588, %v587
  %v712 = vpack.c.b16 %v590, %v589
  %v713 = vpack.c.b16 %v592, %v591
  %v714 = vpack.c.b16 %v594, %v593
  %v715 = vpack.c.b16 %v596, %v595
  %v716 = vpack.c.b16 %v598, %v597
  %v717 = vpack.c.b16 %v600, %v599
  %v718 = vpack.c.b16 %v602, %v601
  %v719 = vpack.c.b16 %v604, %v603
  %v720 = vpack.c.b16 %v606, %v605
  %v721 = vpack.c.b16 %v608, %v607
  %v722 = vpack.c.b16 %v610, %v609
  %v723 = vpack.c.b16 %v612, %v611
  %v724 = vpack.c.b16 %v614, %v613
  %v725 = vpack.c.b16 %v616, %v615
  %v726 = vpack.c.b16 %v618, %v617
  %v727 = vpack.c.b16 %v620, %v619
  %v728 = vpack.c.b16 %v622, %v621
  %v729 = vpack.c.b16 %v624, %v623
  %v730 = vpack.c.b16 %v626, %v625
  %v731 = vpack.c.b16 %v628, %v627
  %v732 = vpack.c.b16 %v630, %v629
  %v733 = vpack.c.b16 %v632, %v631
  %v734 = vpack.c.b16 %v634, %v633
  %v735 = vpack.c.b16 %v636, %v635
  %v736 = vpack.c.b16 %v638, %v637
  %v737 = vpack.c.b16 %v640, %v639
  %v738 = vpack.c.b16 %v642, %v641
  %v739 = vpack.c.b16 %v644, %v643
  %v740 = vpack.c.b16 %v646, %v645
  %v741 = vpack.c.b16 %v648, %v647
  %v742 = vpack.c.b16 %v650, %v649
  %v743 = vpack.c.b16 %v652, %v651
  %v744 = vpack.c.b16 %v654, %v653
  %v745 = vpack.c.b16 %v656, %v655
  %v746 = vpack.c.b16 %v658, %v657
  %v747 = vpack.c.b16 %v660, %v659
  %v748 = vpack.c.b16 %v662, %v661
  %v749 = vpack.c.b16 %v664, %v663
  %v750 = vpack.c.b16 %v666, %v665
  %v751 = vpack.c.b16 %v668, %v667
  %v752 = vpack.c.b16 %v670, %v669
  %v753 = vpack.c.b16 %v672, %v671
  %v754 = vpack.c.b16 %v674, %v673
  %v755 = vpack.c.b16 %v676, %v675
  %v756 = vpack.c.b16 %v678, %v677
  %v757 = vpack.c.b16 %v680, %v679
  %v758 = vpack.c.b16 %v682, %v681
  %v759 = vpack.c.b16 %v684, %v683
  %v760 = vpack.c.b16 %v686, %v685
  %v761 = vpack.c.b16 %v688, %v687
  %v762 = vpack.c.b16 %v690, %v689
  %835 = vmatprep.subr.bf16.mxu0 0
  %836 = vmatpush1.bf16.msra.mxu0 %v691
  %837 = vmatprep.subr.bf16.mxu0 0
  %838 = vmatpush1.bf16.msra.mxu0 %v692
  %839 = vmatprep.subr.bf16.mxu0 0
  %840 = vmatpush1.bf16.msra.mxu0 %v693
  %841 = vmatprep.subr.bf16.mxu0 0
  %842 = vmatpush1.bf16.msra.mxu0 %v694
  %843 = vmatprep.subr.bf16.mxu0 0
  %844 = vmatpush1.bf16.msra.mxu0 %v695
  %845 = vmatprep.subr.bf16.mxu0 0
  %846 = vmatpush1.bf16.msra.mxu0 %v696
  %847 = vmatprep.subr.bf16.mxu0 0
  %848 = vmatpush1.bf16.msra.mxu0 %v697
  %849 = vmatprep.subr.bf16.mxu0 0
  %850 = vmatpush1.bf16.msra.mxu0 %v698
  %851 = vmatprep.subr.bf16.mxu0 0
  %852 = vmatpush1.bf16.msra.mxu0 %v699
  %853 = vmatprep.subr.bf16.mxu0 0
  %854 = vmatpush1.bf16.msra.mxu0 %v700
  %855 = vmatprep.subr.bf16.mxu0 0
  %856 = vmatpush1.bf16.msra.mxu0 %v701
  %857 = vmatprep.subr.bf16.mxu0 0
  %858 = vmatpush1.bf16.msra.mxu0 %v702
  %859 = vmatprep.subr.bf16.mxu0 0
  %860 = vmatpush1.bf16.msra.mxu0 %v703
  %861 = vmatprep.subr.bf16.mxu0 0
  %862 = vmatpush1.bf16.msra.mxu0 %v704
  %863 = vmatprep.subr.bf16.mxu0 0
  %864 = vmatpush1.bf16.msra.mxu0 %v705
  %865 = vmatprep.subr.bf16.mxu0 0
  %866 = vmatpush1.bf16.msra.mxu0 %v706
  %867 = vmatprep.mubr.bf16.mxu0 %v368
  %868 = vmatmul.mubr.bf16.gmra.mrb[0].mxu0 %v367
  %v869 = vpop.f32.mrb[0].mxu0
  %v870 = vadd.f32 %v297, %v869
  %v871 = vpop.f32.mrb[0].mxu0
  %v872 = vpop.f32.mrb[0].mxu0
  %v873 = vadd.f32 %v300, %v872
  %v874 = vpop.f32.mrb[0].mxu0
  %875 = vmatprep.mubr.bf16.mxu0 %v377
  %876 = vmatmul.mubr.bf16.gmra.mrb[0].mxu0 %v376
  %v877 = vpop.f32.mrb[0].mxu0
  %v878 = vadd.f32 %v305, %v877
  %v879 = vpop.f32.mrb[0].mxu0
  %v880 = vpop.f32.mrb[0].mxu0
  %v881 = vadd.f32 %v308, %v880
  %v882 = vpop.f32.mrb[0].mxu0
  %883 = vdwg.mxu0
  %884 = vmatprep.subr.bf16.mxu0 0
  %885 = vmatpush1.bf16.msra.mxu0 %v707
  %886 = vmatprep.subr.bf16.mxu0 0
  %887 = vmatpush1.bf16.msra.mxu0 %v708
  %888 = vmatprep.subr.bf16.mxu0 0
  %889 = vmatpush1.bf16.msra.mxu0 %v709
  %890 = vmatprep.subr.bf16.mxu0 0
  %891 = vmatpush1.bf16.msra.mxu0 %v710
  %892 = vmatprep.subr.bf16.mxu0 0
  %893 = vmatpush1.bf16.msra.mxu0 %v711
  %894 = vmatprep.subr.bf16.mxu0 0
  %895 = vmatpush1.bf16.msra.mxu0 %v712
  %896 = vmatprep.subr.bf16.mxu0 0
  %897 = vmatpush1.bf16.msra.mxu0 %v713
  %898 = vmatprep.subr.bf16.mxu0 0
  %899 = vmatpush1.bf16.msra.mxu0 %v714
  %900 = vmatprep.subr.bf16.mxu0 0
  %901 = vmatpush1.bf16.msra.mxu0 %v715
  %902 = vmatprep.subr.bf16.mxu0 0
  %903 = vmatpush1.bf16.msra.mxu0 %v716
  %904 = vmatprep.subr.bf16.mxu0 0
  %905 = vmatpush1.bf16.msra.mxu0 %v717
  %906 = vmatprep.subr.bf16.mxu0 0
  %907 = vmatpush1.bf16.msra.mxu0 %v718
  %908 = vmatprep.subr.bf16.mxu0 0
  %909 = vmatpush1.bf16.msra.mxu0 %v719
  %910 = vmatprep.subr.bf16.mxu0 0
  %911 = vmatpush1.bf16.msra.mxu0 %v720
  %912 = vmatprep.subr.bf16.mxu0 0
  %913 = vmatpush1.bf16.msra.mxu0 %v721
  %914 = vmatprep.subr.bf16.mxu0 0
  %915 = vmatpush1.bf16.msra.mxu0 %v722
  %916 = vmatprep.mubr.bf16.mxu0 %v370
  %917 = vmatmul.mubr.bf16.gmra.mrb[0].mxu0 %v369
  %v918 = vpop.f32.mrb[0].mxu0
  %v919 = vadd.f32 %v870, %v918
  %v920 = vpop.f32.mrb[0].mxu0
  %v921 = vpop.f32.mrb[0].mxu0
  %v922 = vadd.f32 %v873, %v921
  %v923 = vpop.f32.mrb[0].mxu0
  %924 = vmatprep.mubr.bf16.mxu0 %v379
  %925 = vmatmul.mubr.bf16.gmra.mrb[0].mxu0 %v378
  %v926 = vpop.f32.mrb[0].mxu0
  %v927 = vadd.f32 %v878, %v926
  %v928 = vpop.f32.mrb[0].mxu0
  %v929 = vpop.f32.mrb[0].mxu0
  %v930 = vadd.f32 %v881, %v929
  %v931 = vpop.f32.mrb[0].mxu0
  %932 = vdwg.mxu0
  %933 = vmatprep.subr.bf16.mxu0 0
  %934 = vmatpush1.bf16.msra.mxu0 %v723
  %935 = vmatprep.subr.bf16.mxu0 0
  %936 = vmatpush1.bf16.msra.mxu0 %v724
  %937 = vmatprep.subr.bf16.mxu0 0
  %938 = vmatpush1.bf16.msra.mxu0 %v725
  %939 = vmatprep.subr.bf16.mxu0 0
  %940 = vmatpush1.bf16.msra.mxu0 %v726
  %941 = vmatprep.subr.bf16.mxu0 0
  %942 = vmatpush1.bf16.msra.mxu0 %v727
  %943 = vmatprep.subr.bf16.mxu0 0
  %944 = vmatpush1.bf16.msra.mxu0 %v728
  %945 = vmatprep.subr.bf16.mxu0 0
  %946 = vmatpush1.bf16.msra.mxu0 %v729
  %947 = vmatprep.subr.bf16.mxu0 0
  %948 = vmatpush1.bf16.msra.mxu0 %v730
  %949 = vmatprep.subr.bf16.mxu0 0
  %950 = vmatpush1.bf16.msra.mxu0 %v731
  %951 = vmatprep.subr.bf16.mxu0 0
  %952 = vmatpush1.bf16.msra.mxu0 %v732
  %953 = vmatprep.subr.bf16.mxu0 0
  %954 = vmatpush1.bf16.msra.mxu0 %v733
  %955 = vmatprep.subr.bf16.mxu0 0
  %956 = vmatpush1.bf16.msra.mxu0 %v734
  %957 = vmatprep.subr.bf16.mxu0 0
  %958 = vmatpush1.bf16.msra.mxu0 %v735
  %959 = vmatprep.subr.bf16.mxu0 0
  %960 = vmatpush1.bf16.msra.mxu0 %v736
  %961 = vmatprep.subr.bf16.mxu0 0
  %962 = vmatpush1.bf16.msra.mxu0 %v737
  %963 = vmatprep.subr.bf16.mxu0 0
  %964 = vmatpush1.bf16.msra.mxu0 %v738
  %965 = vmatprep.mubr.bf16.mxu0 %v372
  %966 = vmatmul.mubr.bf16.gmra.mrb[0].mxu0 %v371
  %v967 = vpop.f32.mrb[0].mxu0
  %v968 = vadd.f32 %v919, %v967
  %v969 = vpop.f32.mrb[0].mxu0
  %v970 = vpop.f32.mrb[0].mxu0
  %v971 = vadd.f32 %v922, %v970
  %v972 = vpop.f32.mrb[0].mxu0
  %973 = vmatprep.mubr.bf16.mxu0 %v381
  %974 = vmatmul.mubr.bf16.gmra.mrb[0].mxu0 %v380
  %v975 = vpop.f32.mrb[0].mxu0
  %v976 = vadd.f32 %v927, %v975
  %v977 = vpop.f32.mrb[0].mxu0
  %v978 = vpop.f32.mrb[0].mxu0
  %v979 = vadd.f32 %v930, %v978
  %v980 = vpop.f32.mrb[0].mxu0
  %981 = vdwg.mxu0
  %982 = vmatprep.subr.bf16.mxu0 0
  %983 = vmatpush1.bf16.msra.mxu0 %v739
  %984 = vmatprep.subr.bf16.mxu0 0
  %985 = vmatpush1.bf16.msra.mxu0 %v740
  %986 = vmatprep.subr.bf16.mxu0 0
  %987 = vmatpush1.bf16.msra.mxu0 %v741
  %988 = vmatprep.subr.bf16.mxu0 0
  %989 = vmatpush1.bf16.msra.mxu0 %v742
  %990 = vmatprep.subr.bf16.mxu0 0
  %991 = vmatpush1.bf16.msra.mxu0 %v743
  %992 = vmatprep.subr.bf16.mxu0 0
  %993 = vmatpush1.bf16.msra.mxu0 %v744
  %994 = vmatprep.subr.bf16.mxu0 0
  %995 = vmatpush1.bf16.msra.mxu0 %v745
  %996 = vmatprep.subr.bf16.mxu0 0
  %997 = vmatpush1.bf16.msra.mxu0 %v746
  %998 = vmatprep.subr.bf16.mxu0 0
  %999 = vmatpush1.bf16.msra.mxu0 %v747
  %1000 = vmatprep.subr.bf16.mxu0 0
  %1001 = vmatpush1.bf16.msra.mxu0 %v748
  %1002 = vmatprep.subr.bf16.mxu0 0
  %1003 = vmatpush1.bf16.msra.mxu0 %v749
  %1004 = vmatprep.subr.bf16.mxu0 0
  %1005 = vmatpush1.bf16.msra.mxu0 %v750
  %1006 = vmatprep.subr.bf16.mxu0 0
  %1007 = vmatpush1.bf16.msra.mxu0 %v751
  %1008 = vmatprep.subr.bf16.mxu0 0
  %1009 = vmatpush1.bf16.msra.mxu0 %v752
  %1010 = vmatprep.subr.bf16.mxu0 0
  %1011 = vmatpush1.bf16.msra.mxu0 %v753
  %1012 = vmatprep.subr.bf16.mxu0 0
  %1013 = vmatpush1.bf16.msra.mxu0 %v754
  %1014 = vmatprep.mubr.bf16.mxu0 %v374
  %1015 = vmatmul.mubr.bf16.gmra.mrb[0].mxu0 %v373
  %v1016 = vpop.f32.mrb[0].mxu0
  %v1017 = vadd.f32 %v968, %v1016
  %v1018 = vpop.f32.mrb[0].mxu0
  %v1019 = vpop.f32.mrb[0].mxu0
  %v1020 = vadd.f32 %v971, %v1019
  %v1021 = vpop.f32.mrb[0].mxu0
  %1022 = vmatprep.mubr.bf16.mxu0 %v383
  %1023 = vmatmul.mubr.bf16.gmra.mrb[0].mxu0 %v382
  %v1024 = vpop.f32.mrb[0].mxu0
  %v1025 = vadd.f32 %v976, %v1024
  %v1026 = vpop.f32.mrb[0].mxu0
  %v1027 = vpop.f32.mrb[0].mxu0
  %v1028 = vadd.f32 %v979, %v1027
  %v1029 = vpop.f32.mrb[0].mxu0
  %1030 = vdwg.mxu0
  %1031 = vmatprep.subr.bf16.mxu0 0
  %1032 = vmatpush1.bf16.msra.mxu0 %v755
  %1033 = vmatprep.subr.bf16.mxu0 0
  %1034 = vmatpush1.bf16.msra.mxu0 %v756
  %1035 = vmatprep.subr.bf16.mxu0 0
  %1036 = vmatpush1.bf16.msra.mxu0 %v757
  %1037 = vmatprep.subr.bf16.mxu0 0
  %1038 = vmatpush1.bf16.msra.mxu0 %v758
  %1039 = vmatprep.subr.bf16.mxu0 0
  %1040 = vmatpush1.bf16.msra.mxu0 %v759
  %1041 = vmatprep.subr.bf16.mxu0 0
  %1042 = vmatpush1.bf16.msra.mxu0 %v760
  %1043 = vmatprep.subr.bf16.mxu0 0
  %1044 = vmatpush1.bf16.msra.mxu0 %v761
  %1045 = vmatprep.subr.bf16.mxu0 0
  %1046 = vmatpush1.bf16.msra.mxu0 %v762
  %1047 = vmatprep.subr.bf16.mxu0 0
  %1048 = vmatpush1.bf16.msra.mxu0 0
  %1049 = vmatprep.subr.bf16.mxu0 0
  %1050 = vmatpush1.bf16.msra.mxu0 0
  %1051 = vmatprep.subr.bf16.mxu0 0
  %1052 = vmatpush1.bf16.msra.mxu0 0
  %1053 = vmatprep.subr.bf16.mxu0 0
  %1054 = vmatpush1.bf16.msra.mxu0 0
  %1055 = vmatprep.subr.bf16.mxu0 0
  %1056 = vmatpush1.bf16.msra.mxu0 0
  %1057 = vmatprep.subr.bf16.mxu0 0
  %1058 = vmatpush1.bf16.msra.mxu0 0
  %1059 = vmatprep.subr.bf16.mxu0 0
  %1060 = vmatpush1.bf16.msra.mxu0 0
  %1061 = vmatprep.subr.bf16.mxu0 0
  %1062 = vmatpush1.bf16.msra.mxu0 0
  %1063 = vmatprep.mubr.bf16.mxu0 0
  %1064 = vmatmul.mubr.bf16.gmra.mrb[0].mxu0 %v375
  %v1065 = vpop.f32.mrb[0].mxu0
  %v1066 = vadd.f32 %v1017, %v1065
  %v1067 = vpop.f32.mrb[0].mxu0
  %v1068 = vpop.f32.mrb[0].mxu0
  %v1069 = vadd.f32 %v1020, %v1068
  %v1070 = vpop.f32.mrb[0].mxu0
  %1071 = vmatprep.mubr.bf16.mxu0 0
  %1072 = vmatmul.mubr.bf16.gmra.mrb[0].mxu0 %v384
  %v1073 = vpop.f32.mrb[0].mxu0
  %v1074 = vadd.f32 %v1025, %v1073
  %v1075 = vpop.f32.mrb[0].mxu0
  %v1076 = vpop.f32.mrb[0].mxu0
  %v1077 = vadd.f32 %v1028, %v1076
  %v1078 = vpop.f32.mrb[0].mxu0
  %1079 = vdwg.mxu0
  %1080 = vst [vmem:[%s4] sm:$0xff] %v1066
  %1081 = vst [vmem:[%s4 + $0x8] sm:$0xff] %v1069
  %1082 = vst [vmem:[%s4 + $0x10] sm:$0xff] %v1074
  %1083 = vst [vmem:[%s4 + $0x18] sm:$0xff] %v1077
  // Predicated region
  $region18: #{_lambda_.20} parent=0 // pred_check
    _
  $region19: #{_lambda_.20} parent=0 // pred_check_branch
    %1085 = sbr.rel (0) target = $region21
  $region20: #{_lambda_.20} parent=0 // pred_region
    _
  $region21: #{_lambda_.20} parent=0 // pred_fallthru
    _
  // Predicated region
  $region22: #{_lambda_.20} parent=0 // pred_check
    _
  $region23: #{_lambda_.20} parent=0 // pred_check_branch
    %1087 = sbr.rel (0) target = $region25
  $region24: #{_lambda_.20} parent=0 // pred_region
    _
  $region25: #{_lambda_.20} parent=0 // pred_fallthru
    _

</llo_original>
